<compile_context>
chip_gen: v7x
topology: tpu7x:2x2x1
jax: 0.10.0
libtpu: 0.0.40
codegen_flags: <defaults>
</compile_context>

<pallas_src>
import functools
import math

import jax
import jax.numpy as jnp
from jax import lax
from jax.experimental import pallas as pl
from jax.experimental.pallas import tpu as pltpu

H = 30            # LSTM hidden size per direction
HP = 128          # lane-padded hidden size
BWD_OFF = 64      # lane offset of the backward direction inside each 128-block
D_IN = 300        # GloVe embedding dim
D_PAD = 384       # 300 padded up to 3*128
G = 4 * HP        # packed gate width (i, f, g, o blocks of 128 lanes each)
NUM_LAYERS = 2

_VMEM_SPEC = pl.BlockSpec(memory_space=pltpu.MemorySpace.VMEM)


# ----------------------------------------------------------------------------
# Fused Pallas kernel
# ----------------------------------------------------------------------------
def _fused_kernel(x_ref, wih1f_ref, wih1b_ref, whh1_ref, b1_ref,
                  wih2f_ref, wih2b_ref, whh2_ref, b2_ref,
                  fcw_ref, fcb_ref, o_ref,
                  g1f_ref, g1b_ref, g2f_ref, g2b_ref, buf1_ref, *, T):
    f32 = jnp.float32
    unroll = True if T <= 32 else 8

    lane = lax.broadcasted_iota(jnp.int32, (1, HP), 1)
    fwd_mask = (lane < BWD_OFF).astype(f32)        # lanes [0, 64)
    bwd_mask = 1.0 - fwd_mask                      # lanes [64, 128)

    def gate_act(gates, c):
        i = jax.nn.sigmoid(gates[:, 0 * HP:1 * HP])
        f = jax.nn.sigmoid(gates[:, 1 * HP:2 * HP])
        g = jnp.tanh(gates[:, 2 * HP:3 * HP])
        o = jax.nn.sigmoid(gates[:, 3 * HP:4 * HP])
        c = f * c + i * g
        h = o * jnp.tanh(c)
        return h, c

    # ---- layer 1: hoisted input projections (outside the serial chain) -----
    x = x_ref[...]                                                    # (Tp, 384)
    g1f_ref[...] = (jnp.dot(x, wih1f_ref[...], preferred_element_type=f32)
                    + b1_ref[...])
    g1b_ref[...] = jnp.dot(x, wih1b_ref[...], preferred_element_type=f32)
    buf1_ref[...] = jnp.zeros_like(buf1_ref)

    # ---- layer 1: fused fwd+bwd recurrence (single 128-lane chain) ---------
    def step1(s, carry):
        h, c = carry
        r = T - 1 - s
        gates = (g1f_ref[pl.ds(s, 1), :] + g1b_ref[pl.ds(r, 1), :]
                 + jnp.dot(h, whh1_ref[...], preferred_element_type=f32))
        h, c = gate_act(gates, c)
        # fwd half of h belongs to time s, bwd half to time r
        buf1_ref[pl.ds(s, 1), :] = buf1_ref[pl.ds(s, 1), :] + h * fwd_mask
        buf1_ref[pl.ds(r, 1), :] = buf1_ref[pl.ds(r, 1), :] + h * bwd_mask
        return h, c

    zero_h = jnp.zeros((1, HP), f32)
    lax.fori_loop(0, T, step1, (zero_h, zero_h), unroll=unroll)

    # ---- layer 2: hoisted input projections --------------------------------
    y = buf1_ref[...]                                                 # (Tp, 128)
    g2f_ref[...] = (jnp.dot(y, wih2f_ref[...], preferred_element_type=f32)
                    + b2_ref[...])
    g2b_ref[...] = jnp.dot(y, wih2b_ref[...], preferred_element_type=f32)

    # ---- layer 2: fused recurrence + running max over time -----------------
    def step2(s, carry):
        h, c, pooled = carry
        r = T - 1 - s
        gates = (g2f_ref[pl.ds(s, 1), :] + g2b_ref[pl.ds(r, 1), :]
                 + jnp.dot(h, whh2_ref[...], preferred_element_type=f32))
        h, c = gate_act(gates, c)
        pooled = jnp.maximum(pooled, h)      # row order irrelevant for the max
        return h, c, pooled

    pooled0 = jnp.full((1, HP), -1e30, f32)  # pad lanes end at 0; fcw is 0 there
    _, _, pooled = lax.fori_loop(0, T, step2, (zero_h, zero_h, pooled0),
                                 unroll=unroll)

    # ---- head: Linear(60 -> 1) + sigmoid ------------------------------------
    z = jnp.sum(pooled * fcw_ref[...], axis=1, keepdims=True) + fcb_ref[...]
    o_ref[...] = jax.nn.sigmoid(z)


# ----------------------------------------------------------------------------
# Wrapper
# ----------------------------------------------------------------------------
@jax.jit
def mynn_forward(feat, packed, fcw_p, fcb):
    # feat: (T, 300). Torch does feat.unsqueeze(0); batch=1 is implicit here.
    T = feat.shape[0]
    Tp = max(8, ((T + 7) // 8) * 8)
    x = jnp.pad(feat, ((0, Tp - T), (0, D_PAD - D_IN)))
    return pl.pallas_call(
        functools.partial(_fused_kernel, T=T),
        out_shape=jax.ShapeDtypeStruct((1, 1), jnp.float32),
        in_specs=[_VMEM_SPEC] * 11,
        out_specs=_VMEM_SPEC,
        scratch_shapes=[
            pltpu.VMEM((Tp, G), jnp.float32),    # layer-1 fwd hoisted gates
            pltpu.VMEM((Tp, G), jnp.float32),    # layer-1 bwd hoisted gates
            pltpu.VMEM((Tp, G), jnp.float32),    # layer-2 fwd hoisted gates
            pltpu.VMEM((Tp, G), jnp.float32),    # layer-2 bwd hoisted gates
            pltpu.VMEM((Tp, HP), jnp.float32),   # lane-dense layer-1 output
        ],
    )(x, *packed, fcw_p, fcb)


# ----------------------------------------------------------------------------
# Deterministic parameter construction + kernel-layout packing
# ----------------------------------------------------------------------------
def _pack_gate_cols(w, off):
    """(rows, 4*H) -> (rows, 4*HP): each gate's H real cols at lane offset off."""
    parts = jnp.split(w, 4, axis=-1)
    parts = [jnp.pad(p, ((0, 0), (off, HP - H - off))) for p in parts]
    return jnp.concatenate(parts, axis=-1)


def _scatter_rows(w, dst_rows, n_dst):
    out = jnp.zeros((n_dst, w.shape[1]), w.dtype)
    return out.at[jnp.asarray(dst_rows)].set(w)


def make_params(key):
    k_lstm = 1.0 / math.sqrt(H)
    raw = []       # raw PyTorch-shaped weights (for the pure-JAX reference)
    packed = []    # kernel-layout weights (per layer: wih_f, wih_b, whh, bias)
    for layer in range(NUM_LAYERS):
        d_in = D_IN if layer == 0 else 2 * H
        raw_layer = {}
        wih_p = {}
        whh_c = jnp.zeros((HP, G), jnp.float32)
        b_c = jnp.zeros((1, G), jnp.float32)
        for direction, off in (("fwd", 0), ("bwd", BWD_OFF)):
            key, k1, k2, k3, k4 = jax.random.split(key, 5)
            w_ih = jax.random.uniform(k1, (4 * H, d_in), jnp.float32, -k_lstm, k_lstm)
            w_hh = jax.random.uniform(k2, (4 * H, H), jnp.float32, -k_lstm, k_lstm)
            b_ih = jax.random.uniform(k3, (4 * H,), jnp.float32, -k_lstm, k_lstm)
            b_hh = jax.random.uniform(k4, (4 * H,), jnp.float32, -k_lstm, k_lstm)
            raw_layer[direction] = (w_ih, w_hh, b_ih, b_hh)

            cols = _pack_gate_cols(w_ih.T, off)                   # (d_in, 512)
            if layer == 0:
                wih_p[direction] = jnp.pad(cols, ((0, D_PAD - D_IN), (0, 0)))
            else:
                # layer-2 input is the lane-dense buffer:
                # fwd h at input lanes 0:30, bwd h at input lanes 64:94
                dst = list(range(H)) + list(range(BWD_OFF, BWD_OFF + H))
                wih_p[direction] = _scatter_rows(cols, dst, HP)
            whh_c = whh_c + _scatter_rows(_pack_gate_cols(w_hh.T, off),
                                          list(range(off, off + H)), HP)
            b_c = b_c + _pack_gate_cols((b_ih + b_hh)[None, :], off)
        raw.append(raw_layer)
        packed.extend([wih_p["fwd"], wih_p["bwd"], whh_c, b_c])

    k_fc = 1.0 / math.sqrt(2 * H)
    key, k1, k2 = jax.random.split(key, 3)
    fc_w = jax.random.uniform(k1, (1, 2 * H), jnp.float32, -k_fc, k_fc)
    fc_b = jax.random.uniform(k2, (1, 1), jnp.float32, -k_fc, k_fc)
    fcw_p = (jnp.zeros((1, HP), jnp.float32)
             .at[0, 0:H].set(fc_w[0, 0:H])
             .at[0, BWD_OFF:BWD_OFF + H].set(fc_w[0, H:2 * H]))
    return raw, fc_w, fc_b, tuple(packed), fcw_p


# ----------------------------------------------------------------------------
# Pure-JAX reference (mirrors torch.nn.LSTM semantics) for validation
# ----------------------------------------------------------------------------
def _lstm_dir_ref(x, w_ih, w_hh, b_ih, b_hh):
    def cell(carry, x_t):
        h, c = carry
        gates = x_t @ w_ih.T + h @ w_hh.T + b_ih + b_hh
        i, f, g, o = jnp.split(gates, 4, axis=-1)
        i, f, o = jax.nn.sigmoid(i), jax.nn.sigmoid(f), jax.nn.sigmoid(o)
        g = jnp.tanh(g)
        c = f * c + i * g
        h = o * jnp.tanh(c)
        return (h, c), h

    h0 = jnp.zeros((H,), jnp.float32)
    (_, _), hs = lax.scan(cell, (h0, h0), x)
    return hs                                                        # (T, H)


def mynn_forward_ref(feat, raw_params, fc_w, fc_b):
    x = feat
    for layer in range(NUM_LAYERS):
        out_f = _lstm_dir_ref(x, *raw_params[layer]["fwd"])
        out_b = jnp.flip(_lstm_dir_ref(jnp.flip(x, 0), *raw_params[layer]["bwd"]), 0)
        x = jnp.concatenate([out_f, out_b], axis=-1)
    pooled = jnp.max(x, axis=0, keepdims=True)
    return jax.nn.sigmoid(pooled @ fc_w.T + fc_b)


# ----------------------------------------------------------------------------
# TODO(synk): GloVe featurize / Adam training loop are host-side and out of
# scope for the forward-pass kernel.
if __name__ == "__main__":
    key = jax.random.PRNGKey(0)
    key, k_feat = jax.random.split(key)

    T = 8                                   # sequence length (number of words)
    feat = jax.random.normal(k_feat, (T, D_IN), jnp.float32)   # GloVe features

    raw_params, fc_w, fc_b, packed, fcw_p = make_params(key)

    out = mynn_forward(feat, packed, fcw_p, fc_b)
    out = jax.block_until_ready(out)

    ref = mynn_forward_ref(feat, raw_params, fc_w, fc_b)
    assert out.shape == (1, 1)
    assert jnp.allclose(out, ref, atol=2e-3), (out, ref)

    print("KERNEL_OK")
</pallas_src>

<mosaic_0001>
module attributes {stable_mosaic.version = 11 : i64} {
  func.func @_fused_kernel(%arg0: memref<8x384xf32, #tpu.memory_space<vmem>>, %arg1: memref<384x512xf32, #tpu.memory_space<vmem>>, %arg2: memref<384x512xf32, #tpu.memory_space<vmem>>, %arg3: memref<128x512xf32, #tpu.memory_space<vmem>>, %arg4: memref<1x512xf32, #tpu.memory_space<vmem>>, %arg5: memref<128x512xf32, #tpu.memory_space<vmem>>, %arg6: memref<128x512xf32, #tpu.memory_space<vmem>>, %arg7: memref<128x512xf32, #tpu.memory_space<vmem>>, %arg8: memref<1x512xf32, #tpu.memory_space<vmem>>, %arg9: memref<1x128xf32, #tpu.memory_space<vmem>>, %arg10: memref<1x1xf32, #tpu.memory_space<vmem>>, %arg11: memref<1x1xf32, #tpu.memory_space<vmem>>, %arg12: memref<8x512xf32, #tpu.memory_space<vmem>>, %arg13: memref<8x512xf32, #tpu.memory_space<vmem>>, %arg14: memref<8x512xf32, #tpu.memory_space<vmem>>, %arg15: memref<8x512xf32, #tpu.memory_space<vmem>>, %arg16: memref<8x128xf32, #tpu.memory_space<vmem>>) attributes {dimension_semantics = [], scalar_prefetch = 0 : i64, scratch_operands = 5 : i64, tpu.core_type = #tpu.core_type<tc>} {
    %0 = tpu.iota {dimensions = array<i32: 1>} : vector<1x128xi32>
    %c64_i32 = arith.constant 64 : i32
    %1 = vector.broadcast %c64_i32 : i32 to vector<1x128xi32>
    %2 = arith.cmpi slt, %0, %1 : vector<1x128xi32>
    %3 = arith.extui %2 : vector<1x128xi1> to vector<1x128xi32>
    %4 = arith.sitofp %3 : vector<1x128xi32> to vector<1x128xf32>
    %cst = arith.constant 1.000000e+00 : f32
    %5 = vector.broadcast %cst : f32 to vector<1x128xf32>
    %6 = arith.subf %5, %4 : vector<1x128xf32>
    %c0 = arith.constant 0 : index
    %c0_0 = arith.constant 0 : index
    %7 = vector.load %arg0[%c0, %c0_0] : memref<8x384xf32, #tpu.memory_space<vmem>>, vector<8x384xf32>
    %c0_1 = arith.constant 0 : index
    %c0_2 = arith.constant 0 : index
    %8 = vector.load %arg1[%c0_1, %c0_2] : memref<384x512xf32, #tpu.memory_space<vmem>>, vector<384x512xf32>
    %cst_3 = arith.constant dense<0.000000e+00> : vector<8x512xf32>
    %9 = tpu.matmul %7, %8, %cst_3 {dimension_numbers = #tpu.dot_dimension_numbers<[1], [0], [0], [1], [0, 0, 1, 1], [], []>} : vector<8x384xf32>, vector<384x512xf32>, vector<8x512xf32> -> vector<8x512xf32>
    %c0_4 = arith.constant 0 : index
    %c0_5 = arith.constant 0 : index
    %10 = vector.load %arg4[%c0_4, %c0_5] : memref<1x512xf32, #tpu.memory_space<vmem>>, vector<1x512xf32>
    %11 = vector.broadcast %10 : vector<1x512xf32> to vector<8x512xf32>
    %12 = arith.addf %9, %11 : vector<8x512xf32>
    %c0_6 = arith.constant 0 : index
    %c0_7 = arith.constant 0 : index
    %13 = vector.load %arg12[%c0_6, %c0_7] : memref<8x512xf32, #tpu.memory_space<vmem>>, vector<8x512xf32>
    tpu.vector_store %arg12[%c0_6, %c0_7], %12 {strides = array<i32>} : memref<8x512xf32, #tpu.memory_space<vmem>>, vector<8x512xf32>,
    %c0_8 = arith.constant 0 : index
    %c0_9 = arith.constant 0 : index
    %14 = vector.load %arg2[%c0_8, %c0_9] : memref<384x512xf32, #tpu.memory_space<vmem>>, vector<384x512xf32>
    %cst_10 = arith.constant dense<0.000000e+00> : vector<8x512xf32>
    %15 = tpu.matmul %7, %14, %cst_10 {dimension_numbers = #tpu.dot_dimension_numbers<[1], [0], [0], [1], [0, 0, 1, 1], [], []>} : vector<8x384xf32>, vector<384x512xf32>, vector<8x512xf32> -> vector<8x512xf32>
    %c0_11 = arith.constant 0 : index
    %c0_12 = arith.constant 0 : index
    %16 = vector.load %arg13[%c0_11, %c0_12] : memref<8x512xf32, #tpu.memory_space<vmem>>, vector<8x512xf32>
    tpu.vector_store %arg13[%c0_11, %c0_12], %15 {strides = array<i32>} : memref<8x512xf32, #tpu.memory_space<vmem>>, vector<8x512xf32>,
    %cst_13 = arith.constant 0.000000e+00 : f32
    %17 = vector.broadcast %cst_13 : f32 to vector<8x128xf32>
    %c0_14 = arith.constant 0 : index
    %c0_15 = arith.constant 0 : index
    %18 = vector.load %arg16[%c0_14, %c0_15] : memref<8x128xf32, #tpu.memory_space<vmem>>, vector<8x128xf32>
    tpu.vector_store %arg16[%c0_14, %c0_15], %17 {strides = array<i32>} : memref<8x128xf32, #tpu.memory_space<vmem>>, vector<8x128xf32>,
    %cst_16 = arith.constant 0.000000e+00 : f32
    %19 = vector.broadcast %cst_16 : f32 to vector<1x128xf32>
    %c0_i32 = arith.constant 0 : i32
    %c7_i32 = arith.constant 7 : i32
    %20 = arith.subi %c7_i32, %c0_i32 : i32
    %21 = arith.index_cast %c0_i32 : i32 to index
    %c0_17 = arith.constant 0 : index
    %22 = vector.load %arg12[%21, %c0_17] : memref<8x512xf32, #tpu.memory_space<vmem>>, vector<1x512xf32>
    %23 = arith.index_cast %20 : i32 to index
    %c0_18 = arith.constant 0 : index
    %24 = vector.load %arg13[%23, %c0_18] : memref<8x512xf32, #tpu.memory_space<vmem>>, vector<1x512xf32>
    %25 = arith.addf %22, %24 : vector<1x512xf32>
    %c0_19 = arith.constant 0 : index
    %c0_20 = arith.constant 0 : index
    %26 = vector.load %arg3[%c0_19, %c0_20] : memref<128x512xf32, #tpu.memory_space<vmem>>, vector<128x512xf32>
    %cst_21 = arith.constant dense<0.000000e+00> : vector<1x512xf32>
    %27 = tpu.matmul %19, %26, %cst_21 {dimension_numbers = #tpu.dot_dimension_numbers<[1], [0], [0], [1], [0, 0, 1, 1], [], []>} : vector<1x128xf32>, vector<128x512xf32>, vector<1x512xf32> -> vector<1x512xf32>
    %28 = arith.addf %25, %27 : vector<1x512xf32>
    %29 = vector.extract_strided_slice %28 {offsets = [0, 0], sizes = [1, 128], strides = [1, 1]} : vector<1x512xf32> to vector<1x128xf32>
    %30 = arith.negf %29 : vector<1x128xf32>
    %31 = math.exp %30 : vector<1x128xf32>
    %cst_22 = arith.constant 1.000000e+00 : f32
    %32 = vector.broadcast %cst_22 : f32 to vector<1x128xf32>
    %33 = arith.addf %32, %31 : vector<1x128xf32>
    %34 = arith.divf %32, %33 : vector<1x128xf32>
    %35 = vector.extract_strided_slice %28 {offsets = [0, 128], sizes = [1, 128], strides = [1, 1]} : vector<1x512xf32> to vector<1x128xf32>
    %36 = arith.negf %35 : vector<1x128xf32>
    %37 = math.exp %36 : vector<1x128xf32>
    %cst_23 = arith.constant 1.000000e+00 : f32
    %38 = vector.broadcast %cst_23 : f32 to vector<1x128xf32>
    %39 = arith.addf %38, %37 : vector<1x128xf32>
    %40 = arith.divf %38, %39 : vector<1x128xf32>
    %41 = vector.extract_strided_slice %28 {offsets = [0, 256], sizes = [1, 128], strides = [1, 1]} : vector<1x512xf32> to vector<1x128xf32>
    %42 = math.tanh %41 : vector<1x128xf32>
    %43 = vector.extract_strided_slice %28 {offsets = [0, 384], sizes = [1, 128], strides = [1, 1]} : vector<1x512xf32> to vector<1x128xf32>
    %44 = arith.negf %43 : vector<1x128xf32>
    %45 = math.exp %44 : vector<1x128xf32>
    %cst_24 = arith.constant 1.000000e+00 : f32
    %46 = vector.broadcast %cst_24 : f32 to vector<1x128xf32>
    %47 = arith.addf %46, %45 : vector<1x128xf32>
    %48 = arith.divf %46, %47 : vector<1x128xf32>
    %49 = arith.mulf %40, %19 : vector<1x128xf32>
    %50 = arith.mulf %34, %42 : vector<1x128xf32>
    %51 = arith.addf %49, %50 : vector<1x128xf32>
    %52 = math.tanh %51 : vector<1x128xf32>
    %53 = arith.mulf %48, %52 : vector<1x128xf32>
    %54 = arith.index_cast %c0_i32 : i32 to index
    %c0_25 = arith.constant 0 : index
    %55 = vector.load %arg16[%54, %c0_25] : memref<8x128xf32, #tpu.memory_space<vmem>>, vector<1x128xf32>
    %56 = arith.mulf %53, %4 : vector<1x128xf32>
    %57 = arith.addf %55, %56 : vector<1x128xf32>
    %58 = arith.index_cast %c0_i32 : i32 to index
    %c0_26 = arith.constant 0 : index
    %59 = vector.load %arg16[%58, %c0_26] : memref<8x128xf32, #tpu.memory_space<vmem>>, vector<1x128xf32>
    tpu.vector_store %arg16[%58, %c0_26], %57 {strides = array<i32>} : memref<8x128xf32, #tpu.memory_space<vmem>>, vector<1x128xf32>,
    %60 = arith.index_cast %20 : i32 to index
    %c0_27 = arith.constant 0 : index
    %61 = vector.load %arg16[%60, %c0_27] : memref<8x128xf32, #tpu.memory_space<vmem>>, vector<1x128xf32>
    %62 = arith.mulf %53, %6 : vector<1x128xf32>
    %63 = arith.addf %61, %62 : vector<1x128xf32>
    %64 = arith.index_cast %20 : i32 to index
    %c0_28 = arith.constant 0 : index
    %65 = vector.load %arg16[%64, %c0_28] : memref<8x128xf32, #tpu.memory_space<vmem>>, vector<1x128xf32>
    tpu.vector_store %arg16[%64, %c0_28], %63 {strides = array<i32>} : memref<8x128xf32, #tpu.memory_space<vmem>>, vector<1x128xf32>,
    %c1_i32 = arith.constant 1 : i32
    %c7_i32_29 = arith.constant 7 : i32
    %66 = arith.subi %c7_i32_29, %c1_i32 : i32
    %67 = arith.index_cast %c1_i32 : i32 to index
    %c0_30 = arith.constant 0 : index
    %68 = vector.load %arg12[%67, %c0_30] : memref<8x512xf32, #tpu.memory_space<vmem>>, vector<1x512xf32>
    %69 = arith.index_cast %66 : i32 to index
    %c0_31 = arith.constant 0 : index
    %70 = vector.load %arg13[%69, %c0_31] : memref<8x512xf32, #tpu.memory_space<vmem>>, vector<1x512xf32>
    %71 = arith.addf %68, %70 : vector<1x512xf32>
    %c0_32 = arith.constant 0 : index
    %c0_33 = arith.constant 0 : index
    %72 = vector.load %arg3[%c0_32, %c0_33] : memref<128x512xf32, #tpu.memory_space<vmem>>, vector<128x512xf32>
    %cst_34 = arith.constant dense<0.000000e+00> : vector<1x512xf32>
    %73 = tpu.matmul %53, %72, %cst_34 {dimension_numbers = #tpu.dot_dimension_numbers<[1], [0], [0], [1], [0, 0, 1, 1], [], []>} : vector<1x128xf32>, vector<128x512xf32>, vector<1x512xf32> -> vector<1x512xf32>
    %74 = arith.addf %71, %73 : vector<1x512xf32>
    %75 = vector.extract_strided_slice %74 {offsets = [0, 0], sizes = [1, 128], strides = [1, 1]} : vector<1x512xf32> to vector<1x128xf32>
    %76 = arith.negf %75 : vector<1x128xf32>
    %77 = math.exp %76 : vector<1x128xf32>
    %cst_35 = arith.constant 1.000000e+00 : f32
    %78 = vector.broadcast %cst_35 : f32 to vector<1x128xf32>
    %79 = arith.addf %78, %77 : vector<1x128xf32>
    %80 = arith.divf %78, %79 : vector<1x128xf32>
    %81 = vector.extract_strided_slice %74 {offsets = [0, 128], sizes = [1, 128], strides = [1, 1]} : vector<1x512xf32> to vector<1x128xf32>
    %82 = arith.negf %81 : vector<1x128xf32>
    %83 = math.exp %82 : vector<1x128xf32>
    %cst_36 = arith.constant 1.000000e+00 : f32
    %84 = vector.broadcast %cst_36 : f32 to vector<1x128xf32>
    %85 = arith.addf %84, %83 : vector<1x128xf32>
    %86 = arith.divf %84, %85 : vector<1x128xf32>
    %87 = vector.extract_strided_slice %74 {offsets = [0, 256], sizes = [1, 128], strides = [1, 1]} : vector<1x512xf32> to vector<1x128xf32>
    %88 = math.tanh %87 : vector<1x128xf32>
    %89 = vector.extract_strided_slice %74 {offsets = [0, 384], sizes = [1, 128], strides = [1, 1]} : vector<1x512xf32> to vector<1x128xf32>
    %90 = arith.negf %89 : vector<1x128xf32>
    %91 = math.exp %90 : vector<1x128xf32>
    %cst_37 = arith.constant 1.000000e+00 : f32
    %92 = vector.broadcast %cst_37 : f32 to vector<1x128xf32>
    %93 = arith.addf %92, %91 : vector<1x128xf32>
    %94 = arith.divf %92, %93 : vector<1x128xf32>
    %95 = arith.mulf %86, %51 : vector<1x128xf32>
    %96 = arith.mulf %80, %88 : vector<1x128xf32>
    %97 = arith.addf %95, %96 : vector<1x128xf32>
    %98 = math.tanh %97 : vector<1x128xf32>
    %99 = arith.mulf %94, %98 : vector<1x128xf32>
    %100 = arith.index_cast %c1_i32 : i32 to index
    %c0_38 = arith.constant 0 : index
    %101 = vector.load %arg16[%100, %c0_38] : memref<8x128xf32, #tpu.memory_space<vmem>>, vector<1x128xf32>
    %102 = arith.mulf %99, %4 : vector<1x128xf32>
    %103 = arith.addf %101, %102 : vector<1x128xf32>
    %104 = arith.index_cast %c1_i32 : i32 to index
    %c0_39 = arith.constant 0 : index
    %105 = vector.load %arg16[%104, %c0_39] : memref<8x128xf32, #tpu.memory_space<vmem>>, vector<1x128xf32>
    tpu.vector_store %arg16[%104, %c0_39], %103 {strides = array<i32>} : memref<8x128xf32, #tpu.memory_space<vmem>>, vector<1x128xf32>,
    %106 = arith.index_cast %66 : i32 to index
    %c0_40 = arith.constant 0 : index
    %107 = vector.load %arg16[%106, %c0_40] : memref<8x128xf32, #tpu.memory_space<vmem>>, vector<1x128xf32>
    %108 = arith.mulf %99, %6 : vector<1x128xf32>
    %109 = arith.addf %107, %108 : vector<1x128xf32>
    %110 = arith.index_cast %66 : i32 to index
    %c0_41 = arith.constant 0 : index
    %111 = vector.load %arg16[%110, %c0_41] : memref<8x128xf32, #tpu.memory_space<vmem>>, vector<1x128xf32>
    tpu.vector_store %arg16[%110, %c0_41], %109 {strides = array<i32>} : memref<8x128xf32, #tpu.memory_space<vmem>>, vector<1x128xf32>,
    %c2_i32 = arith.constant 2 : i32
    %c7_i32_42 = arith.constant 7 : i32
    %112 = arith.subi %c7_i32_42, %c2_i32 : i32
    %113 = arith.index_cast %c2_i32 : i32 to index
    %c0_43 = arith.constant 0 : index
    %114 = vector.load %arg12[%113, %c0_43] : memref<8x512xf32, #tpu.memory_space<vmem>>, vector<1x512xf32>
    %115 = arith.index_cast %112 : i32 to index
    %c0_44 = arith.constant 0 : index
    %116 = vector.load %arg13[%115, %c0_44] : memref<8x512xf32, #tpu.memory_space<vmem>>, vector<1x512xf32>
    %117 = arith.addf %114, %116 : vector<1x512xf32>
    %c0_45 = arith.constant 0 : index
    %c0_46 = arith.constant 0 : index
    %118 = vector.load %arg3[%c0_45, %c0_46] : memref<128x512xf32, #tpu.memory_space<vmem>>, vector<128x512xf32>
    %cst_47 = arith.constant dense<0.000000e+00> : vector<1x512xf32>
    %119 = tpu.matmul %99, %118, %cst_47 {dimension_numbers = #tpu.dot_dimension_numbers<[1], [0], [0], [1], [0, 0, 1, 1], [], []>} : vector<1x128xf32>, vector<128x512xf32>, vector<1x512xf32> -> vector<1x512xf32>
    %120 = arith.addf %117, %119 : vector<1x512xf32>
    %121 = vector.extract_strided_slice %120 {offsets = [0, 0], sizes = [1, 128], strides = [1, 1]} : vector<1x512xf32> to vector<1x128xf32>
    %122 = arith.negf %121 : vector<1x128xf32>
    %123 = math.exp %122 : vector<1x128xf32>
    %cst_48 = arith.constant 1.000000e+00 : f32
    %124 = vector.broadcast %cst_48 : f32 to vector<1x128xf32>
    %125 = arith.addf %124, %123 : vector<1x128xf32>
    %126 = arith.divf %124, %125 : vector<1x128xf32>
    %127 = vector.extract_strided_slice %120 {offsets = [0, 128], sizes = [1, 128], strides = [1, 1]} : vector<1x512xf32> to vector<1x128xf32>
    %128 = arith.negf %127 : vector<1x128xf32>
    %129 = math.exp %128 : vector<1x128xf32>
    %cst_49 = arith.constant 1.000000e+00 : f32
    %130 = vector.broadcast %cst_49 : f32 to vector<1x128xf32>
    %131 = arith.addf %130, %129 : vector<1x128xf32>
    %132 = arith.divf %130, %131 : vector<1x128xf32>
    %133 = vector.extract_strided_slice %120 {offsets = [0, 256], sizes = [1, 128], strides = [1, 1]} : vector<1x512xf32> to vector<1x128xf32>
    %134 = math.tanh %133 : vector<1x128xf32>
    %135 = vector.extract_strided_slice %120 {offsets = [0, 384], sizes = [1, 128], strides = [1, 1]} : vector<1x512xf32> to vector<1x128xf32>
    %136 = arith.negf %135 : vector<1x128xf32>
    %137 = math.exp %136 : vector<1x128xf32>
    %cst_50 = arith.constant 1.000000e+00 : f32
    %138 = vector.broadcast %cst_50 : f32 to vector<1x128xf32>
    %139 = arith.addf %138, %137 : vector<1x128xf32>
    %140 = arith.divf %138, %139 : vector<1x128xf32>
    %141 = arith.mulf %132, %97 : vector<1x128xf32>
    %142 = arith.mulf %126, %134 : vector<1x128xf32>
    %143 = arith.addf %141, %142 : vector<1x128xf32>
    %144 = math.tanh %143 : vector<1x128xf32>
    %145 = arith.mulf %140, %144 : vector<1x128xf32>
    %146 = arith.index_cast %c2_i32 : i32 to index
    %c0_51 = arith.constant 0 : index
    %147 = vector.load %arg16[%146, %c0_51] : memref<8x128xf32, #tpu.memory_space<vmem>>, vector<1x128xf32>
    %148 = arith.mulf %145, %4 : vector<1x128xf32>
    %149 = arith.addf %147, %148 : vector<1x128xf32>
    %150 = arith.index_cast %c2_i32 : i32 to index
    %c0_52 = arith.constant 0 : index
    %151 = vector.load %arg16[%150, %c0_52] : memref<8x128xf32, #tpu.memory_space<vmem>>, vector<1x128xf32>
    tpu.vector_store %arg16[%150, %c0_52], %149 {strides = array<i32>} : memref<8x128xf32, #tpu.memory_space<vmem>>, vector<1x128xf32>,
    %152 = arith.index_cast %112 : i32 to index
    %c0_53 = arith.constant 0 : index
    %153 = vector.load %arg16[%152, %c0_53] : memref<8x128xf32, #tpu.memory_space<vmem>>, vector<1x128xf32>
    %154 = arith.mulf %145, %6 : vector<1x128xf32>
    %155 = arith.addf %153, %154 : vector<1x128xf32>
    %156 = arith.index_cast %112 : i32 to index
    %c0_54 = arith.constant 0 : index
    %157 = vector.load %arg16[%156, %c0_54] : memref<8x128xf32, #tpu.memory_space<vmem>>, vector<1x128xf32>
    tpu.vector_store %arg16[%156, %c0_54], %155 {strides = array<i32>} : memref<8x128xf32, #tpu.memory_space<vmem>>, vector<1x128xf32>,
    %c3_i32 = arith.constant 3 : i32
    %c7_i32_55 = arith.constant 7 : i32
    %158 = arith.subi %c7_i32_55, %c3_i32 : i32
    %159 = arith.index_cast %c3_i32 : i32 to index
    %c0_56 = arith.constant 0 : index
    %160 = vector.load %arg12[%159, %c0_56] : memref<8x512xf32, #tpu.memory_space<vmem>>, vector<1x512xf32>
    %161 = arith.index_cast %158 : i32 to index
    %c0_57 = arith.constant 0 : index
    %162 = vector.load %arg13[%161, %c0_57] : memref<8x512xf32, #tpu.memory_space<vmem>>, vector<1x512xf32>
    %163 = arith.addf %160, %162 : vector<1x512xf32>
    %c0_58 = arith.constant 0 : index
    %c0_59 = arith.constant 0 : index
    %164 = vector.load %arg3[%c0_58, %c0_59] : memref<128x512xf32, #tpu.memory_space<vmem>>, vector<128x512xf32>
    %cst_60 = arith.constant dense<0.000000e+00> : vector<1x512xf32>
    %165 = tpu.matmul %145, %164, %cst_60 {dimension_numbers = #tpu.dot_dimension_numbers<[1], [0], [0], [1], [0, 0, 1, 1], [], []>} : vector<1x128xf32>, vector<128x512xf32>, vector<1x512xf32> -> vector<1x512xf32>
    %166 = arith.addf %163, %165 : vector<1x512xf32>
    %167 = vector.extract_strided_slice %166 {offsets = [0, 0], sizes = [1, 128], strides = [1, 1]} : vector<1x512xf32> to vector<1x128xf32>
    %168 = arith.negf %167 : vector<1x128xf32>
    %169 = math.exp %168 : vector<1x128xf32>
    %cst_61 = arith.constant 1.000000e+00 : f32
    %170 = vector.broadcast %cst_61 : f32 to vector<1x128xf32>
    %171 = arith.addf %170, %169 : vector<1x128xf32>
    %172 = arith.divf %170, %171 : vector<1x128xf32>
    %173 = vector.extract_strided_slice %166 {offsets = [0, 128], sizes = [1, 128], strides = [1, 1]} : vector<1x512xf32> to vector<1x128xf32>
    %174 = arith.negf %173 : vector<1x128xf32>
    %175 = math.exp %174 : vector<1x128xf32>
    %cst_62 = arith.constant 1.000000e+00 : f32
    %176 = vector.broadcast %cst_62 : f32 to vector<1x128xf32>
    %177 = arith.addf %176, %175 : vector<1x128xf32>
    %178 = arith.divf %176, %177 : vector<1x128xf32>
    %179 = vector.extract_strided_slice %166 {offsets = [0, 256], sizes = [1, 128], strides = [1, 1]} : vector<1x512xf32> to vector<1x128xf32>
    %180 = math.tanh %179 : vector<1x128xf32>
    %181 = vector.extract_strided_slice %166 {offsets = [0, 384], sizes = [1, 128], strides = [1, 1]} : vector<1x512xf32> to vector<1x128xf32>
    %182 = arith.negf %181 : vector<1x128xf32>
    %183 = math.exp %182 : vector<1x128xf32>
    %cst_63 = arith.constant 1.000000e+00 : f32
    %184 = vector.broadcast %cst_63 : f32 to vector<1x128xf32>
    %185 = arith.addf %184, %183 : vector<1x128xf32>
    %186 = arith.divf %184, %185 : vector<1x128xf32>
    %187 = arith.mulf %178, %143 : vector<1x128xf32>
    %188 = arith.mulf %172, %180 : vector<1x128xf32>
    %189 = arith.addf %187, %188 : vector<1x128xf32>
    %190 = math.tanh %189 : vector<1x128xf32>
    %191 = arith.mulf %186, %190 : vector<1x128xf32>
    %192 = arith.index_cast %c3_i32 : i32 to index
    %c0_64 = arith.constant 0 : index
    %193 = vector.load %arg16[%192, %c0_64] : memref<8x128xf32, #tpu.memory_space<vmem>>, vector<1x128xf32>
    %194 = arith.mulf %191, %4 : vector<1x128xf32>
    %195 = arith.addf %193, %194 : vector<1x128xf32>
    %196 = arith.index_cast %c3_i32 : i32 to index
    %c0_65 = arith.constant 0 : index
    %197 = vector.load %arg16[%196, %c0_65] : memref<8x128xf32, #tpu.memory_space<vmem>>, vector<1x128xf32>
    tpu.vector_store %arg16[%196, %c0_65], %195 {strides = array<i32>} : memref<8x128xf32, #tpu.memory_space<vmem>>, vector<1x128xf32>,
    %198 = arith.index_cast %158 : i32 to index
    %c0_66 = arith.constant 0 : index
    %199 = vector.load %arg16[%198, %c0_66] : memref<8x128xf32, #tpu.memory_space<vmem>>, vector<1x128xf32>
    %200 = arith.mulf %191, %6 : vector<1x128xf32>
    %201 = arith.addf %199, %200 : vector<1x128xf32>
    %202 = arith.index_cast %158 : i32 to index
    %c0_67 = arith.constant 0 : index
    %203 = vector.load %arg16[%202, %c0_67] : memref<8x128xf32, #tpu.memory_space<vmem>>, vector<1x128xf32>
    tpu.vector_store %arg16[%202, %c0_67], %201 {strides = array<i32>} : memref<8x128xf32, #tpu.memory_space<vmem>>, vector<1x128xf32>,
    %c4_i32 = arith.constant 4 : i32
    %c7_i32_68 = arith.constant 7 : i32
    %204 = arith.subi %c7_i32_68, %c4_i32 : i32
    %205 = arith.index_cast %c4_i32 : i32 to index
    %c0_69 = arith.constant 0 : index
    %206 = vector.load %arg12[%205, %c0_69] : memref<8x512xf32, #tpu.memory_space<vmem>>, vector<1x512xf32>
    %207 = arith.index_cast %204 : i32 to index
    %c0_70 = arith.constant 0 : index
    %208 = vector.load %arg13[%207, %c0_70] : memref<8x512xf32, #tpu.memory_space<vmem>>, vector<1x512xf32>
    %209 = arith.addf %206, %208 : vector<1x512xf32>
    %c0_71 = arith.constant 0 : index
    %c0_72 = arith.constant 0 : index
    %210 = vector.load %arg3[%c0_71, %c0_72] : memref<128x512xf32, #tpu.memory_space<vmem>>, vector<128x512xf32>
    %cst_73 = arith.constant dense<0.000000e+00> : vector<1x512xf32>
    %211 = tpu.matmul %191, %210, %cst_73 {dimension_numbers = #tpu.dot_dimension_numbers<[1], [0], [0], [1], [0, 0, 1, 1], [], []>} : vector<1x128xf32>, vector<128x512xf32>, vector<1x512xf32> -> vector<1x512xf32>
    %212 = arith.addf %209, %211 : vector<1x512xf32>
    %213 = vector.extract_strided_slice %212 {offsets = [0, 0], sizes = [1, 128], strides = [1, 1]} : vector<1x512xf32> to vector<1x128xf32>
    %214 = arith.negf %213 : vector<1x128xf32>
    %215 = math.exp %214 : vector<1x128xf32>
    %cst_74 = arith.constant 1.000000e+00 : f32
    %216 = vector.broadcast %cst_74 : f32 to vector<1x128xf32>
    %217 = arith.addf %216, %215 : vector<1x128xf32>
    %218 = arith.divf %216, %217 : vector<1x128xf32>
    %219 = vector.extract_strided_slice %212 {offsets = [0, 128], sizes = [1, 128], strides = [1, 1]} : vector<1x512xf32> to vector<1x128xf32>
    %220 = arith.negf %219 : vector<1x128xf32>
    %221 = math.exp %220 : vector<1x128xf32>
    %cst_75 = arith.constant 1.000000e+00 : f32
    %222 = vector.broadcast %cst_75 : f32 to vector<1x128xf32>
    %223 = arith.addf %222, %221 : vector<1x128xf32>
    %224 = arith.divf %222, %223 : vector<1x128xf32>
    %225 = vector.extract_strided_slice %212 {offsets = [0, 256], sizes = [1, 128], strides = [1, 1]} : vector<1x512xf32> to vector<1x128xf32>
    %226 = math.tanh %225 : vector<1x128xf32>
    %227 = vector.extract_strided_slice %212 {offsets = [0, 384], sizes = [1, 128], strides = [1, 1]} : vector<1x512xf32> to vector<1x128xf32>
    %228 = arith.negf %227 : vector<1x128xf32>
    %229 = math.exp %228 : vector<1x128xf32>
    %cst_76 = arith.constant 1.000000e+00 : f32
    %230 = vector.broadcast %cst_76 : f32 to vector<1x128xf32>
    %231 = arith.addf %230, %229 : vector<1x128xf32>
    %232 = arith.divf %230, %231 : vector<1x128xf32>
    %233 = arith.mulf %224, %189 : vector<1x128xf32>
    %234 = arith.mulf %218, %226 : vector<1x128xf32>
    %235 = arith.addf %233, %234 : vector<1x128xf32>
    %236 = math.tanh %235 : vector<1x128xf32>
    %237 = arith.mulf %232, %236 : vector<1x128xf32>
    %238 = arith.index_cast %c4_i32 : i32 to index
    %c0_77 = arith.constant 0 : index
    %239 = vector.load %arg16[%238, %c0_77] : memref<8x128xf32, #tpu.memory_space<vmem>>, vector<1x128xf32>
    %240 = arith.mulf %237, %4 : vector<1x128xf32>
    %241 = arith.addf %239, %240 : vector<1x128xf32>
    %242 = arith.index_cast %c4_i32 : i32 to index
    %c0_78 = arith.constant 0 : index
    %243 = vector.load %arg16[%242, %c0_78] : memref<8x128xf32, #tpu.memory_space<vmem>>, vector<1x128xf32>
    tpu.vector_store %arg16[%242, %c0_78], %241 {strides = array<i32>} : memref<8x128xf32, #tpu.memory_space<vmem>>, vector<1x128xf32>,
    %244 = arith.index_cast %204 : i32 to index
    %c0_79 = arith.constant 0 : index
    %245 = vector.load %arg16[%244, %c0_79] : memref<8x128xf32, #tpu.memory_space<vmem>>, vector<1x128xf32>
    %246 = arith.mulf %237, %6 : vector<1x128xf32>
    %247 = arith.addf %245, %246 : vector<1x128xf32>
    %248 = arith.index_cast %204 : i32 to index
    %c0_80 = arith.constant 0 : index
    %249 = vector.load %arg16[%248, %c0_80] : memref<8x128xf32, #tpu.memory_space<vmem>>, vector<1x128xf32>
    tpu.vector_store %arg16[%248, %c0_80], %247 {strides = array<i32>} : memref<8x128xf32, #tpu.memory_space<vmem>>, vector<1x128xf32>,
    %c5_i32 = arith.constant 5 : i32
    %c7_i32_81 = arith.constant 7 : i32
    %250 = arith.subi %c7_i32_81, %c5_i32 : i32
    %251 = arith.index_cast %c5_i32 : i32 to index
    %c0_82 = arith.constant 0 : index
    %252 = vector.load %arg12[%251, %c0_82] : memref<8x512xf32, #tpu.memory_space<vmem>>, vector<1x512xf32>
    %253 = arith.index_cast %250 : i32 to index
    %c0_83 = arith.constant 0 : index
    %254 = vector.load %arg13[%253, %c0_83] : memref<8x512xf32, #tpu.memory_space<vmem>>, vector<1x512xf32>
    %255 = arith.addf %252, %254 : vector<1x512xf32>
    %c0_84 = arith.constant 0 : index
    %c0_85 = arith.constant 0 : index
    %256 = vector.load %arg3[%c0_84, %c0_85] : memref<128x512xf32, #tpu.memory_space<vmem>>, vector<128x512xf32>
    %cst_86 = arith.constant dense<0.000000e+00> : vector<1x512xf32>
    %257 = tpu.matmul %237, %256, %cst_86 {dimension_numbers = #tpu.dot_dimension_numbers<[1], [0], [0], [1], [0, 0, 1, 1], [], []>} : vector<1x128xf32>, vector<128x512xf32>, vector<1x512xf32> -> vector<1x512xf32>
    %258 = arith.addf %255, %257 : vector<1x512xf32>
    %259 = vector.extract_strided_slice %258 {offsets = [0, 0], sizes = [1, 128], strides = [1, 1]} : vector<1x512xf32> to vector<1x128xf32>
    %260 = arith.negf %259 : vector<1x128xf32>
    %261 = math.exp %260 : vector<1x128xf32>
    %cst_87 = arith.constant 1.000000e+00 : f32
    %262 = vector.broadcast %cst_87 : f32 to vector<1x128xf32>
    %263 = arith.addf %262, %261 : vector<1x128xf32>
    %264 = arith.divf %262, %263 : vector<1x128xf32>
    %265 = vector.extract_strided_slice %258 {offsets = [0, 128], sizes = [1, 128], strides = [1, 1]} : vector<1x512xf32> to vector<1x128xf32>
    %266 = arith.negf %265 : vector<1x128xf32>
    %267 = math.exp %266 : vector<1x128xf32>
    %cst_88 = arith.constant 1.000000e+00 : f32
    %268 = vector.broadcast %cst_88 : f32 to vector<1x128xf32>
    %269 = arith.addf %268, %267 : vector<1x128xf32>
    %270 = arith.divf %268, %269 : vector<1x128xf32>
    %271 = vector.extract_strided_slice %258 {offsets = [0, 256], sizes = [1, 128], strides = [1, 1]} : vector<1x512xf32> to vector<1x128xf32>
    %272 = math.tanh %271 : vector<1x128xf32>
    %273 = vector.extract_strided_slice %258 {offsets = [0, 384], sizes = [1, 128], strides = [1, 1]} : vector<1x512xf32> to vector<1x128xf32>
    %274 = arith.negf %273 : vector<1x128xf32>
    %275 = math.exp %274 : vector<1x128xf32>
    %cst_89 = arith.constant 1.000000e+00 : f32
    %276 = vector.broadcast %cst_89 : f32 to vector<1x128xf32>
    %277 = arith.addf %276, %275 : vector<1x128xf32>
    %278 = arith.divf %276, %277 : vector<1x128xf32>
    %279 = arith.mulf %270, %235 : vector<1x128xf32>
    %280 = arith.mulf %264, %272 : vector<1x128xf32>
    %281 = arith.addf %279, %280 : vector<1x128xf32>
    %282 = math.tanh %281 : vector<1x128xf32>
    %283 = arith.mulf %278, %282 : vector<1x128xf32>
    %284 = arith.index_cast %c5_i32 : i32 to index
    %c0_90 = arith.constant 0 : index
    %285 = vector.load %arg16[%284, %c0_90] : memref<8x128xf32, #tpu.memory_space<vmem>>, vector<1x128xf32>
    %286 = arith.mulf %283, %4 : vector<1x128xf32>
    %287 = arith.addf %285, %286 : vector<1x128xf32>
    %288 = arith.index_cast %c5_i32 : i32 to index
    %c0_91 = arith.constant 0 : index
    %289 = vector.load %arg16[%288, %c0_91] : memref<8x128xf32, #tpu.memory_space<vmem>>, vector<1x128xf32>
    tpu.vector_store %arg16[%288, %c0_91], %287 {strides = array<i32>} : memref<8x128xf32, #tpu.memory_space<vmem>>, vector<1x128xf32>,
    %290 = arith.index_cast %250 : i32 to index
    %c0_92 = arith.constant 0 : index
    %291 = vector.load %arg16[%290, %c0_92] : memref<8x128xf32, #tpu.memory_space<vmem>>, vector<1x128xf32>
    %292 = arith.mulf %283, %6 : vector<1x128xf32>
    %293 = arith.addf %291, %292 : vector<1x128xf32>
    %294 = arith.index_cast %250 : i32 to index
    %c0_93 = arith.constant 0 : index
    %295 = vector.load %arg16[%294, %c0_93] : memref<8x128xf32, #tpu.memory_space<vmem>>, vector<1x128xf32>
    tpu.vector_store %arg16[%294, %c0_93], %293 {strides = array<i32>} : memref<8x128xf32, #tpu.memory_space<vmem>>, vector<1x128xf32>,
    %c6_i32 = arith.constant 6 : i32
    %c7_i32_94 = arith.constant 7 : i32
    %296 = arith.subi %c7_i32_94, %c6_i32 : i32
    %297 = arith.index_cast %c6_i32 : i32 to index
    %c0_95 = arith.constant 0 : index
    %298 = vector.load %arg12[%297, %c0_95] : memref<8x512xf32, #tpu.memory_space<vmem>>, vector<1x512xf32>
    %299 = arith.index_cast %296 : i32 to index
    %c0_96 = arith.constant 0 : index
    %300 = vector.load %arg13[%299, %c0_96] : memref<8x512xf32, #tpu.memory_space<vmem>>, vector<1x512xf32>
    %301 = arith.addf %298, %300 : vector<1x512xf32>
    %c0_97 = arith.constant 0 : index
    %c0_98 = arith.constant 0 : index
    %302 = vector.load %arg3[%c0_97, %c0_98] : memref<128x512xf32, #tpu.memory_space<vmem>>, vector<128x512xf32>
    %cst_99 = arith.constant dense<0.000000e+00> : vector<1x512xf32>
    %303 = tpu.matmul %283, %302, %cst_99 {dimension_numbers = #tpu.dot_dimension_numbers<[1], [0], [0], [1], [0, 0, 1, 1], [], []>} : vector<1x128xf32>, vector<128x512xf32>, vector<1x512xf32> -> vector<1x512xf32>
    %304 = arith.addf %301, %303 : vector<1x512xf32>
    %305 = vector.extract_strided_slice %304 {offsets = [0, 0], sizes = [1, 128], strides = [1, 1]} : vector<1x512xf32> to vector<1x128xf32>
    %306 = arith.negf %305 : vector<1x128xf32>
    %307 = math.exp %306 : vector<1x128xf32>
    %cst_100 = arith.constant 1.000000e+00 : f32
    %308 = vector.broadcast %cst_100 : f32 to vector<1x128xf32>
    %309 = arith.addf %308, %307 : vector<1x128xf32>
    %310 = arith.divf %308, %309 : vector<1x128xf32>
    %311 = vector.extract_strided_slice %304 {offsets = [0, 128], sizes = [1, 128], strides = [1, 1]} : vector<1x512xf32> to vector<1x128xf32>
    %312 = arith.negf %311 : vector<1x128xf32>
    %313 = math.exp %312 : vector<1x128xf32>
    %cst_101 = arith.constant 1.000000e+00 : f32
    %314 = vector.broadcast %cst_101 : f32 to vector<1x128xf32>
    %315 = arith.addf %314, %313 : vector<1x128xf32>
    %316 = arith.divf %314, %315 : vector<1x128xf32>
    %317 = vector.extract_strided_slice %304 {offsets = [0, 256], sizes = [1, 128], strides = [1, 1]} : vector<1x512xf32> to vector<1x128xf32>
    %318 = math.tanh %317 : vector<1x128xf32>
    %319 = vector.extract_strided_slice %304 {offsets = [0, 384], sizes = [1, 128], strides = [1, 1]} : vector<1x512xf32> to vector<1x128xf32>
    %320 = arith.negf %319 : vector<1x128xf32>
    %321 = math.exp %320 : vector<1x128xf32>
    %cst_102 = arith.constant 1.000000e+00 : f32
    %322 = vector.broadcast %cst_102 : f32 to vector<1x128xf32>
    %323 = arith.addf %322, %321 : vector<1x128xf32>
    %324 = arith.divf %322, %323 : vector<1x128xf32>
    %325 = arith.mulf %316, %281 : vector<1x128xf32>
    %326 = arith.mulf %310, %318 : vector<1x128xf32>
    %327 = arith.addf %325, %326 : vector<1x128xf32>
    %328 = math.tanh %327 : vector<1x128xf32>
    %329 = arith.mulf %324, %328 : vector<1x128xf32>
    %330 = arith.index_cast %c6_i32 : i32 to index
    %c0_103 = arith.constant 0 : index
    %331 = vector.load %arg16[%330, %c0_103] : memref<8x128xf32, #tpu.memory_space<vmem>>, vector<1x128xf32>
    %332 = arith.mulf %329, %4 : vector<1x128xf32>
    %333 = arith.addf %331, %332 : vector<1x128xf32>
    %334 = arith.index_cast %c6_i32 : i32 to index
    %c0_104 = arith.constant 0 : index
    %335 = vector.load %arg16[%334, %c0_104] : memref<8x128xf32, #tpu.memory_space<vmem>>, vector<1x128xf32>
    tpu.vector_store %arg16[%334, %c0_104], %333 {strides = array<i32>} : memref<8x128xf32, #tpu.memory_space<vmem>>, vector<1x128xf32>,
    %336 = arith.index_cast %296 : i32 to index
    %c0_105 = arith.constant 0 : index
    %337 = vector.load %arg16[%336, %c0_105] : memref<8x128xf32, #tpu.memory_space<vmem>>, vector<1x128xf32>
    %338 = arith.mulf %329, %6 : vector<1x128xf32>
    %339 = arith.addf %337, %338 : vector<1x128xf32>
    %340 = arith.index_cast %296 : i32 to index
    %c0_106 = arith.constant 0 : index
    %341 = vector.load %arg16[%340, %c0_106] : memref<8x128xf32, #tpu.memory_space<vmem>>, vector<1x128xf32>
    tpu.vector_store %arg16[%340, %c0_106], %339 {strides = array<i32>} : memref<8x128xf32, #tpu.memory_space<vmem>>, vector<1x128xf32>,
    %c7_i32_107 = arith.constant 7 : i32
    %c7_i32_108 = arith.constant 7 : i32
    %342 = arith.subi %c7_i32_108, %c7_i32_107 : i32
    %343 = arith.index_cast %c7_i32_107 : i32 to index
    %c0_109 = arith.constant 0 : index
    %344 = vector.load %arg12[%343, %c0_109] : memref<8x512xf32, #tpu.memory_space<vmem>>, vector<1x512xf32>
    %345 = arith.index_cast %342 : i32 to index
    %c0_110 = arith.constant 0 : index
    %346 = vector.load %arg13[%345, %c0_110] : memref<8x512xf32, #tpu.memory_space<vmem>>, vector<1x512xf32>
    %347 = arith.addf %344, %346 : vector<1x512xf32>
    %c0_111 = arith.constant 0 : index
    %c0_112 = arith.constant 0 : index
    %348 = vector.load %arg3[%c0_111, %c0_112] : memref<128x512xf32, #tpu.memory_space<vmem>>, vector<128x512xf32>
    %cst_113 = arith.constant dense<0.000000e+00> : vector<1x512xf32>
    %349 = tpu.matmul %329, %348, %cst_113 {dimension_numbers = #tpu.dot_dimension_numbers<[1], [0], [0], [1], [0, 0, 1, 1], [], []>} : vector<1x128xf32>, vector<128x512xf32>, vector<1x512xf32> -> vector<1x512xf32>
    %350 = arith.addf %347, %349 : vector<1x512xf32>
    %351 = vector.extract_strided_slice %350 {offsets = [0, 0], sizes = [1, 128], strides = [1, 1]} : vector<1x512xf32> to vector<1x128xf32>
    %352 = arith.negf %351 : vector<1x128xf32>
    %353 = math.exp %352 : vector<1x128xf32>
    %cst_114 = arith.constant 1.000000e+00 : f32
    %354 = vector.broadcast %cst_114 : f32 to vector<1x128xf32>
    %355 = arith.addf %354, %353 : vector<1x128xf32>
    %356 = arith.divf %354, %355 : vector<1x128xf32>
    %357 = vector.extract_strided_slice %350 {offsets = [0, 128], sizes = [1, 128], strides = [1, 1]} : vector<1x512xf32> to vector<1x128xf32>
    %358 = arith.negf %357 : vector<1x128xf32>
    %359 = math.exp %358 : vector<1x128xf32>
    %cst_115 = arith.constant 1.000000e+00 : f32
    %360 = vector.broadcast %cst_115 : f32 to vector<1x128xf32>
    %361 = arith.addf %360, %359 : vector<1x128xf32>
    %362 = arith.divf %360, %361 : vector<1x128xf32>
    %363 = vector.extract_strided_slice %350 {offsets = [0, 256], sizes = [1, 128], strides = [1, 1]} : vector<1x512xf32> to vector<1x128xf32>
    %364 = math.tanh %363 : vector<1x128xf32>
    %365 = vector.extract_strided_slice %350 {offsets = [0, 384], sizes = [1, 128], strides = [1, 1]} : vector<1x512xf32> to vector<1x128xf32>
    %366 = arith.negf %365 : vector<1x128xf32>
    %367 = math.exp %366 : vector<1x128xf32>
    %cst_116 = arith.constant 1.000000e+00 : f32
    %368 = vector.broadcast %cst_116 : f32 to vector<1x128xf32>
    %369 = arith.addf %368, %367 : vector<1x128xf32>
    %370 = arith.divf %368, %369 : vector<1x128xf32>
    %371 = arith.mulf %362, %327 : vector<1x128xf32>
    %372 = arith.mulf %356, %364 : vector<1x128xf32>
    %373 = arith.addf %371, %372 : vector<1x128xf32>
    %374 = math.tanh %373 : vector<1x128xf32>
    %375 = arith.mulf %370, %374 : vector<1x128xf32>
    %376 = arith.index_cast %c7_i32_107 : i32 to index
    %c0_117 = arith.constant 0 : index
    %377 = vector.load %arg16[%376, %c0_117] : memref<8x128xf32, #tpu.memory_space<vmem>>, vector<1x128xf32>
    %378 = arith.mulf %375, %4 : vector<1x128xf32>
    %379 = arith.addf %377, %378 : vector<1x128xf32>
    %380 = arith.index_cast %c7_i32_107 : i32 to index
    %c0_118 = arith.constant 0 : index
    %381 = vector.load %arg16[%380, %c0_118] : memref<8x128xf32, #tpu.memory_space<vmem>>, vector<1x128xf32>
    tpu.vector_store %arg16[%380, %c0_118], %379 {strides = array<i32>} : memref<8x128xf32, #tpu.memory_space<vmem>>, vector<1x128xf32>,
    %382 = arith.index_cast %342 : i32 to index
    %c0_119 = arith.constant 0 : index
    %383 = vector.load %arg16[%382, %c0_119] : memref<8x128xf32, #tpu.memory_space<vmem>>, vector<1x128xf32>
    %384 = arith.mulf %375, %6 : vector<1x128xf32>
    %385 = arith.addf %383, %384 : vector<1x128xf32>
    %386 = arith.index_cast %342 : i32 to index
    %c0_120 = arith.constant 0 : index
    %387 = vector.load %arg16[%386, %c0_120] : memref<8x128xf32, #tpu.memory_space<vmem>>, vector<1x128xf32>
    tpu.vector_store %arg16[%386, %c0_120], %385 {strides = array<i32>} : memref<8x128xf32, #tpu.memory_space<vmem>>, vector<1x128xf32>,
    %c8_i32 = arith.constant 8 : i32
    %c0_121 = arith.constant 0 : index
    %c0_122 = arith.constant 0 : index
    %388 = vector.load %arg16[%c0_121, %c0_122] : memref<8x128xf32, #tpu.memory_space<vmem>>, vector<8x128xf32>
    %c0_123 = arith.constant 0 : index
    %c0_124 = arith.constant 0 : index
    %389 = vector.load %arg5[%c0_123, %c0_124] : memref<128x512xf32, #tpu.memory_space<vmem>>, vector<128x512xf32>
    %cst_125 = arith.constant dense<0.000000e+00> : vector<8x512xf32>
    %390 = tpu.matmul %388, %389, %cst_125 {dimension_numbers = #tpu.dot_dimension_numbers<[1], [0], [0], [1], [0, 0, 1, 1], [], []>} : vector<8x128xf32>, vector<128x512xf32>, vector<8x512xf32> -> vector<8x512xf32>
    %c0_126 = arith.constant 0 : index
    %c0_127 = arith.constant 0 : index
    %391 = vector.load %arg8[%c0_126, %c0_127] : memref<1x512xf32, #tpu.memory_space<vmem>>, vector<1x512xf32>
    %392 = vector.broadcast %391 : vector<1x512xf32> to vector<8x512xf32>
    %393 = arith.addf %390, %392 : vector<8x512xf32>
    %c0_128 = arith.constant 0 : index
    %c0_129 = arith.constant 0 : index
    %394 = vector.load %arg14[%c0_128, %c0_129] : memref<8x512xf32, #tpu.memory_space<vmem>>, vector<8x512xf32>
    tpu.vector_store %arg14[%c0_128, %c0_129], %393 {strides = array<i32>} : memref<8x512xf32, #tpu.memory_space<vmem>>, vector<8x512xf32>,
    %c0_130 = arith.constant 0 : index
    %c0_131 = arith.constant 0 : index
    %395 = vector.load %arg6[%c0_130, %c0_131] : memref<128x512xf32, #tpu.memory_space<vmem>>, vector<128x512xf32>
    %cst_132 = arith.constant dense<0.000000e+00> : vector<8x512xf32>
    %396 = tpu.matmul %388, %395, %cst_132 {dimension_numbers = #tpu.dot_dimension_numbers<[1], [0], [0], [1], [0, 0, 1, 1], [], []>} : vector<8x128xf32>, vector<128x512xf32>, vector<8x512xf32> -> vector<8x512xf32>
    %c0_133 = arith.constant 0 : index
    %c0_134 = arith.constant 0 : index
    %397 = vector.load %arg15[%c0_133, %c0_134] : memref<8x512xf32, #tpu.memory_space<vmem>>, vector<8x512xf32>
    tpu.vector_store %arg15[%c0_133, %c0_134], %396 {strides = array<i32>} : memref<8x512xf32, #tpu.memory_space<vmem>>, vector<8x512xf32>,
    %cst_135 = arith.constant -1.000000e+30 : f32
    %398 = vector.broadcast %cst_135 : f32 to vector<1x128xf32>
    %c0_i32_136 = arith.constant 0 : i32
    %c7_i32_137 = arith.constant 7 : i32
    %399 = arith.subi %c7_i32_137, %c0_i32_136 : i32
    %400 = arith.index_cast %c0_i32_136 : i32 to index
    %c0_138 = arith.constant 0 : index
    %401 = vector.load %arg14[%400, %c0_138] : memref<8x512xf32, #tpu.memory_space<vmem>>, vector<1x512xf32>
    %402 = arith.index_cast %399 : i32 to index
    %c0_139 = arith.constant 0 : index
    %403 = vector.load %arg15[%402, %c0_139] : memref<8x512xf32, #tpu.memory_space<vmem>>, vector<1x512xf32>
    %404 = arith.addf %401, %403 : vector<1x512xf32>
    %c0_140 = arith.constant 0 : index
    %c0_141 = arith.constant 0 : index
    %405 = vector.load %arg7[%c0_140, %c0_141] : memref<128x512xf32, #tpu.memory_space<vmem>>, vector<128x512xf32>
    %cst_142 = arith.constant dense<0.000000e+00> : vector<1x512xf32>
    %406 = tpu.matmul %19, %405, %cst_142 {dimension_numbers = #tpu.dot_dimension_numbers<[1], [0], [0], [1], [0, 0, 1, 1], [], []>} : vector<1x128xf32>, vector<128x512xf32>, vector<1x512xf32> -> vector<1x512xf32>
    %407 = arith.addf %404, %406 : vector<1x512xf32>
    %408 = vector.extract_strided_slice %407 {offsets = [0, 0], sizes = [1, 128], strides = [1, 1]} : vector<1x512xf32> to vector<1x128xf32>
    %409 = arith.negf %408 : vector<1x128xf32>
    %410 = math.exp %409 : vector<1x128xf32>
    %cst_143 = arith.constant 1.000000e+00 : f32
    %411 = vector.broadcast %cst_143 : f32 to vector<1x128xf32>
    %412 = arith.addf %411, %410 : vector<1x128xf32>
    %413 = arith.divf %411, %412 : vector<1x128xf32>
    %414 = vector.extract_strided_slice %407 {offsets = [0, 128], sizes = [1, 128], strides = [1, 1]} : vector<1x512xf32> to vector<1x128xf32>
    %415 = arith.negf %414 : vector<1x128xf32>
    %416 = math.exp %415 : vector<1x128xf32>
    %cst_144 = arith.constant 1.000000e+00 : f32
    %417 = vector.broadcast %cst_144 : f32 to vector<1x128xf32>
    %418 = arith.addf %417, %416 : vector<1x128xf32>
    %419 = arith.divf %417, %418 : vector<1x128xf32>
    %420 = vector.extract_strided_slice %407 {offsets = [0, 256], sizes = [1, 128], strides = [1, 1]} : vector<1x512xf32> to vector<1x128xf32>
    %421 = math.tanh %420 : vector<1x128xf32>
    %422 = vector.extract_strided_slice %407 {offsets = [0, 384], sizes = [1, 128], strides = [1, 1]} : vector<1x512xf32> to vector<1x128xf32>
    %423 = arith.negf %422 : vector<1x128xf32>
    %424 = math.exp %423 : vector<1x128xf32>
    %cst_145 = arith.constant 1.000000e+00 : f32
    %425 = vector.broadcast %cst_145 : f32 to vector<1x128xf32>
    %426 = arith.addf %425, %424 : vector<1x128xf32>
    %427 = arith.divf %425, %426 : vector<1x128xf32>
    %428 = arith.mulf %419, %19 : vector<1x128xf32>
    %429 = arith.mulf %413, %421 : vector<1x128xf32>
    %430 = arith.addf %428, %429 : vector<1x128xf32>
    %431 = math.tanh %430 : vector<1x128xf32>
    %432 = arith.mulf %427, %431 : vector<1x128xf32>
    %433 = arith.maximumf %398, %432 : vector<1x128xf32>
    %c1_i32_146 = arith.constant 1 : i32
    %c7_i32_147 = arith.constant 7 : i32
    %434 = arith.subi %c7_i32_147, %c1_i32_146 : i32
    %435 = arith.index_cast %c1_i32_146 : i32 to index
    %c0_148 = arith.constant 0 : index
    %436 = vector.load %arg14[%435, %c0_148] : memref<8x512xf32, #tpu.memory_space<vmem>>, vector<1x512xf32>
    %437 = arith.index_cast %434 : i32 to index
    %c0_149 = arith.constant 0 : index
    %438 = vector.load %arg15[%437, %c0_149] : memref<8x512xf32, #tpu.memory_space<vmem>>, vector<1x512xf32>
    %439 = arith.addf %436, %438 : vector<1x512xf32>
    %c0_150 = arith.constant 0 : index
    %c0_151 = arith.constant 0 : index
    %440 = vector.load %arg7[%c0_150, %c0_151] : memref<128x512xf32, #tpu.memory_space<vmem>>, vector<128x512xf32>
    %cst_152 = arith.constant dense<0.000000e+00> : vector<1x512xf32>
    %441 = tpu.matmul %432, %440, %cst_152 {dimension_numbers = #tpu.dot_dimension_numbers<[1], [0], [0], [1], [0, 0, 1, 1], [], []>} : vector<1x128xf32>, vector<128x512xf32>, vector<1x512xf32> -> vector<1x512xf32>
    %442 = arith.addf %439, %441 : vector<1x512xf32>
    %443 = vector.extract_strided_slice %442 {offsets = [0, 0], sizes = [1, 128], strides = [1, 1]} : vector<1x512xf32> to vector<1x128xf32>
    %444 = arith.negf %443 : vector<1x128xf32>
    %445 = math.exp %444 : vector<1x128xf32>
    %cst_153 = arith.constant 1.000000e+00 : f32
    %446 = vector.broadcast %cst_153 : f32 to vector<1x128xf32>
    %447 = arith.addf %446, %445 : vector<1x128xf32>
    %448 = arith.divf %446, %447 : vector<1x128xf32>
    %449 = vector.extract_strided_slice %442 {offsets = [0, 128], sizes = [1, 128], strides = [1, 1]} : vector<1x512xf32> to vector<1x128xf32>
    %450 = arith.negf %449 : vector<1x128xf32>
    %451 = math.exp %450 : vector<1x128xf32>
    %cst_154 = arith.constant 1.000000e+00 : f32
    %452 = vector.broadcast %cst_154 : f32 to vector<1x128xf32>
    %453 = arith.addf %452, %451 : vector<1x128xf32>
    %454 = arith.divf %452, %453 : vector<1x128xf32>
    %455 = vector.extract_strided_slice %442 {offsets = [0, 256], sizes = [1, 128], strides = [1, 1]} : vector<1x512xf32> to vector<1x128xf32>
    %456 = math.tanh %455 : vector<1x128xf32>
    %457 = vector.extract_strided_slice %442 {offsets = [0, 384], sizes = [1, 128], strides = [1, 1]} : vector<1x512xf32> to vector<1x128xf32>
    %458 = arith.negf %457 : vector<1x128xf32>
    %459 = math.exp %458 : vector<1x128xf32>
    %cst_155 = arith.constant 1.000000e+00 : f32
    %460 = vector.broadcast %cst_155 : f32 to vector<1x128xf32>
    %461 = arith.addf %460, %459 : vector<1x128xf32>
    %462 = arith.divf %460, %461 : vector<1x128xf32>
    %463 = arith.mulf %454, %430 : vector<1x128xf32>
    %464 = arith.mulf %448, %456 : vector<1x128xf32>
    %465 = arith.addf %463, %464 : vector<1x128xf32>
    %466 = math.tanh %465 : vector<1x128xf32>
    %467 = arith.mulf %462, %466 : vector<1x128xf32>
    %468 = arith.maximumf %433, %467 : vector<1x128xf32>
    %c2_i32_156 = arith.constant 2 : i32
    %c7_i32_157 = arith.constant 7 : i32
    %469 = arith.subi %c7_i32_157, %c2_i32_156 : i32
    %470 = arith.index_cast %c2_i32_156 : i32 to index
    %c0_158 = arith.constant 0 : index
    %471 = vector.load %arg14[%470, %c0_158] : memref<8x512xf32, #tpu.memory_space<vmem>>, vector<1x512xf32>
    %472 = arith.index_cast %469 : i32 to index
    %c0_159 = arith.constant 0 : index
    %473 = vector.load %arg15[%472, %c0_159] : memref<8x512xf32, #tpu.memory_space<vmem>>, vector<1x512xf32>
    %474 = arith.addf %471, %473 : vector<1x512xf32>
    %c0_160 = arith.constant 0 : index
    %c0_161 = arith.constant 0 : index
    %475 = vector.load %arg7[%c0_160, %c0_161] : memref<128x512xf32, #tpu.memory_space<vmem>>, vector<128x512xf32>
    %cst_162 = arith.constant dense<0.000000e+00> : vector<1x512xf32>
    %476 = tpu.matmul %467, %475, %cst_162 {dimension_numbers = #tpu.dot_dimension_numbers<[1], [0], [0], [1], [0, 0, 1, 1], [], []>} : vector<1x128xf32>, vector<128x512xf32>, vector<1x512xf32> -> vector<1x512xf32>
    %477 = arith.addf %474, %476 : vector<1x512xf32>
    %478 = vector.extract_strided_slice %477 {offsets = [0, 0], sizes = [1, 128], strides = [1, 1]} : vector<1x512xf32> to vector<1x128xf32>
    %479 = arith.negf %478 : vector<1x128xf32>
    %480 = math.exp %479 : vector<1x128xf32>
    %cst_163 = arith.constant 1.000000e+00 : f32
    %481 = vector.broadcast %cst_163 : f32 to vector<1x128xf32>
    %482 = arith.addf %481, %480 : vector<1x128xf32>
    %483 = arith.divf %481, %482 : vector<1x128xf32>
    %484 = vector.extract_strided_slice %477 {offsets = [0, 128], sizes = [1, 128], strides = [1, 1]} : vector<1x512xf32> to vector<1x128xf32>
    %485 = arith.negf %484 : vector<1x128xf32>
    %486 = math.exp %485 : vector<1x128xf32>
    %cst_164 = arith.constant 1.000000e+00 : f32
    %487 = vector.broadcast %cst_164 : f32 to vector<1x128xf32>
    %488 = arith.addf %487, %486 : vector<1x128xf32>
    %489 = arith.divf %487, %488 : vector<1x128xf32>
    %490 = vector.extract_strided_slice %477 {offsets = [0, 256], sizes = [1, 128], strides = [1, 1]} : vector<1x512xf32> to vector<1x128xf32>
    %491 = math.tanh %490 : vector<1x128xf32>
    %492 = vector.extract_strided_slice %477 {offsets = [0, 384], sizes = [1, 128], strides = [1, 1]} : vector<1x512xf32> to vector<1x128xf32>
    %493 = arith.negf %492 : vector<1x128xf32>
    %494 = math.exp %493 : vector<1x128xf32>
    %cst_165 = arith.constant 1.000000e+00 : f32
    %495 = vector.broadcast %cst_165 : f32 to vector<1x128xf32>
    %496 = arith.addf %495, %494 : vector<1x128xf32>
    %497 = arith.divf %495, %496 : vector<1x128xf32>
    %498 = arith.mulf %489, %465 : vector<1x128xf32>
    %499 = arith.mulf %483, %491 : vector<1x128xf32>
    %500 = arith.addf %498, %499 : vector<1x128xf32>
    %501 = math.tanh %500 : vector<1x128xf32>
    %502 = arith.mulf %497, %501 : vector<1x128xf32>
    %503 = arith.maximumf %468, %502 : vector<1x128xf32>
    %c3_i32_166 = arith.constant 3 : i32
    %c7_i32_167 = arith.constant 7 : i32
    %504 = arith.subi %c7_i32_167, %c3_i32_166 : i32
    %505 = arith.index_cast %c3_i32_166 : i32 to index
    %c0_168 = arith.constant 0 : index
    %506 = vector.load %arg14[%505, %c0_168] : memref<8x512xf32, #tpu.memory_space<vmem>>, vector<1x512xf32>
    %507 = arith.index_cast %504 : i32 to index
    %c0_169 = arith.constant 0 : index
    %508 = vector.load %arg15[%507, %c0_169] : memref<8x512xf32, #tpu.memory_space<vmem>>, vector<1x512xf32>
    %509 = arith.addf %506, %508 : vector<1x512xf32>
    %c0_170 = arith.constant 0 : index
    %c0_171 = arith.constant 0 : index
    %510 = vector.load %arg7[%c0_170, %c0_171] : memref<128x512xf32, #tpu.memory_space<vmem>>, vector<128x512xf32>
    %cst_172 = arith.constant dense<0.000000e+00> : vector<1x512xf32>
    %511 = tpu.matmul %502, %510, %cst_172 {dimension_numbers = #tpu.dot_dimension_numbers<[1], [0], [0], [1], [0, 0, 1, 1], [], []>} : vector<1x128xf32>, vector<128x512xf32>, vector<1x512xf32> -> vector<1x512xf32>
    %512 = arith.addf %509, %511 : vector<1x512xf32>
    %513 = vector.extract_strided_slice %512 {offsets = [0, 0], sizes = [1, 128], strides = [1, 1]} : vector<1x512xf32> to vector<1x128xf32>
    %514 = arith.negf %513 : vector<1x128xf32>
    %515 = math.exp %514 : vector<1x128xf32>
    %cst_173 = arith.constant 1.000000e+00 : f32
    %516 = vector.broadcast %cst_173 : f32 to vector<1x128xf32>
    %517 = arith.addf %516, %515 : vector<1x128xf32>
    %518 = arith.divf %516, %517 : vector<1x128xf32>
    %519 = vector.extract_strided_slice %512 {offsets = [0, 128], sizes = [1, 128], strides = [1, 1]} : vector<1x512xf32> to vector<1x128xf32>
    %520 = arith.negf %519 : vector<1x128xf32>
    %521 = math.exp %520 : vector<1x128xf32>
    %cst_174 = arith.constant 1.000000e+00 : f32
    %522 = vector.broadcast %cst_174 : f32 to vector<1x128xf32>
    %523 = arith.addf %522, %521 : vector<1x128xf32>
    %524 = arith.divf %522, %523 : vector<1x128xf32>
    %525 = vector.extract_strided_slice %512 {offsets = [0, 256], sizes = [1, 128], strides = [1, 1]} : vector<1x512xf32> to vector<1x128xf32>
    %526 = math.tanh %525 : vector<1x128xf32>
    %527 = vector.extract_strided_slice %512 {offsets = [0, 384], sizes = [1, 128], strides = [1, 1]} : vector<1x512xf32> to vector<1x128xf32>
    %528 = arith.negf %527 : vector<1x128xf32>
    %529 = math.exp %528 : vector<1x128xf32>
    %cst_175 = arith.constant 1.000000e+00 : f32
    %530 = vector.broadcast %cst_175 : f32 to vector<1x128xf32>
    %531 = arith.addf %530, %529 : vector<1x128xf32>
    %532 = arith.divf %530, %531 : vector<1x128xf32>
    %533 = arith.mulf %524, %500 : vector<1x128xf32>
    %534 = arith.mulf %518, %526 : vector<1x128xf32>
    %535 = arith.addf %533, %534 : vector<1x128xf32>
    %536 = math.tanh %535 : vector<1x128xf32>
    %537 = arith.mulf %532, %536 : vector<1x128xf32>
    %538 = arith.maximumf %503, %537 : vector<1x128xf32>
    %c4_i32_176 = arith.constant 4 : i32
    %c7_i32_177 = arith.constant 7 : i32
    %539 = arith.subi %c7_i32_177, %c4_i32_176 : i32
    %540 = arith.index_cast %c4_i32_176 : i32 to index
    %c0_178 = arith.constant 0 : index
    %541 = vector.load %arg14[%540, %c0_178] : memref<8x512xf32, #tpu.memory_space<vmem>>, vector<1x512xf32>
    %542 = arith.index_cast %539 : i32 to index
    %c0_179 = arith.constant 0 : index
    %543 = vector.load %arg15[%542, %c0_179] : memref<8x512xf32, #tpu.memory_space<vmem>>, vector<1x512xf32>
    %544 = arith.addf %541, %543 : vector<1x512xf32>
    %c0_180 = arith.constant 0 : index
    %c0_181 = arith.constant 0 : index
    %545 = vector.load %arg7[%c0_180, %c0_181] : memref<128x512xf32, #tpu.memory_space<vmem>>, vector<128x512xf32>
    %cst_182 = arith.constant dense<0.000000e+00> : vector<1x512xf32>
    %546 = tpu.matmul %537, %545, %cst_182 {dimension_numbers = #tpu.dot_dimension_numbers<[1], [0], [0], [1], [0, 0, 1, 1], [], []>} : vector<1x128xf32>, vector<128x512xf32>, vector<1x512xf32> -> vector<1x512xf32>
    %547 = arith.addf %544, %546 : vector<1x512xf32>
    %548 = vector.extract_strided_slice %547 {offsets = [0, 0], sizes = [1, 128], strides = [1, 1]} : vector<1x512xf32> to vector<1x128xf32>
    %549 = arith.negf %548 : vector<1x128xf32>
    %550 = math.exp %549 : vector<1x128xf32>
    %cst_183 = arith.constant 1.000000e+00 : f32
    %551 = vector.broadcast %cst_183 : f32 to vector<1x128xf32>
    %552 = arith.addf %551, %550 : vector<1x128xf32>
    %553 = arith.divf %551, %552 : vector<1x128xf32>
    %554 = vector.extract_strided_slice %547 {offsets = [0, 128], sizes = [1, 128], strides = [1, 1]} : vector<1x512xf32> to vector<1x128xf32>
    %555 = arith.negf %554 : vector<1x128xf32>
    %556 = math.exp %555 : vector<1x128xf32>
    %cst_184 = arith.constant 1.000000e+00 : f32
    %557 = vector.broadcast %cst_184 : f32 to vector<1x128xf32>
    %558 = arith.addf %557, %556 : vector<1x128xf32>
    %559 = arith.divf %557, %558 : vector<1x128xf32>
    %560 = vector.extract_strided_slice %547 {offsets = [0, 256], sizes = [1, 128], strides = [1, 1]} : vector<1x512xf32> to vector<1x128xf32>
    %561 = math.tanh %560 : vector<1x128xf32>
    %562 = vector.extract_strided_slice %547 {offsets = [0, 384], sizes = [1, 128], strides = [1, 1]} : vector<1x512xf32> to vector<1x128xf32>
    %563 = arith.negf %562 : vector<1x128xf32>
    %564 = math.exp %563 : vector<1x128xf32>
    %cst_185 = arith.constant 1.000000e+00 : f32
    %565 = vector.broadcast %cst_185 : f32 to vector<1x128xf32>
    %566 = arith.addf %565, %564 : vector<1x128xf32>
    %567 = arith.divf %565, %566 : vector<1x128xf32>
    %568 = arith.mulf %559, %535 : vector<1x128xf32>
    %569 = arith.mulf %553, %561 : vector<1x128xf32>
    %570 = arith.addf %568, %569 : vector<1x128xf32>
    %571 = math.tanh %570 : vector<1x128xf32>
    %572 = arith.mulf %567, %571 : vector<1x128xf32>
    %573 = arith.maximumf %538, %572 : vector<1x128xf32>
    %c5_i32_186 = arith.constant 5 : i32
    %c7_i32_187 = arith.constant 7 : i32
    %574 = arith.subi %c7_i32_187, %c5_i32_186 : i32
    %575 = arith.index_cast %c5_i32_186 : i32 to index
    %c0_188 = arith.constant 0 : index
    %576 = vector.load %arg14[%575, %c0_188] : memref<8x512xf32, #tpu.memory_space<vmem>>, vector<1x512xf32>
    %577 = arith.index_cast %574 : i32 to index
    %c0_189 = arith.constant 0 : index
    %578 = vector.load %arg15[%577, %c0_189] : memref<8x512xf32, #tpu.memory_space<vmem>>, vector<1x512xf32>
    %579 = arith.addf %576, %578 : vector<1x512xf32>
    %c0_190 = arith.constant 0 : index
    %c0_191 = arith.constant 0 : index
    %580 = vector.load %arg7[%c0_190, %c0_191] : memref<128x512xf32, #tpu.memory_space<vmem>>, vector<128x512xf32>
    %cst_192 = arith.constant dense<0.000000e+00> : vector<1x512xf32>
    %581 = tpu.matmul %572, %580, %cst_192 {dimension_numbers = #tpu.dot_dimension_numbers<[1], [0], [0], [1], [0, 0, 1, 1], [], []>} : vector<1x128xf32>, vector<128x512xf32>, vector<1x512xf32> -> vector<1x512xf32>
    %582 = arith.addf %579, %581 : vector<1x512xf32>
    %583 = vector.extract_strided_slice %582 {offsets = [0, 0], sizes = [1, 128], strides = [1, 1]} : vector<1x512xf32> to vector<1x128xf32>
    %584 = arith.negf %583 : vector<1x128xf32>
    %585 = math.exp %584 : vector<1x128xf32>
    %cst_193 = arith.constant 1.000000e+00 : f32
    %586 = vector.broadcast %cst_193 : f32 to vector<1x128xf32>
    %587 = arith.addf %586, %585 : vector<1x128xf32>
    %588 = arith.divf %586, %587 : vector<1x128xf32>
    %589 = vector.extract_strided_slice %582 {offsets = [0, 128], sizes = [1, 128], strides = [1, 1]} : vector<1x512xf32> to vector<1x128xf32>
    %590 = arith.negf %589 : vector<1x128xf32>
    %591 = math.exp %590 : vector<1x128xf32>
    %cst_194 = arith.constant 1.000000e+00 : f32
    %592 = vector.broadcast %cst_194 : f32 to vector<1x128xf32>
    %593 = arith.addf %592, %591 : vector<1x128xf32>
    %594 = arith.divf %592, %593 : vector<1x128xf32>
    %595 = vector.extract_strided_slice %582 {offsets = [0, 256], sizes = [1, 128], strides = [1, 1]} : vector<1x512xf32> to vector<1x128xf32>
    %596 = math.tanh %595 : vector<1x128xf32>
    %597 = vector.extract_strided_slice %582 {offsets = [0, 384], sizes = [1, 128], strides = [1, 1]} : vector<1x512xf32> to vector<1x128xf32>
    %598 = arith.negf %597 : vector<1x128xf32>
    %599 = math.exp %598 : vector<1x128xf32>
    %cst_195 = arith.constant 1.000000e+00 : f32
    %600 = vector.broadcast %cst_195 : f32 to vector<1x128xf32>
    %601 = arith.addf %600, %599 : vector<1x128xf32>
    %602 = arith.divf %600, %601 : vector<1x128xf32>
    %603 = arith.mulf %594, %570 : vector<1x128xf32>
    %604 = arith.mulf %588, %596 : vector<1x128xf32>
    %605 = arith.addf %603, %604 : vector<1x128xf32>
    %606 = math.tanh %605 : vector<1x128xf32>
    %607 = arith.mulf %602, %606 : vector<1x128xf32>
    %608 = arith.maximumf %573, %607 : vector<1x128xf32>
    %c6_i32_196 = arith.constant 6 : i32
    %c7_i32_197 = arith.constant 7 : i32
    %609 = arith.subi %c7_i32_197, %c6_i32_196 : i32
    %610 = arith.index_cast %c6_i32_196 : i32 to index
    %c0_198 = arith.constant 0 : index
    %611 = vector.load %arg14[%610, %c0_198] : memref<8x512xf32, #tpu.memory_space<vmem>>, vector<1x512xf32>
    %612 = arith.index_cast %609 : i32 to index
    %c0_199 = arith.constant 0 : index
    %613 = vector.load %arg15[%612, %c0_199] : memref<8x512xf32, #tpu.memory_space<vmem>>, vector<1x512xf32>
    %614 = arith.addf %611, %613 : vector<1x512xf32>
    %c0_200 = arith.constant 0 : index
    %c0_201 = arith.constant 0 : index
    %615 = vector.load %arg7[%c0_200, %c0_201] : memref<128x512xf32, #tpu.memory_space<vmem>>, vector<128x512xf32>
    %cst_202 = arith.constant dense<0.000000e+00> : vector<1x512xf32>
    %616 = tpu.matmul %607, %615, %cst_202 {dimension_numbers = #tpu.dot_dimension_numbers<[1], [0], [0], [1], [0, 0, 1, 1], [], []>} : vector<1x128xf32>, vector<128x512xf32>, vector<1x512xf32> -> vector<1x512xf32>
    %617 = arith.addf %614, %616 : vector<1x512xf32>
    %618 = vector.extract_strided_slice %617 {offsets = [0, 0], sizes = [1, 128], strides = [1, 1]} : vector<1x512xf32> to vector<1x128xf32>
    %619 = arith.negf %618 : vector<1x128xf32>
    %620 = math.exp %619 : vector<1x128xf32>
    %cst_203 = arith.constant 1.000000e+00 : f32
    %621 = vector.broadcast %cst_203 : f32 to vector<1x128xf32>
    %622 = arith.addf %621, %620 : vector<1x128xf32>
    %623 = arith.divf %621, %622 : vector<1x128xf32>
    %624 = vector.extract_strided_slice %617 {offsets = [0, 128], sizes = [1, 128], strides = [1, 1]} : vector<1x512xf32> to vector<1x128xf32>
    %625 = arith.negf %624 : vector<1x128xf32>
    %626 = math.exp %625 : vector<1x128xf32>
    %cst_204 = arith.constant 1.000000e+00 : f32
    %627 = vector.broadcast %cst_204 : f32 to vector<1x128xf32>
    %628 = arith.addf %627, %626 : vector<1x128xf32>
    %629 = arith.divf %627, %628 : vector<1x128xf32>
    %630 = vector.extract_strided_slice %617 {offsets = [0, 256], sizes = [1, 128], strides = [1, 1]} : vector<1x512xf32> to vector<1x128xf32>
    %631 = math.tanh %630 : vector<1x128xf32>
    %632 = vector.extract_strided_slice %617 {offsets = [0, 384], sizes = [1, 128], strides = [1, 1]} : vector<1x512xf32> to vector<1x128xf32>
    %633 = arith.negf %632 : vector<1x128xf32>
    %634 = math.exp %633 : vector<1x128xf32>
    %cst_205 = arith.constant 1.000000e+00 : f32
    %635 = vector.broadcast %cst_205 : f32 to vector<1x128xf32>
    %636 = arith.addf %635, %634 : vector<1x128xf32>
    %637 = arith.divf %635, %636 : vector<1x128xf32>
    %638 = arith.mulf %629, %605 : vector<1x128xf32>
    %639 = arith.mulf %623, %631 : vector<1x128xf32>
    %640 = arith.addf %638, %639 : vector<1x128xf32>
    %641 = math.tanh %640 : vector<1x128xf32>
    %642 = arith.mulf %637, %641 : vector<1x128xf32>
    %643 = arith.maximumf %608, %642 : vector<1x128xf32>
    %c7_i32_206 = arith.constant 7 : i32
    %c7_i32_207 = arith.constant 7 : i32
    %644 = arith.subi %c7_i32_207, %c7_i32_206 : i32
    %645 = arith.index_cast %c7_i32_206 : i32 to index
    %c0_208 = arith.constant 0 : index
    %646 = vector.load %arg14[%645, %c0_208] : memref<8x512xf32, #tpu.memory_space<vmem>>, vector<1x512xf32>
    %647 = arith.index_cast %644 : i32 to index
    %c0_209 = arith.constant 0 : index
    %648 = vector.load %arg15[%647, %c0_209] : memref<8x512xf32, #tpu.memory_space<vmem>>, vector<1x512xf32>
    %649 = arith.addf %646, %648 : vector<1x512xf32>
    %c0_210 = arith.constant 0 : index
    %c0_211 = arith.constant 0 : index
    %650 = vector.load %arg7[%c0_210, %c0_211] : memref<128x512xf32, #tpu.memory_space<vmem>>, vector<128x512xf32>
    %cst_212 = arith.constant dense<0.000000e+00> : vector<1x512xf32>
    %651 = tpu.matmul %642, %650, %cst_212 {dimension_numbers = #tpu.dot_dimension_numbers<[1], [0], [0], [1], [0, 0, 1, 1], [], []>} : vector<1x128xf32>, vector<128x512xf32>, vector<1x512xf32> -> vector<1x512xf32>
    %652 = arith.addf %649, %651 : vector<1x512xf32>
    %653 = vector.extract_strided_slice %652 {offsets = [0, 0], sizes = [1, 128], strides = [1, 1]} : vector<1x512xf32> to vector<1x128xf32>
    %654 = arith.negf %653 : vector<1x128xf32>
    %655 = math.exp %654 : vector<1x128xf32>
    %cst_213 = arith.constant 1.000000e+00 : f32
    %656 = vector.broadcast %cst_213 : f32 to vector<1x128xf32>
    %657 = arith.addf %656, %655 : vector<1x128xf32>
    %658 = arith.divf %656, %657 : vector<1x128xf32>
    %659 = vector.extract_strided_slice %652 {offsets = [0, 128], sizes = [1, 128], strides = [1, 1]} : vector<1x512xf32> to vector<1x128xf32>
    %660 = arith.negf %659 : vector<1x128xf32>
    %661 = math.exp %660 : vector<1x128xf32>
    %cst_214 = arith.constant 1.000000e+00 : f32
    %662 = vector.broadcast %cst_214 : f32 to vector<1x128xf32>
    %663 = arith.addf %662, %661 : vector<1x128xf32>
    %664 = arith.divf %662, %663 : vector<1x128xf32>
    %665 = vector.extract_strided_slice %652 {offsets = [0, 256], sizes = [1, 128], strides = [1, 1]} : vector<1x512xf32> to vector<1x128xf32>
    %666 = math.tanh %665 : vector<1x128xf32>
    %667 = vector.extract_strided_slice %652 {offsets = [0, 384], sizes = [1, 128], strides = [1, 1]} : vector<1x512xf32> to vector<1x128xf32>
    %668 = arith.negf %667 : vector<1x128xf32>
    %669 = math.exp %668 : vector<1x128xf32>
    %cst_215 = arith.constant 1.000000e+00 : f32
    %670 = vector.broadcast %cst_215 : f32 to vector<1x128xf32>
    %671 = arith.addf %670, %669 : vector<1x128xf32>
    %672 = arith.divf %670, %671 : vector<1x128xf32>
    %673 = arith.mulf %664, %640 : vector<1x128xf32>
    %674 = arith.mulf %658, %666 : vector<1x128xf32>
    %675 = arith.addf %673, %674 : vector<1x128xf32>
    %676 = math.tanh %675 : vector<1x128xf32>
    %677 = arith.mulf %672, %676 : vector<1x128xf32>
    %678 = arith.maximumf %643, %677 : vector<1x128xf32>
    %c8_i32_216 = arith.constant 8 : i32
    %c0_217 = arith.constant 0 : index
    %c0_218 = arith.constant 0 : index
    %679 = vector.load %arg9[%c0_217, %c0_218] : memref<1x128xf32, #tpu.memory_space<vmem>>, vector<1x128xf32>
    %680 = arith.mulf %678, %679 : vector<1x128xf32>
    %cst_219 = arith.constant dense<0.000000e+00> : vector<1xf32>
    %681 = vector.multi_reduction <add>, %680, %cst_219 [1] : vector<1x128xf32> to vector<1xf32>
    %682 = vector.shape_cast %681 : vector<1xf32> to vector<1x1xf32>
    %c0_220 = arith.constant 0 : index
    %c0_221 = arith.constant 0 : index
    %683 = vector.load %arg10[%c0_220, %c0_221] : memref<1x1xf32, #tpu.memory_space<vmem>>, vector<1x1xf32>
    %684 = arith.addf %682, %683 : vector<1x1xf32>
    %685 = arith.negf %684 : vector<1x1xf32>
    %686 = math.exp %685 : vector<1x1xf32>
    %cst_222 = arith.constant 1.000000e+00 : f32
    %687 = vector.broadcast %cst_222 : f32 to vector<1x1xf32>
    %688 = arith.addf %687, %686 : vector<1x1xf32>
    %689 = arith.divf %687, %688 : vector<1x1xf32>
    %c0_223 = arith.constant 0 : index
    %c0_224 = arith.constant 0 : index
    %690 = vector.load %arg11[%c0_223, %c0_224] : memref<1x1xf32, #tpu.memory_space<vmem>>, vector<1x1xf32>
    tpu.vector_store %arg11[%c0_223, %c0_224], %689 {strides = array<i32>} : memref<1x1xf32, #tpu.memory_space<vmem>>, vector<1x1xf32>,
    return
  }
}

</mosaic_0001>

<llo_original>
// kernel: mynn_forward.1
$region0: #{mynn_forward.1}
  #allocation0 [shape = 'u32[]', space=smem, size = 0x4, offset = 0x4, fixed_abs, tag = 'smem constant byte address 0x4 - core index']
  #allocation1 [shape = 'u32[144,128]{1,0:T(1,128)}', space=vmem, size = 0x12000, scoped, tag = 'internal scratch']
  #allocation2 [shape = 'f32[8,512]{1,0:T(8,128)}', space=vmem, size = 0x4000, scoped, tag = 'scratch operand']
  #allocation3 [shape = 'f32[8,512]{1,0:T(8,128)}', space=vmem, size = 0x4000, scoped, tag = 'scratch operand']
  #allocation4 [shape = 'f32[8,512]{1,0:T(8,128)}', space=vmem, size = 0x4000, scoped, tag = 'scratch operand']
  #allocation5 [shape = 'f32[8,512]{1,0:T(8,128)}', space=vmem, size = 0x4000, scoped, tag = 'scratch operand']
  #allocation6 [shape = 'f32[8,128]{1,0:T(8,128)}', space=vmem, size = 0x1000, scoped, tag = 'scratch operand']
  #allocation7 [shape = 'f32[1,1]{1,0:T(1,128)S(1)}', space=vmem, size = 0x200, scoped, tag = 'scoped memory for mynn_forward.1']
  %s0 = inlined_call_operand.vmem [shape: f32[8,384], index: 0, kind: input, shape index: {}]
  %s1 = inlined_call_operand.hbm [shape: f32[384,512], index: 1, kind: input, shape index: {}]
  %s2 = inlined_call_operand.hbm [shape: f32[384,512], index: 2, kind: input, shape index: {}]
  %s3 = inlined_call_operand.hbm [shape: f32[128,512], index: 3, kind: input, shape index: {}]
  %s4 = inlined_call_operand.vmem [shape: f32[1,512], index: 4, kind: input, shape index: {}]
  %s5 = inlined_call_operand.hbm [shape: f32[128,512], index: 5, kind: input, shape index: {}]
  %s6 = inlined_call_operand.hbm [shape: f32[128,512], index: 6, kind: input, shape index: {}]
  %s7 = inlined_call_operand.hbm [shape: f32[128,512], index: 7, kind: input, shape index: {}]
  %s8 = inlined_call_operand.vmem [shape: f32[1,512], index: 8, kind: input, shape index: {}]
  %s9 = inlined_call_operand.vmem [shape: f32[1,128], index: 9, kind: input, shape index: {}]
  %s10 = inlined_call_operand.<no memory space> [shape: f32[1,1], index: 10, kind: input, shape index: {}]
  %s11 = inlined_call_operand.hbm [shape: f32[1,1], index: 11, kind: output, shape index: {}]
  %s12 = sld [smem:[#allocation0]]
  $region78: #{mynn_forward.1} parent=0
    _
  %s14 = ssub.s32 1, %s12
  %s15 = scalar_select 0, %s14, %s12
  %v16 = vstv %s10
  %17 = vst [vmem:[#allocation7] sm:$0x1] %v16
  $region1: #{mynn_forward.1} parent=0
    #allocation8 [shape = 'u8[786432]{0}', space=vmem, size = 0xc0000, scoped, tag = 'input window, operand 1, single buffered']
    #allocation9 [shape = 's32[1]{0}', space=sflag, size = 0x4, scoped, tag = 'scoped memory for mynn_forward.1']
    #allocation10 [shape = 's32[1]{0}', space=sflag, size = 0x4, scoped, tag = 'scoped memory for mynn_forward.1']
    #allocation11 [shape = 'u8[786432]{0}', space=vmem, size = 0xc0000, scoped, tag = 'input window, operand 2, single buffered']
    #allocation12 [shape = 's32[1]{0}', space=sflag, size = 0x4, scoped, tag = 'scoped memory for mynn_forward.1']
    #allocation13 [shape = 'u8[262144]{0}', space=vmem, size = 0x40000, scoped, tag = 'input window, operand 3, single buffered']
    #allocation14 [shape = 'u8[262144]{0}', space=vmem, size = 0x40000, scoped, tag = 'input window, operand 5, single buffered']
    #allocation15 [shape = 's32[1]{0}', space=sflag, size = 0x4, scoped, tag = 'scoped memory for mynn_forward.1']
    #allocation16 [shape = 'u8[262144]{0}', space=vmem, size = 0x40000, scoped, tag = 'input window, operand 6, single buffered']
    #allocation17 [shape = 'u8[262144]{0}', space=vmem, size = 0x40000, scoped, tag = 'input window, operand 7, single buffered']
    #allocation18 [shape = 's32[1]{0}', space=sflag, size = 0x4, scoped, tag = 'scoped memory for mynn_forward.1']
    #allocation19 [shape = 'u8[512]{0}', space=vmem, size = 0x400, scoped, tag = 'output window, operand 0, single buffered']
    %18 = vsyncpa [#allocation9], 0
    %19 = vsyncpa [#allocation12], 0
    %20 = vsyncpa [#allocation15], 0
    %21 = vsyncpa [#allocation18], 0
    %22 = vsyncpa [#allocation10], 0
    // Predicated region
    $region2: #{mynn_forward.1} parent=1 // pred_check
      _
    $region3: #{mynn_forward.1} parent=1 // pred_check_branch
      %24 = sbr.rel (0) target = $region5
    $region4: #{mynn_forward.1} parent=1 // pred_region
      _
    $region5: #{mynn_forward.1} parent=1 // pred_fallthru
      _
    // Predicated region
    $region6: #{mynn_forward.1} parent=1 // pred_check
      _
    $region7: #{mynn_forward.1} parent=1 // pred_check_branch
      %26 = sbr.rel (0) target = $region9
    $region8: #{mynn_forward.1} parent=1 // pred_region
      %s28 = ssub.s32 24576, 24576
      %29 = vsyncadd [#allocation9], %s28
      %s30 = sshll.u32 [#allocation8], 4
      %s31 = int_to_ptr.vmem [resolvable:$true] %s30
      %36 = dma.hbm_to_vmem [thread:$0]  %s1, 24576, %s31, [#allocation9], 512, 512, 32
    $region9: #{mynn_forward.1} parent=1 // pred_fallthru
      _
    // Predicated region
    $region10: #{mynn_forward.1} parent=1 // pred_check
      _
    $region11: #{mynn_forward.1} parent=1 // pred_check_branch
      %38 = sbr.rel (0) target = $region13
    $region12: #{mynn_forward.1} parent=1 // pred_region
      %s40 = ssub.s32 24576, 24576
      %41 = vsyncadd [#allocation12], %s40
      %s42 = sshll.u32 [#allocation11], 4
      %s43 = int_to_ptr.vmem [resolvable:$true] %s42
      %48 = dma.hbm_to_vmem [thread:$0]  %s2, 24576, %s43, [#allocation12], 512, 512, 32
    $region13: #{mynn_forward.1} parent=1 // pred_fallthru
      _
    // Predicated region
    $region14: #{mynn_forward.1} parent=1 // pred_check
      _
    $region15: #{mynn_forward.1} parent=1 // pred_check_branch
      %50 = sbr.rel (0) target = $region17
    $region16: #{mynn_forward.1} parent=1 // pred_region
      %s52 = ssub.s32 8192, 8192
      %53 = vsyncadd [#allocation12], %s52
      %s54 = sshll.u32 [#allocation13], 4
      %s55 = int_to_ptr.vmem [resolvable:$true] %s54
      %60 = dma.hbm_to_vmem [thread:$0]  %s3, 8192, %s55, [#allocation12], 512, 512, 32
    $region17: #{mynn_forward.1} parent=1 // pred_fallthru
      _
    // Predicated region
    $region18: #{mynn_forward.1} parent=1 // pred_check
      _
    $region19: #{mynn_forward.1} parent=1 // pred_check_branch
      %62 = sbr.rel (0) target = $region21
    $region20: #{mynn_forward.1} parent=1 // pred_region
      _
    $region21: #{mynn_forward.1} parent=1 // pred_fallthru
      _
    // Predicated region
    $region22: #{mynn_forward.1} parent=1 // pred_check
      _
    $region23: #{mynn_forward.1} parent=1 // pred_check_branch
      %64 = sbr.rel (0) target = $region25
    $region24: #{mynn_forward.1} parent=1 // pred_region
      %s66 = ssub.s32 8192, 8192
      %67 = vsyncadd [#allocation15], %s66
      %s68 = sshll.u32 [#allocation14], 4
      %s69 = int_to_ptr.vmem [resolvable:$true] %s68
      %74 = dma.hbm_to_vmem [thread:$0]  %s5, 8192, %s69, [#allocation15], 512, 512, 32
    $region25: #{mynn_forward.1} parent=1 // pred_fallthru
      _
    // Predicated region
    $region26: #{mynn_forward.1} parent=1 // pred_check
      _
    $region27: #{mynn_forward.1} parent=1 // pred_check_branch
      %76 = sbr.rel (0) target = $region29
    $region28: #{mynn_forward.1} parent=1 // pred_region
      %s78 = ssub.s32 8192, 8192
      %79 = vsyncadd [#allocation15], %s78
      %s80 = sshll.u32 [#allocation16], 4
      %s81 = int_to_ptr.vmem [resolvable:$true] %s80
      %86 = dma.hbm_to_vmem [thread:$0]  %s6, 8192, %s81, [#allocation15], 512, 512, 32
    $region29: #{mynn_forward.1} parent=1 // pred_fallthru
      _
    // Predicated region
    $region30: #{mynn_forward.1} parent=1 // pred_check
      _
    $region31: #{mynn_forward.1} parent=1 // pred_check_branch
      %88 = sbr.rel (0) target = $region33
    $region32: #{mynn_forward.1} parent=1 // pred_region
      %s90 = ssub.s32 8192, 8192
      %91 = vsyncadd [#allocation18], %s90
      %s92 = sshll.u32 [#allocation17], 4
      %s93 = int_to_ptr.vmem [resolvable:$true] %s92
      %98 = dma.hbm_to_vmem [thread:$0]  %s7, 8192, %s93, [#allocation18], 512, 512, 32
    $region33: #{mynn_forward.1} parent=1 // pred_fallthru
      _
    // Predicated region
    $region34: #{mynn_forward.1} parent=1 // pred_check
      _
    $region35: #{mynn_forward.1} parent=1 // pred_check_branch
      %100 = sbr.rel (0) target = $region37
    $region36: #{mynn_forward.1} parent=1 // pred_region
      _
    $region37: #{mynn_forward.1} parent=1 // pred_fallthru
      _
    // Predicated region
    $region38: #{mynn_forward.1} parent=1 // pred_check
      _
    $region39: #{mynn_forward.1} parent=1 // pred_check_branch
      %102 = sbr.rel (0) target = $region41
    $region40: #{mynn_forward.1} parent=1 // pred_region
      _
    $region41: #{mynn_forward.1} parent=1 // pred_fallthru
      _
    // Predicated region
    $region42: #{mynn_forward.1} parent=1 // pred_check
      _
    $region43: #{mynn_forward.1} parent=1 // pred_check_branch
      %104 = sbr.rel (0) target = $region45
    $region44: #{mynn_forward.1} parent=1 // pred_region
      _
    $region45: #{mynn_forward.1} parent=1 // pred_fallthru
      _
    // Predicated region
    $region46: #{mynn_forward.1} parent=1 // pred_check
      _
    $region47: #{mynn_forward.1} parent=1 // pred_check_branch
      %106 = sbr.rel (0) target = $region49
    $region48: #{mynn_forward.1} parent=1 // pred_region
      %107 = dma.done [#allocation9], 24576
    $region49: #{mynn_forward.1} parent=1 // pred_fallthru
      _
    // Predicated region
    $region50: #{mynn_forward.1} parent=1 // pred_check
      _
    $region51: #{mynn_forward.1} parent=1 // pred_check_branch
      %109 = sbr.rel (0) target = $region53
    $region52: #{mynn_forward.1} parent=1 // pred_region
      %110 = dma.done [#allocation12], 24576
    $region53: #{mynn_forward.1} parent=1 // pred_fallthru
      _
    // Predicated region
    $region54: #{mynn_forward.1} parent=1 // pred_check
      _
    $region55: #{mynn_forward.1} parent=1 // pred_check_branch
      %112 = sbr.rel (0) target = $region57
    $region56: #{mynn_forward.1} parent=1 // pred_region
      %113 = dma.done [#allocation12], 8192
    $region57: #{mynn_forward.1} parent=1 // pred_fallthru
      _
    // Predicated region
    $region58: #{mynn_forward.1} parent=1 // pred_check
      _
    $region59: #{mynn_forward.1} parent=1 // pred_check_branch
      %115 = sbr.rel (0) target = $region61
    $region60: #{mynn_forward.1} parent=1 // pred_region
      %116 = dma.done [#allocation15], 8192
    $region61: #{mynn_forward.1} parent=1 // pred_fallthru
      _
    // Predicated region
    $region62: #{mynn_forward.1} parent=1 // pred_check
      _
    $region63: #{mynn_forward.1} parent=1 // pred_check_branch
      %118 = sbr.rel (0) target = $region65
    $region64: #{mynn_forward.1} parent=1 // pred_region
      %119 = dma.done [#allocation15], 8192
    $region65: #{mynn_forward.1} parent=1 // pred_fallthru
      _
    // Predicated region
    $region66: #{mynn_forward.1} parent=1 // pred_check
      _
    $region67: #{mynn_forward.1} parent=1 // pred_check_branch
      %121 = sbr.rel (0) target = $region69
    $region68: #{mynn_forward.1} parent=1 // pred_region
      %122 = dma.done [#allocation18], 8192
    $region69: #{mynn_forward.1} parent=1 // pred_fallthru
      _
    %v123 = vlaneseq
    %v124 = vand.u32 %v123, 127
    %vm125 = vcmp.lt.s32.totalorder %v124, 64
    %v126 = vsel %vm125, 1, 0
    %v127 = vcvt.s32.f32 %v126
    %v128 = vsub.f32 1.0, %v127
    %v129 = vld [vmem:[%s0] sm:$0xff]
    %v130 = vld [vmem:[%s0 + $0x8] sm:$0xff]
    %v131 = vld [vmem:[%s0 + $0x10] sm:$0xff]
    %v132 = vld [vmem:[#allocation8] sm:$0xff]
    %v133 = vld [vmem:[#allocation8 + $0x8] sm:$0xff]
    %v134 = vld [vmem:[#allocation8 + $0x10] sm:$0xff]
    %v135 = vld [vmem:[#allocation8 + $0x18] sm:$0xff]
    %v136 = vld [vmem:[#allocation8 + $0x20] sm:$0xff]
    %v137 = vld [vmem:[#allocation8 + $0x28] sm:$0xff]
    %v138 = vld [vmem:[#allocation8 + $0x30] sm:$0xff]
    %v139 = vld [vmem:[#allocation8 + $0x38] sm:$0xff]
    %v140 = vld [vmem:[#allocation8 + $0x40] sm:$0xff]
    %v141 = vld [vmem:[#allocation8 + $0x48] sm:$0xff]
    %v142 = vld [vmem:[#allocation8 + $0x50] sm:$0xff]
    %v143 = vld [vmem:[#allocation8 + $0x58] sm:$0xff]
    %v144 = vld [vmem:[#allocation8 + $0x60] sm:$0xff]
    %v145 = vld [vmem:[#allocation8 + $0x68] sm:$0xff]
    %v146 = vld [vmem:[#allocation8 + $0x70] sm:$0xff]
    %v147 = vld [vmem:[#allocation8 + $0x78] sm:$0xff]
    %v148 = vld [vmem:[#allocation8 + $0x80] sm:$0xff]
    %v149 = vld [vmem:[#allocation8 + $0x88] sm:$0xff]
    %v150 = vld [vmem:[#allocation8 + $0x90] sm:$0xff]
    %v151 = vld [vmem:[#allocation8 + $0x98] sm:$0xff]
    %v152 = vld [vmem:[#allocation8 + $0xa0] sm:$0xff]
    %v153 = vld [vmem:[#allocation8 + $0xa8] sm:$0xff]
    %v154 = vld [vmem:[#allocation8 + $0xb0] sm:$0xff]
    %v155 = vld [vmem:[#allocation8 + $0xb8] sm:$0xff]
    %v156 = vld [vmem:[#allocation8 + $0xc0] sm:$0xff]
    %v157 = vld [vmem:[#allocation8 + $0xc8] sm:$0xff]
    %v158 = vld [vmem:[#allocation8 + $0xd0] sm:$0xff]
    %v159 = vld [vmem:[#allocation8 + $0xd8] sm:$0xff]
    %v160 = vld [vmem:[#allocation8 + $0xe0] sm:$0xff]
    %v161 = vld [vmem:[#allocation8 + $0xe8] sm:$0xff]
    %v162 = vld [vmem:[#allocation8 + $0xf0] sm:$0xff]
    %v163 = vld [vmem:[#allocation8 + $0xf8] sm:$0xff]
    %v164 = vld [vmem:[#allocation8 + $0x100] sm:$0xff]
    %v165 = vld [vmem:[#allocation8 + $0x108] sm:$0xff]
    %v166 = vld [vmem:[#allocation8 + $0x110] sm:$0xff]
    %v167 = vld [vmem:[#allocation8 + $0x118] sm:$0xff]
    %v168 = vld [vmem:[#allocation8 + $0x120] sm:$0xff]
    %v169 = vld [vmem:[#allocation8 + $0x128] sm:$0xff]
    %v170 = vld [vmem:[#allocation8 + $0x130] sm:$0xff]
    %v171 = vld [vmem:[#allocation8 + $0x138] sm:$0xff]
    %v172 = vld [vmem:[#allocation8 + $0x140] sm:$0xff]
    %v173 = vld [vmem:[#allocation8 + $0x148] sm:$0xff]
    %v174 = vld [vmem:[#allocation8 + $0x150] sm:$0xff]
    %v175 = vld [vmem:[#allocation8 + $0x158] sm:$0xff]
    %v176 = vld [vmem:[#allocation8 + $0x160] sm:$0xff]
    %v177 = vld [vmem:[#allocation8 + $0x168] sm:$0xff]
    %v178 = vld [vmem:[#allocation8 + $0x170] sm:$0xff]
    %v179 = vld [vmem:[#allocation8 + $0x178] sm:$0xff]
    %v180 = vld [vmem:[#allocation8 + $0x180] sm:$0xff]
    %v181 = vld [vmem:[#allocation8 + $0x188] sm:$0xff]
    %v182 = vld [vmem:[#allocation8 + $0x190] sm:$0xff]
    %v183 = vld [vmem:[#allocation8 + $0x198] sm:$0xff]
    %v184 = vld [vmem:[#allocation8 + $0x1a0] sm:$0xff]
    %v185 = vld [vmem:[#allocation8 + $0x1a8] sm:$0xff]
    %v186 = vld [vmem:[#allocation8 + $0x1b0] sm:$0xff]
    %v187 = vld [vmem:[#allocation8 + $0x1b8] sm:$0xff]
    %v188 = vld [vmem:[#allocation8 + $0x1c0] sm:$0xff]
    %v189 = vld [vmem:[#allocation8 + $0x1c8] sm:$0xff]
    %v190 = vld [vmem:[#allocation8 + $0x1d0] sm:$0xff]
    %v191 = vld [vmem:[#allocation8 + $0x1d8] sm:$0xff]
    %v192 = vld [vmem:[#allocation8 + $0x1e0] sm:$0xff]
    %v193 = vld [vmem:[#allocation8 + $0x1e8] sm:$0xff]
    %v194 = vld [vmem:[#allocation8 + $0x1f0] sm:$0xff]
    %v195 = vld [vmem:[#allocation8 + $0x1f8] sm:$0xff]
    %v196 = vld [vmem:[#allocation8 + $0x200] sm:$0xff]
    %v197 = vld [vmem:[#allocation8 + $0x208] sm:$0xff]
    %v198 = vld [vmem:[#allocation8 + $0x210] sm:$0xff]
    %v199 = vld [vmem:[#allocation8 + $0x218] sm:$0xff]
    %v200 = vld [vmem:[#allocation8 + $0x220] sm:$0xff]
    %v201 = vld [vmem:[#allocation8 + $0x228] sm:$0xff]
    %v202 = vld [vmem:[#allocation8 + $0x230] sm:$0xff]
    %v203 = vld [vmem:[#allocation8 + $0x238] sm:$0xff]
    %v204 = vld [vmem:[#allocation8 + $0x240] sm:$0xff]
    %v205 = vld [vmem:[#allocation8 + $0x248] sm:$0xff]
    %v206 = vld [vmem:[#allocation8 + $0x250] sm:$0xff]
    %v207 = vld [vmem:[#allocation8 + $0x258] sm:$0xff]
    %v208 = vld [vmem:[#allocation8 + $0x260] sm:$0xff]
    %v209 = vld [vmem:[#allocation8 + $0x268] sm:$0xff]
    %v210 = vld [vmem:[#allocation8 + $0x270] sm:$0xff]
    %v211 = vld [vmem:[#allocation8 + $0x278] sm:$0xff]
    %v212 = vld [vmem:[#allocation8 + $0x280] sm:$0xff]
    %v213 = vld [vmem:[#allocation8 + $0x288] sm:$0xff]
    %v214 = vld [vmem:[#allocation8 + $0x290] sm:$0xff]
    %v215 = vld [vmem:[#allocation8 + $0x298] sm:$0xff]
    %v216 = vld [vmem:[#allocation8 + $0x2a0] sm:$0xff]
    %v217 = vld [vmem:[#allocation8 + $0x2a8] sm:$0xff]
    %v218 = vld [vmem:[#allocation8 + $0x2b0] sm:$0xff]
    %v219 = vld [vmem:[#allocation8 + $0x2b8] sm:$0xff]
    %v220 = vld [vmem:[#allocation8 + $0x2c0] sm:$0xff]
    %v221 = vld [vmem:[#allocation8 + $0x2c8] sm:$0xff]
    %v222 = vld [vmem:[#allocation8 + $0x2d0] sm:$0xff]
    %v223 = vld [vmem:[#allocation8 + $0x2d8] sm:$0xff]
    %v224 = vld [vmem:[#allocation8 + $0x2e0] sm:$0xff]
    %v225 = vld [vmem:[#allocation8 + $0x2e8] sm:$0xff]
    %v226 = vld [vmem:[#allocation8 + $0x2f0] sm:$0xff]
    %v227 = vld [vmem:[#allocation8 + $0x2f8] sm:$0xff]
    %v228 = vld [vmem:[#allocation8 + $0x300] sm:$0xff]
    %v229 = vld [vmem:[#allocation8 + $0x308] sm:$0xff]
    %v230 = vld [vmem:[#allocation8 + $0x310] sm:$0xff]
    %v231 = vld [vmem:[#allocation8 + $0x318] sm:$0xff]
    %v232 = vld [vmem:[#allocation8 + $0x320] sm:$0xff]
    %v233 = vld [vmem:[#allocation8 + $0x328] sm:$0xff]
    %v234 = vld [vmem:[#allocation8 + $0x330] sm:$0xff]
    %v235 = vld [vmem:[#allocation8 + $0x338] sm:$0xff]
    %v236 = vld [vmem:[#allocation8 + $0x340] sm:$0xff]
    %v237 = vld [vmem:[#allocation8 + $0x348] sm:$0xff]
    %v238 = vld [vmem:[#allocation8 + $0x350] sm:$0xff]
    %v239 = vld [vmem:[#allocation8 + $0x358] sm:$0xff]
    %v240 = vld [vmem:[#allocation8 + $0x360] sm:$0xff]
    %v241 = vld [vmem:[#allocation8 + $0x368] sm:$0xff]
    %v242 = vld [vmem:[#allocation8 + $0x370] sm:$0xff]
    %v243 = vld [vmem:[#allocation8 + $0x378] sm:$0xff]
    %v244 = vld [vmem:[#allocation8 + $0x380] sm:$0xff]
    %v245 = vld [vmem:[#allocation8 + $0x388] sm:$0xff]
    %v246 = vld [vmem:[#allocation8 + $0x390] sm:$0xff]
    %v247 = vld [vmem:[#allocation8 + $0x398] sm:$0xff]
    %v248 = vld [vmem:[#allocation8 + $0x3a0] sm:$0xff]
    %v249 = vld [vmem:[#allocation8 + $0x3a8] sm:$0xff]
    %v250 = vld [vmem:[#allocation8 + $0x3b0] sm:$0xff]
    %v251 = vld [vmem:[#allocation8 + $0x3b8] sm:$0xff]
    %v252 = vld [vmem:[#allocation8 + $0x3c0] sm:$0xff]
    %v253 = vld [vmem:[#allocation8 + $0x3c8] sm:$0xff]
    %v254 = vld [vmem:[#allocation8 + $0x3d0] sm:$0xff]
    %v255 = vld [vmem:[#allocation8 + $0x3d8] sm:$0xff]
    %v256 = vld [vmem:[#allocation8 + $0x3e0] sm:$0xff]
    %v257 = vld [vmem:[#allocation8 + $0x3e8] sm:$0xff]
    %v258 = vld [vmem:[#allocation8 + $0x3f0] sm:$0xff]
    %v259 = vld [vmem:[#allocation8 + $0x3f8] sm:$0xff]
    %v260 = vld [vmem:[#allocation8 + $0x400] sm:$0xff]
    %v261 = vld [vmem:[#allocation8 + $0x408] sm:$0xff]
    %v262 = vld [vmem:[#allocation8 + $0x410] sm:$0xff]
    %v263 = vld [vmem:[#allocation8 + $0x418] sm:$0xff]
    %v264 = vld [vmem:[#allocation8 + $0x420] sm:$0xff]
    %v265 = vld [vmem:[#allocation8 + $0x428] sm:$0xff]
    %v266 = vld [vmem:[#allocation8 + $0x430] sm:$0xff]
    %v267 = vld [vmem:[#allocation8 + $0x438] sm:$0xff]
    %v268 = vld [vmem:[#allocation8 + $0x440] sm:$0xff]
    %v269 = vld [vmem:[#allocation8 + $0x448] sm:$0xff]
    %v270 = vld [vmem:[#allocation8 + $0x450] sm:$0xff]
    %v271 = vld [vmem:[#allocation8 + $0x458] sm:$0xff]
    %v272 = vld [vmem:[#allocation8 + $0x460] sm:$0xff]
    %v273 = vld [vmem:[#allocation8 + $0x468] sm:$0xff]
    %v274 = vld [vmem:[#allocation8 + $0x470] sm:$0xff]
    %v275 = vld [vmem:[#allocation8 + $0x478] sm:$0xff]
    %v276 = vld [vmem:[#allocation8 + $0x480] sm:$0xff]
    %v277 = vld [vmem:[#allocation8 + $0x488] sm:$0xff]
    %v278 = vld [vmem:[#allocation8 + $0x490] sm:$0xff]
    %v279 = vld [vmem:[#allocation8 + $0x498] sm:$0xff]
    %v280 = vld [vmem:[#allocation8 + $0x4a0] sm:$0xff]
    %v281 = vld [vmem:[#allocation8 + $0x4a8] sm:$0xff]
    %v282 = vld [vmem:[#allocation8 + $0x4b0] sm:$0xff]
    %v283 = vld [vmem:[#allocation8 + $0x4b8] sm:$0xff]
    %v284 = vld [vmem:[#allocation8 + $0x4c0] sm:$0xff]
    %v285 = vld [vmem:[#allocation8 + $0x4c8] sm:$0xff]
    %v286 = vld [vmem:[#allocation8 + $0x4d0] sm:$0xff]
    %v287 = vld [vmem:[#allocation8 + $0x4d8] sm:$0xff]
    %v288 = vld [vmem:[#allocation8 + $0x4e0] sm:$0xff]
    %v289 = vld [vmem:[#allocation8 + $0x4e8] sm:$0xff]
    %v290 = vld [vmem:[#allocation8 + $0x4f0] sm:$0xff]
    %v291 = vld [vmem:[#allocation8 + $0x4f8] sm:$0xff]
    %v292 = vld [vmem:[#allocation8 + $0x500] sm:$0xff]
    %v293 = vld [vmem:[#allocation8 + $0x508] sm:$0xff]
    %v294 = vld [vmem:[#allocation8 + $0x510] sm:$0xff]
    %v295 = vld [vmem:[#allocation8 + $0x518] sm:$0xff]
    %v296 = vld [vmem:[#allocation8 + $0x520] sm:$0xff]
    %v297 = vld [vmem:[#allocation8 + $0x528] sm:$0xff]
    %v298 = vld [vmem:[#allocation8 + $0x530] sm:$0xff]
    %v299 = vld [vmem:[#allocation8 + $0x538] sm:$0xff]
    %v300 = vld [vmem:[#allocation8 + $0x540] sm:$0xff]
    %v301 = vld [vmem:[#allocation8 + $0x548] sm:$0xff]
    %v302 = vld [vmem:[#allocation8 + $0x550] sm:$0xff]
    %v303 = vld [vmem:[#allocation8 + $0x558] sm:$0xff]
    %v304 = vld [vmem:[#allocation8 + $0x560] sm:$0xff]
    %v305 = vld [vmem:[#allocation8 + $0x568] sm:$0xff]
    %v306 = vld [vmem:[#allocation8 + $0x570] sm:$0xff]
    %v307 = vld [vmem:[#allocation8 + $0x578] sm:$0xff]
    %v308 = vld [vmem:[#allocation8 + $0x580] sm:$0xff]
    %v309 = vld [vmem:[#allocation8 + $0x588] sm:$0xff]
    %v310 = vld [vmem:[#allocation8 + $0x590] sm:$0xff]
    %v311 = vld [vmem:[#allocation8 + $0x598] sm:$0xff]
    %v312 = vld [vmem:[#allocation8 + $0x5a0] sm:$0xff]
    %v313 = vld [vmem:[#allocation8 + $0x5a8] sm:$0xff]
    %v314 = vld [vmem:[#allocation8 + $0x5b0] sm:$0xff]
    %v315 = vld [vmem:[#allocation8 + $0x5b8] sm:$0xff]
    %v316 = vld [vmem:[#allocation8 + $0x5c0] sm:$0xff]
    %v317 = vld [vmem:[#allocation8 + $0x5c8] sm:$0xff]
    %v318 = vld [vmem:[#allocation8 + $0x5d0] sm:$0xff]
    %v319 = vld [vmem:[#allocation8 + $0x5d8] sm:$0xff]
    %v320 = vld [vmem:[#allocation8 + $0x5e0] sm:$0xff]
    %v321 = vld [vmem:[#allocation8 + $0x5e8] sm:$0xff]
    %v322 = vld [vmem:[#allocation8 + $0x5f0] sm:$0xff]
    %v323 = vld [vmem:[#allocation8 + $0x5f8] sm:$0xff]
    %v324 = vld [vmem:[%s4] sm:$0xf]
    %v326 = vlaneseq
    %v327 = vshrl.u32 %v326, 7
    %v328 = vsub.s32 0, %v327
    %v329 = vrot.slane %v324, %v328
    %v330 = vlaneseq
    %v331 = vshrl.u32 %v330, 7
    %v332 = vsub.s32 1, %v331
    %v333 = vrot.slane %v324, %v332
    %v334 = vlaneseq
    %v335 = vshrl.u32 %v334, 7
    %v336 = vsub.s32 2, %v335
    %v337 = vrot.slane %v324, %v336
    %v338 = vlaneseq
    %v339 = vshrl.u32 %v338, 7
    %v340 = vsub.s32 3, %v339
    %v341 = vrot.slane %v324, %v340
    %346 = vmatprep.subr.mxu0 %v133
    %347 = vmatpush1.msra.mxu0 %v132
    %348 = vmatprep.subr.mxu0 %v137
    %349 = vmatpush1.msra.mxu0 %v136
    %350 = vmatprep.subr.mxu0 %v141
    %351 = vmatpush1.msra.mxu0 %v140
    %352 = vmatprep.subr.mxu0 %v145
    %353 = vmatpush1.msra.mxu0 %v144
    %354 = vmatprep.subr.mxu0 %v149
    %355 = vmatpush1.msra.mxu0 %v148
    %356 = vmatprep.subr.mxu0 %v153
    %357 = vmatpush1.msra.mxu0 %v152
    %358 = vmatprep.subr.mxu0 %v157
    %359 = vmatpush1.msra.mxu0 %v156
    %360 = vmatprep.subr.mxu0 %v161
    %361 = vmatpush1.msra.mxu0 %v160
    %362 = vmatprep.subr.mxu0 %v165
    %363 = vmatpush1.msra.mxu0 %v164
    %364 = vmatprep.subr.mxu0 %v169
    %365 = vmatpush1.msra.mxu0 %v168
    %366 = vmatprep.subr.mxu0 %v173
    %367 = vmatpush1.msra.mxu0 %v172
    %368 = vmatprep.subr.mxu0 %v177
    %369 = vmatpush1.msra.mxu0 %v176
    %370 = vmatprep.subr.mxu0 %v181
    %371 = vmatpush1.msra.mxu0 %v180
    %372 = vmatprep.subr.mxu0 %v185
    %373 = vmatpush1.msra.mxu0 %v184
    %374 = vmatprep.subr.mxu0 %v189
    %375 = vmatpush1.msra.mxu0 %v188
    %376 = vmatprep.subr.mxu0 %v193
    %377 = vmatpush1.msra.mxu0 %v192
    %378 = vmatprep.subr.mxu0 %v197
    %379 = vmatpush1.msra.mxu0 %v196
    %380 = vmatprep.subr.mxu0 %v201
    %381 = vmatpush1.msra.mxu0 %v200
    %382 = vmatprep.subr.mxu0 %v205
    %383 = vmatpush1.msra.mxu0 %v204
    %384 = vmatprep.subr.mxu0 %v209
    %385 = vmatpush1.msra.mxu0 %v208
    %386 = vmatprep.subr.mxu0 %v213
    %387 = vmatpush1.msra.mxu0 %v212
    %388 = vmatprep.subr.mxu0 %v217
    %389 = vmatpush1.msra.mxu0 %v216
    %390 = vmatprep.subr.mxu0 %v221
    %391 = vmatpush1.msra.mxu0 %v220
    %392 = vmatprep.subr.mxu0 %v225
    %393 = vmatpush1.msra.mxu0 %v224
    %394 = vmatprep.subr.mxu0 %v229
    %395 = vmatpush1.msra.mxu0 %v228
    %396 = vmatprep.subr.mxu0 %v233
    %397 = vmatpush1.msra.mxu0 %v232
    %398 = vmatprep.subr.mxu0 %v237
    %399 = vmatpush1.msra.mxu0 %v236
    %400 = vmatprep.subr.mxu0 %v241
    %401 = vmatpush1.msra.mxu0 %v240
    %402 = vmatprep.subr.mxu0 %v245
    %403 = vmatpush1.msra.mxu0 %v244
    %404 = vmatprep.subr.mxu0 %v249
    %405 = vmatpush1.msra.mxu0 %v248
    %406 = vmatprep.subr.mxu0 %v253
    %407 = vmatpush1.msra.mxu0 %v252
    %408 = vmatprep.subr.mxu0 %v257
    %409 = vmatpush1.msra.mxu0 %v256
    %410 = vmatprep.mubr.f32.mxu0 %v130
    %411 = vmatmul.mubr.f32.gmra.mrb[0].mxu0 %v129
    %v412 = vpop.f32.mrb[0].mxu0
    %v413 = vadd.f32 %v329, %v412
    %v414 = vpop.f32.mrb[0].mxu0
    %v415 = vadd.f32 %v333, %v414
    %416 = vdwg.mxu0
    %417 = vmatprep.subr.mxu0 %v261
    %418 = vmatpush1.msra.mxu0 %v260
    %419 = vmatprep.subr.mxu0 %v265
    %420 = vmatpush1.msra.mxu0 %v264
    %421 = vmatprep.subr.mxu0 %v269
    %422 = vmatpush1.msra.mxu0 %v268
    %423 = vmatprep.subr.mxu0 %v273
    %424 = vmatpush1.msra.mxu0 %v272
    %425 = vmatprep.subr.mxu0 %v277
    %426 = vmatpush1.msra.mxu0 %v276
    %427 = vmatprep.subr.mxu0 %v281
    %428 = vmatpush1.msra.mxu0 %v280
    %429 = vmatprep.subr.mxu0 %v285
    %430 = vmatpush1.msra.mxu0 %v284
    %431 = vmatprep.subr.mxu0 %v289
    %432 = vmatpush1.msra.mxu0 %v288
    %433 = vmatprep.subr.mxu0 %v293
    %434 = vmatpush1.msra.mxu0 %v292
    %435 = vmatprep.subr.mxu0 %v297
    %436 = vmatpush1.msra.mxu0 %v296
    %437 = vmatprep.subr.mxu0 %v301
    %438 = vmatpush1.msra.mxu0 %v300
    %439 = vmatprep.subr.mxu0 %v305
    %440 = vmatpush1.msra.mxu0 %v304
    %441 = vmatprep.subr.mxu0 %v309
    %442 = vmatpush1.msra.mxu0 %v308
    %443 = vmatprep.subr.mxu0 %v313
    %444 = vmatpush1.msra.mxu0 %v312
    %445 = vmatprep.subr.mxu0 %v317
    %446 = vmatpush1.msra.mxu0 %v316
    %447 = vmatprep.subr.mxu0 %v321
    %448 = vmatpush1.msra.mxu0 %v320
    %449 = vmatprep.subr.mxu0 0.0
    %450 = vmatpush1.msra.mxu0 0.0
    %451 = vmatprep.subr.mxu0 0.0
    %452 = vmatpush1.msra.mxu0 0.0
    %453 = vmatprep.subr.mxu0 0.0
    %454 = vmatpush1.msra.mxu0 0.0
    %455 = vmatprep.subr.mxu0 0.0
    %456 = vmatpush1.msra.mxu0 0.0
    %457 = vmatprep.subr.mxu0 0.0
    %458 = vmatpush1.msra.mxu0 0.0
    %459 = vmatprep.subr.mxu0 0.0
    %460 = vmatpush1.msra.mxu0 0.0
    %461 = vmatprep.subr.mxu0 0.0
    %462 = vmatpush1.msra.mxu0 0.0
    %463 = vmatprep.subr.mxu0 0.0
    %464 = vmatpush1.msra.mxu0 0.0
    %465 = vmatprep.subr.mxu0 0.0
    %466 = vmatpush1.msra.mxu0 0.0
    %467 = vmatprep.subr.mxu0 0.0
    %468 = vmatpush1.msra.mxu0 0.0
    %469 = vmatprep.subr.mxu0 0.0
    %470 = vmatpush1.msra.mxu0 0.0
    %471 = vmatprep.subr.mxu0 0.0
    %472 = vmatpush1.msra.mxu0 0.0
    %473 = vmatprep.subr.mxu0 0.0
    %474 = vmatpush1.msra.mxu0 0.0
    %475 = vmatprep.subr.mxu0 0.0
    %476 = vmatpush1.msra.mxu0 0.0
    %477 = vmatprep.subr.mxu0 0.0
    %478 = vmatpush1.msra.mxu0 0.0
    %479 = vmatprep.subr.mxu0 0.0
    %480 = vmatpush1.msra.mxu0 0.0
    %481 = vmatprep.mubr.f32.mxu0 0.0
    %482 = vmatmul.mubr.f32.gmra.mrb[0].mxu0 %v131
    %v483 = vpop.f32.mrb[0].mxu0
    %v484 = vadd.f32 %v413, %v483
    %v485 = vpop.f32.mrb[0].mxu0
    %v486 = vadd.f32 %v415, %v485
    %487 = vdwg.mxu0
    %488 = vmatprep.subr.mxu0 %v135
    %489 = vmatpush1.msra.mxu0 %v134
    %490 = vmatprep.subr.mxu0 %v139
    %491 = vmatpush1.msra.mxu0 %v138
    %492 = vmatprep.subr.mxu0 %v143
    %493 = vmatpush1.msra.mxu0 %v142
    %494 = vmatprep.subr.mxu0 %v147
    %495 = vmatpush1.msra.mxu0 %v146
    %496 = vmatprep.subr.mxu0 %v151
    %497 = vmatpush1.msra.mxu0 %v150
    %498 = vmatprep.subr.mxu0 %v155
    %499 = vmatpush1.msra.mxu0 %v154
    %500 = vmatprep.subr.mxu0 %v159
    %501 = vmatpush1.msra.mxu0 %v158
    %502 = vmatprep.subr.mxu0 %v163
    %503 = vmatpush1.msra.mxu0 %v162
    %504 = vmatprep.subr.mxu0 %v167
    %505 = vmatpush1.msra.mxu0 %v166
    %506 = vmatprep.subr.mxu0 %v171
    %507 = vmatpush1.msra.mxu0 %v170
    %508 = vmatprep.subr.mxu0 %v175
    %509 = vmatpush1.msra.mxu0 %v174
    %510 = vmatprep.subr.mxu0 %v179
    %511 = vmatpush1.msra.mxu0 %v178
    %512 = vmatprep.subr.mxu0 %v183
    %513 = vmatpush1.msra.mxu0 %v182
    %514 = vmatprep.subr.mxu0 %v187
    %515 = vmatpush1.msra.mxu0 %v186
    %516 = vmatprep.subr.mxu0 %v191
    %517 = vmatpush1.msra.mxu0 %v190
    %518 = vmatprep.subr.mxu0 %v195
    %519 = vmatpush1.msra.mxu0 %v194
    %520 = vmatprep.subr.mxu0 %v199
    %521 = vmatpush1.msra.mxu0 %v198
    %522 = vmatprep.subr.mxu0 %v203
    %523 = vmatpush1.msra.mxu0 %v202
    %524 = vmatprep.subr.mxu0 %v207
    %525 = vmatpush1.msra.mxu0 %v206
    %526 = vmatprep.subr.mxu0 %v211
    %527 = vmatpush1.msra.mxu0 %v210
    %528 = vmatprep.subr.mxu0 %v215
    %529 = vmatpush1.msra.mxu0 %v214
    %530 = vmatprep.subr.mxu0 %v219
    %531 = vmatpush1.msra.mxu0 %v218
    %532 = vmatprep.subr.mxu0 %v223
    %533 = vmatpush1.msra.mxu0 %v222
    %534 = vmatprep.subr.mxu0 %v227
    %535 = vmatpush1.msra.mxu0 %v226
    %536 = vmatprep.subr.mxu0 %v231
    %537 = vmatpush1.msra.mxu0 %v230
    %538 = vmatprep.subr.mxu0 %v235
    %539 = vmatpush1.msra.mxu0 %v234
    %540 = vmatprep.subr.mxu0 %v239
    %541 = vmatpush1.msra.mxu0 %v238
    %542 = vmatprep.subr.mxu0 %v243
    %543 = vmatpush1.msra.mxu0 %v242
    %544 = vmatprep.subr.mxu0 %v247
    %545 = vmatpush1.msra.mxu0 %v246
    %546 = vmatprep.subr.mxu0 %v251
    %547 = vmatpush1.msra.mxu0 %v250
    %548 = vmatprep.subr.mxu0 %v255
    %549 = vmatpush1.msra.mxu0 %v254
    %550 = vmatprep.subr.mxu0 %v259
    %551 = vmatpush1.msra.mxu0 %v258
    %552 = vmatprep.mubr.f32.mxu0 %v130
    %553 = vmatmul.mubr.f32.gmra.mrb[0].mxu0 %v129
    %v554 = vpop.f32.mrb[0].mxu0
    %v555 = vadd.f32 %v337, %v554
    %v556 = vpop.f32.mrb[0].mxu0
    %v557 = vadd.f32 %v341, %v556
    %558 = vdwg.mxu0
    %559 = vmatprep.subr.mxu0 %v263
    %560 = vmatpush1.msra.mxu0 %v262
    %561 = vmatprep.subr.mxu0 %v267
    %562 = vmatpush1.msra.mxu0 %v266
    %563 = vmatprep.subr.mxu0 %v271
    %564 = vmatpush1.msra.mxu0 %v270
    %565 = vmatprep.subr.mxu0 %v275
    %566 = vmatpush1.msra.mxu0 %v274
    %567 = vmatprep.subr.mxu0 %v279
    %568 = vmatpush1.msra.mxu0 %v278
    %569 = vmatprep.subr.mxu0 %v283
    %570 = vmatpush1.msra.mxu0 %v282
    %571 = vmatprep.subr.mxu0 %v287
    %572 = vmatpush1.msra.mxu0 %v286
    %573 = vmatprep.subr.mxu0 %v291
    %574 = vmatpush1.msra.mxu0 %v290
    %575 = vmatprep.subr.mxu0 %v295
    %576 = vmatpush1.msra.mxu0 %v294
    %577 = vmatprep.subr.mxu0 %v299
    %578 = vmatpush1.msra.mxu0 %v298
    %579 = vmatprep.subr.mxu0 %v303
    %580 = vmatpush1.msra.mxu0 %v302
    %581 = vmatprep.subr.mxu0 %v307
    %582 = vmatpush1.msra.mxu0 %v306
    %583 = vmatprep.subr.mxu0 %v311
    %584 = vmatpush1.msra.mxu0 %v310
    %585 = vmatprep.subr.mxu0 %v315
    %586 = vmatpush1.msra.mxu0 %v314
    %587 = vmatprep.subr.mxu0 %v319
    %588 = vmatpush1.msra.mxu0 %v318
    %589 = vmatprep.subr.mxu0 %v323
    %590 = vmatpush1.msra.mxu0 %v322
    %591 = vmatprep.subr.mxu0 0.0
    %592 = vmatpush1.msra.mxu0 0.0
    %593 = vmatprep.subr.mxu0 0.0
    %594 = vmatpush1.msra.mxu0 0.0
    %595 = vmatprep.subr.mxu0 0.0
    %596 = vmatpush1.msra.mxu0 0.0
    %597 = vmatprep.subr.mxu0 0.0
    %598 = vmatpush1.msra.mxu0 0.0
    %599 = vmatprep.subr.mxu0 0.0
    %600 = vmatpush1.msra.mxu0 0.0
    %601 = vmatprep.subr.mxu0 0.0
    %602 = vmatpush1.msra.mxu0 0.0
    %603 = vmatprep.subr.mxu0 0.0
    %604 = vmatpush1.msra.mxu0 0.0
    %605 = vmatprep.subr.mxu0 0.0
    %606 = vmatpush1.msra.mxu0 0.0
    %607 = vmatprep.subr.mxu0 0.0
    %608 = vmatpush1.msra.mxu0 0.0
    %609 = vmatprep.subr.mxu0 0.0
    %610 = vmatpush1.msra.mxu0 0.0
    %611 = vmatprep.subr.mxu0 0.0
    %612 = vmatpush1.msra.mxu0 0.0
    %613 = vmatprep.subr.mxu0 0.0
    %614 = vmatpush1.msra.mxu0 0.0
    %615 = vmatprep.subr.mxu0 0.0
    %616 = vmatpush1.msra.mxu0 0.0
    %617 = vmatprep.subr.mxu0 0.0
    %618 = vmatpush1.msra.mxu0 0.0
    %619 = vmatprep.subr.mxu0 0.0
    %620 = vmatpush1.msra.mxu0 0.0
    %621 = vmatprep.subr.mxu0 0.0
    %622 = vmatpush1.msra.mxu0 0.0
    %623 = vmatprep.mubr.f32.mxu0 0.0
    %624 = vmatmul.mubr.f32.gmra.mrb[0].mxu0 %v131
    %v625 = vpop.f32.mrb[0].mxu0
    %v626 = vadd.f32 %v555, %v625
    %v627 = vpop.f32.mrb[0].mxu0
    %v628 = vadd.f32 %v557, %v627
    %629 = vdwg.mxu0
    %630 = vst [vmem:[#allocation2] sm:$0xff] %v484
    %631 = vst [vmem:[#allocation2 + $0x8] sm:$0xff] %v486
    %632 = vst [vmem:[#allocation2 + $0x10] sm:$0xff] %v626
    %633 = vst [vmem:[#allocation2 + $0x18] sm:$0xff] %v628
    %v634 = vld [vmem:[#allocation11] sm:$0xff]
    %v635 = vld [vmem:[#allocation11 + $0x8] sm:$0xff]
    %v636 = vld [vmem:[#allocation11 + $0x10] sm:$0xff]
    %v637 = vld [vmem:[#allocation11 + $0x18] sm:$0xff]
    %v638 = vld [vmem:[#allocation11 + $0x20] sm:$0xff]
    %v639 = vld [vmem:[#allocation11 + $0x28] sm:$0xff]
    %v640 = vld [vmem:[#allocation11 + $0x30] sm:$0xff]
    %v641 = vld [vmem:[#allocation11 + $0x38] sm:$0xff]
    %v642 = vld [vmem:[#allocation11 + $0x40] sm:$0xff]
    %v643 = vld [vmem:[#allocation11 + $0x48] sm:$0xff]
    %v644 = vld [vmem:[#allocation11 + $0x50] sm:$0xff]
    %v645 = vld [vmem:[#allocation11 + $0x58] sm:$0xff]
    %v646 = vld [vmem:[#allocation11 + $0x60] sm:$0xff]
    %v647 = vld [vmem:[#allocation11 + $0x68] sm:$0xff]
    %v648 = vld [vmem:[#allocation11 + $0x70] sm:$0xff]
    %v649 = vld [vmem:[#allocation11 + $0x78] sm:$0xff]
    %v650 = vld [vmem:[#allocation11 + $0x80] sm:$0xff]
    %v651 = vld [vmem:[#allocation11 + $0x88] sm:$0xff]
    %v652 = vld [vmem:[#allocation11 + $0x90] sm:$0xff]
    %v653 = vld [vmem:[#allocation11 + $0x98] sm:$0xff]
    %v654 = vld [vmem:[#allocation11 + $0xa0] sm:$0xff]
    %v655 = vld [vmem:[#allocation11 + $0xa8] sm:$0xff]
    %v656 = vld [vmem:[#allocation11 + $0xb0] sm:$0xff]
    %v657 = vld [vmem:[#allocation11 + $0xb8] sm:$0xff]
    %v658 = vld [vmem:[#allocation11 + $0xc0] sm:$0xff]
    %v659 = vld [vmem:[#allocation11 + $0xc8] sm:$0xff]
    %v660 = vld [vmem:[#allocation11 + $0xd0] sm:$0xff]
    %v661 = vld [vmem:[#allocation11 + $0xd8] sm:$0xff]
    %v662 = vld [vmem:[#allocation11 + $0xe0] sm:$0xff]
    %v663 = vld [vmem:[#allocation11 + $0xe8] sm:$0xff]
    %v664 = vld [vmem:[#allocation11 + $0xf0] sm:$0xff]
    %v665 = vld [vmem:[#allocation11 + $0xf8] sm:$0xff]
    %v666 = vld [vmem:[#allocation11 + $0x100] sm:$0xff]
    %v667 = vld [vmem:[#allocation11 + $0x108] sm:$0xff]
    %v668 = vld [vmem:[#allocation11 + $0x110] sm:$0xff]
    %v669 = vld [vmem:[#allocation11 + $0x118] sm:$0xff]
    %v670 = vld [vmem:[#allocation11 + $0x120] sm:$0xff]
    %v671 = vld [vmem:[#allocation11 + $0x128] sm:$0xff]
    %v672 = vld [vmem:[#allocation11 + $0x130] sm:$0xff]
    %v673 = vld [vmem:[#allocation11 + $0x138] sm:$0xff]
    %v674 = vld [vmem:[#allocation11 + $0x140] sm:$0xff]
    %v675 = vld [vmem:[#allocation11 + $0x148] sm:$0xff]
    %v676 = vld [vmem:[#allocation11 + $0x150] sm:$0xff]
    %v677 = vld [vmem:[#allocation11 + $0x158] sm:$0xff]
    %v678 = vld [vmem:[#allocation11 + $0x160] sm:$0xff]
    %v679 = vld [vmem:[#allocation11 + $0x168] sm:$0xff]
    %v680 = vld [vmem:[#allocation11 + $0x170] sm:$0xff]
    %v681 = vld [vmem:[#allocation11 + $0x178] sm:$0xff]
    %v682 = vld [vmem:[#allocation11 + $0x180] sm:$0xff]
    %v683 = vld [vmem:[#allocation11 + $0x188] sm:$0xff]
    %v684 = vld [vmem:[#allocation11 + $0x190] sm:$0xff]
    %v685 = vld [vmem:[#allocation11 + $0x198] sm:$0xff]
    %v686 = vld [vmem:[#allocation11 + $0x1a0] sm:$0xff]
    %v687 = vld [vmem:[#allocation11 + $0x1a8] sm:$0xff]
    %v688 = vld [vmem:[#allocation11 + $0x1b0] sm:$0xff]
    %v689 = vld [vmem:[#allocation11 + $0x1b8] sm:$0xff]
    %v690 = vld [vmem:[#allocation11 + $0x1c0] sm:$0xff]
    %v691 = vld [vmem:[#allocation11 + $0x1c8] sm:$0xff]
    %v692 = vld [vmem:[#allocation11 + $0x1d0] sm:$0xff]
    %v693 = vld [vmem:[#allocation11 + $0x1d8] sm:$0xff]
    %v694 = vld [vmem:[#allocation11 + $0x1e0] sm:$0xff]
    %v695 = vld [vmem:[#allocation11 + $0x1e8] sm:$0xff]
    %v696 = vld [vmem:[#allocation11 + $0x1f0] sm:$0xff]
    %v697 = vld [vmem:[#allocation11 + $0x1f8] sm:$0xff]
    %v698 = vld [vmem:[#allocation11 + $0x200] sm:$0xff]
    %v699 = vld [vmem:[#allocation11 + $0x208] sm:$0xff]
    %v700 = vld [vmem:[#allocation11 + $0x210] sm:$0xff]
    %v701 = vld [vmem:[#allocation11 + $0x218] sm:$0xff]
    %v702 = vld [vmem:[#allocation11 + $0x220] sm:$0xff]
    %v703 = vld [vmem:[#allocation11 + $0x228] sm:$0xff]
    %v704 = vld [vmem:[#allocation11 + $0x230] sm:$0xff]
    %v705 = vld [vmem:[#allocation11 + $0x238] sm:$0xff]
    %v706 = vld [vmem:[#allocation11 + $0x240] sm:$0xff]
    %v707 = vld [vmem:[#allocation11 + $0x248] sm:$0xff]
    %v708 = vld [vmem:[#allocation11 + $0x250] sm:$0xff]
    %v709 = vld [vmem:[#allocation11 + $0x258] sm:$0xff]
    %v710 = vld [vmem:[#allocation11 + $0x260] sm:$0xff]
    %v711 = vld [vmem:[#allocation11 + $0x268] sm:$0xff]
    %v712 = vld [vmem:[#allocation11 + $0x270] sm:$0xff]
    %v713 = vld [vmem:[#allocation11 + $0x278] sm:$0xff]
    %v714 = vld [vmem:[#allocation11 + $0x280] sm:$0xff]
    %v715 = vld [vmem:[#allocation11 + $0x288] sm:$0xff]
    %v716 = vld [vmem:[#allocation11 + $0x290] sm:$0xff]
    %v717 = vld [vmem:[#allocation11 + $0x298] sm:$0xff]
    %v718 = vld [vmem:[#allocation11 + $0x2a0] sm:$0xff]
    %v719 = vld [vmem:[#allocation11 + $0x2a8] sm:$0xff]
    %v720 = vld [vmem:[#allocation11 + $0x2b0] sm:$0xff]
    %v721 = vld [vmem:[#allocation11 + $0x2b8] sm:$0xff]
    %v722 = vld [vmem:[#allocation11 + $0x2c0] sm:$0xff]
    %v723 = vld [vmem:[#allocation11 + $0x2c8] sm:$0xff]
    %v724 = vld [vmem:[#allocation11 + $0x2d0] sm:$0xff]
    %v725 = vld [vmem:[#allocation11 + $0x2d8] sm:$0xff]
    %v726 = vld [vmem:[#allocation11 + $0x2e0] sm:$0xff]
    %v727 = vld [vmem:[#allocation11 + $0x2e8] sm:$0xff]
    %v728 = vld [vmem:[#allocation11 + $0x2f0] sm:$0xff]
    %v729 = vld [vmem:[#allocation11 + $0x2f8] sm:$0xff]
    %v730 = vld [vmem:[#allocation11 + $0x300] sm:$0xff]
    %v731 = vld [vmem:[#allocation11 + $0x308] sm:$0xff]
    %v732 = vld [vmem:[#allocation11 + $0x310] sm:$0xff]
    %v733 = vld [vmem:[#allocation11 + $0x318] sm:$0xff]
    %v734 = vld [vmem:[#allocation11 + $0x320] sm:$0xff]
    %v735 = vld [vmem:[#allocation11 + $0x328] sm:$0xff]
    %v736 = vld [vmem:[#allocation11 + $0x330] sm:$0xff]
    %v737 = vld [vmem:[#allocation11 + $0x338] sm:$0xff]
    %v738 = vld [vmem:[#allocation11 + $0x340] sm:$0xff]
    %v739 = vld [vmem:[#allocation11 + $0x348] sm:$0xff]
    %v740 = vld [vmem:[#allocation11 + $0x350] sm:$0xff]
    %v741 = vld [vmem:[#allocation11 + $0x358] sm:$0xff]
    %v742 = vld [vmem:[#allocation11 + $0x360] sm:$0xff]
    %v743 = vld [vmem:[#allocation11 + $0x368] sm:$0xff]
    %v744 = vld [vmem:[#allocation11 + $0x370] sm:$0xff]
    %v745 = vld [vmem:[#allocation11 + $0x378] sm:$0xff]
    %v746 = vld [vmem:[#allocation11 + $0x380] sm:$0xff]
    %v747 = vld [vmem:[#allocation11 + $0x388] sm:$0xff]
    %v748 = vld [vmem:[#allocation11 + $0x390] sm:$0xff]
    %v749 = vld [vmem:[#allocation11 + $0x398] sm:$0xff]
    %v750 = vld [vmem:[#allocation11 + $0x3a0] sm:$0xff]
    %v751 = vld [vmem:[#allocation11 + $0x3a8] sm:$0xff]
    %v752 = vld [vmem:[#allocation11 + $0x3b0] sm:$0xff]
    %v753 = vld [vmem:[#allocation11 + $0x3b8] sm:$0xff]
    %v754 = vld [vmem:[#allocation11 + $0x3c0] sm:$0xff]
    %v755 = vld [vmem:[#allocation11 + $0x3c8] sm:$0xff]
    %v756 = vld [vmem:[#allocation11 + $0x3d0] sm:$0xff]
    %v757 = vld [vmem:[#allocation11 + $0x3d8] sm:$0xff]
    %v758 = vld [vmem:[#allocation11 + $0x3e0] sm:$0xff]
    %v759 = vld [vmem:[#allocation11 + $0x3e8] sm:$0xff]
    %v760 = vld [vmem:[#allocation11 + $0x3f0] sm:$0xff]
    %v761 = vld [vmem:[#allocation11 + $0x3f8] sm:$0xff]
    %v762 = vld [vmem:[#allocation11 + $0x400] sm:$0xff]
    %v763 = vld [vmem:[#allocation11 + $0x408] sm:$0xff]
    %v764 = vld [vmem:[#allocation11 + $0x410] sm:$0xff]
    %v765 = vld [vmem:[#allocation11 + $0x418] sm:$0xff]
    %v766 = vld [vmem:[#allocation11 + $0x420] sm:$0xff]
    %v767 = vld [vmem:[#allocation11 + $0x428] sm:$0xff]
    %v768 = vld [vmem:[#allocation11 + $0x430] sm:$0xff]
    %v769 = vld [vmem:[#allocation11 + $0x438] sm:$0xff]
    %v770 = vld [vmem:[#allocation11 + $0x440] sm:$0xff]
    %v771 = vld [vmem:[#allocation11 + $0x448] sm:$0xff]
    %v772 = vld [vmem:[#allocation11 + $0x450] sm:$0xff]
    %v773 = vld [vmem:[#allocation11 + $0x458] sm:$0xff]
    %v774 = vld [vmem:[#allocation11 + $0x460] sm:$0xff]
    %v775 = vld [vmem:[#allocation11 + $0x468] sm:$0xff]
    %v776 = vld [vmem:[#allocation11 + $0x470] sm:$0xff]
    %v777 = vld [vmem:[#allocation11 + $0x478] sm:$0xff]
    %v778 = vld [vmem:[#allocation11 + $0x480] sm:$0xff]
    %v779 = vld [vmem:[#allocation11 + $0x488] sm:$0xff]
    %v780 = vld [vmem:[#allocation11 + $0x490] sm:$0xff]
    %v781 = vld [vmem:[#allocation11 + $0x498] sm:$0xff]
    %v782 = vld [vmem:[#allocation11 + $0x4a0] sm:$0xff]
    %v783 = vld [vmem:[#allocation11 + $0x4a8] sm:$0xff]
    %v784 = vld [vmem:[#allocation11 + $0x4b0] sm:$0xff]
    %v785 = vld [vmem:[#allocation11 + $0x4b8] sm:$0xff]
    %v786 = vld [vmem:[#allocation11 + $0x4c0] sm:$0xff]
    %v787 = vld [vmem:[#allocation11 + $0x4c8] sm:$0xff]
    %v788 = vld [vmem:[#allocation11 + $0x4d0] sm:$0xff]
    %v789 = vld [vmem:[#allocation11 + $0x4d8] sm:$0xff]
    %v790 = vld [vmem:[#allocation11 + $0x4e0] sm:$0xff]
    %v791 = vld [vmem:[#allocation11 + $0x4e8] sm:$0xff]
    %v792 = vld [vmem:[#allocation11 + $0x4f0] sm:$0xff]
    %v793 = vld [vmem:[#allocation11 + $0x4f8] sm:$0xff]
    %v794 = vld [vmem:[#allocation11 + $0x500] sm:$0xff]
    %v795 = vld [vmem:[#allocation11 + $0x508] sm:$0xff]
    %v796 = vld [vmem:[#allocation11 + $0x510] sm:$0xff]
    %v797 = vld [vmem:[#allocation11 + $0x518] sm:$0xff]
    %v798 = vld [vmem:[#allocation11 + $0x520] sm:$0xff]
    %v799 = vld [vmem:[#allocation11 + $0x528] sm:$0xff]
    %v800 = vld [vmem:[#allocation11 + $0x530] sm:$0xff]
    %v801 = vld [vmem:[#allocation11 + $0x538] sm:$0xff]
    %v802 = vld [vmem:[#allocation11 + $0x540] sm:$0xff]
    %v803 = vld [vmem:[#allocation11 + $0x548] sm:$0xff]
    %v804 = vld [vmem:[#allocation11 + $0x550] sm:$0xff]
    %v805 = vld [vmem:[#allocation11 + $0x558] sm:$0xff]
    %v806 = vld [vmem:[#allocation11 + $0x560] sm:$0xff]
    %v807 = vld [vmem:[#allocation11 + $0x568] sm:$0xff]
    %v808 = vld [vmem:[#allocation11 + $0x570] sm:$0xff]
    %v809 = vld [vmem:[#allocation11 + $0x578] sm:$0xff]
    %v810 = vld [vmem:[#allocation11 + $0x580] sm:$0xff]
    %v811 = vld [vmem:[#allocation11 + $0x588] sm:$0xff]
    %v812 = vld [vmem:[#allocation11 + $0x590] sm:$0xff]
    %v813 = vld [vmem:[#allocation11 + $0x598] sm:$0xff]
    %v814 = vld [vmem:[#allocation11 + $0x5a0] sm:$0xff]
    %v815 = vld [vmem:[#allocation11 + $0x5a8] sm:$0xff]
    %v816 = vld [vmem:[#allocation11 + $0x5b0] sm:$0xff]
    %v817 = vld [vmem:[#allocation11 + $0x5b8] sm:$0xff]
    %v818 = vld [vmem:[#allocation11 + $0x5c0] sm:$0xff]
    %v819 = vld [vmem:[#allocation11 + $0x5c8] sm:$0xff]
    %v820 = vld [vmem:[#allocation11 + $0x5d0] sm:$0xff]
    %v821 = vld [vmem:[#allocation11 + $0x5d8] sm:$0xff]
    %v822 = vld [vmem:[#allocation11 + $0x5e0] sm:$0xff]
    %v823 = vld [vmem:[#allocation11 + $0x5e8] sm:$0xff]
    %v824 = vld [vmem:[#allocation11 + $0x5f0] sm:$0xff]
    %v825 = vld [vmem:[#allocation11 + $0x5f8] sm:$0xff]
    %826 = vmatprep.subr.mxu0 %v635
    %827 = vmatpush1.msra.mxu0 %v634
    %828 = vmatprep.subr.mxu0 %v639
    %829 = vmatpush1.msra.mxu0 %v638
    %830 = vmatprep.subr.mxu0 %v643
    %831 = vmatpush1.msra.mxu0 %v642
    %832 = vmatprep.subr.mxu0 %v647
    %833 = vmatpush1.msra.mxu0 %v646
    %834 = vmatprep.subr.mxu0 %v651
    %835 = vmatpush1.msra.mxu0 %v650
    %836 = vmatprep.subr.mxu0 %v655
    %837 = vmatpush1.msra.mxu0 %v654
    %838 = vmatprep.subr.mxu0 %v659
    %839 = vmatpush1.msra.mxu0 %v658
    %840 = vmatprep.subr.mxu0 %v663
    %841 = vmatpush1.msra.mxu0 %v662
    %842 = vmatprep.subr.mxu0 %v667
    %843 = vmatpush1.msra.mxu0 %v666
    %844 = vmatprep.subr.mxu0 %v671
    %845 = vmatpush1.msra.mxu0 %v670
    %846 = vmatprep.subr.mxu0 %v675
    %847 = vmatpush1.msra.mxu0 %v674
    %848 = vmatprep.subr.mxu0 %v679
    %849 = vmatpush1.msra.mxu0 %v678
    %850 = vmatprep.subr.mxu0 %v683
    %851 = vmatpush1.msra.mxu0 %v682
    %852 = vmatprep.subr.mxu0 %v687
    %853 = vmatpush1.msra.mxu0 %v686
    %854 = vmatprep.subr.mxu0 %v691
    %855 = vmatpush1.msra.mxu0 %v690
    %856 = vmatprep.subr.mxu0 %v695
    %857 = vmatpush1.msra.mxu0 %v694
    %858 = vmatprep.subr.mxu0 %v699
    %859 = vmatpush1.msra.mxu0 %v698
    %860 = vmatprep.subr.mxu0 %v703
    %861 = vmatpush1.msra.mxu0 %v702
    %862 = vmatprep.subr.mxu0 %v707
    %863 = vmatpush1.msra.mxu0 %v706
    %864 = vmatprep.subr.mxu0 %v711
    %865 = vmatpush1.msra.mxu0 %v710
    %866 = vmatprep.subr.mxu0 %v715
    %867 = vmatpush1.msra.mxu0 %v714
    %868 = vmatprep.subr.mxu0 %v719
    %869 = vmatpush1.msra.mxu0 %v718
    %870 = vmatprep.subr.mxu0 %v723
    %871 = vmatpush1.msra.mxu0 %v722
    %872 = vmatprep.subr.mxu0 %v727
    %873 = vmatpush1.msra.mxu0 %v726
    %874 = vmatprep.subr.mxu0 %v731
    %875 = vmatpush1.msra.mxu0 %v730
    %876 = vmatprep.subr.mxu0 %v735
    %877 = vmatpush1.msra.mxu0 %v734
    %878 = vmatprep.subr.mxu0 %v739
    %879 = vmatpush1.msra.mxu0 %v738
    %880 = vmatprep.subr.mxu0 %v743
    %881 = vmatpush1.msra.mxu0 %v742
    %882 = vmatprep.subr.mxu0 %v747
    %883 = vmatpush1.msra.mxu0 %v746
    %884 = vmatprep.subr.mxu0 %v751
    %885 = vmatpush1.msra.mxu0 %v750
    %886 = vmatprep.subr.mxu0 %v755
    %887 = vmatpush1.msra.mxu0 %v754
    %888 = vmatprep.subr.mxu0 %v759
    %889 = vmatpush1.msra.mxu0 %v758
    %890 = vmatprep.mubr.f32.mxu0 %v130
    %891 = vmatmul.mubr.f32.gmra.mrb[0].mxu0 %v129
    %v892 = vpop.f32.mrb[0].mxu0
    %v893 = vadd.f32 0.0, %v892
    %v894 = vpop.f32.mrb[0].mxu0
    %v895 = vadd.f32 0.0, %v894
    %896 = vdwg.mxu0
    %897 = vmatprep.subr.mxu0 %v763
    %898 = vmatpush1.msra.mxu0 %v762
    %899 = vmatprep.subr.mxu0 %v767
    %900 = vmatpush1.msra.mxu0 %v766
    %901 = vmatprep.subr.mxu0 %v771
    %902 = vmatpush1.msra.mxu0 %v770
    %903 = vmatprep.subr.mxu0 %v775
    %904 = vmatpush1.msra.mxu0 %v774
    %905 = vmatprep.subr.mxu0 %v779
    %906 = vmatpush1.msra.mxu0 %v778
    %907 = vmatprep.subr.mxu0 %v783
    %908 = vmatpush1.msra.mxu0 %v782
    %909 = vmatprep.subr.mxu0 %v787
    %910 = vmatpush1.msra.mxu0 %v786
    %911 = vmatprep.subr.mxu0 %v791
    %912 = vmatpush1.msra.mxu0 %v790
    %913 = vmatprep.subr.mxu0 %v795
    %914 = vmatpush1.msra.mxu0 %v794
    %915 = vmatprep.subr.mxu0 %v799
    %916 = vmatpush1.msra.mxu0 %v798
    %917 = vmatprep.subr.mxu0 %v803
    %918 = vmatpush1.msra.mxu0 %v802
    %919 = vmatprep.subr.mxu0 %v807
    %920 = vmatpush1.msra.mxu0 %v806
    %921 = vmatprep.subr.mxu0 %v811
    %922 = vmatpush1.msra.mxu0 %v810
    %923 = vmatprep.subr.mxu0 %v815
    %924 = vmatpush1.msra.mxu0 %v814
    %925 = vmatprep.subr.mxu0 %v819
    %926 = vmatpush1.msra.mxu0 %v818
    %927 = vmatprep.subr.mxu0 %v823
    %928 = vmatpush1.msra.mxu0 %v822
    %929 = vmatprep.subr.mxu0 0.0
    %930 = vmatpush1.msra.mxu0 0.0
    %931 = vmatprep.subr.mxu0 0.0
    %932 = vmatpush1.msra.mxu0 0.0
    %933 = vmatprep.subr.mxu0 0.0
    %934 = vmatpush1.msra.mxu0 0.0
    %935 = vmatprep.subr.mxu0 0.0
    %936 = vmatpush1.msra.mxu0 0.0
    %937 = vmatprep.subr.mxu0 0.0
    %938 = vmatpush1.msra.mxu0 0.0
    %939 = vmatprep.subr.mxu0 0.0
    %940 = vmatpush1.msra.mxu0 0.0
    %941 = vmatprep.subr.mxu0 0.0
    %942 = vmatpush1.msra.mxu0 0.0
    %943 = vmatprep.subr.mxu0 0.0
    %944 = vmatpush1.msra.mxu0 0.0
    %945 = vmatprep.subr.mxu0 0.0
    %946 = vmatpush1.msra.mxu0 0.0
    %947 = vmatprep.subr.mxu0 0.0
    %948 = vmatpush1.msra.mxu0 0.0
    %949 = vmatprep.subr.mxu0 0.0
    %950 = vmatpush1.msra.mxu0 0.0
    %951 = vmatprep.subr.mxu0 0.0
    %952 = vmatpush1.msra.mxu0 0.0
    %953 = vmatprep.subr.mxu0 0.0
    %954 = vmatpush1.msra.mxu0 0.0
    %955 = vmatprep.subr.mxu0 0.0
    %956 = vmatpush1.msra.mxu0 0.0
    %957 = vmatprep.subr.mxu0 0.0
    %958 = vmatpush1.msra.mxu0 0.0
    %959 = vmatprep.subr.mxu0 0.0
    %960 = vmatpush1.msra.mxu0 0.0
    %961 = vmatprep.mubr.f32.mxu0 0.0
    %962 = vmatmul.mubr.f32.gmra.mrb[0].mxu0 %v131
    %v963 = vpop.f32.mrb[0].mxu0
    %v964 = vadd.f32 %v893, %v963
    %v965 = vpop.f32.mrb[0].mxu0
    %v966 = vadd.f32 %v895, %v965
    %967 = vdwg.mxu0
    %968 = vmatprep.subr.mxu0 %v637
    %969 = vmatpush1.msra.mxu0 %v636
    %970 = vmatprep.subr.mxu0 %v641
    %971 = vmatpush1.msra.mxu0 %v640
    %972 = vmatprep.subr.mxu0 %v645
    %973 = vmatpush1.msra.mxu0 %v644
    %974 = vmatprep.subr.mxu0 %v649
    %975 = vmatpush1.msra.mxu0 %v648
    %976 = vmatprep.subr.mxu0 %v653
    %977 = vmatpush1.msra.mxu0 %v652
    %978 = vmatprep.subr.mxu0 %v657
    %979 = vmatpush1.msra.mxu0 %v656
    %980 = vmatprep.subr.mxu0 %v661
    %981 = vmatpush1.msra.mxu0 %v660
    %982 = vmatprep.subr.mxu0 %v665
    %983 = vmatpush1.msra.mxu0 %v664
    %984 = vmatprep.subr.mxu0 %v669
    %985 = vmatpush1.msra.mxu0 %v668
    %986 = vmatprep.subr.mxu0 %v673
    %987 = vmatpush1.msra.mxu0 %v672
    %988 = vmatprep.subr.mxu0 %v677
    %989 = vmatpush1.msra.mxu0 %v676
    %990 = vmatprep.subr.mxu0 %v681
    %991 = vmatpush1.msra.mxu0 %v680
    %992 = vmatprep.subr.mxu0 %v685
    %993 = vmatpush1.msra.mxu0 %v684
    %994 = vmatprep.subr.mxu0 %v689
    %995 = vmatpush1.msra.mxu0 %v688
    %996 = vmatprep.subr.mxu0 %v693
    %997 = vmatpush1.msra.mxu0 %v692
    %998 = vmatprep.subr.mxu0 %v697
    %999 = vmatpush1.msra.mxu0 %v696
    %1000 = vmatprep.subr.mxu0 %v701
    %1001 = vmatpush1.msra.mxu0 %v700
    %1002 = vmatprep.subr.mxu0 %v705
    %1003 = vmatpush1.msra.mxu0 %v704
    %1004 = vmatprep.subr.mxu0 %v709
    %1005 = vmatpush1.msra.mxu0 %v708
    %1006 = vmatprep.subr.mxu0 %v713
    %1007 = vmatpush1.msra.mxu0 %v712
    %1008 = vmatprep.subr.mxu0 %v717
    %1009 = vmatpush1.msra.mxu0 %v716
    %1010 = vmatprep.subr.mxu0 %v721
    %1011 = vmatpush1.msra.mxu0 %v720
    %1012 = vmatprep.subr.mxu0 %v725
    %1013 = vmatpush1.msra.mxu0 %v724
    %1014 = vmatprep.subr.mxu0 %v729
    %1015 = vmatpush1.msra.mxu0 %v728
    %1016 = vmatprep.subr.mxu0 %v733
    %1017 = vmatpush1.msra.mxu0 %v732
    %1018 = vmatprep.subr.mxu0 %v737
    %1019 = vmatpush1.msra.mxu0 %v736
    %1020 = vmatprep.subr.mxu0 %v741
    %1021 = vmatpush1.msra.mxu0 %v740
    %1022 = vmatprep.subr.mxu0 %v745
    %1023 = vmatpush1.msra.mxu0 %v744
    %1024 = vmatprep.subr.mxu0 %v749
    %1025 = vmatpush1.msra.mxu0 %v748
    %1026 = vmatprep.subr.mxu0 %v753
    %1027 = vmatpush1.msra.mxu0 %v752
    %1028 = vmatprep.subr.mxu0 %v757
    %1029 = vmatpush1.msra.mxu0 %v756
    %1030 = vmatprep.subr.mxu0 %v761
    %1031 = vmatpush1.msra.mxu0 %v760
    %1032 = vmatprep.mubr.f32.mxu0 %v130
    %1033 = vmatmul.mubr.f32.gmra.mrb[0].mxu0 %v129
    %v1034 = vpop.f32.mrb[0].mxu0
    %v1035 = vadd.f32 0.0, %v1034
    %v1036 = vpop.f32.mrb[0].mxu0
    %v1037 = vadd.f32 0.0, %v1036
    %1038 = vdwg.mxu0
    %1039 = vmatprep.subr.mxu0 %v765
    %1040 = vmatpush1.msra.mxu0 %v764
    %1041 = vmatprep.subr.mxu0 %v769
    %1042 = vmatpush1.msra.mxu0 %v768
    %1043 = vmatprep.subr.mxu0 %v773
    %1044 = vmatpush1.msra.mxu0 %v772
    %1045 = vmatprep.subr.mxu0 %v777
    %1046 = vmatpush1.msra.mxu0 %v776
    %1047 = vmatprep.subr.mxu0 %v781
    %1048 = vmatpush1.msra.mxu0 %v780
    %1049 = vmatprep.subr.mxu0 %v785
    %1050 = vmatpush1.msra.mxu0 %v784
    %1051 = vmatprep.subr.mxu0 %v789
    %1052 = vmatpush1.msra.mxu0 %v788
    %1053 = vmatprep.subr.mxu0 %v793
    %1054 = vmatpush1.msra.mxu0 %v792
    %1055 = vmatprep.subr.mxu0 %v797
    %1056 = vmatpush1.msra.mxu0 %v796
    %1057 = vmatprep.subr.mxu0 %v801
    %1058 = vmatpush1.msra.mxu0 %v800
    %1059 = vmatprep.subr.mxu0 %v805
    %1060 = vmatpush1.msra.mxu0 %v804
    %1061 = vmatprep.subr.mxu0 %v809
    %1062 = vmatpush1.msra.mxu0 %v808
    %1063 = vmatprep.subr.mxu0 %v813
    %1064 = vmatpush1.msra.mxu0 %v812
    %1065 = vmatprep.subr.mxu0 %v817
    %1066 = vmatpush1.msra.mxu0 %v816
    %1067 = vmatprep.subr.mxu0 %v821
    %1068 = vmatpush1.msra.mxu0 %v820
    %1069 = vmatprep.subr.mxu0 %v825
    %1070 = vmatpush1.msra.mxu0 %v824
    %1071 = vmatprep.subr.mxu0 0.0
    %1072 = vmatpush1.msra.mxu0 0.0
    %1073 = vmatprep.subr.mxu0 0.0
    %1074 = vmatpush1.msra.mxu0 0.0
    %1075 = vmatprep.subr.mxu0 0.0
    %1076 = vmatpush1.msra.mxu0 0.0
    %1077 = vmatprep.subr.mxu0 0.0
    %1078 = vmatpush1.msra.mxu0 0.0
    %1079 = vmatprep.subr.mxu0 0.0
    %1080 = vmatpush1.msra.mxu0 0.0
    %1081 = vmatprep.subr.mxu0 0.0
    %1082 = vmatpush1.msra.mxu0 0.0
    %1083 = vmatprep.subr.mxu0 0.0
    %1084 = vmatpush1.msra.mxu0 0.0
    %1085 = vmatprep.subr.mxu0 0.0
    %1086 = vmatpush1.msra.mxu0 0.0
    %1087 = vmatprep.subr.mxu0 0.0
    %1088 = vmatpush1.msra.mxu0 0.0
    %1089 = vmatprep.subr.mxu0 0.0
    %1090 = vmatpush1.msra.mxu0 0.0
    %1091 = vmatprep.subr.mxu0 0.0
    %1092 = vmatpush1.msra.mxu0 0.0
    %1093 = vmatprep.subr.mxu0 0.0
    %1094 = vmatpush1.msra.mxu0 0.0
    %1095 = vmatprep.subr.mxu0 0.0
    %1096 = vmatpush1.msra.mxu0 0.0
    %1097 = vmatprep.subr.mxu0 0.0
    %1098 = vmatpush1.msra.mxu0 0.0
    %1099 = vmatprep.subr.mxu0 0.0
    %1100 = vmatpush1.msra.mxu0 0.0
    %1101 = vmatprep.subr.mxu0 0.0
    %1102 = vmatpush1.msra.mxu0 0.0
    %1103 = vmatprep.mubr.f32.mxu0 0.0
    %1104 = vmatmul.mubr.f32.gmra.mrb[0].mxu0 %v131
    %v1105 = vpop.f32.mrb[0].mxu0
    %v1106 = vadd.f32 %v1035, %v1105
    %v1107 = vpop.f32.mrb[0].mxu0
    %v1108 = vadd.f32 %v1037, %v1107
    %1109 = vdwg.mxu0
    %1110 = vst [vmem:[#allocation3] sm:$0xff] %v964
    %1111 = vst [vmem:[#allocation3 + $0x8] sm:$0xff] %v966
    %1112 = vst [vmem:[#allocation3 + $0x10] sm:$0xff] %v1106
    %1113 = vst [vmem:[#allocation3 + $0x18] sm:$0xff] %v1108
    %1114 = vst [vmem:[#allocation6] sm:$0xff] 0.0
    %v1115 = vld [vmem:[#allocation2] ss:$8 sm:$0xf]
    %s1116 = scalar_lea.vmem [#allocation3], 7
    %v1117 = vld [vmem:[%s1116] ss:$8 sm:$0xf]
    %v1118 = vadd.f32 %v1115, %v1117
    %v1119 = vld [vmem:[#allocation13] sm:$0xff]
    %v1120 = vld [vmem:[#allocation13 + $0x8] sm:$0xff]
    %v1121 = vld [vmem:[#allocation13 + $0x10] sm:$0xff]
    %v1122 = vld [vmem:[#allocation13 + $0x18] sm:$0xff]
    %v1123 = vld [vmem:[#allocation13 + $0x20] sm:$0xff]
    %v1124 = vld [vmem:[#allocation13 + $0x28] sm:$0xff]
    %v1125 = vld [vmem:[#allocation13 + $0x30] sm:$0xff]
    %v1126 = vld [vmem:[#allocation13 + $0x38] sm:$0xff]
    %v1127 = vld [vmem:[#allocation13 + $0x40] sm:$0xff]
    %v1128 = vld [vmem:[#allocation13 + $0x48] sm:$0xff]
    %v1129 = vld [vmem:[#allocation13 + $0x50] sm:$0xff]
    %v1130 = vld [vmem:[#allocation13 + $0x58] sm:$0xff]
    %v1131 = vld [vmem:[#allocation13 + $0x60] sm:$0xff]
    %v1132 = vld [vmem:[#allocation13 + $0x68] sm:$0xff]
    %v1133 = vld [vmem:[#allocation13 + $0x70] sm:$0xff]
    %v1134 = vld [vmem:[#allocation13 + $0x78] sm:$0xff]
    %v1135 = vld [vmem:[#allocation13 + $0x80] sm:$0xff]
    %v1136 = vld [vmem:[#allocation13 + $0x88] sm:$0xff]
    %v1137 = vld [vmem:[#allocation13 + $0x90] sm:$0xff]
    %v1138 = vld [vmem:[#allocation13 + $0x98] sm:$0xff]
    %v1139 = vld [vmem:[#allocation13 + $0xa0] sm:$0xff]
    %v1140 = vld [vmem:[#allocation13 + $0xa8] sm:$0xff]
    %v1141 = vld [vmem:[#allocation13 + $0xb0] sm:$0xff]
    %v1142 = vld [vmem:[#allocation13 + $0xb8] sm:$0xff]
    %v1143 = vld [vmem:[#allocation13 + $0xc0] sm:$0xff]
    %v1144 = vld [vmem:[#allocation13 + $0xc8] sm:$0xff]
    %v1145 = vld [vmem:[#allocation13 + $0xd0] sm:$0xff]
    %v1146 = vld [vmem:[#allocation13 + $0xd8] sm:$0xff]
    %v1147 = vld [vmem:[#allocation13 + $0xe0] sm:$0xff]
    %v1148 = vld [vmem:[#allocation13 + $0xe8] sm:$0xff]
    %v1149 = vld [vmem:[#allocation13 + $0xf0] sm:$0xff]
    %v1150 = vld [vmem:[#allocation13 + $0xf8] sm:$0xff]
    %v1151 = vld [vmem:[#allocation13 + $0x100] sm:$0xff]
    %v1152 = vld [vmem:[#allocation13 + $0x108] sm:$0xff]
    %v1153 = vld [vmem:[#allocation13 + $0x110] sm:$0xff]
    %v1154 = vld [vmem:[#allocation13 + $0x118] sm:$0xff]
    %v1155 = vld [vmem:[#allocation13 + $0x120] sm:$0xff]
    %v1156 = vld [vmem:[#allocation13 + $0x128] sm:$0xff]
    %v1157 = vld [vmem:[#allocation13 + $0x130] sm:$0xff]
    %v1158 = vld [vmem:[#allocation13 + $0x138] sm:$0xff]
    %v1159 = vld [vmem:[#allocation13 + $0x140] sm:$0xff]
    %v1160 = vld [vmem:[#allocation13 + $0x148] sm:$0xff]
    %v1161 = vld [vmem:[#allocation13 + $0x150] sm:$0xff]
    %v1162 = vld [vmem:[#allocation13 + $0x158] sm:$0xff]
    %v1163 = vld [vmem:[#allocation13 + $0x160] sm:$0xff]
    %v1164 = vld [vmem:[#allocation13 + $0x168] sm:$0xff]
    %v1165 = vld [vmem:[#allocation13 + $0x170] sm:$0xff]
    %v1166 = vld [vmem:[#allocation13 + $0x178] sm:$0xff]
    %v1167 = vld [vmem:[#allocation13 + $0x180] sm:$0xff]
    %v1168 = vld [vmem:[#allocation13 + $0x188] sm:$0xff]
    %v1169 = vld [vmem:[#allocation13 + $0x190] sm:$0xff]
    %v1170 = vld [vmem:[#allocation13 + $0x198] sm:$0xff]
    %v1171 = vld [vmem:[#allocation13 + $0x1a0] sm:$0xff]
    %v1172 = vld [vmem:[#allocation13 + $0x1a8] sm:$0xff]
    %v1173 = vld [vmem:[#allocation13 + $0x1b0] sm:$0xff]
    %v1174 = vld [vmem:[#allocation13 + $0x1b8] sm:$0xff]
    %v1175 = vld [vmem:[#allocation13 + $0x1c0] sm:$0xff]
    %v1176 = vld [vmem:[#allocation13 + $0x1c8] sm:$0xff]
    %v1177 = vld [vmem:[#allocation13 + $0x1d0] sm:$0xff]
    %v1178 = vld [vmem:[#allocation13 + $0x1d8] sm:$0xff]
    %v1179 = vld [vmem:[#allocation13 + $0x1e0] sm:$0xff]
    %v1180 = vld [vmem:[#allocation13 + $0x1e8] sm:$0xff]
    %v1181 = vld [vmem:[#allocation13 + $0x1f0] sm:$0xff]
    %v1182 = vld [vmem:[#allocation13 + $0x1f8] sm:$0xff]
    %1183 = vmatprep.subr.mxu0 %v1120
    %1184 = vmatpush1.msra.mxu0 %v1119
    %1185 = vmatprep.subr.mxu0 %v1124
    %1186 = vmatpush1.msra.mxu0 %v1123
    %1187 = vmatprep.subr.mxu0 %v1128
    %1188 = vmatpush1.msra.mxu0 %v1127
    %1189 = vmatprep.subr.mxu0 %v1132
    %1190 = vmatpush1.msra.mxu0 %v1131
    %1191 = vmatprep.subr.mxu0 %v1136
    %1192 = vmatpush1.msra.mxu0 %v1135
    %1193 = vmatprep.subr.mxu0 %v1140
    %1194 = vmatpush1.msra.mxu0 %v1139
    %1195 = vmatprep.subr.mxu0 %v1144
    %1196 = vmatpush1.msra.mxu0 %v1143
    %1197 = vmatprep.subr.mxu0 %v1148
    %1198 = vmatpush1.msra.mxu0 %v1147
    %1199 = vmatprep.subr.mxu0 %v1152
    %1200 = vmatpush1.msra.mxu0 %v1151
    %1201 = vmatprep.subr.mxu0 %v1156
    %1202 = vmatpush1.msra.mxu0 %v1155
    %1203 = vmatprep.subr.mxu0 %v1160
    %1204 = vmatpush1.msra.mxu0 %v1159
    %1205 = vmatprep.subr.mxu0 %v1164
    %1206 = vmatpush1.msra.mxu0 %v1163
    %1207 = vmatprep.subr.mxu0 %v1168
    %1208 = vmatpush1.msra.mxu0 %v1167
    %1209 = vmatprep.subr.mxu0 %v1172
    %1210 = vmatpush1.msra.mxu0 %v1171
    %1211 = vmatprep.subr.mxu0 %v1176
    %1212 = vmatpush1.msra.mxu0 %v1175
    %1213 = vmatprep.subr.mxu0 %v1180
    %1214 = vmatpush1.msra.mxu0 %v1179
    %1215 = vmatprep.subr.mxu0 0.0
    %1216 = vmatpush1.msra.mxu0 0.0
    %1217 = vmatprep.subr.mxu0 0.0
    %1218 = vmatpush1.msra.mxu0 0.0
    %1219 = vmatprep.subr.mxu0 0.0
    %1220 = vmatpush1.msra.mxu0 0.0
    %1221 = vmatprep.subr.mxu0 0.0
    %1222 = vmatpush1.msra.mxu0 0.0
    %1223 = vmatprep.subr.mxu0 0.0
    %1224 = vmatpush1.msra.mxu0 0.0
    %1225 = vmatprep.subr.mxu0 0.0
    %1226 = vmatpush1.msra.mxu0 0.0
    %1227 = vmatprep.subr.mxu0 0.0
    %1228 = vmatpush1.msra.mxu0 0.0
    %1229 = vmatprep.subr.mxu0 0.0
    %1230 = vmatpush1.msra.mxu0 0.0
    %1231 = vmatprep.subr.mxu0 0.0
    %1232 = vmatpush1.msra.mxu0 0.0
    %1233 = vmatprep.subr.mxu0 0.0
    %1234 = vmatpush1.msra.mxu0 0.0
    %1235 = vmatprep.subr.mxu0 0.0
    %1236 = vmatpush1.msra.mxu0 0.0
    %1237 = vmatprep.subr.mxu0 0.0
    %1238 = vmatpush1.msra.mxu0 0.0
    %1239 = vmatprep.subr.mxu0 0.0
    %1240 = vmatpush1.msra.mxu0 0.0
    %1241 = vmatprep.subr.mxu0 0.0
    %1242 = vmatpush1.msra.mxu0 0.0
    %1243 = vmatprep.subr.mxu0 0.0
    %1244 = vmatpush1.msra.mxu0 0.0
    %1245 = vmatprep.subr.mxu0 0.0
    %1246 = vmatpush1.msra.mxu0 0.0
    %1247 = vmatprep.mubr.f32.mxu0 0.0
    %1248 = vmatmul.mubr.f32.gmra.mrb[0].mxu0 0.0
    %v1249 = vpop.f32.mrb[0].mxu0
    %v1250 = vadd.f32 0.0, %v1249
    %v1251 = vpop.f32.mrb[0].mxu0
    %v1252 = vadd.f32 0.0, %v1251
    %1253 = vdwg.mxu0
    %1254 = vmatprep.subr.mxu0 %v1122
    %1255 = vmatpush1.msra.mxu0 %v1121
    %1256 = vmatprep.subr.mxu0 %v1126
    %1257 = vmatpush1.msra.mxu0 %v1125
    %1258 = vmatprep.subr.mxu0 %v1130
    %1259 = vmatpush1.msra.mxu0 %v1129
    %1260 = vmatprep.subr.mxu0 %v1134
    %1261 = vmatpush1.msra.mxu0 %v1133
    %1262 = vmatprep.subr.mxu0 %v1138
    %1263 = vmatpush1.msra.mxu0 %v1137
    %1264 = vmatprep.subr.mxu0 %v1142
    %1265 = vmatpush1.msra.mxu0 %v1141
    %1266 = vmatprep.subr.mxu0 %v1146
    %1267 = vmatpush1.msra.mxu0 %v1145
    %1268 = vmatprep.subr.mxu0 %v1150
    %1269 = vmatpush1.msra.mxu0 %v1149
    %1270 = vmatprep.subr.mxu0 %v1154
    %1271 = vmatpush1.msra.mxu0 %v1153
    %1272 = vmatprep.subr.mxu0 %v1158
    %1273 = vmatpush1.msra.mxu0 %v1157
    %1274 = vmatprep.subr.mxu0 %v1162
    %1275 = vmatpush1.msra.mxu0 %v1161
    %1276 = vmatprep.subr.mxu0 %v1166
    %1277 = vmatpush1.msra.mxu0 %v1165
    %1278 = vmatprep.subr.mxu0 %v1170
    %1279 = vmatpush1.msra.mxu0 %v1169
    %1280 = vmatprep.subr.mxu0 %v1174
    %1281 = vmatpush1.msra.mxu0 %v1173
    %1282 = vmatprep.subr.mxu0 %v1178
    %1283 = vmatpush1.msra.mxu0 %v1177
    %1284 = vmatprep.subr.mxu0 %v1182
    %1285 = vmatpush1.msra.mxu0 %v1181
    %1286 = vmatprep.subr.mxu0 0.0
    %1287 = vmatpush1.msra.mxu0 0.0
    %1288 = vmatprep.subr.mxu0 0.0
    %1289 = vmatpush1.msra.mxu0 0.0
    %1290 = vmatprep.subr.mxu0 0.0
    %1291 = vmatpush1.msra.mxu0 0.0
    %1292 = vmatprep.subr.mxu0 0.0
    %1293 = vmatpush1.msra.mxu0 0.0
    %1294 = vmatprep.subr.mxu0 0.0
    %1295 = vmatpush1.msra.mxu0 0.0
    %1296 = vmatprep.subr.mxu0 0.0
    %1297 = vmatpush1.msra.mxu0 0.0
    %1298 = vmatprep.subr.mxu0 0.0
    %1299 = vmatpush1.msra.mxu0 0.0
    %1300 = vmatprep.subr.mxu0 0.0
    %1301 = vmatpush1.msra.mxu0 0.0
    %1302 = vmatprep.subr.mxu0 0.0
    %1303 = vmatpush1.msra.mxu0 0.0
    %1304 = vmatprep.subr.mxu0 0.0
    %1305 = vmatpush1.msra.mxu0 0.0
    %1306 = vmatprep.subr.mxu0 0.0
    %1307 = vmatpush1.msra.mxu0 0.0
    %1308 = vmatprep.subr.mxu0 0.0
    %1309 = vmatpush1.msra.mxu0 0.0
    %1310 = vmatprep.subr.mxu0 0.0
    %1311 = vmatpush1.msra.mxu0 0.0
    %1312 = vmatprep.subr.mxu0 0.0
    %1313 = vmatpush1.msra.mxu0 0.0
    %1314 = vmatprep.subr.mxu0 0.0
    %1315 = vmatpush1.msra.mxu0 0.0
    %1316 = vmatprep.subr.mxu0 0.0
    %1317 = vmatpush1.msra.mxu0 0.0
    %1318 = vmatprep.mubr.f32.mxu0 0.0
    %1319 = vmatmul.mubr.f32.gmra.mrb[0].mxu0 0.0
    %v1320 = vpop.f32.mrb[0].mxu0
    %v1321 = vadd.f32 0.0, %v1320
    %v1322 = vpop.f32.mrb[0].mxu0
    %v1323 = vadd.f32 0.0, %v1322
    %1324 = vdwg.mxu0
    %v1329 = vcombine.low %v1250, %v1252
    %v1330 = vcombine.low %v1321, %v1323
    %v1332 = vunpack.c.l.s4 1966171168
    %v1333 = vunpack.c.0.s8 %v1332
    %v1334 = vlaneseq
    %v1335 = vshrl.u32 %v1334, 7
    %v1336 = vsub.s32 %v1333, %v1335
    %v1337 = vrot.slane %v1329, %v1336
    %v1339 = vunpack.c.l.s4 1966171168
    %v1340 = vunpack.c.0.s8 %v1339
    %v1341 = vlaneseq
    %v1342 = vshrl.u32 %v1341, 7
    %v1343 = vsub.s32 %v1340, %v1342
    %v1344 = vrot.slane %v1330, %v1343
    %v1345 = vcombine.low %v1337, %v1344
    %v1347 = vunpack.c.l.s4 1966171168
    %v1348 = vunpack.c.0.s8 %v1347
    %v1349 = vlaneseq
    %v1350 = vshrl.u32 %v1349, 7
    %v1351 = vsub.s32 %v1348, %v1350
    %v1352 = vrot.slane %v1345, %v1351
    %v1354 = vadd.f32 %v1118, %v1352
    %v1355 = vxor.u32 %v1354, 2147483648
    %v1356 = vmul.f32 %v1355, 1.442695
    %v1357 = vpow.pop %v1356
    %v1358 = vadd.f32 %v1357, 1.0
    %v1359 = vrcp.pop %v1358
    %v1360 = vmul.f32 1.0, %v1359
    %v1362 = vrot.slane %v1354, 1
    %v1364 = vxor.u32 %v1362, 2147483648
    %v1365 = vmul.f32 %v1364, 1.442695
    %v1366 = vpow.pop %v1365
    %v1367 = vadd.f32 %v1366, 1.0
    %v1368 = vrcp.pop %v1367
    %v1369 = vmul.f32 1.0, %v1368
    %v1370 = vrot.slane %v1354, 2
    %v1372 = vtanh.pop %v1370
    %v1373 = vrot.slane %v1354, 3
    %v1375 = vxor.u32 %v1373, 2147483648
    %v1376 = vmul.f32 %v1375, 1.442695
    %v1377 = vpow.pop %v1376
    %v1378 = vadd.f32 %v1377, 1.0
    %v1379 = vrcp.pop %v1378
    %v1380 = vmul.f32 1.0, %v1379
    %v1381 = vmul.f32 %v1369, 0.0
    %v1382 = vmul.f32 %v1360, %v1372
    %v1383 = vadd.f32 %v1381, %v1382
    %v1384 = vtanh.pop %v1383
    %v1385 = vmul.f32 %v1380, %v1384
    %v1386 = vld [vmem:[#allocation6] sm:$0x1]
    %v1387 = vmul.f32 %v1385, %v127
    %v1388 = vadd.f32 %v1386, %v1387
    %1389 = vst [vmem:[#allocation6] sm:$0x1] %v1388
    %v1390 = vld [vmem:[#allocation6 + $0x7] sm:$0x1]
    %v1391 = vmul.f32 %v1385, %v128
    %v1392 = vadd.f32 %v1390, %v1391
    %1393 = vst [vmem:[#allocation6 + $0x7] sm:$0x1] %v1392
    %s1394 = scalar_lea.vmem [#allocation2], 1
    %v1395 = vld [vmem:[%s1394] ss:$8 sm:$0xf]
    %s1396 = scalar_lea.vmem [#allocation3], 6
    %v1397 = vld [vmem:[%s1396] ss:$8 sm:$0xf]
    %v1398 = vadd.f32 %v1395, %v1397
    %v1399 = vld [vmem:[#allocation13] sm:$0xff]
    %v1400 = vld [vmem:[#allocation13 + $0x8] sm:$0xff]
    %v1401 = vld [vmem:[#allocation13 + $0x10] sm:$0xff]
    %v1402 = vld [vmem:[#allocation13 + $0x18] sm:$0xff]
    %v1403 = vld [vmem:[#allocation13 + $0x20] sm:$0xff]
    %v1404 = vld [vmem:[#allocation13 + $0x28] sm:$0xff]
    %v1405 = vld [vmem:[#allocation13 + $0x30] sm:$0xff]
    %v1406 = vld [vmem:[#allocation13 + $0x38] sm:$0xff]
    %v1407 = vld [vmem:[#allocation13 + $0x40] sm:$0xff]
    %v1408 = vld [vmem:[#allocation13 + $0x48] sm:$0xff]
    %v1409 = vld [vmem:[#allocation13 + $0x50] sm:$0xff]
    %v1410 = vld [vmem:[#allocation13 + $0x58] sm:$0xff]
    %v1411 = vld [vmem:[#allocation13 + $0x60] sm:$0xff]
    %v1412 = vld [vmem:[#allocation13 + $0x68] sm:$0xff]
    %v1413 = vld [vmem:[#allocation13 + $0x70] sm:$0xff]
    %v1414 = vld [vmem:[#allocation13 + $0x78] sm:$0xff]
    %v1415 = vld [vmem:[#allocation13 + $0x80] sm:$0xff]
    %v1416 = vld [vmem:[#allocation13 + $0x88] sm:$0xff]
    %v1417 = vld [vmem:[#allocation13 + $0x90] sm:$0xff]
    %v1418 = vld [vmem:[#allocation13 + $0x98] sm:$0xff]
    %v1419 = vld [vmem:[#allocation13 + $0xa0] sm:$0xff]
    %v1420 = vld [vmem:[#allocation13 + $0xa8] sm:$0xff]
    %v1421 = vld [vmem:[#allocation13 + $0xb0] sm:$0xff]
    %v1422 = vld [vmem:[#allocation13 + $0xb8] sm:$0xff]
    %v1423 = vld [vmem:[#allocation13 + $0xc0] sm:$0xff]
    %v1424 = vld [vmem:[#allocation13 + $0xc8] sm:$0xff]
    %v1425 = vld [vmem:[#allocation13 + $0xd0] sm:$0xff]
    %v1426 = vld [vmem:[#allocation13 + $0xd8] sm:$0xff]
    %v1427 = vld [vmem:[#allocation13 + $0xe0] sm:$0xff]
    %v1428 = vld [vmem:[#allocation13 + $0xe8] sm:$0xff]
    %v1429 = vld [vmem:[#allocation13 + $0xf0] sm:$0xff]
    %v1430 = vld [vmem:[#allocation13 + $0xf8] sm:$0xff]
    %v1431 = vld [vmem:[#allocation13 + $0x100] sm:$0xff]
    %v1432 = vld [vmem:[#allocation13 + $0x108] sm:$0xff]
    %v1433 = vld [vmem:[#allocation13 + $0x110] sm:$0xff]
    %v1434 = vld [vmem:[#allocation13 + $0x118] sm:$0xff]
    %v1435 = vld [vmem:[#allocation13 + $0x120] sm:$0xff]
    %v1436 = vld [vmem:[#allocation13 + $0x128] sm:$0xff]
    %v1437 = vld [vmem:[#allocation13 + $0x130] sm:$0xff]
    %v1438 = vld [vmem:[#allocation13 + $0x138] sm:$0xff]
    %v1439 = vld [vmem:[#allocation13 + $0x140] sm:$0xff]
    %v1440 = vld [vmem:[#allocation13 + $0x148] sm:$0xff]
    %v1441 = vld [vmem:[#allocation13 + $0x150] sm:$0xff]
    %v1442 = vld [vmem:[#allocation13 + $0x158] sm:$0xff]
    %v1443 = vld [vmem:[#allocation13 + $0x160] sm:$0xff]
    %v1444 = vld [vmem:[#allocation13 + $0x168] sm:$0xff]
    %v1445 = vld [vmem:[#allocation13 + $0x170] sm:$0xff]
    %v1446 = vld [vmem:[#allocation13 + $0x178] sm:$0xff]
    %v1447 = vld [vmem:[#allocation13 + $0x180] sm:$0xff]
    %v1448 = vld [vmem:[#allocation13 + $0x188] sm:$0xff]
    %v1449 = vld [vmem:[#allocation13 + $0x190] sm:$0xff]
    %v1450 = vld [vmem:[#allocation13 + $0x198] sm:$0xff]
    %v1451 = vld [vmem:[#allocation13 + $0x1a0] sm:$0xff]
    %v1452 = vld [vmem:[#allocation13 + $0x1a8] sm:$0xff]
    %v1453 = vld [vmem:[#allocation13 + $0x1b0] sm:$0xff]
    %v1454 = vld [vmem:[#allocation13 + $0x1b8] sm:$0xff]
    %v1455 = vld [vmem:[#allocation13 + $0x1c0] sm:$0xff]
    %v1456 = vld [vmem:[#allocation13 + $0x1c8] sm:$0xff]
    %v1457 = vld [vmem:[#allocation13 + $0x1d0] sm:$0xff]
    %v1458 = vld [vmem:[#allocation13 + $0x1d8] sm:$0xff]
    %v1459 = vld [vmem:[#allocation13 + $0x1e0] sm:$0xff]
    %v1460 = vld [vmem:[#allocation13 + $0x1e8] sm:$0xff]
    %v1461 = vld [vmem:[#allocation13 + $0x1f0] sm:$0xff]
    %v1462 = vld [vmem:[#allocation13 + $0x1f8] sm:$0xff]
    %1463 = vmatprep.subr.mxu0 %v1400
    %1464 = vmatpush1.msra.mxu0 %v1399
    %1465 = vmatprep.subr.mxu0 %v1404
    %1466 = vmatpush1.msra.mxu0 %v1403
    %1467 = vmatprep.subr.mxu0 %v1408
    %1468 = vmatpush1.msra.mxu0 %v1407
    %1469 = vmatprep.subr.mxu0 %v1412
    %1470 = vmatpush1.msra.mxu0 %v1411
    %1471 = vmatprep.subr.mxu0 %v1416
    %1472 = vmatpush1.msra.mxu0 %v1415
    %1473 = vmatprep.subr.mxu0 %v1420
    %1474 = vmatpush1.msra.mxu0 %v1419
    %1475 = vmatprep.subr.mxu0 %v1424
    %1476 = vmatpush1.msra.mxu0 %v1423
    %1477 = vmatprep.subr.mxu0 %v1428
    %1478 = vmatpush1.msra.mxu0 %v1427
    %1479 = vmatprep.subr.mxu0 %v1432
    %1480 = vmatpush1.msra.mxu0 %v1431
    %1481 = vmatprep.subr.mxu0 %v1436
    %1482 = vmatpush1.msra.mxu0 %v1435
    %1483 = vmatprep.subr.mxu0 %v1440
    %1484 = vmatpush1.msra.mxu0 %v1439
    %1485 = vmatprep.subr.mxu0 %v1444
    %1486 = vmatpush1.msra.mxu0 %v1443
    %1487 = vmatprep.subr.mxu0 %v1448
    %1488 = vmatpush1.msra.mxu0 %v1447
    %1489 = vmatprep.subr.mxu0 %v1452
    %1490 = vmatpush1.msra.mxu0 %v1451
    %1491 = vmatprep.subr.mxu0 %v1456
    %1492 = vmatpush1.msra.mxu0 %v1455
    %1493 = vmatprep.subr.mxu0 %v1460
    %1494 = vmatpush1.msra.mxu0 %v1459
    %1495 = vmatprep.subr.mxu0 0.0
    %1496 = vmatpush1.msra.mxu0 0.0
    %1497 = vmatprep.subr.mxu0 0.0
    %1498 = vmatpush1.msra.mxu0 0.0
    %1499 = vmatprep.subr.mxu0 0.0
    %1500 = vmatpush1.msra.mxu0 0.0
    %1501 = vmatprep.subr.mxu0 0.0
    %1502 = vmatpush1.msra.mxu0 0.0
    %1503 = vmatprep.subr.mxu0 0.0
    %1504 = vmatpush1.msra.mxu0 0.0
    %1505 = vmatprep.subr.mxu0 0.0
    %1506 = vmatpush1.msra.mxu0 0.0
    %1507 = vmatprep.subr.mxu0 0.0
    %1508 = vmatpush1.msra.mxu0 0.0
    %1509 = vmatprep.subr.mxu0 0.0
    %1510 = vmatpush1.msra.mxu0 0.0
    %1511 = vmatprep.subr.mxu0 0.0
    %1512 = vmatpush1.msra.mxu0 0.0
    %1513 = vmatprep.subr.mxu0 0.0
    %1514 = vmatpush1.msra.mxu0 0.0
    %1515 = vmatprep.subr.mxu0 0.0
    %1516 = vmatpush1.msra.mxu0 0.0
    %1517 = vmatprep.subr.mxu0 0.0
    %1518 = vmatpush1.msra.mxu0 0.0
    %1519 = vmatprep.subr.mxu0 0.0
    %1520 = vmatpush1.msra.mxu0 0.0
    %1521 = vmatprep.subr.mxu0 0.0
    %1522 = vmatpush1.msra.mxu0 0.0
    %1523 = vmatprep.subr.mxu0 0.0
    %1524 = vmatpush1.msra.mxu0 0.0
    %1525 = vmatprep.subr.mxu0 0.0
    %1526 = vmatpush1.msra.mxu0 0.0
    %1527 = vmatprep.mubr.f32.mxu0 0.0
    %1528 = vmatmul.mubr.f32.gmra.mrb[0].mxu0 %v1385
    %v1529 = vpop.f32.mrb[0].mxu0
    %v1530 = vadd.f32 0.0, %v1529
    %v1531 = vpop.f32.mrb[0].mxu0
    %v1532 = vadd.f32 0.0, %v1531
    %1533 = vdwg.mxu0
    %1534 = vmatprep.subr.mxu0 %v1402
    %1535 = vmatpush1.msra.mxu0 %v1401
    %1536 = vmatprep.subr.mxu0 %v1406
    %1537 = vmatpush1.msra.mxu0 %v1405
    %1538 = vmatprep.subr.mxu0 %v1410
    %1539 = vmatpush1.msra.mxu0 %v1409
    %1540 = vmatprep.subr.mxu0 %v1414
    %1541 = vmatpush1.msra.mxu0 %v1413
    %1542 = vmatprep.subr.mxu0 %v1418
    %1543 = vmatpush1.msra.mxu0 %v1417
    %1544 = vmatprep.subr.mxu0 %v1422
    %1545 = vmatpush1.msra.mxu0 %v1421
    %1546 = vmatprep.subr.mxu0 %v1426
    %1547 = vmatpush1.msra.mxu0 %v1425
    %1548 = vmatprep.subr.mxu0 %v1430
    %1549 = vmatpush1.msra.mxu0 %v1429
    %1550 = vmatprep.subr.mxu0 %v1434
    %1551 = vmatpush1.msra.mxu0 %v1433
    %1552 = vmatprep.subr.mxu0 %v1438
    %1553 = vmatpush1.msra.mxu0 %v1437
    %1554 = vmatprep.subr.mxu0 %v1442
    %1555 = vmatpush1.msra.mxu0 %v1441
    %1556 = vmatprep.subr.mxu0 %v1446
    %1557 = vmatpush1.msra.mxu0 %v1445
    %1558 = vmatprep.subr.mxu0 %v1450
    %1559 = vmatpush1.msra.mxu0 %v1449
    %1560 = vmatprep.subr.mxu0 %v1454
    %1561 = vmatpush1.msra.mxu0 %v1453
    %1562 = vmatprep.subr.mxu0 %v1458
    %1563 = vmatpush1.msra.mxu0 %v1457
    %1564 = vmatprep.subr.mxu0 %v1462
    %1565 = vmatpush1.msra.mxu0 %v1461
    %1566 = vmatprep.subr.mxu0 0.0
    %1567 = vmatpush1.msra.mxu0 0.0
    %1568 = vmatprep.subr.mxu0 0.0
    %1569 = vmatpush1.msra.mxu0 0.0
    %1570 = vmatprep.subr.mxu0 0.0
    %1571 = vmatpush1.msra.mxu0 0.0
    %1572 = vmatprep.subr.mxu0 0.0
    %1573 = vmatpush1.msra.mxu0 0.0
    %1574 = vmatprep.subr.mxu0 0.0
    %1575 = vmatpush1.msra.mxu0 0.0
    %1576 = vmatprep.subr.mxu0 0.0
    %1577 = vmatpush1.msra.mxu0 0.0
    %1578 = vmatprep.subr.mxu0 0.0
    %1579 = vmatpush1.msra.mxu0 0.0
    %1580 = vmatprep.subr.mxu0 0.0
    %1581 = vmatpush1.msra.mxu0 0.0
    %1582 = vmatprep.subr.mxu0 0.0
    %1583 = vmatpush1.msra.mxu0 0.0
    %1584 = vmatprep.subr.mxu0 0.0
    %1585 = vmatpush1.msra.mxu0 0.0
    %1586 = vmatprep.subr.mxu0 0.0
    %1587 = vmatpush1.msra.mxu0 0.0
    %1588 = vmatprep.subr.mxu0 0.0
    %1589 = vmatpush1.msra.mxu0 0.0
    %1590 = vmatprep.subr.mxu0 0.0
    %1591 = vmatpush1.msra.mxu0 0.0
    %1592 = vmatprep.subr.mxu0 0.0
    %1593 = vmatpush1.msra.mxu0 0.0
    %1594 = vmatprep.subr.mxu0 0.0
    %1595 = vmatpush1.msra.mxu0 0.0
    %1596 = vmatprep.subr.mxu0 0.0
    %1597 = vmatpush1.msra.mxu0 0.0
    %1598 = vmatprep.mubr.f32.mxu0 0.0
    %1599 = vmatmul.mubr.f32.gmra.mrb[0].mxu0 %v1385
    %v1600 = vpop.f32.mrb[0].mxu0
    %v1601 = vadd.f32 0.0, %v1600
    %v1602 = vpop.f32.mrb[0].mxu0
    %v1603 = vadd.f32 0.0, %v1602
    %1604 = vdwg.mxu0
    %v1609 = vcombine.low %v1530, %v1532
    %v1610 = vcombine.low %v1601, %v1603
    %v1612 = vunpack.c.l.s4 1966171168
    %v1613 = vunpack.c.0.s8 %v1612
    %v1614 = vlaneseq
    %v1615 = vshrl.u32 %v1614, 7
    %v1616 = vsub.s32 %v1613, %v1615
    %v1617 = vrot.slane %v1609, %v1616
    %v1619 = vunpack.c.l.s4 1966171168
    %v1620 = vunpack.c.0.s8 %v1619
    %v1621 = vlaneseq
    %v1622 = vshrl.u32 %v1621, 7
    %v1623 = vsub.s32 %v1620, %v1622
    %v1624 = vrot.slane %v1610, %v1623
    %v1625 = vcombine.low %v1617, %v1624
    %v1627 = vunpack.c.l.s4 1966171168
    %v1628 = vunpack.c.0.s8 %v1627
    %v1629 = vlaneseq
    %v1630 = vshrl.u32 %v1629, 7
    %v1631 = vsub.s32 %v1628, %v1630
    %v1632 = vrot.slane %v1625, %v1631
    %v1634 = vadd.f32 %v1398, %v1632
    %v1635 = vxor.u32 %v1634, 2147483648
    %v1636 = vmul.f32 %v1635, 1.442695
    %v1637 = vpow.pop %v1636
    %v1638 = vadd.f32 %v1637, 1.0
    %v1639 = vrcp.pop %v1638
    %v1640 = vmul.f32 1.0, %v1639
    %v1642 = vrot.slane %v1634, 1
    %v1644 = vxor.u32 %v1642, 2147483648
    %v1645 = vmul.f32 %v1644, 1.442695
    %v1646 = vpow.pop %v1645
    %v1647 = vadd.f32 %v1646, 1.0
    %v1648 = vrcp.pop %v1647
    %v1649 = vmul.f32 1.0, %v1648
    %v1650 = vrot.slane %v1634, 2
    %v1652 = vtanh.pop %v1650
    %v1653 = vrot.slane %v1634, 3
    %v1655 = vxor.u32 %v1653, 2147483648
    %v1656 = vmul.f32 %v1655, 1.442695
    %v1657 = vpow.pop %v1656
    %v1658 = vadd.f32 %v1657, 1.0
    %v1659 = vrcp.pop %v1658
    %v1660 = vmul.f32 1.0, %v1659
    %v1661 = vmul.f32 %v1649, %v1383
    %v1662 = vmul.f32 %v1640, %v1652
    %v1663 = vadd.f32 %v1661, %v1662
    %v1664 = vtanh.pop %v1663
    %v1665 = vmul.f32 %v1660, %v1664
    %v1666 = vld [vmem:[#allocation6 + $0x1] sm:$0x1]
    %v1667 = vmul.f32 %v1665, %v127
    %v1668 = vadd.f32 %v1666, %v1667
    %1669 = vst [vmem:[#allocation6 + $0x1] sm:$0x1] %v1668
    %v1670 = vld [vmem:[#allocation6 + $0x6] sm:$0x1]
    %v1671 = vmul.f32 %v1665, %v128
    %v1672 = vadd.f32 %v1670, %v1671
    %1673 = vst [vmem:[#allocation6 + $0x6] sm:$0x1] %v1672
    %s1674 = scalar_lea.vmem [#allocation2], 2
    %v1675 = vld [vmem:[%s1674] ss:$8 sm:$0xf]
    %s1676 = scalar_lea.vmem [#allocation3], 5
    %v1677 = vld [vmem:[%s1676] ss:$8 sm:$0xf]
    %v1678 = vadd.f32 %v1675, %v1677
    %v1679 = vld [vmem:[#allocation13] sm:$0xff]
    %v1680 = vld [vmem:[#allocation13 + $0x8] sm:$0xff]
    %v1681 = vld [vmem:[#allocation13 + $0x10] sm:$0xff]
    %v1682 = vld [vmem:[#allocation13 + $0x18] sm:$0xff]
    %v1683 = vld [vmem:[#allocation13 + $0x20] sm:$0xff]
    %v1684 = vld [vmem:[#allocation13 + $0x28] sm:$0xff]
    %v1685 = vld [vmem:[#allocation13 + $0x30] sm:$0xff]
    %v1686 = vld [vmem:[#allocation13 + $0x38] sm:$0xff]
    %v1687 = vld [vmem:[#allocation13 + $0x40] sm:$0xff]
    %v1688 = vld [vmem:[#allocation13 + $0x48] sm:$0xff]
    %v1689 = vld [vmem:[#allocation13 + $0x50] sm:$0xff]
    %v1690 = vld [vmem:[#allocation13 + $0x58] sm:$0xff]
    %v1691 = vld [vmem:[#allocation13 + $0x60] sm:$0xff]
    %v1692 = vld [vmem:[#allocation13 + $0x68] sm:$0xff]
    %v1693 = vld [vmem:[#allocation13 + $0x70] sm:$0xff]
    %v1694 = vld [vmem:[#allocation13 + $0x78] sm:$0xff]
    %v1695 = vld [vmem:[#allocation13 + $0x80] sm:$0xff]
    %v1696 = vld [vmem:[#allocation13 + $0x88] sm:$0xff]
    %v1697 = vld [vmem:[#allocation13 + $0x90] sm:$0xff]
    %v1698 = vld [vmem:[#allocation13 + $0x98] sm:$0xff]
    %v1699 = vld [vmem:[#allocation13 + $0xa0] sm:$0xff]
    %v1700 = vld [vmem:[#allocation13 + $0xa8] sm:$0xff]
    %v1701 = vld [vmem:[#allocation13 + $0xb0] sm:$0xff]
    %v1702 = vld [vmem:[#allocation13 + $0xb8] sm:$0xff]
    %v1703 = vld [vmem:[#allocation13 + $0xc0] sm:$0xff]
    %v1704 = vld [vmem:[#allocation13 + $0xc8] sm:$0xff]
    %v1705 = vld [vmem:[#allocation13 + $0xd0] sm:$0xff]
    %v1706 = vld [vmem:[#allocation13 + $0xd8] sm:$0xff]
    %v1707 = vld [vmem:[#allocation13 + $0xe0] sm:$0xff]
    %v1708 = vld [vmem:[#allocation13 + $0xe8] sm:$0xff]
    %v1709 = vld [vmem:[#allocation13 + $0xf0] sm:$0xff]
    %v1710 = vld [vmem:[#allocation13 + $0xf8] sm:$0xff]
    %v1711 = vld [vmem:[#allocation13 + $0x100] sm:$0xff]
    %v1712 = vld [vmem:[#allocation13 + $0x108] sm:$0xff]
    %v1713 = vld [vmem:[#allocation13 + $0x110] sm:$0xff]
    %v1714 = vld [vmem:[#allocation13 + $0x118] sm:$0xff]
    %v1715 = vld [vmem:[#allocation13 + $0x120] sm:$0xff]
    %v1716 = vld [vmem:[#allocation13 + $0x128] sm:$0xff]
    %v1717 = vld [vmem:[#allocation13 + $0x130] sm:$0xff]
    %v1718 = vld [vmem:[#allocation13 + $0x138] sm:$0xff]
    %v1719 = vld [vmem:[#allocation13 + $0x140] sm:$0xff]
    %v1720 = vld [vmem:[#allocation13 + $0x148] sm:$0xff]
    %v1721 = vld [vmem:[#allocation13 + $0x150] sm:$0xff]
    %v1722 = vld [vmem:[#allocation13 + $0x158] sm:$0xff]
    %v1723 = vld [vmem:[#allocation13 + $0x160] sm:$0xff]
    %v1724 = vld [vmem:[#allocation13 + $0x168] sm:$0xff]
    %v1725 = vld [vmem:[#allocation13 + $0x170] sm:$0xff]
    %v1726 = vld [vmem:[#allocation13 + $0x178] sm:$0xff]
    %v1727 = vld [vmem:[#allocation13 + $0x180] sm:$0xff]
    %v1728 = vld [vmem:[#allocation13 + $0x188] sm:$0xff]
    %v1729 = vld [vmem:[#allocation13 + $0x190] sm:$0xff]
    %v1730 = vld [vmem:[#allocation13 + $0x198] sm:$0xff]
    %v1731 = vld [vmem:[#allocation13 + $0x1a0] sm:$0xff]
    %v1732 = vld [vmem:[#allocation13 + $0x1a8] sm:$0xff]
    %v1733 = vld [vmem:[#allocation13 + $0x1b0] sm:$0xff]
    %v1734 = vld [vmem:[#allocation13 + $0x1b8] sm:$0xff]
    %v1735 = vld [vmem:[#allocation13 + $0x1c0] sm:$0xff]
    %v1736 = vld [vmem:[#allocation13 + $0x1c8] sm:$0xff]
    %v1737 = vld [vmem:[#allocation13 + $0x1d0] sm:$0xff]
    %v1738 = vld [vmem:[#allocation13 + $0x1d8] sm:$0xff]
    %v1739 = vld [vmem:[#allocation13 + $0x1e0] sm:$0xff]
    %v1740 = vld [vmem:[#allocation13 + $0x1e8] sm:$0xff]
    %v1741 = vld [vmem:[#allocation13 + $0x1f0] sm:$0xff]
    %v1742 = vld [vmem:[#allocation13 + $0x1f8] sm:$0xff]
    %1743 = vmatprep.subr.mxu0 %v1680
    %1744 = vmatpush1.msra.mxu0 %v1679
    %1745 = vmatprep.subr.mxu0 %v1684
    %1746 = vmatpush1.msra.mxu0 %v1683
    %1747 = vmatprep.subr.mxu0 %v1688
    %1748 = vmatpush1.msra.mxu0 %v1687
    %1749 = vmatprep.subr.mxu0 %v1692
    %1750 = vmatpush1.msra.mxu0 %v1691
    %1751 = vmatprep.subr.mxu0 %v1696
    %1752 = vmatpush1.msra.mxu0 %v1695
    %1753 = vmatprep.subr.mxu0 %v1700
    %1754 = vmatpush1.msra.mxu0 %v1699
    %1755 = vmatprep.subr.mxu0 %v1704
    %1756 = vmatpush1.msra.mxu0 %v1703
    %1757 = vmatprep.subr.mxu0 %v1708
    %1758 = vmatpush1.msra.mxu0 %v1707
    %1759 = vmatprep.subr.mxu0 %v1712
    %1760 = vmatpush1.msra.mxu0 %v1711
    %1761 = vmatprep.subr.mxu0 %v1716
    %1762 = vmatpush1.msra.mxu0 %v1715
    %1763 = vmatprep.subr.mxu0 %v1720
    %1764 = vmatpush1.msra.mxu0 %v1719
    %1765 = vmatprep.subr.mxu0 %v1724
    %1766 = vmatpush1.msra.mxu0 %v1723
    %1767 = vmatprep.subr.mxu0 %v1728
    %1768 = vmatpush1.msra.mxu0 %v1727
    %1769 = vmatprep.subr.mxu0 %v1732
    %1770 = vmatpush1.msra.mxu0 %v1731
    %1771 = vmatprep.subr.mxu0 %v1736
    %1772 = vmatpush1.msra.mxu0 %v1735
    %1773 = vmatprep.subr.mxu0 %v1740
    %1774 = vmatpush1.msra.mxu0 %v1739
    %1775 = vmatprep.subr.mxu0 0.0
    %1776 = vmatpush1.msra.mxu0 0.0
    %1777 = vmatprep.subr.mxu0 0.0
    %1778 = vmatpush1.msra.mxu0 0.0
    %1779 = vmatprep.subr.mxu0 0.0
    %1780 = vmatpush1.msra.mxu0 0.0
    %1781 = vmatprep.subr.mxu0 0.0
    %1782 = vmatpush1.msra.mxu0 0.0
    %1783 = vmatprep.subr.mxu0 0.0
    %1784 = vmatpush1.msra.mxu0 0.0
    %1785 = vmatprep.subr.mxu0 0.0
    %1786 = vmatpush1.msra.mxu0 0.0
    %1787 = vmatprep.subr.mxu0 0.0
    %1788 = vmatpush1.msra.mxu0 0.0
    %1789 = vmatprep.subr.mxu0 0.0
    %1790 = vmatpush1.msra.mxu0 0.0
    %1791 = vmatprep.subr.mxu0 0.0
    %1792 = vmatpush1.msra.mxu0 0.0
    %1793 = vmatprep.subr.mxu0 0.0
    %1794 = vmatpush1.msra.mxu0 0.0
    %1795 = vmatprep.subr.mxu0 0.0
    %1796 = vmatpush1.msra.mxu0 0.0
    %1797 = vmatprep.subr.mxu0 0.0
    %1798 = vmatpush1.msra.mxu0 0.0
    %1799 = vmatprep.subr.mxu0 0.0
    %1800 = vmatpush1.msra.mxu0 0.0
    %1801 = vmatprep.subr.mxu0 0.0
    %1802 = vmatpush1.msra.mxu0 0.0
    %1803 = vmatprep.subr.mxu0 0.0
    %1804 = vmatpush1.msra.mxu0 0.0
    %1805 = vmatprep.subr.mxu0 0.0
    %1806 = vmatpush1.msra.mxu0 0.0
    %1807 = vmatprep.mubr.f32.mxu0 0.0
    %1808 = vmatmul.mubr.f32.gmra.mrb[0].mxu0 %v1665
    %v1809 = vpop.f32.mrb[0].mxu0
    %v1810 = vadd.f32 0.0, %v1809
    %v1811 = vpop.f32.mrb[0].mxu0
    %v1812 = vadd.f32 0.0, %v1811
    %1813 = vdwg.mxu0
    %1814 = vmatprep.subr.mxu0 %v1682
    %1815 = vmatpush1.msra.mxu0 %v1681
    %1816 = vmatprep.subr.mxu0 %v1686
    %1817 = vmatpush1.msra.mxu0 %v1685
    %1818 = vmatprep.subr.mxu0 %v1690
    %1819 = vmatpush1.msra.mxu0 %v1689
    %1820 = vmatprep.subr.mxu0 %v1694
    %1821 = vmatpush1.msra.mxu0 %v1693
    %1822 = vmatprep.subr.mxu0 %v1698
    %1823 = vmatpush1.msra.mxu0 %v1697
    %1824 = vmatprep.subr.mxu0 %v1702
    %1825 = vmatpush1.msra.mxu0 %v1701
    %1826 = vmatprep.subr.mxu0 %v1706
    %1827 = vmatpush1.msra.mxu0 %v1705
    %1828 = vmatprep.subr.mxu0 %v1710
    %1829 = vmatpush1.msra.mxu0 %v1709
    %1830 = vmatprep.subr.mxu0 %v1714
    %1831 = vmatpush1.msra.mxu0 %v1713
    %1832 = vmatprep.subr.mxu0 %v1718
    %1833 = vmatpush1.msra.mxu0 %v1717
    %1834 = vmatprep.subr.mxu0 %v1722
    %1835 = vmatpush1.msra.mxu0 %v1721
    %1836 = vmatprep.subr.mxu0 %v1726
    %1837 = vmatpush1.msra.mxu0 %v1725
    %1838 = vmatprep.subr.mxu0 %v1730
    %1839 = vmatpush1.msra.mxu0 %v1729
    %1840 = vmatprep.subr.mxu0 %v1734
    %1841 = vmatpush1.msra.mxu0 %v1733
    %1842 = vmatprep.subr.mxu0 %v1738
    %1843 = vmatpush1.msra.mxu0 %v1737
    %1844 = vmatprep.subr.mxu0 %v1742
    %1845 = vmatpush1.msra.mxu0 %v1741
    %1846 = vmatprep.subr.mxu0 0.0
    %1847 = vmatpush1.msra.mxu0 0.0
    %1848 = vmatprep.subr.mxu0 0.0
    %1849 = vmatpush1.msra.mxu0 0.0
    %1850 = vmatprep.subr.mxu0 0.0
    %1851 = vmatpush1.msra.mxu0 0.0
    %1852 = vmatprep.subr.mxu0 0.0
    %1853 = vmatpush1.msra.mxu0 0.0
    %1854 = vmatprep.subr.mxu0 0.0
    %1855 = vmatpush1.msra.mxu0 0.0
    %1856 = vmatprep.subr.mxu0 0.0
    %1857 = vmatpush1.msra.mxu0 0.0
    %1858 = vmatprep.subr.mxu0 0.0
    %1859 = vmatpush1.msra.mxu0 0.0
    %1860 = vmatprep.subr.mxu0 0.0
    %1861 = vmatpush1.msra.mxu0 0.0
    %1862 = vmatprep.subr.mxu0 0.0
    %1863 = vmatpush1.msra.mxu0 0.0
    %1864 = vmatprep.subr.mxu0 0.0
    %1865 = vmatpush1.msra.mxu0 0.0
    %1866 = vmatprep.subr.mxu0 0.0
    %1867 = vmatpush1.msra.mxu0 0.0
    %1868 = vmatprep.subr.mxu0 0.0
    %1869 = vmatpush1.msra.mxu0 0.0
    %1870 = vmatprep.subr.mxu0 0.0
    %1871 = vmatpush1.msra.mxu0 0.0
    %1872 = vmatprep.subr.mxu0 0.0
    %1873 = vmatpush1.msra.mxu0 0.0
    %1874 = vmatprep.subr.mxu0 0.0
    %1875 = vmatpush1.msra.mxu0 0.0
    %1876 = vmatprep.subr.mxu0 0.0
    %1877 = vmatpush1.msra.mxu0 0.0
    %1878 = vmatprep.mubr.f32.mxu0 0.0
    %1879 = vmatmul.mubr.f32.gmra.mrb[0].mxu0 %v1665
    %v1880 = vpop.f32.mrb[0].mxu0
    %v1881 = vadd.f32 0.0, %v1880
    %v1882 = vpop.f32.mrb[0].mxu0
    %v1883 = vadd.f32 0.0, %v1882
    %1884 = vdwg.mxu0
    %v1889 = vcombine.low %v1810, %v1812
    %v1890 = vcombine.low %v1881, %v1883
    %v1892 = vunpack.c.l.s4 1966171168
    %v1893 = vunpack.c.0.s8 %v1892
    %v1894 = vlaneseq
    %v1895 = vshrl.u32 %v1894, 7
    %v1896 = vsub.s32 %v1893, %v1895
    %v1897 = vrot.slane %v1889, %v1896
    %v1899 = vunpack.c.l.s4 1966171168
    %v1900 = vunpack.c.0.s8 %v1899
    %v1901 = vlaneseq
    %v1902 = vshrl.u32 %v1901, 7
    %v1903 = vsub.s32 %v1900, %v1902
    %v1904 = vrot.slane %v1890, %v1903
    %v1905 = vcombine.low %v1897, %v1904
    %v1907 = vunpack.c.l.s4 1966171168
    %v1908 = vunpack.c.0.s8 %v1907
    %v1909 = vlaneseq
    %v1910 = vshrl.u32 %v1909, 7
    %v1911 = vsub.s32 %v1908, %v1910
    %v1912 = vrot.slane %v1905, %v1911
    %v1914 = vadd.f32 %v1678, %v1912
    %v1915 = vxor.u32 %v1914, 2147483648
    %v1916 = vmul.f32 %v1915, 1.442695
    %v1917 = vpow.pop %v1916
    %v1918 = vadd.f32 %v1917, 1.0
    %v1919 = vrcp.pop %v1918
    %v1920 = vmul.f32 1.0, %v1919
    %v1922 = vrot.slane %v1914, 1
    %v1924 = vxor.u32 %v1922, 2147483648
    %v1925 = vmul.f32 %v1924, 1.442695
    %v1926 = vpow.pop %v1925
    %v1927 = vadd.f32 %v1926, 1.0
    %v1928 = vrcp.pop %v1927
    %v1929 = vmul.f32 1.0, %v1928
    %v1930 = vrot.slane %v1914, 2
    %v1932 = vtanh.pop %v1930
    %v1933 = vrot.slane %v1914, 3
    %v1935 = vxor.u32 %v1933, 2147483648
    %v1936 = vmul.f32 %v1935, 1.442695
    %v1937 = vpow.pop %v1936
    %v1938 = vadd.f32 %v1937, 1.0
    %v1939 = vrcp.pop %v1938
    %v1940 = vmul.f32 1.0, %v1939
    %v1941 = vmul.f32 %v1929, %v1663
    %v1942 = vmul.f32 %v1920, %v1932
    %v1943 = vadd.f32 %v1941, %v1942
    %v1944 = vtanh.pop %v1943
    %v1945 = vmul.f32 %v1940, %v1944
    %v1946 = vld [vmem:[#allocation6 + $0x2] sm:$0x1]
    %v1947 = vmul.f32 %v1945, %v127
    %v1948 = vadd.f32 %v1946, %v1947
    %1949 = vst [vmem:[#allocation6 + $0x2] sm:$0x1] %v1948
    %v1950 = vld [vmem:[#allocation6 + $0x5] sm:$0x1]
    %v1951 = vmul.f32 %v1945, %v128
    %v1952 = vadd.f32 %v1950, %v1951
    %1953 = vst [vmem:[#allocation6 + $0x5] sm:$0x1] %v1952
    %s1954 = scalar_lea.vmem [#allocation2], 3
    %v1955 = vld [vmem:[%s1954] ss:$8 sm:$0xf]
    %s1956 = scalar_lea.vmem [#allocation3], 4
    %v1957 = vld [vmem:[%s1956] ss:$8 sm:$0xf]
    %v1958 = vadd.f32 %v1955, %v1957
    %v1959 = vld [vmem:[#allocation13] sm:$0xff]
    %v1960 = vld [vmem:[#allocation13 + $0x8] sm:$0xff]
    %v1961 = vld [vmem:[#allocation13 + $0x10] sm:$0xff]
    %v1962 = vld [vmem:[#allocation13 + $0x18] sm:$0xff]
    %v1963 = vld [vmem:[#allocation13 + $0x20] sm:$0xff]
    %v1964 = vld [vmem:[#allocation13 + $0x28] sm:$0xff]
    %v1965 = vld [vmem:[#allocation13 + $0x30] sm:$0xff]
    %v1966 = vld [vmem:[#allocation13 + $0x38] sm:$0xff]
    %v1967 = vld [vmem:[#allocation13 + $0x40] sm:$0xff]
    %v1968 = vld [vmem:[#allocation13 + $0x48] sm:$0xff]
    %v1969 = vld [vmem:[#allocation13 + $0x50] sm:$0xff]
    %v1970 = vld [vmem:[#allocation13 + $0x58] sm:$0xff]
    %v1971 = vld [vmem:[#allocation13 + $0x60] sm:$0xff]
    %v1972 = vld [vmem:[#allocation13 + $0x68] sm:$0xff]
    %v1973 = vld [vmem:[#allocation13 + $0x70] sm:$0xff]
    %v1974 = vld [vmem:[#allocation13 + $0x78] sm:$0xff]
    %v1975 = vld [vmem:[#allocation13 + $0x80] sm:$0xff]
    %v1976 = vld [vmem:[#allocation13 + $0x88] sm:$0xff]
    %v1977 = vld [vmem:[#allocation13 + $0x90] sm:$0xff]
    %v1978 = vld [vmem:[#allocation13 + $0x98] sm:$0xff]
    %v1979 = vld [vmem:[#allocation13 + $0xa0] sm:$0xff]
    %v1980 = vld [vmem:[#allocation13 + $0xa8] sm:$0xff]
    %v1981 = vld [vmem:[#allocation13 + $0xb0] sm:$0xff]
    %v1982 = vld [vmem:[#allocation13 + $0xb8] sm:$0xff]
    %v1983 = vld [vmem:[#allocation13 + $0xc0] sm:$0xff]
    %v1984 = vld [vmem:[#allocation13 + $0xc8] sm:$0xff]
    %v1985 = vld [vmem:[#allocation13 + $0xd0] sm:$0xff]
    %v1986 = vld [vmem:[#allocation13 + $0xd8] sm:$0xff]
    %v1987 = vld [vmem:[#allocation13 + $0xe0] sm:$0xff]
    %v1988 = vld [vmem:[#allocation13 + $0xe8] sm:$0xff]
    %v1989 = vld [vmem:[#allocation13 + $0xf0] sm:$0xff]
    %v1990 = vld [vmem:[#allocation13 + $0xf8] sm:$0xff]
    %v1991 = vld [vmem:[#allocation13 + $0x100] sm:$0xff]
    %v1992 = vld [vmem:[#allocation13 + $0x108] sm:$0xff]
    %v1993 = vld [vmem:[#allocation13 + $0x110] sm:$0xff]
    %v1994 = vld [vmem:[#allocation13 + $0x118] sm:$0xff]
    %v1995 = vld [vmem:[#allocation13 + $0x120] sm:$0xff]
    %v1996 = vld [vmem:[#allocation13 + $0x128] sm:$0xff]
    %v1997 = vld [vmem:[#allocation13 + $0x130] sm:$0xff]
    %v1998 = vld [vmem:[#allocation13 + $0x138] sm:$0xff]
    %v1999 = vld [vmem:[#allocation13 + $0x140] sm:$0xff]
    %v2000 = vld [vmem:[#allocation13 + $0x148] sm:$0xff]
    %v2001 = vld [vmem:[#allocation13 + $0x150] sm:$0xff]
    %v2002 = vld [vmem:[#allocation13 + $0x158] sm:$0xff]
    %v2003 = vld [vmem:[#allocation13 + $0x160] sm:$0xff]
    %v2004 = vld [vmem:[#allocation13 + $0x168] sm:$0xff]
    %v2005 = vld [vmem:[#allocation13 + $0x170] sm:$0xff]
    %v2006 = vld [vmem:[#allocation13 + $0x178] sm:$0xff]
    %v2007 = vld [vmem:[#allocation13 + $0x180] sm:$0xff]
    %v2008 = vld [vmem:[#allocation13 + $0x188] sm:$0xff]
    %v2009 = vld [vmem:[#allocation13 + $0x190] sm:$0xff]
    %v2010 = vld [vmem:[#allocation13 + $0x198] sm:$0xff]
    %v2011 = vld [vmem:[#allocation13 + $0x1a0] sm:$0xff]
    %v2012 = vld [vmem:[#allocation13 + $0x1a8] sm:$0xff]
    %v2013 = vld [vmem:[#allocation13 + $0x1b0] sm:$0xff]
    %v2014 = vld [vmem:[#allocation13 + $0x1b8] sm:$0xff]
    %v2015 = vld [vmem:[#allocation13 + $0x1c0] sm:$0xff]
    %v2016 = vld [vmem:[#allocation13 + $0x1c8] sm:$0xff]
    %v2017 = vld [vmem:[#allocation13 + $0x1d0] sm:$0xff]
    %v2018 = vld [vmem:[#allocation13 + $0x1d8] sm:$0xff]
    %v2019 = vld [vmem:[#allocation13 + $0x1e0] sm:$0xff]
    %v2020 = vld [vmem:[#allocation13 + $0x1e8] sm:$0xff]
    %v2021 = vld [vmem:[#allocation13 + $0x1f0] sm:$0xff]
    %v2022 = vld [vmem:[#allocation13 + $0x1f8] sm:$0xff]
    %2023 = vmatprep.subr.mxu0 %v1960
    %2024 = vmatpush1.msra.mxu0 %v1959
    %2025 = vmatprep.subr.mxu0 %v1964
    %2026 = vmatpush1.msra.mxu0 %v1963
    %2027 = vmatprep.subr.mxu0 %v1968
    %2028 = vmatpush1.msra.mxu0 %v1967
    %2029 = vmatprep.subr.mxu0 %v1972
    %2030 = vmatpush1.msra.mxu0 %v1971
    %2031 = vmatprep.subr.mxu0 %v1976
    %2032 = vmatpush1.msra.mxu0 %v1975
    %2033 = vmatprep.subr.mxu0 %v1980
    %2034 = vmatpush1.msra.mxu0 %v1979
    %2035 = vmatprep.subr.mxu0 %v1984
    %2036 = vmatpush1.msra.mxu0 %v1983
    %2037 = vmatprep.subr.mxu0 %v1988
    %2038 = vmatpush1.msra.mxu0 %v1987
    %2039 = vmatprep.subr.mxu0 %v1992
    %2040 = vmatpush1.msra.mxu0 %v1991
    %2041 = vmatprep.subr.mxu0 %v1996
    %2042 = vmatpush1.msra.mxu0 %v1995
    %2043 = vmatprep.subr.mxu0 %v2000
    %2044 = vmatpush1.msra.mxu0 %v1999
    %2045 = vmatprep.subr.mxu0 %v2004
    %2046 = vmatpush1.msra.mxu0 %v2003
    %2047 = vmatprep.subr.mxu0 %v2008
    %2048 = vmatpush1.msra.mxu0 %v2007
    %2049 = vmatprep.subr.mxu0 %v2012
    %2050 = vmatpush1.msra.mxu0 %v2011
    %2051 = vmatprep.subr.mxu0 %v2016
    %2052 = vmatpush1.msra.mxu0 %v2015
    %2053 = vmatprep.subr.mxu0 %v2020
    %2054 = vmatpush1.msra.mxu0 %v2019
    %2055 = vmatprep.subr.mxu0 0.0
    %2056 = vmatpush1.msra.mxu0 0.0
    %2057 = vmatprep.subr.mxu0 0.0
    %2058 = vmatpush1.msra.mxu0 0.0
    %2059 = vmatprep.subr.mxu0 0.0
    %2060 = vmatpush1.msra.mxu0 0.0
    %2061 = vmatprep.subr.mxu0 0.0
    %2062 = vmatpush1.msra.mxu0 0.0
    %2063 = vmatprep.subr.mxu0 0.0
    %2064 = vmatpush1.msra.mxu0 0.0
    %2065 = vmatprep.subr.mxu0 0.0
    %2066 = vmatpush1.msra.mxu0 0.0
    %2067 = vmatprep.subr.mxu0 0.0
    %2068 = vmatpush1.msra.mxu0 0.0
    %2069 = vmatprep.subr.mxu0 0.0
    %2070 = vmatpush1.msra.mxu0 0.0
    %2071 = vmatprep.subr.mxu0 0.0
    %2072 = vmatpush1.msra.mxu0 0.0
    %2073 = vmatprep.subr.mxu0 0.0
    %2074 = vmatpush1.msra.mxu0 0.0
    %2075 = vmatprep.subr.mxu0 0.0
    %2076 = vmatpush1.msra.mxu0 0.0
    %2077 = vmatprep.subr.mxu0 0.0
    %2078 = vmatpush1.msra.mxu0 0.0
    %2079 = vmatprep.subr.mxu0 0.0
    %2080 = vmatpush1.msra.mxu0 0.0
    %2081 = vmatprep.subr.mxu0 0.0
    %2082 = vmatpush1.msra.mxu0 0.0
    %2083 = vmatprep.subr.mxu0 0.0
    %2084 = vmatpush1.msra.mxu0 0.0
    %2085 = vmatprep.subr.mxu0 0.0
    %2086 = vmatpush1.msra.mxu0 0.0
    %2087 = vmatprep.mubr.f32.mxu0 0.0
    %2088 = vmatmul.mubr.f32.gmra.mrb[0].mxu0 %v1945
    %v2089 = vpop.f32.mrb[0].mxu0
    %v2090 = vadd.f32 0.0, %v2089
    %v2091 = vpop.f32.mrb[0].mxu0
    %v2092 = vadd.f32 0.0, %v2091
    %2093 = vdwg.mxu0
    %2094 = vmatprep.subr.mxu0 %v1962
    %2095 = vmatpush1.msra.mxu0 %v1961
    %2096 = vmatprep.subr.mxu0 %v1966
    %2097 = vmatpush1.msra.mxu0 %v1965
    %2098 = vmatprep.subr.mxu0 %v1970
    %2099 = vmatpush1.msra.mxu0 %v1969
    %2100 = vmatprep.subr.mxu0 %v1974
    %2101 = vmatpush1.msra.mxu0 %v1973
    %2102 = vmatprep.subr.mxu0 %v1978
    %2103 = vmatpush1.msra.mxu0 %v1977
    %2104 = vmatprep.subr.mxu0 %v1982
    %2105 = vmatpush1.msra.mxu0 %v1981
    %2106 = vmatprep.subr.mxu0 %v1986
    %2107 = vmatpush1.msra.mxu0 %v1985
    %2108 = vmatprep.subr.mxu0 %v1990
    %2109 = vmatpush1.msra.mxu0 %v1989
    %2110 = vmatprep.subr.mxu0 %v1994
    %2111 = vmatpush1.msra.mxu0 %v1993
    %2112 = vmatprep.subr.mxu0 %v1998
    %2113 = vmatpush1.msra.mxu0 %v1997
    %2114 = vmatprep.subr.mxu0 %v2002
    %2115 = vmatpush1.msra.mxu0 %v2001
    %2116 = vmatprep.subr.mxu0 %v2006
    %2117 = vmatpush1.msra.mxu0 %v2005
    %2118 = vmatprep.subr.mxu0 %v2010
    %2119 = vmatpush1.msra.mxu0 %v2009
    %2120 = vmatprep.subr.mxu0 %v2014
    %2121 = vmatpush1.msra.mxu0 %v2013
    %2122 = vmatprep.subr.mxu0 %v2018
    %2123 = vmatpush1.msra.mxu0 %v2017
    %2124 = vmatprep.subr.mxu0 %v2022
    %2125 = vmatpush1.msra.mxu0 %v2021
    %2126 = vmatprep.subr.mxu0 0.0
    %2127 = vmatpush1.msra.mxu0 0.0
    %2128 = vmatprep.subr.mxu0 0.0
    %2129 = vmatpush1.msra.mxu0 0.0
    %2130 = vmatprep.subr.mxu0 0.0
    %2131 = vmatpush1.msra.mxu0 0.0
    %2132 = vmatprep.subr.mxu0 0.0
    %2133 = vmatpush1.msra.mxu0 0.0
    %2134 = vmatprep.subr.mxu0 0.0
    %2135 = vmatpush1.msra.mxu0 0.0
    %2136 = vmatprep.subr.mxu0 0.0
    %2137 = vmatpush1.msra.mxu0 0.0
    %2138 = vmatprep.subr.mxu0 0.0
    %2139 = vmatpush1.msra.mxu0 0.0
    %2140 = vmatprep.subr.mxu0 0.0
    %2141 = vmatpush1.msra.mxu0 0.0
    %2142 = vmatprep.subr.mxu0 0.0
    %2143 = vmatpush1.msra.mxu0 0.0
    %2144 = vmatprep.subr.mxu0 0.0
    %2145 = vmatpush1.msra.mxu0 0.0
    %2146 = vmatprep.subr.mxu0 0.0
    %2147 = vmatpush1.msra.mxu0 0.0
    %2148 = vmatprep.subr.mxu0 0.0
    %2149 = vmatpush1.msra.mxu0 0.0
    %2150 = vmatprep.subr.mxu0 0.0
    %2151 = vmatpush1.msra.mxu0 0.0
    %2152 = vmatprep.subr.mxu0 0.0
    %2153 = vmatpush1.msra.mxu0 0.0
    %2154 = vmatprep.subr.mxu0 0.0
    %2155 = vmatpush1.msra.mxu0 0.0
    %2156 = vmatprep.subr.mxu0 0.0
    %2157 = vmatpush1.msra.mxu0 0.0
    %2158 = vmatprep.mubr.f32.mxu0 0.0
    %2159 = vmatmul.mubr.f32.gmra.mrb[0].mxu0 %v1945
    %v2160 = vpop.f32.mrb[0].mxu0
    %v2161 = vadd.f32 0.0, %v2160
    %v2162 = vpop.f32.mrb[0].mxu0
    %v2163 = vadd.f32 0.0, %v2162
    %2164 = vdwg.mxu0
    %v2169 = vcombine.low %v2090, %v2092
    %v2170 = vcombine.low %v2161, %v2163
    %v2172 = vunpack.c.l.s4 1966171168
    %v2173 = vunpack.c.0.s8 %v2172
    %v2174 = vlaneseq
    %v2175 = vshrl.u32 %v2174, 7
    %v2176 = vsub.s32 %v2173, %v2175
    %v2177 = vrot.slane %v2169, %v2176
    %v2179 = vunpack.c.l.s4 1966171168
    %v2180 = vunpack.c.0.s8 %v2179
    %v2181 = vlaneseq
    %v2182 = vshrl.u32 %v2181, 7
    %v2183 = vsub.s32 %v2180, %v2182
    %v2184 = vrot.slane %v2170, %v2183
    %v2185 = vcombine.low %v2177, %v2184
    %v2187 = vunpack.c.l.s4 1966171168
    %v2188 = vunpack.c.0.s8 %v2187
    %v2189 = vlaneseq
    %v2190 = vshrl.u32 %v2189, 7
    %v2191 = vsub.s32 %v2188, %v2190
    %v2192 = vrot.slane %v2185, %v2191
    %v2194 = vadd.f32 %v1958, %v2192
    %v2195 = vxor.u32 %v2194, 2147483648
    %v2196 = vmul.f32 %v2195, 1.442695
    %v2197 = vpow.pop %v2196
    %v2198 = vadd.f32 %v2197, 1.0
    %v2199 = vrcp.pop %v2198
    %v2200 = vmul.f32 1.0, %v2199
    %v2202 = vrot.slane %v2194, 1
    %v2204 = vxor.u32 %v2202, 2147483648
    %v2205 = vmul.f32 %v2204, 1.442695
    %v2206 = vpow.pop %v2205
    %v2207 = vadd.f32 %v2206, 1.0
    %v2208 = vrcp.pop %v2207
    %v2209 = vmul.f32 1.0, %v2208
    %v2210 = vrot.slane %v2194, 2
    %v2212 = vtanh.pop %v2210
    %v2213 = vrot.slane %v2194, 3
    %v2215 = vxor.u32 %v2213, 2147483648
    %v2216 = vmul.f32 %v2215, 1.442695
    %v2217 = vpow.pop %v2216
    %v2218 = vadd.f32 %v2217, 1.0
    %v2219 = vrcp.pop %v2218
    %v2220 = vmul.f32 1.0, %v2219
    %v2221 = vmul.f32 %v2209, %v1943
    %v2222 = vmul.f32 %v2200, %v2212
    %v2223 = vadd.f32 %v2221, %v2222
    %v2224 = vtanh.pop %v2223
    %v2225 = vmul.f32 %v2220, %v2224
    %v2226 = vld [vmem:[#allocation6 + $0x3] sm:$0x1]
    %v2227 = vmul.f32 %v2225, %v127
    %v2228 = vadd.f32 %v2226, %v2227
    %2229 = vst [vmem:[#allocation6 + $0x3] sm:$0x1] %v2228
    %v2230 = vld [vmem:[#allocation6 + $0x4] sm:$0x1]
    %v2231 = vmul.f32 %v2225, %v128
    %v2232 = vadd.f32 %v2230, %v2231
    %2233 = vst [vmem:[#allocation6 + $0x4] sm:$0x1] %v2232
    %s2234 = scalar_lea.vmem [#allocation2], 4
    %v2235 = vld [vmem:[%s2234] ss:$8 sm:$0xf]
    %s2236 = scalar_lea.vmem [#allocation3], 3
    %v2237 = vld [vmem:[%s2236] ss:$8 sm:$0xf]
    %v2238 = vadd.f32 %v2235, %v2237
    %v2239 = vld [vmem:[#allocation13] sm:$0xff]
    %v2240 = vld [vmem:[#allocation13 + $0x8] sm:$0xff]
    %v2241 = vld [vmem:[#allocation13 + $0x10] sm:$0xff]
    %v2242 = vld [vmem:[#allocation13 + $0x18] sm:$0xff]
    %v2243 = vld [vmem:[#allocation13 + $0x20] sm:$0xff]
    %v2244 = vld [vmem:[#allocation13 + $0x28] sm:$0xff]
    %v2245 = vld [vmem:[#allocation13 + $0x30] sm:$0xff]
    %v2246 = vld [vmem:[#allocation13 + $0x38] sm:$0xff]
    %v2247 = vld [vmem:[#allocation13 + $0x40] sm:$0xff]
    %v2248 = vld [vmem:[#allocation13 + $0x48] sm:$0xff]
    %v2249 = vld [vmem:[#allocation13 + $0x50] sm:$0xff]
    %v2250 = vld [vmem:[#allocation13 + $0x58] sm:$0xff]
    %v2251 = vld [vmem:[#allocation13 + $0x60] sm:$0xff]
    %v2252 = vld [vmem:[#allocation13 + $0x68] sm:$0xff]
    %v2253 = vld [vmem:[#allocation13 + $0x70] sm:$0xff]
    %v2254 = vld [vmem:[#allocation13 + $0x78] sm:$0xff]
    %v2255 = vld [vmem:[#allocation13 + $0x80] sm:$0xff]
    %v2256 = vld [vmem:[#allocation13 + $0x88] sm:$0xff]
    %v2257 = vld [vmem:[#allocation13 + $0x90] sm:$0xff]
    %v2258 = vld [vmem:[#allocation13 + $0x98] sm:$0xff]
    %v2259 = vld [vmem:[#allocation13 + $0xa0] sm:$0xff]
    %v2260 = vld [vmem:[#allocation13 + $0xa8] sm:$0xff]
    %v2261 = vld [vmem:[#allocation13 + $0xb0] sm:$0xff]
    %v2262 = vld [vmem:[#allocation13 + $0xb8] sm:$0xff]
    %v2263 = vld [vmem:[#allocation13 + $0xc0] sm:$0xff]
    %v2264 = vld [vmem:[#allocation13 + $0xc8] sm:$0xff]
    %v2265 = vld [vmem:[#allocation13 + $0xd0] sm:$0xff]
    %v2266 = vld [vmem:[#allocation13 + $0xd8] sm:$0xff]
    %v2267 = vld [vmem:[#allocation13 + $0xe0] sm:$0xff]
    %v2268 = vld [vmem:[#allocation13 + $0xe8] sm:$0xff]
    %v2269 = vld [vmem:[#allocation13 + $0xf0] sm:$0xff]
    %v2270 = vld [vmem:[#allocation13 + $0xf8] sm:$0xff]
    %v2271 = vld [vmem:[#allocation13 + $0x100] sm:$0xff]
    %v2272 = vld [vmem:[#allocation13 + $0x108] sm:$0xff]
    %v2273 = vld [vmem:[#allocation13 + $0x110] sm:$0xff]
    %v2274 = vld [vmem:[#allocation13 + $0x118] sm:$0xff]
    %v2275 = vld [vmem:[#allocation13 + $0x120] sm:$0xff]
    %v2276 = vld [vmem:[#allocation13 + $0x128] sm:$0xff]
    %v2277 = vld [vmem:[#allocation13 + $0x130] sm:$0xff]
    %v2278 = vld [vmem:[#allocation13 + $0x138] sm:$0xff]
    %v2279 = vld [vmem:[#allocation13 + $0x140] sm:$0xff]
    %v2280 = vld [vmem:[#allocation13 + $0x148] sm:$0xff]
    %v2281 = vld [vmem:[#allocation13 + $0x150] sm:$0xff]
    %v2282 = vld [vmem:[#allocation13 + $0x158] sm:$0xff]
    %v2283 = vld [vmem:[#allocation13 + $0x160] sm:$0xff]
    %v2284 = vld [vmem:[#allocation13 + $0x168] sm:$0xff]
    %v2285 = vld [vmem:[#allocation13 + $0x170] sm:$0xff]
    %v2286 = vld [vmem:[#allocation13 + $0x178] sm:$0xff]
    %v2287 = vld [vmem:[#allocation13 + $0x180] sm:$0xff]
    %v2288 = vld [vmem:[#allocation13 + $0x188] sm:$0xff]
    %v2289 = vld [vmem:[#allocation13 + $0x190] sm:$0xff]
    %v2290 = vld [vmem:[#allocation13 + $0x198] sm:$0xff]
    %v2291 = vld [vmem:[#allocation13 + $0x1a0] sm:$0xff]
    %v2292 = vld [vmem:[#allocation13 + $0x1a8] sm:$0xff]
    %v2293 = vld [vmem:[#allocation13 + $0x1b0] sm:$0xff]
    %v2294 = vld [vmem:[#allocation13 + $0x1b8] sm:$0xff]
    %v2295 = vld [vmem:[#allocation13 + $0x1c0] sm:$0xff]
    %v2296 = vld [vmem:[#allocation13 + $0x1c8] sm:$0xff]
    %v2297 = vld [vmem:[#allocation13 + $0x1d0] sm:$0xff]
    %v2298 = vld [vmem:[#allocation13 + $0x1d8] sm:$0xff]
    %v2299 = vld [vmem:[#allocation13 + $0x1e0] sm:$0xff]
    %v2300 = vld [vmem:[#allocation13 + $0x1e8] sm:$0xff]
    %v2301 = vld [vmem:[#allocation13 + $0x1f0] sm:$0xff]
    %v2302 = vld [vmem:[#allocation13 + $0x1f8] sm:$0xff]
    %2303 = vmatprep.subr.mxu0 %v2240
    %2304 = vmatpush1.msra.mxu0 %v2239
    %2305 = vmatprep.subr.mxu0 %v2244
    %2306 = vmatpush1.msra.mxu0 %v2243
    %2307 = vmatprep.subr.mxu0 %v2248
    %2308 = vmatpush1.msra.mxu0 %v2247
    %2309 = vmatprep.subr.mxu0 %v2252
    %2310 = vmatpush1.msra.mxu0 %v2251
    %2311 = vmatprep.subr.mxu0 %v2256
    %2312 = vmatpush1.msra.mxu0 %v2255
    %2313 = vmatprep.subr.mxu0 %v2260
    %2314 = vmatpush1.msra.mxu0 %v2259
    %2315 = vmatprep.subr.mxu0 %v2264
    %2316 = vmatpush1.msra.mxu0 %v2263
    %2317 = vmatprep.subr.mxu0 %v2268
    %2318 = vmatpush1.msra.mxu0 %v2267
    %2319 = vmatprep.subr.mxu0 %v2272
    %2320 = vmatpush1.msra.mxu0 %v2271
    %2321 = vmatprep.subr.mxu0 %v2276
    %2322 = vmatpush1.msra.mxu0 %v2275
    %2323 = vmatprep.subr.mxu0 %v2280
    %2324 = vmatpush1.msra.mxu0 %v2279
    %2325 = vmatprep.subr.mxu0 %v2284
    %2326 = vmatpush1.msra.mxu0 %v2283
    %2327 = vmatprep.subr.mxu0 %v2288
    %2328 = vmatpush1.msra.mxu0 %v2287
    %2329 = vmatprep.subr.mxu0 %v2292
    %2330 = vmatpush1.msra.mxu0 %v2291
    %2331 = vmatprep.subr.mxu0 %v2296
    %2332 = vmatpush1.msra.mxu0 %v2295
    %2333 = vmatprep.subr.mxu0 %v2300
    %2334 = vmatpush1.msra.mxu0 %v2299
    %2335 = vmatprep.subr.mxu0 0.0
    %2336 = vmatpush1.msra.mxu0 0.0
    %2337 = vmatprep.subr.mxu0 0.0
    %2338 = vmatpush1.msra.mxu0 0.0
    %2339 = vmatprep.subr.mxu0 0.0
    %2340 = vmatpush1.msra.mxu0 0.0
    %2341 = vmatprep.subr.mxu0 0.0
    %2342 = vmatpush1.msra.mxu0 0.0
    %2343 = vmatprep.subr.mxu0 0.0
    %2344 = vmatpush1.msra.mxu0 0.0
    %2345 = vmatprep.subr.mxu0 0.0
    %2346 = vmatpush1.msra.mxu0 0.0
    %2347 = vmatprep.subr.mxu0 0.0
    %2348 = vmatpush1.msra.mxu0 0.0
    %2349 = vmatprep.subr.mxu0 0.0
    %2350 = vmatpush1.msra.mxu0 0.0
    %2351 = vmatprep.subr.mxu0 0.0
    %2352 = vmatpush1.msra.mxu0 0.0
    %2353 = vmatprep.subr.mxu0 0.0
    %2354 = vmatpush1.msra.mxu0 0.0
    %2355 = vmatprep.subr.mxu0 0.0
    %2356 = vmatpush1.msra.mxu0 0.0
    %2357 = vmatprep.subr.mxu0 0.0
    %2358 = vmatpush1.msra.mxu0 0.0
    %2359 = vmatprep.subr.mxu0 0.0
    %2360 = vmatpush1.msra.mxu0 0.0
    %2361 = vmatprep.subr.mxu0 0.0
    %2362 = vmatpush1.msra.mxu0 0.0
    %2363 = vmatprep.subr.mxu0 0.0
    %2364 = vmatpush1.msra.mxu0 0.0
    %2365 = vmatprep.subr.mxu0 0.0
    %2366 = vmatpush1.msra.mxu0 0.0
    %2367 = vmatprep.mubr.f32.mxu0 0.0
    %2368 = vmatmul.mubr.f32.gmra.mrb[0].mxu0 %v2225
    %v2369 = vpop.f32.mrb[0].mxu0
    %v2370 = vadd.f32 0.0, %v2369
    %v2371 = vpop.f32.mrb[0].mxu0
    %v2372 = vadd.f32 0.0, %v2371
    %2373 = vdwg.mxu0
    %2374 = vmatprep.subr.mxu0 %v2242
    %2375 = vmatpush1.msra.mxu0 %v2241
    %2376 = vmatprep.subr.mxu0 %v2246
    %2377 = vmatpush1.msra.mxu0 %v2245
    %2378 = vmatprep.subr.mxu0 %v2250
    %2379 = vmatpush1.msra.mxu0 %v2249
    %2380 = vmatprep.subr.mxu0 %v2254
    %2381 = vmatpush1.msra.mxu0 %v2253
    %2382 = vmatprep.subr.mxu0 %v2258
    %2383 = vmatpush1.msra.mxu0 %v2257
    %2384 = vmatprep.subr.mxu0 %v2262
    %2385 = vmatpush1.msra.mxu0 %v2261
    %2386 = vmatprep.subr.mxu0 %v2266
    %2387 = vmatpush1.msra.mxu0 %v2265
    %2388 = vmatprep.subr.mxu0 %v2270
    %2389 = vmatpush1.msra.mxu0 %v2269
    %2390 = vmatprep.subr.mxu0 %v2274
    %2391 = vmatpush1.msra.mxu0 %v2273
    %2392 = vmatprep.subr.mxu0 %v2278
    %2393 = vmatpush1.msra.mxu0 %v2277
    %2394 = vmatprep.subr.mxu0 %v2282
    %2395 = vmatpush1.msra.mxu0 %v2281
    %2396 = vmatprep.subr.mxu0 %v2286
    %2397 = vmatpush1.msra.mxu0 %v2285
    %2398 = vmatprep.subr.mxu0 %v2290
    %2399 = vmatpush1.msra.mxu0 %v2289
    %2400 = vmatprep.subr.mxu0 %v2294
    %2401 = vmatpush1.msra.mxu0 %v2293
    %2402 = vmatprep.subr.mxu0 %v2298
    %2403 = vmatpush1.msra.mxu0 %v2297
    %2404 = vmatprep.subr.mxu0 %v2302
    %2405 = vmatpush1.msra.mxu0 %v2301
    %2406 = vmatprep.subr.mxu0 0.0
    %2407 = vmatpush1.msra.mxu0 0.0
    %2408 = vmatprep.subr.mxu0 0.0
    %2409 = vmatpush1.msra.mxu0 0.0
    %2410 = vmatprep.subr.mxu0 0.0
    %2411 = vmatpush1.msra.mxu0 0.0
    %2412 = vmatprep.subr.mxu0 0.0
    %2413 = vmatpush1.msra.mxu0 0.0
    %2414 = vmatprep.subr.mxu0 0.0
    %2415 = vmatpush1.msra.mxu0 0.0
    %2416 = vmatprep.subr.mxu0 0.0
    %2417 = vmatpush1.msra.mxu0 0.0
    %2418 = vmatprep.subr.mxu0 0.0
    %2419 = vmatpush1.msra.mxu0 0.0
    %2420 = vmatprep.subr.mxu0 0.0
    %2421 = vmatpush1.msra.mxu0 0.0
    %2422 = vmatprep.subr.mxu0 0.0
    %2423 = vmatpush1.msra.mxu0 0.0
    %2424 = vmatprep.subr.mxu0 0.0
    %2425 = vmatpush1.msra.mxu0 0.0
    %2426 = vmatprep.subr.mxu0 0.0
    %2427 = vmatpush1.msra.mxu0 0.0
    %2428 = vmatprep.subr.mxu0 0.0
    %2429 = vmatpush1.msra.mxu0 0.0
    %2430 = vmatprep.subr.mxu0 0.0
    %2431 = vmatpush1.msra.mxu0 0.0
    %2432 = vmatprep.subr.mxu0 0.0
    %2433 = vmatpush1.msra.mxu0 0.0
    %2434 = vmatprep.subr.mxu0 0.0
    %2435 = vmatpush1.msra.mxu0 0.0
    %2436 = vmatprep.subr.mxu0 0.0
    %2437 = vmatpush1.msra.mxu0 0.0
    %2438 = vmatprep.mubr.f32.mxu0 0.0
    %2439 = vmatmul.mubr.f32.gmra.mrb[0].mxu0 %v2225
    %v2440 = vpop.f32.mrb[0].mxu0
    %v2441 = vadd.f32 0.0, %v2440
    %v2442 = vpop.f32.mrb[0].mxu0
    %v2443 = vadd.f32 0.0, %v2442
    %2444 = vdwg.mxu0
    %v2449 = vcombine.low %v2370, %v2372
    %v2450 = vcombine.low %v2441, %v2443
    %v2452 = vunpack.c.l.s4 1966171168
    %v2453 = vunpack.c.0.s8 %v2452
    %v2454 = vlaneseq
    %v2455 = vshrl.u32 %v2454, 7
    %v2456 = vsub.s32 %v2453, %v2455
    %v2457 = vrot.slane %v2449, %v2456
    %v2459 = vunpack.c.l.s4 1966171168
    %v2460 = vunpack.c.0.s8 %v2459
    %v2461 = vlaneseq
    %v2462 = vshrl.u32 %v2461, 7
    %v2463 = vsub.s32 %v2460, %v2462
    %v2464 = vrot.slane %v2450, %v2463
    %v2465 = vcombine.low %v2457, %v2464
    %v2467 = vunpack.c.l.s4 1966171168
    %v2468 = vunpack.c.0.s8 %v2467
    %v2469 = vlaneseq
    %v2470 = vshrl.u32 %v2469, 7
    %v2471 = vsub.s32 %v2468, %v2470
    %v2472 = vrot.slane %v2465, %v2471
    %v2474 = vadd.f32 %v2238, %v2472
    %v2475 = vxor.u32 %v2474, 2147483648
    %v2476 = vmul.f32 %v2475, 1.442695
    %v2477 = vpow.pop %v2476
    %v2478 = vadd.f32 %v2477, 1.0
    %v2479 = vrcp.pop %v2478
    %v2480 = vmul.f32 1.0, %v2479
    %v2482 = vrot.slane %v2474, 1
    %v2484 = vxor.u32 %v2482, 2147483648
    %v2485 = vmul.f32 %v2484, 1.442695
    %v2486 = vpow.pop %v2485
    %v2487 = vadd.f32 %v2486, 1.0
    %v2488 = vrcp.pop %v2487
    %v2489 = vmul.f32 1.0, %v2488
    %v2490 = vrot.slane %v2474, 2
    %v2492 = vtanh.pop %v2490
    %v2493 = vrot.slane %v2474, 3
    %v2495 = vxor.u32 %v2493, 2147483648
    %v2496 = vmul.f32 %v2495, 1.442695
    %v2497 = vpow.pop %v2496
    %v2498 = vadd.f32 %v2497, 1.0
    %v2499 = vrcp.pop %v2498
    %v2500 = vmul.f32 1.0, %v2499
    %v2501 = vmul.f32 %v2489, %v2223
    %v2502 = vmul.f32 %v2480, %v2492
    %v2503 = vadd.f32 %v2501, %v2502
    %v2504 = vtanh.pop %v2503
    %v2505 = vmul.f32 %v2500, %v2504
    %v2506 = vld [vmem:[#allocation6 + $0x4] sm:$0x1]
    %v2507 = vmul.f32 %v2505, %v127
    %v2508 = vadd.f32 %v2506, %v2507
    %2509 = vst [vmem:[#allocation6 + $0x4] sm:$0x1] %v2508
    %v2510 = vld [vmem:[#allocation6 + $0x3] sm:$0x1]
    %v2511 = vmul.f32 %v2505, %v128
    %v2512 = vadd.f32 %v2510, %v2511
    %2513 = vst [vmem:[#allocation6 + $0x3] sm:$0x1] %v2512
    %s2514 = scalar_lea.vmem [#allocation2], 5
    %v2515 = vld [vmem:[%s2514] ss:$8 sm:$0xf]
    %s2516 = scalar_lea.vmem [#allocation3], 2
    %v2517 = vld [vmem:[%s2516] ss:$8 sm:$0xf]
    %v2518 = vadd.f32 %v2515, %v2517
    %v2519 = vld [vmem:[#allocation13] sm:$0xff]
    %v2520 = vld [vmem:[#allocation13 + $0x8] sm:$0xff]
    %v2521 = vld [vmem:[#allocation13 + $0x10] sm:$0xff]
    %v2522 = vld [vmem:[#allocation13 + $0x18] sm:$0xff]
    %v2523 = vld [vmem:[#allocation13 + $0x20] sm:$0xff]
    %v2524 = vld [vmem:[#allocation13 + $0x28] sm:$0xff]
    %v2525 = vld [vmem:[#allocation13 + $0x30] sm:$0xff]
    %v2526 = vld [vmem:[#allocation13 + $0x38] sm:$0xff]
    %v2527 = vld [vmem:[#allocation13 + $0x40] sm:$0xff]
    %v2528 = vld [vmem:[#allocation13 + $0x48] sm:$0xff]
    %v2529 = vld [vmem:[#allocation13 + $0x50] sm:$0xff]
    %v2530 = vld [vmem:[#allocation13 + $0x58] sm:$0xff]
    %v2531 = vld [vmem:[#allocation13 + $0x60] sm:$0xff]
    %v2532 = vld [vmem:[#allocation13 + $0x68] sm:$0xff]
    %v2533 = vld [vmem:[#allocation13 + $0x70] sm:$0xff]
    %v2534 = vld [vmem:[#allocation13 + $0x78] sm:$0xff]
    %v2535 = vld [vmem:[#allocation13 + $0x80] sm:$0xff]
    %v2536 = vld [vmem:[#allocation13 + $0x88] sm:$0xff]
    %v2537 = vld [vmem:[#allocation13 + $0x90] sm:$0xff]
    %v2538 = vld [vmem:[#allocation13 + $0x98] sm:$0xff]
    %v2539 = vld [vmem:[#allocation13 + $0xa0] sm:$0xff]
    %v2540 = vld [vmem:[#allocation13 + $0xa8] sm:$0xff]
    %v2541 = vld [vmem:[#allocation13 + $0xb0] sm:$0xff]
    %v2542 = vld [vmem:[#allocation13 + $0xb8] sm:$0xff]
    %v2543 = vld [vmem:[#allocation13 + $0xc0] sm:$0xff]
    %v2544 = vld [vmem:[#allocation13 + $0xc8] sm:$0xff]
    %v2545 = vld [vmem:[#allocation13 + $0xd0] sm:$0xff]
    %v2546 = vld [vmem:[#allocation13 + $0xd8] sm:$0xff]
    %v2547 = vld [vmem:[#allocation13 + $0xe0] sm:$0xff]
    %v2548 = vld [vmem:[#allocation13 + $0xe8] sm:$0xff]
    %v2549 = vld [vmem:[#allocation13 + $0xf0] sm:$0xff]
    %v2550 = vld [vmem:[#allocation13 + $0xf8] sm:$0xff]
    %v2551 = vld [vmem:[#allocation13 + $0x100] sm:$0xff]
    %v2552 = vld [vmem:[#allocation13 + $0x108] sm:$0xff]
    %v2553 = vld [vmem:[#allocation13 + $0x110] sm:$0xff]
    %v2554 = vld [vmem:[#allocation13 + $0x118] sm:$0xff]
    %v2555 = vld [vmem:[#allocation13 + $0x120] sm:$0xff]
    %v2556 = vld [vmem:[#allocation13 + $0x128] sm:$0xff]
    %v2557 = vld [vmem:[#allocation13 + $0x130] sm:$0xff]
    %v2558 = vld [vmem:[#allocation13 + $0x138] sm:$0xff]
    %v2559 = vld [vmem:[#allocation13 + $0x140] sm:$0xff]
    %v2560 = vld [vmem:[#allocation13 + $0x148] sm:$0xff]
    %v2561 = vld [vmem:[#allocation13 + $0x150] sm:$0xff]
    %v2562 = vld [vmem:[#allocation13 + $0x158] sm:$0xff]
    %v2563 = vld [vmem:[#allocation13 + $0x160] sm:$0xff]
    %v2564 = vld [vmem:[#allocation13 + $0x168] sm:$0xff]
    %v2565 = vld [vmem:[#allocation13 + $0x170] sm:$0xff]
    %v2566 = vld [vmem:[#allocation13 + $0x178] sm:$0xff]
    %v2567 = vld [vmem:[#allocation13 + $0x180] sm:$0xff]
    %v2568 = vld [vmem:[#allocation13 + $0x188] sm:$0xff]
    %v2569 = vld [vmem:[#allocation13 + $0x190] sm:$0xff]
    %v2570 = vld [vmem:[#allocation13 + $0x198] sm:$0xff]
    %v2571 = vld [vmem:[#allocation13 + $0x1a0] sm:$0xff]
    %v2572 = vld [vmem:[#allocation13 + $0x1a8] sm:$0xff]
    %v2573 = vld [vmem:[#allocation13 + $0x1b0] sm:$0xff]
    %v2574 = vld [vmem:[#allocation13 + $0x1b8] sm:$0xff]
    %v2575 = vld [vmem:[#allocation13 + $0x1c0] sm:$0xff]
    %v2576 = vld [vmem:[#allocation13 + $0x1c8] sm:$0xff]
    %v2577 = vld [vmem:[#allocation13 + $0x1d0] sm:$0xff]
    %v2578 = vld [vmem:[#allocation13 + $0x1d8] sm:$0xff]
    %v2579 = vld [vmem:[#allocation13 + $0x1e0] sm:$0xff]
    %v2580 = vld [vmem:[#allocation13 + $0x1e8] sm:$0xff]
    %v2581 = vld [vmem:[#allocation13 + $0x1f0] sm:$0xff]
    %v2582 = vld [vmem:[#allocation13 + $0x1f8] sm:$0xff]
    %2583 = vmatprep.subr.mxu0 %v2520
    %2584 = vmatpush1.msra.mxu0 %v2519
    %2585 = vmatprep.subr.mxu0 %v2524
    %2586 = vmatpush1.msra.mxu0 %v2523
    %2587 = vmatprep.subr.mxu0 %v2528
    %2588 = vmatpush1.msra.mxu0 %v2527
    %2589 = vmatprep.subr.mxu0 %v2532
    %2590 = vmatpush1.msra.mxu0 %v2531
    %2591 = vmatprep.subr.mxu0 %v2536
    %2592 = vmatpush1.msra.mxu0 %v2535
    %2593 = vmatprep.subr.mxu0 %v2540
    %2594 = vmatpush1.msra.mxu0 %v2539
    %2595 = vmatprep.subr.mxu0 %v2544
    %2596 = vmatpush1.msra.mxu0 %v2543
    %2597 = vmatprep.subr.mxu0 %v2548
    %2598 = vmatpush1.msra.mxu0 %v2547
    %2599 = vmatprep.subr.mxu0 %v2552
    %2600 = vmatpush1.msra.mxu0 %v2551
    %2601 = vmatprep.subr.mxu0 %v2556
    %2602 = vmatpush1.msra.mxu0 %v2555
    %2603 = vmatprep.subr.mxu0 %v2560
    %2604 = vmatpush1.msra.mxu0 %v2559
    %2605 = vmatprep.subr.mxu0 %v2564
    %2606 = vmatpush1.msra.mxu0 %v2563
    %2607 = vmatprep.subr.mxu0 %v2568
    %2608 = vmatpush1.msra.mxu0 %v2567
    %2609 = vmatprep.subr.mxu0 %v2572
    %2610 = vmatpush1.msra.mxu0 %v2571
    %2611 = vmatprep.subr.mxu0 %v2576
    %2612 = vmatpush1.msra.mxu0 %v2575
    %2613 = vmatprep.subr.mxu0 %v2580
    %2614 = vmatpush1.msra.mxu0 %v2579
    %2615 = vmatprep.subr.mxu0 0.0
    %2616 = vmatpush1.msra.mxu0 0.0
    %2617 = vmatprep.subr.mxu0 0.0
    %2618 = vmatpush1.msra.mxu0 0.0
    %2619 = vmatprep.subr.mxu0 0.0
    %2620 = vmatpush1.msra.mxu0 0.0
    %2621 = vmatprep.subr.mxu0 0.0
    %2622 = vmatpush1.msra.mxu0 0.0
    %2623 = vmatprep.subr.mxu0 0.0
    %2624 = vmatpush1.msra.mxu0 0.0
    %2625 = vmatprep.subr.mxu0 0.0
    %2626 = vmatpush1.msra.mxu0 0.0
    %2627 = vmatprep.subr.mxu0 0.0
    %2628 = vmatpush1.msra.mxu0 0.0
    %2629 = vmatprep.subr.mxu0 0.0
    %2630 = vmatpush1.msra.mxu0 0.0
    %2631 = vmatprep.subr.mxu0 0.0
    %2632 = vmatpush1.msra.mxu0 0.0
    %2633 = vmatprep.subr.mxu0 0.0
    %2634 = vmatpush1.msra.mxu0 0.0
    %2635 = vmatprep.subr.mxu0 0.0
    %2636 = vmatpush1.msra.mxu0 0.0
    %2637 = vmatprep.subr.mxu0 0.0
    %2638 = vmatpush1.msra.mxu0 0.0
    %2639 = vmatprep.subr.mxu0 0.0
    %2640 = vmatpush1.msra.mxu0 0.0
    %2641 = vmatprep.subr.mxu0 0.0
    %2642 = vmatpush1.msra.mxu0 0.0
    %2643 = vmatprep.subr.mxu0 0.0
    %2644 = vmatpush1.msra.mxu0 0.0
    %2645 = vmatprep.subr.mxu0 0.0
    %2646 = vmatpush1.msra.mxu0 0.0
    %2647 = vmatprep.mubr.f32.mxu0 0.0
    %2648 = vmatmul.mubr.f32.gmra.mrb[0].mxu0 %v2505
    %v2649 = vpop.f32.mrb[0].mxu0
    %v2650 = vadd.f32 0.0, %v2649
    %v2651 = vpop.f32.mrb[0].mxu0
    %v2652 = vadd.f32 0.0, %v2651
    %2653 = vdwg.mxu0
    %2654 = vmatprep.subr.mxu0 %v2522
    %2655 = vmatpush1.msra.mxu0 %v2521
    %2656 = vmatprep.subr.mxu0 %v2526
    %2657 = vmatpush1.msra.mxu0 %v2525
    %2658 = vmatprep.subr.mxu0 %v2530
    %2659 = vmatpush1.msra.mxu0 %v2529
    %2660 = vmatprep.subr.mxu0 %v2534
    %2661 = vmatpush1.msra.mxu0 %v2533
    %2662 = vmatprep.subr.mxu0 %v2538
    %2663 = vmatpush1.msra.mxu0 %v2537
    %2664 = vmatprep.subr.mxu0 %v2542
    %2665 = vmatpush1.msra.mxu0 %v2541
    %2666 = vmatprep.subr.mxu0 %v2546
    %2667 = vmatpush1.msra.mxu0 %v2545
    %2668 = vmatprep.subr.mxu0 %v2550
    %2669 = vmatpush1.msra.mxu0 %v2549
    %2670 = vmatprep.subr.mxu0 %v2554
    %2671 = vmatpush1.msra.mxu0 %v2553
    %2672 = vmatprep.subr.mxu0 %v2558
    %2673 = vmatpush1.msra.mxu0 %v2557
    %2674 = vmatprep.subr.mxu0 %v2562
    %2675 = vmatpush1.msra.mxu0 %v2561
    %2676 = vmatprep.subr.mxu0 %v2566
    %2677 = vmatpush1.msra.mxu0 %v2565
    %2678 = vmatprep.subr.mxu0 %v2570
    %2679 = vmatpush1.msra.mxu0 %v2569
    %2680 = vmatprep.subr.mxu0 %v2574
    %2681 = vmatpush1.msra.mxu0 %v2573
    %2682 = vmatprep.subr.mxu0 %v2578
    %2683 = vmatpush1.msra.mxu0 %v2577
    %2684 = vmatprep.subr.mxu0 %v2582
    %2685 = vmatpush1.msra.mxu0 %v2581
    %2686 = vmatprep.subr.mxu0 0.0
    %2687 = vmatpush1.msra.mxu0 0.0
    %2688 = vmatprep.subr.mxu0 0.0
    %2689 = vmatpush1.msra.mxu0 0.0
    %2690 = vmatprep.subr.mxu0 0.0
    %2691 = vmatpush1.msra.mxu0 0.0
    %2692 = vmatprep.subr.mxu0 0.0
    %2693 = vmatpush1.msra.mxu0 0.0
    %2694 = vmatprep.subr.mxu0 0.0
    %2695 = vmatpush1.msra.mxu0 0.0
    %2696 = vmatprep.subr.mxu0 0.0
    %2697 = vmatpush1.msra.mxu0 0.0
    %2698 = vmatprep.subr.mxu0 0.0
    %2699 = vmatpush1.msra.mxu0 0.0
    %2700 = vmatprep.subr.mxu0 0.0
    %2701 = vmatpush1.msra.mxu0 0.0
    %2702 = vmatprep.subr.mxu0 0.0
    %2703 = vmatpush1.msra.mxu0 0.0
    %2704 = vmatprep.subr.mxu0 0.0
    %2705 = vmatpush1.msra.mxu0 0.0
    %2706 = vmatprep.subr.mxu0 0.0
    %2707 = vmatpush1.msra.mxu0 0.0
    %2708 = vmatprep.subr.mxu0 0.0
    %2709 = vmatpush1.msra.mxu0 0.0
    %2710 = vmatprep.subr.mxu0 0.0
    %2711 = vmatpush1.msra.mxu0 0.0
    %2712 = vmatprep.subr.mxu0 0.0
    %2713 = vmatpush1.msra.mxu0 0.0
    %2714 = vmatprep.subr.mxu0 0.0
    %2715 = vmatpush1.msra.mxu0 0.0
    %2716 = vmatprep.subr.mxu0 0.0
    %2717 = vmatpush1.msra.mxu0 0.0
    %2718 = vmatprep.mubr.f32.mxu0 0.0
    %2719 = vmatmul.mubr.f32.gmra.mrb[0].mxu0 %v2505
    %v2720 = vpop.f32.mrb[0].mxu0
    %v2721 = vadd.f32 0.0, %v2720
    %v2722 = vpop.f32.mrb[0].mxu0
    %v2723 = vadd.f32 0.0, %v2722
    %2724 = vdwg.mxu0
    %v2729 = vcombine.low %v2650, %v2652
    %v2730 = vcombine.low %v2721, %v2723
    %v2732 = vunpack.c.l.s4 1966171168
    %v2733 = vunpack.c.0.s8 %v2732
    %v2734 = vlaneseq
    %v2735 = vshrl.u32 %v2734, 7
    %v2736 = vsub.s32 %v2733, %v2735
    %v2737 = vrot.slane %v2729, %v2736
    %v2739 = vunpack.c.l.s4 1966171168
    %v2740 = vunpack.c.0.s8 %v2739
    %v2741 = vlaneseq
    %v2742 = vshrl.u32 %v2741, 7
    %v2743 = vsub.s32 %v2740, %v2742
    %v2744 = vrot.slane %v2730, %v2743
    %v2745 = vcombine.low %v2737, %v2744
    %v2747 = vunpack.c.l.s4 1966171168
    %v2748 = vunpack.c.0.s8 %v2747
    %v2749 = vlaneseq
    %v2750 = vshrl.u32 %v2749, 7
    %v2751 = vsub.s32 %v2748, %v2750
    %v2752 = vrot.slane %v2745, %v2751
    %v2754 = vadd.f32 %v2518, %v2752
    %v2755 = vxor.u32 %v2754, 2147483648
    %v2756 = vmul.f32 %v2755, 1.442695
    %v2757 = vpow.pop %v2756
    %v2758 = vadd.f32 %v2757, 1.0
    %v2759 = vrcp.pop %v2758
    %v2760 = vmul.f32 1.0, %v2759
    %v2762 = vrot.slane %v2754, 1
    %v2764 = vxor.u32 %v2762, 2147483648
    %v2765 = vmul.f32 %v2764, 1.442695
    %v2766 = vpow.pop %v2765
    %v2767 = vadd.f32 %v2766, 1.0
    %v2768 = vrcp.pop %v2767
    %v2769 = vmul.f32 1.0, %v2768
    %v2770 = vrot.slane %v2754, 2
    %v2772 = vtanh.pop %v2770
    %v2773 = vrot.slane %v2754, 3
    %v2775 = vxor.u32 %v2773, 2147483648
    %v2776 = vmul.f32 %v2775, 1.442695
    %v2777 = vpow.pop %v2776
    %v2778 = vadd.f32 %v2777, 1.0
    %v2779 = vrcp.pop %v2778
    %v2780 = vmul.f32 1.0, %v2779
    %v2781 = vmul.f32 %v2769, %v2503
    %v2782 = vmul.f32 %v2760, %v2772
    %v2783 = vadd.f32 %v2781, %v2782
    %v2784 = vtanh.pop %v2783
    %v2785 = vmul.f32 %v2780, %v2784
    %v2786 = vld [vmem:[#allocation6 + $0x5] sm:$0x1]
    %v2787 = vmul.f32 %v2785, %v127
    %v2788 = vadd.f32 %v2786, %v2787
    %2789 = vst [vmem:[#allocation6 + $0x5] sm:$0x1] %v2788
    %v2790 = vld [vmem:[#allocation6 + $0x2] sm:$0x1]
    %v2791 = vmul.f32 %v2785, %v128
    %v2792 = vadd.f32 %v2790, %v2791
    %2793 = vst [vmem:[#allocation6 + $0x2] sm:$0x1] %v2792
    %s2794 = scalar_lea.vmem [#allocation2], 6
    %v2795 = vld [vmem:[%s2794] ss:$8 sm:$0xf]
    %s2796 = scalar_lea.vmem [#allocation3], 1
    %v2797 = vld [vmem:[%s2796] ss:$8 sm:$0xf]
    %v2798 = vadd.f32 %v2795, %v2797
    %v2799 = vld [vmem:[#allocation13] sm:$0xff]
    %v2800 = vld [vmem:[#allocation13 + $0x8] sm:$0xff]
    %v2801 = vld [vmem:[#allocation13 + $0x10] sm:$0xff]
    %v2802 = vld [vmem:[#allocation13 + $0x18] sm:$0xff]
    %v2803 = vld [vmem:[#allocation13 + $0x20] sm:$0xff]
    %v2804 = vld [vmem:[#allocation13 + $0x28] sm:$0xff]
    %v2805 = vld [vmem:[#allocation13 + $0x30] sm:$0xff]
    %v2806 = vld [vmem:[#allocation13 + $0x38] sm:$0xff]
    %v2807 = vld [vmem:[#allocation13 + $0x40] sm:$0xff]
    %v2808 = vld [vmem:[#allocation13 + $0x48] sm:$0xff]
    %v2809 = vld [vmem:[#allocation13 + $0x50] sm:$0xff]
    %v2810 = vld [vmem:[#allocation13 + $0x58] sm:$0xff]
    %v2811 = vld [vmem:[#allocation13 + $0x60] sm:$0xff]
    %v2812 = vld [vmem:[#allocation13 + $0x68] sm:$0xff]
    %v2813 = vld [vmem:[#allocation13 + $0x70] sm:$0xff]
    %v2814 = vld [vmem:[#allocation13 + $0x78] sm:$0xff]
    %v2815 = vld [vmem:[#allocation13 + $0x80] sm:$0xff]
    %v2816 = vld [vmem:[#allocation13 + $0x88] sm:$0xff]
    %v2817 = vld [vmem:[#allocation13 + $0x90] sm:$0xff]
    %v2818 = vld [vmem:[#allocation13 + $0x98] sm:$0xff]
    %v2819 = vld [vmem:[#allocation13 + $0xa0] sm:$0xff]
    %v2820 = vld [vmem:[#allocation13 + $0xa8] sm:$0xff]
    %v2821 = vld [vmem:[#allocation13 + $0xb0] sm:$0xff]
    %v2822 = vld [vmem:[#allocation13 + $0xb8] sm:$0xff]
    %v2823 = vld [vmem:[#allocation13 + $0xc0] sm:$0xff]
    %v2824 = vld [vmem:[#allocation13 + $0xc8] sm:$0xff]
    %v2825 = vld [vmem:[#allocation13 + $0xd0] sm:$0xff]
    %v2826 = vld [vmem:[#allocation13 + $0xd8] sm:$0xff]
    %v2827 = vld [vmem:[#allocation13 + $0xe0] sm:$0xff]
    %v2828 = vld [vmem:[#allocation13 + $0xe8] sm:$0xff]
    %v2829 = vld [vmem:[#allocation13 + $0xf0] sm:$0xff]
    %v2830 = vld [vmem:[#allocation13 + $0xf8] sm:$0xff]
    %v2831 = vld [vmem:[#allocation13 + $0x100] sm:$0xff]
    %v2832 = vld [vmem:[#allocation13 + $0x108] sm:$0xff]
    %v2833 = vld [vmem:[#allocation13 + $0x110] sm:$0xff]
    %v2834 = vld [vmem:[#allocation13 + $0x118] sm:$0xff]
    %v2835 = vld [vmem:[#allocation13 + $0x120] sm:$0xff]
    %v2836 = vld [vmem:[#allocation13 + $0x128] sm:$0xff]
    %v2837 = vld [vmem:[#allocation13 + $0x130] sm:$0xff]
    %v2838 = vld [vmem:[#allocation13 + $0x138] sm:$0xff]
    %v2839 = vld [vmem:[#allocation13 + $0x140] sm:$0xff]
    %v2840 = vld [vmem:[#allocation13 + $0x148] sm:$0xff]
    %v2841 = vld [vmem:[#allocation13 + $0x150] sm:$0xff]
    %v2842 = vld [vmem:[#allocation13 + $0x158] sm:$0xff]
    %v2843 = vld [vmem:[#allocation13 + $0x160] sm:$0xff]
    %v2844 = vld [vmem:[#allocation13 + $0x168] sm:$0xff]
    %v2845 = vld [vmem:[#allocation13 + $0x170] sm:$0xff]
    %v2846 = vld [vmem:[#allocation13 + $0x178] sm:$0xff]
    %v2847 = vld [vmem:[#allocation13 + $0x180] sm:$0xff]
    %v2848 = vld [vmem:[#allocation13 + $0x188] sm:$0xff]
    %v2849 = vld [vmem:[#allocation13 + $0x190] sm:$0xff]
    %v2850 = vld [vmem:[#allocation13 + $0x198] sm:$0xff]
    %v2851 = vld [vmem:[#allocation13 + $0x1a0] sm:$0xff]
    %v2852 = vld [vmem:[#allocation13 + $0x1a8] sm:$0xff]
    %v2853 = vld [vmem:[#allocation13 + $0x1b0] sm:$0xff]
    %v2854 = vld [vmem:[#allocation13 + $0x1b8] sm:$0xff]
    %v2855 = vld [vmem:[#allocation13 + $0x1c0] sm:$0xff]
    %v2856 = vld [vmem:[#allocation13 + $0x1c8] sm:$0xff]
    %v2857 = vld [vmem:[#allocation13 + $0x1d0] sm:$0xff]
    %v2858 = vld [vmem:[#allocation13 + $0x1d8] sm:$0xff]
    %v2859 = vld [vmem:[#allocation13 + $0x1e0] sm:$0xff]
    %v2860 = vld [vmem:[#allocation13 + $0x1e8] sm:$0xff]
    %v2861 = vld [vmem:[#allocation13 + $0x1f0] sm:$0xff]
    %v2862 = vld [vmem:[#allocation13 + $0x1f8] sm:$0xff]
    %2863 = vmatprep.subr.mxu0 %v2800
    %2864 = vmatpush1.msra.mxu0 %v2799
    %2865 = vmatprep.subr.mxu0 %v2804
    %2866 = vmatpush1.msra.mxu0 %v2803
    %2867 = vmatprep.subr.mxu0 %v2808
    %2868 = vmatpush1.msra.mxu0 %v2807
    %2869 = vmatprep.subr.mxu0 %v2812
    %2870 = vmatpush1.msra.mxu0 %v2811
    %2871 = vmatprep.subr.mxu0 %v2816
    %2872 = vmatpush1.msra.mxu0 %v2815
    %2873 = vmatprep.subr.mxu0 %v2820
    %2874 = vmatpush1.msra.mxu0 %v2819
    %2875 = vmatprep.subr.mxu0 %v2824
    %2876 = vmatpush1.msra.mxu0 %v2823
    %2877 = vmatprep.subr.mxu0 %v2828
    %2878 = vmatpush1.msra.mxu0 %v2827
    %2879 = vmatprep.subr.mxu0 %v2832
    %2880 = vmatpush1.msra.mxu0 %v2831
    %2881 = vmatprep.subr.mxu0 %v2836
    %2882 = vmatpush1.msra.mxu0 %v2835
    %2883 = vmatprep.subr.mxu0 %v2840
    %2884 = vmatpush1.msra.mxu0 %v2839
    %2885 = vmatprep.subr.mxu0 %v2844
    %2886 = vmatpush1.msra.mxu0 %v2843
    %2887 = vmatprep.subr.mxu0 %v2848
    %2888 = vmatpush1.msra.mxu0 %v2847
    %2889 = vmatprep.subr.mxu0 %v2852
    %2890 = vmatpush1.msra.mxu0 %v2851
    %2891 = vmatprep.subr.mxu0 %v2856
    %2892 = vmatpush1.msra.mxu0 %v2855
    %2893 = vmatprep.subr.mxu0 %v2860
    %2894 = vmatpush1.msra.mxu0 %v2859
    %2895 = vmatprep.subr.mxu0 0.0
    %2896 = vmatpush1.msra.mxu0 0.0
    %2897 = vmatprep.subr.mxu0 0.0
    %2898 = vmatpush1.msra.mxu0 0.0
    %2899 = vmatprep.subr.mxu0 0.0
    %2900 = vmatpush1.msra.mxu0 0.0
    %2901 = vmatprep.subr.mxu0 0.0
    %2902 = vmatpush1.msra.mxu0 0.0
    %2903 = vmatprep.subr.mxu0 0.0
    %2904 = vmatpush1.msra.mxu0 0.0
    %2905 = vmatprep.subr.mxu0 0.0
    %2906 = vmatpush1.msra.mxu0 0.0
    %2907 = vmatprep.subr.mxu0 0.0
    %2908 = vmatpush1.msra.mxu0 0.0
    %2909 = vmatprep.subr.mxu0 0.0
    %2910 = vmatpush1.msra.mxu0 0.0
    %2911 = vmatprep.subr.mxu0 0.0
    %2912 = vmatpush1.msra.mxu0 0.0
    %2913 = vmatprep.subr.mxu0 0.0
    %2914 = vmatpush1.msra.mxu0 0.0
    %2915 = vmatprep.subr.mxu0 0.0
    %2916 = vmatpush1.msra.mxu0 0.0
    %2917 = vmatprep.subr.mxu0 0.0
    %2918 = vmatpush1.msra.mxu0 0.0
    %2919 = vmatprep.subr.mxu0 0.0
    %2920 = vmatpush1.msra.mxu0 0.0
    %2921 = vmatprep.subr.mxu0 0.0
    %2922 = vmatpush1.msra.mxu0 0.0
    %2923 = vmatprep.subr.mxu0 0.0
    %2924 = vmatpush1.msra.mxu0 0.0
    %2925 = vmatprep.subr.mxu0 0.0
    %2926 = vmatpush1.msra.mxu0 0.0
    %2927 = vmatprep.mubr.f32.mxu0 0.0
    %2928 = vmatmul.mubr.f32.gmra.mrb[0].mxu0 %v2785
    %v2929 = vpop.f32.mrb[0].mxu0
    %v2930 = vadd.f32 0.0, %v2929
    %v2931 = vpop.f32.mrb[0].mxu0
    %v2932 = vadd.f32 0.0, %v2931
    %2933 = vdwg.mxu0
    %2934 = vmatprep.subr.mxu0 %v2802
    %2935 = vmatpush1.msra.mxu0 %v2801
    %2936 = vmatprep.subr.mxu0 %v2806
    %2937 = vmatpush1.msra.mxu0 %v2805
    %2938 = vmatprep.subr.mxu0 %v2810
    %2939 = vmatpush1.msra.mxu0 %v2809
    %2940 = vmatprep.subr.mxu0 %v2814
    %2941 = vmatpush1.msra.mxu0 %v2813
    %2942 = vmatprep.subr.mxu0 %v2818
    %2943 = vmatpush1.msra.mxu0 %v2817
    %2944 = vmatprep.subr.mxu0 %v2822
    %2945 = vmatpush1.msra.mxu0 %v2821
    %2946 = vmatprep.subr.mxu0 %v2826
    %2947 = vmatpush1.msra.mxu0 %v2825
    %2948 = vmatprep.subr.mxu0 %v2830
    %2949 = vmatpush1.msra.mxu0 %v2829
    %2950 = vmatprep.subr.mxu0 %v2834
    %2951 = vmatpush1.msra.mxu0 %v2833
    %2952 = vmatprep.subr.mxu0 %v2838
    %2953 = vmatpush1.msra.mxu0 %v2837
    %2954 = vmatprep.subr.mxu0 %v2842
    %2955 = vmatpush1.msra.mxu0 %v2841
    %2956 = vmatprep.subr.mxu0 %v2846
    %2957 = vmatpush1.msra.mxu0 %v2845
    %2958 = vmatprep.subr.mxu0 %v2850
    %2959 = vmatpush1.msra.mxu0 %v2849
    %2960 = vmatprep.subr.mxu0 %v2854
    %2961 = vmatpush1.msra.mxu0 %v2853
    %2962 = vmatprep.subr.mxu0 %v2858
    %2963 = vmatpush1.msra.mxu0 %v2857
    %2964 = vmatprep.subr.mxu0 %v2862
    %2965 = vmatpush1.msra.mxu0 %v2861
    %2966 = vmatprep.subr.mxu0 0.0
    %2967 = vmatpush1.msra.mxu0 0.0
    %2968 = vmatprep.subr.mxu0 0.0
    %2969 = vmatpush1.msra.mxu0 0.0
    %2970 = vmatprep.subr.mxu0 0.0
    %2971 = vmatpush1.msra.mxu0 0.0
    %2972 = vmatprep.subr.mxu0 0.0
    %2973 = vmatpush1.msra.mxu0 0.0
    %2974 = vmatprep.subr.mxu0 0.0
    %2975 = vmatpush1.msra.mxu0 0.0
    %2976 = vmatprep.subr.mxu0 0.0
    %2977 = vmatpush1.msra.mxu0 0.0
    %2978 = vmatprep.subr.mxu0 0.0
    %2979 = vmatpush1.msra.mxu0 0.0
    %2980 = vmatprep.subr.mxu0 0.0
    %2981 = vmatpush1.msra.mxu0 0.0
    %2982 = vmatprep.subr.mxu0 0.0
    %2983 = vmatpush1.msra.mxu0 0.0
    %2984 = vmatprep.subr.mxu0 0.0
    %2985 = vmatpush1.msra.mxu0 0.0
    %2986 = vmatprep.subr.mxu0 0.0
    %2987 = vmatpush1.msra.mxu0 0.0
    %2988 = vmatprep.subr.mxu0 0.0
    %2989 = vmatpush1.msra.mxu0 0.0
    %2990 = vmatprep.subr.mxu0 0.0
    %2991 = vmatpush1.msra.mxu0 0.0
    %2992 = vmatprep.subr.mxu0 0.0
    %2993 = vmatpush1.msra.mxu0 0.0
    %2994 = vmatprep.subr.mxu0 0.0
    %2995 = vmatpush1.msra.mxu0 0.0
    %2996 = vmatprep.subr.mxu0 0.0
    %2997 = vmatpush1.msra.mxu0 0.0
    %2998 = vmatprep.mubr.f32.mxu0 0.0
    %2999 = vmatmul.mubr.f32.gmra.mrb[0].mxu0 %v2785
    %v3000 = vpop.f32.mrb[0].mxu0
    %v3001 = vadd.f32 0.0, %v3000
    %v3002 = vpop.f32.mrb[0].mxu0
    %v3003 = vadd.f32 0.0, %v3002
    %3004 = vdwg.mxu0
    %v3009 = vcombine.low %v2930, %v2932
    %v3010 = vcombine.low %v3001, %v3003
    %v3012 = vunpack.c.l.s4 1966171168
    %v3013 = vunpack.c.0.s8 %v3012
    %v3014 = vlaneseq
    %v3015 = vshrl.u32 %v3014, 7
    %v3016 = vsub.s32 %v3013, %v3015
    %v3017 = vrot.slane %v3009, %v3016
    %v3019 = vunpack.c.l.s4 1966171168
    %v3020 = vunpack.c.0.s8 %v3019
    %v3021 = vlaneseq
    %v3022 = vshrl.u32 %v3021, 7
    %v3023 = vsub.s32 %v3020, %v3022
    %v3024 = vrot.slane %v3010, %v3023
    %v3025 = vcombine.low %v3017, %v3024
    %v3027 = vunpack.c.l.s4 1966171168
    %v3028 = vunpack.c.0.s8 %v3027
    %v3029 = vlaneseq
    %v3030 = vshrl.u32 %v3029, 7
    %v3031 = vsub.s32 %v3028, %v3030
    %v3032 = vrot.slane %v3025, %v3031
    %v3034 = vadd.f32 %v2798, %v3032
    %v3035 = vxor.u32 %v3034, 2147483648
    %v3036 = vmul.f32 %v3035, 1.442695
    %v3037 = vpow.pop %v3036
    %v3038 = vadd.f32 %v3037, 1.0
    %v3039 = vrcp.pop %v3038
    %v3040 = vmul.f32 1.0, %v3039
    %v3042 = vrot.slane %v3034, 1
    %v3044 = vxor.u32 %v3042, 2147483648
    %v3045 = vmul.f32 %v3044, 1.442695
    %v3046 = vpow.pop %v3045
    %v3047 = vadd.f32 %v3046, 1.0
    %v3048 = vrcp.pop %v3047
    %v3049 = vmul.f32 1.0, %v3048
    %v3050 = vrot.slane %v3034, 2
    %v3052 = vtanh.pop %v3050
    %v3053 = vrot.slane %v3034, 3
    %v3055 = vxor.u32 %v3053, 2147483648
    %v3056 = vmul.f32 %v3055, 1.442695
    %v3057 = vpow.pop %v3056
    %v3058 = vadd.f32 %v3057, 1.0
    %v3059 = vrcp.pop %v3058
    %v3060 = vmul.f32 1.0, %v3059
    %v3061 = vmul.f32 %v3049, %v2783
    %v3062 = vmul.f32 %v3040, %v3052
    %v3063 = vadd.f32 %v3061, %v3062
    %v3064 = vtanh.pop %v3063
    %v3065 = vmul.f32 %v3060, %v3064
    %v3066 = vld [vmem:[#allocation6 + $0x6] sm:$0x1]
    %v3067 = vmul.f32 %v3065, %v127
    %v3068 = vadd.f32 %v3066, %v3067
    %3069 = vst [vmem:[#allocation6 + $0x6] sm:$0x1] %v3068
    %v3070 = vld [vmem:[#allocation6 + $0x1] sm:$0x1]
    %v3071 = vmul.f32 %v3065, %v128
    %v3072 = vadd.f32 %v3070, %v3071
    %3073 = vst [vmem:[#allocation6 + $0x1] sm:$0x1] %v3072
    %s3074 = scalar_lea.vmem [#allocation2], 7
    %v3075 = vld [vmem:[%s3074] ss:$8 sm:$0xf]
    %v3076 = vld [vmem:[#allocation3] ss:$8 sm:$0xf]
    %v3077 = vadd.f32 %v3075, %v3076
    %v3078 = vld [vmem:[#allocation13] sm:$0xff]
    %v3079 = vld [vmem:[#allocation13 + $0x8] sm:$0xff]
    %v3080 = vld [vmem:[#allocation13 + $0x10] sm:$0xff]
    %v3081 = vld [vmem:[#allocation13 + $0x18] sm:$0xff]
    %v3082 = vld [vmem:[#allocation13 + $0x20] sm:$0xff]
    %v3083 = vld [vmem:[#allocation13 + $0x28] sm:$0xff]
    %v3084 = vld [vmem:[#allocation13 + $0x30] sm:$0xff]
    %v3085 = vld [vmem:[#allocation13 + $0x38] sm:$0xff]
    %v3086 = vld [vmem:[#allocation13 + $0x40] sm:$0xff]
    %v3087 = vld [vmem:[#allocation13 + $0x48] sm:$0xff]
    %v3088 = vld [vmem:[#allocation13 + $0x50] sm:$0xff]
    %v3089 = vld [vmem:[#allocation13 + $0x58] sm:$0xff]
    %v3090 = vld [vmem:[#allocation13 + $0x60] sm:$0xff]
    %v3091 = vld [vmem:[#allocation13 + $0x68] sm:$0xff]
    %v3092 = vld [vmem:[#allocation13 + $0x70] sm:$0xff]
    %v3093 = vld [vmem:[#allocation13 + $0x78] sm:$0xff]
    %v3094 = vld [vmem:[#allocation13 + $0x80] sm:$0xff]
    %v3095 = vld [vmem:[#allocation13 + $0x88] sm:$0xff]
    %v3096 = vld [vmem:[#allocation13 + $0x90] sm:$0xff]
    %v3097 = vld [vmem:[#allocation13 + $0x98] sm:$0xff]
    %v3098 = vld [vmem:[#allocation13 + $0xa0] sm:$0xff]
    %v3099 = vld [vmem:[#allocation13 + $0xa8] sm:$0xff]
    %v3100 = vld [vmem:[#allocation13 + $0xb0] sm:$0xff]
    %v3101 = vld [vmem:[#allocation13 + $0xb8] sm:$0xff]
    %v3102 = vld [vmem:[#allocation13 + $0xc0] sm:$0xff]
    %v3103 = vld [vmem:[#allocation13 + $0xc8] sm:$0xff]
    %v3104 = vld [vmem:[#allocation13 + $0xd0] sm:$0xff]
    %v3105 = vld [vmem:[#allocation13 + $0xd8] sm:$0xff]
    %v3106 = vld [vmem:[#allocation13 + $0xe0] sm:$0xff]
    %v3107 = vld [vmem:[#allocation13 + $0xe8] sm:$0xff]
    %v3108 = vld [vmem:[#allocation13 + $0xf0] sm:$0xff]
    %v3109 = vld [vmem:[#allocation13 + $0xf8] sm:$0xff]
    %v3110 = vld [vmem:[#allocation13 + $0x100] sm:$0xff]
    %v3111 = vld [vmem:[#allocation13 + $0x108] sm:$0xff]
    %v3112 = vld [vmem:[#allocation13 + $0x110] sm:$0xff]
    %v3113 = vld [vmem:[#allocation13 + $0x118] sm:$0xff]
    %v3114 = vld [vmem:[#allocation13 + $0x120] sm:$0xff]
    %v3115 = vld [vmem:[#allocation13 + $0x128] sm:$0xff]
    %v3116 = vld [vmem:[#allocation13 + $0x130] sm:$0xff]
    %v3117 = vld [vmem:[#allocation13 + $0x138] sm:$0xff]
    %v3118 = vld [vmem:[#allocation13 + $0x140] sm:$0xff]
    %v3119 = vld [vmem:[#allocation13 + $0x148] sm:$0xff]
    %v3120 = vld [vmem:[#allocation13 + $0x150] sm:$0xff]
    %v3121 = vld [vmem:[#allocation13 + $0x158] sm:$0xff]
    %v3122 = vld [vmem:[#allocation13 + $0x160] sm:$0xff]
    %v3123 = vld [vmem:[#allocation13 + $0x168] sm:$0xff]
    %v3124 = vld [vmem:[#allocation13 + $0x170] sm:$0xff]
    %v3125 = vld [vmem:[#allocation13 + $0x178] sm:$0xff]
    %v3126 = vld [vmem:[#allocation13 + $0x180] sm:$0xff]
    %v3127 = vld [vmem:[#allocation13 + $0x188] sm:$0xff]
    %v3128 = vld [vmem:[#allocation13 + $0x190] sm:$0xff]
    %v3129 = vld [vmem:[#allocation13 + $0x198] sm:$0xff]
    %v3130 = vld [vmem:[#allocation13 + $0x1a0] sm:$0xff]
    %v3131 = vld [vmem:[#allocation13 + $0x1a8] sm:$0xff]
    %v3132 = vld [vmem:[#allocation13 + $0x1b0] sm:$0xff]
    %v3133 = vld [vmem:[#allocation13 + $0x1b8] sm:$0xff]
    %v3134 = vld [vmem:[#allocation13 + $0x1c0] sm:$0xff]
    %v3135 = vld [vmem:[#allocation13 + $0x1c8] sm:$0xff]
    %v3136 = vld [vmem:[#allocation13 + $0x1d0] sm:$0xff]
    %v3137 = vld [vmem:[#allocation13 + $0x1d8] sm:$0xff]
    %v3138 = vld [vmem:[#allocation13 + $0x1e0] sm:$0xff]
    %v3139 = vld [vmem:[#allocation13 + $0x1e8] sm:$0xff]
    %v3140 = vld [vmem:[#allocation13 + $0x1f0] sm:$0xff]
    %v3141 = vld [vmem:[#allocation13 + $0x1f8] sm:$0xff]
    %3142 = vmatprep.subr.mxu0 %v3079
    %3143 = vmatpush1.msra.mxu0 %v3078
    %3144 = vmatprep.subr.mxu0 %v3083
    %3145 = vmatpush1.msra.mxu0 %v3082
    %3146 = vmatprep.subr.mxu0 %v3087
    %3147 = vmatpush1.msra.mxu0 %v3086
    %3148 = vmatprep.subr.mxu0 %v3091
    %3149 = vmatpush1.msra.mxu0 %v3090
    %3150 = vmatprep.subr.mxu0 %v3095
    %3151 = vmatpush1.msra.mxu0 %v3094
    %3152 = vmatprep.subr.mxu0 %v3099
    %3153 = vmatpush1.msra.mxu0 %v3098
    %3154 = vmatprep.subr.mxu0 %v3103
    %3155 = vmatpush1.msra.mxu0 %v3102
    %3156 = vmatprep.subr.mxu0 %v3107
    %3157 = vmatpush1.msra.mxu0 %v3106
    %3158 = vmatprep.subr.mxu0 %v3111
    %3159 = vmatpush1.msra.mxu0 %v3110
    %3160 = vmatprep.subr.mxu0 %v3115
    %3161 = vmatpush1.msra.mxu0 %v3114
    %3162 = vmatprep.subr.mxu0 %v3119
    %3163 = vmatpush1.msra.mxu0 %v3118
    %3164 = vmatprep.subr.mxu0 %v3123
    %3165 = vmatpush1.msra.mxu0 %v3122
    %3166 = vmatprep.subr.mxu0 %v3127
    %3167 = vmatpush1.msra.mxu0 %v3126
    %3168 = vmatprep.subr.mxu0 %v3131
    %3169 = vmatpush1.msra.mxu0 %v3130
    %3170 = vmatprep.subr.mxu0 %v3135
    %3171 = vmatpush1.msra.mxu0 %v3134
    %3172 = vmatprep.subr.mxu0 %v3139
    %3173 = vmatpush1.msra.mxu0 %v3138
    %3174 = vmatprep.subr.mxu0 0.0
    %3175 = vmatpush1.msra.mxu0 0.0
    %3176 = vmatprep.subr.mxu0 0.0
    %3177 = vmatpush1.msra.mxu0 0.0
    %3178 = vmatprep.subr.mxu0 0.0
    %3179 = vmatpush1.msra.mxu0 0.0
    %3180 = vmatprep.subr.mxu0 0.0
    %3181 = vmatpush1.msra.mxu0 0.0
    %3182 = vmatprep.subr.mxu0 0.0
    %3183 = vmatpush1.msra.mxu0 0.0
    %3184 = vmatprep.subr.mxu0 0.0
    %3185 = vmatpush1.msra.mxu0 0.0
    %3186 = vmatprep.subr.mxu0 0.0
    %3187 = vmatpush1.msra.mxu0 0.0
    %3188 = vmatprep.subr.mxu0 0.0
    %3189 = vmatpush1.msra.mxu0 0.0
    %3190 = vmatprep.subr.mxu0 0.0
    %3191 = vmatpush1.msra.mxu0 0.0
    %3192 = vmatprep.subr.mxu0 0.0
    %3193 = vmatpush1.msra.mxu0 0.0
    %3194 = vmatprep.subr.mxu0 0.0
    %3195 = vmatpush1.msra.mxu0 0.0
    %3196 = vmatprep.subr.mxu0 0.0
    %3197 = vmatpush1.msra.mxu0 0.0
    %3198 = vmatprep.subr.mxu0 0.0
    %3199 = vmatpush1.msra.mxu0 0.0
    %3200 = vmatprep.subr.mxu0 0.0
    %3201 = vmatpush1.msra.mxu0 0.0
    %3202 = vmatprep.subr.mxu0 0.0
    %3203 = vmatpush1.msra.mxu0 0.0
    %3204 = vmatprep.subr.mxu0 0.0
    %3205 = vmatpush1.msra.mxu0 0.0
    %3206 = vmatprep.mubr.f32.mxu0 0.0
    %3207 = vmatmul.mubr.f32.gmra.mrb[0].mxu0 %v3065
    %v3208 = vpop.f32.mrb[0].mxu0
    %v3209 = vadd.f32 0.0, %v3208
    %v3210 = vpop.f32.mrb[0].mxu0
    %v3211 = vadd.f32 0.0, %v3210
    %3212 = vdwg.mxu0
    %3213 = vmatprep.subr.mxu0 %v3081
    %3214 = vmatpush1.msra.mxu0 %v3080
    %3215 = vmatprep.subr.mxu0 %v3085
    %3216 = vmatpush1.msra.mxu0 %v3084
    %3217 = vmatprep.subr.mxu0 %v3089
    %3218 = vmatpush1.msra.mxu0 %v3088
    %3219 = vmatprep.subr.mxu0 %v3093
    %3220 = vmatpush1.msra.mxu0 %v3092
    %3221 = vmatprep.subr.mxu0 %v3097
    %3222 = vmatpush1.msra.mxu0 %v3096
    %3223 = vmatprep.subr.mxu0 %v3101
    %3224 = vmatpush1.msra.mxu0 %v3100
    %3225 = vmatprep.subr.mxu0 %v3105
    %3226 = vmatpush1.msra.mxu0 %v3104
    %3227 = vmatprep.subr.mxu0 %v3109
    %3228 = vmatpush1.msra.mxu0 %v3108
    %3229 = vmatprep.subr.mxu0 %v3113
    %3230 = vmatpush1.msra.mxu0 %v3112
    %3231 = vmatprep.subr.mxu0 %v3117
    %3232 = vmatpush1.msra.mxu0 %v3116
    %3233 = vmatprep.subr.mxu0 %v3121
    %3234 = vmatpush1.msra.mxu0 %v3120
    %3235 = vmatprep.subr.mxu0 %v3125
    %3236 = vmatpush1.msra.mxu0 %v3124
    %3237 = vmatprep.subr.mxu0 %v3129
    %3238 = vmatpush1.msra.mxu0 %v3128
    %3239 = vmatprep.subr.mxu0 %v3133
    %3240 = vmatpush1.msra.mxu0 %v3132
    %3241 = vmatprep.subr.mxu0 %v3137
    %3242 = vmatpush1.msra.mxu0 %v3136
    %3243 = vmatprep.subr.mxu0 %v3141
    %3244 = vmatpush1.msra.mxu0 %v3140
    %3245 = vmatprep.subr.mxu0 0.0
    %3246 = vmatpush1.msra.mxu0 0.0
    %3247 = vmatprep.subr.mxu0 0.0
    %3248 = vmatpush1.msra.mxu0 0.0
    %3249 = vmatprep.subr.mxu0 0.0
    %3250 = vmatpush1.msra.mxu0 0.0
    %3251 = vmatprep.subr.mxu0 0.0
    %3252 = vmatpush1.msra.mxu0 0.0
    %3253 = vmatprep.subr.mxu0 0.0
    %3254 = vmatpush1.msra.mxu0 0.0
    %3255 = vmatprep.subr.mxu0 0.0
    %3256 = vmatpush1.msra.mxu0 0.0
    %3257 = vmatprep.subr.mxu0 0.0
    %3258 = vmatpush1.msra.mxu0 0.0
    %3259 = vmatprep.subr.mxu0 0.0
    %3260 = vmatpush1.msra.mxu0 0.0
    %3261 = vmatprep.subr.mxu0 0.0
    %3262 = vmatpush1.msra.mxu0 0.0
    %3263 = vmatprep.subr.mxu0 0.0
    %3264 = vmatpush1.msra.mxu0 0.0
    %3265 = vmatprep.subr.mxu0 0.0
    %3266 = vmatpush1.msra.mxu0 0.0
    %3267 = vmatprep.subr.mxu0 0.0
    %3268 = vmatpush1.msra.mxu0 0.0
    %3269 = vmatprep.subr.mxu0 0.0
    %3270 = vmatpush1.msra.mxu0 0.0
    %3271 = vmatprep.subr.mxu0 0.0
    %3272 = vmatpush1.msra.mxu0 0.0
    %3273 = vmatprep.subr.mxu0 0.0
    %3274 = vmatpush1.msra.mxu0 0.0
    %3275 = vmatprep.subr.mxu0 0.0
    %3276 = vmatpush1.msra.mxu0 0.0
    %3277 = vmatprep.mubr.f32.mxu0 0.0
    %3278 = vmatmul.mubr.f32.gmra.mrb[0].mxu0 %v3065
    %v3279 = vpop.f32.mrb[0].mxu0
    %v3280 = vadd.f32 0.0, %v3279
    %v3281 = vpop.f32.mrb[0].mxu0
    %v3282 = vadd.f32 0.0, %v3281
    %3283 = vdwg.mxu0
    %v3288 = vcombine.low %v3209, %v3211
    %v3289 = vcombine.low %v3280, %v3282
    %v3291 = vunpack.c.l.s4 1966171168
    %v3292 = vunpack.c.0.s8 %v3291
    %v3293 = vlaneseq
    %v3294 = vshrl.u32 %v3293, 7
    %v3295 = vsub.s32 %v3292, %v3294
    %v3296 = vrot.slane %v3288, %v3295
    %v3298 = vunpack.c.l.s4 1966171168
    %v3299 = vunpack.c.0.s8 %v3298
    %v3300 = vlaneseq
    %v3301 = vshrl.u32 %v3300, 7
    %v3302 = vsub.s32 %v3299, %v3301
    %v3303 = vrot.slane %v3289, %v3302
    %v3304 = vcombine.low %v3296, %v3303
    %v3306 = vunpack.c.l.s4 1966171168
    %v3307 = vunpack.c.0.s8 %v3306
    %v3308 = vlaneseq
    %v3309 = vshrl.u32 %v3308, 7
    %v3310 = vsub.s32 %v3307, %v3309
    %v3311 = vrot.slane %v3304, %v3310
    %v3313 = vadd.f32 %v3077, %v3311
    %v3314 = vxor.u32 %v3313, 2147483648
    %v3315 = vmul.f32 %v3314, 1.442695
    %v3316 = vpow.pop %v3315
    %v3317 = vadd.f32 %v3316, 1.0
    %v3318 = vrcp.pop %v3317
    %v3319 = vmul.f32 1.0, %v3318
    %v3321 = vrot.slane %v3313, 1
    %v3323 = vxor.u32 %v3321, 2147483648
    %v3324 = vmul.f32 %v3323, 1.442695
    %v3325 = vpow.pop %v3324
    %v3326 = vadd.f32 %v3325, 1.0
    %v3327 = vrcp.pop %v3326
    %v3328 = vmul.f32 1.0, %v3327
    %v3329 = vrot.slane %v3313, 2
    %v3331 = vtanh.pop %v3329
    %v3332 = vrot.slane %v3313, 3
    %v3334 = vxor.u32 %v3332, 2147483648
    %v3335 = vmul.f32 %v3334, 1.442695
    %v3336 = vpow.pop %v3335
    %v3337 = vadd.f32 %v3336, 1.0
    %v3338 = vrcp.pop %v3337
    %v3339 = vmul.f32 1.0, %v3338
    %v3340 = vmul.f32 %v3328, %v3063
    %v3341 = vmul.f32 %v3319, %v3331
    %v3342 = vadd.f32 %v3340, %v3341
    %v3343 = vtanh.pop %v3342
    %v3344 = vmul.f32 %v3339, %v3343
    %v3345 = vld [vmem:[#allocation6 + $0x7] sm:$0x1]
    %v3346 = vmul.f32 %v3344, %v127
    %v3347 = vadd.f32 %v3345, %v3346
    %3348 = vst [vmem:[#allocation6 + $0x7] sm:$0x1] %v3347
    %v3349 = vld [vmem:[#allocation6] sm:$0x1]
    %v3350 = vmul.f32 %v3344, %v128
    %v3351 = vadd.f32 %v3349, %v3350
    %3352 = vst [vmem:[#allocation6] sm:$0x1] %v3351
    %v3353 = vld [vmem:[#allocation6] sm:$0xff]
    %v3354 = vld [vmem:[#allocation14] sm:$0xff]
    %v3355 = vld [vmem:[#allocation14 + $0x8] sm:$0xff]
    %v3356 = vld [vmem:[#allocation14 + $0x10] sm:$0xff]
    %v3357 = vld [vmem:[#allocation14 + $0x18] sm:$0xff]
    %v3358 = vld [vmem:[#allocation14 + $0x20] sm:$0xff]
    %v3359 = vld [vmem:[#allocation14 + $0x28] sm:$0xff]
    %v3360 = vld [vmem:[#allocation14 + $0x30] sm:$0xff]
    %v3361 = vld [vmem:[#allocation14 + $0x38] sm:$0xff]
    %v3362 = vld [vmem:[#allocation14 + $0x40] sm:$0xff]
    %v3363 = vld [vmem:[#allocation14 + $0x48] sm:$0xff]
    %v3364 = vld [vmem:[#allocation14 + $0x50] sm:$0xff]
    %v3365 = vld [vmem:[#allocation14 + $0x58] sm:$0xff]
    %v3366 = vld [vmem:[#allocation14 + $0x60] sm:$0xff]
    %v3367 = vld [vmem:[#allocation14 + $0x68] sm:$0xff]
    %v3368 = vld [vmem:[#allocation14 + $0x70] sm:$0xff]
    %v3369 = vld [vmem:[#allocation14 + $0x78] sm:$0xff]
    %v3370 = vld [vmem:[#allocation14 + $0x80] sm:$0xff]
    %v3371 = vld [vmem:[#allocation14 + $0x88] sm:$0xff]
    %v3372 = vld [vmem:[#allocation14 + $0x90] sm:$0xff]
    %v3373 = vld [vmem:[#allocation14 + $0x98] sm:$0xff]
    %v3374 = vld [vmem:[#allocation14 + $0xa0] sm:$0xff]
    %v3375 = vld [vmem:[#allocation14 + $0xa8] sm:$0xff]
    %v3376 = vld [vmem:[#allocation14 + $0xb0] sm:$0xff]
    %v3377 = vld [vmem:[#allocation14 + $0xb8] sm:$0xff]
    %v3378 = vld [vmem:[#allocation14 + $0xc0] sm:$0xff]
    %v3379 = vld [vmem:[#allocation14 + $0xc8] sm:$0xff]
    %v3380 = vld [vmem:[#allocation14 + $0xd0] sm:$0xff]
    %v3381 = vld [vmem:[#allocation14 + $0xd8] sm:$0xff]
    %v3382 = vld [vmem:[#allocation14 + $0xe0] sm:$0xff]
    %v3383 = vld [vmem:[#allocation14 + $0xe8] sm:$0xff]
    %v3384 = vld [vmem:[#allocation14 + $0xf0] sm:$0xff]
    %v3385 = vld [vmem:[#allocation14 + $0xf8] sm:$0xff]
    %v3386 = vld [vmem:[#allocation14 + $0x100] sm:$0xff]
    %v3387 = vld [vmem:[#allocation14 + $0x108] sm:$0xff]
    %v3388 = vld [vmem:[#allocation14 + $0x110] sm:$0xff]
    %v3389 = vld [vmem:[#allocation14 + $0x118] sm:$0xff]
    %v3390 = vld [vmem:[#allocation14 + $0x120] sm:$0xff]
    %v3391 = vld [vmem:[#allocation14 + $0x128] sm:$0xff]
    %v3392 = vld [vmem:[#allocation14 + $0x130] sm:$0xff]
    %v3393 = vld [vmem:[#allocation14 + $0x138] sm:$0xff]
    %v3394 = vld [vmem:[#allocation14 + $0x140] sm:$0xff]
    %v3395 = vld [vmem:[#allocation14 + $0x148] sm:$0xff]
    %v3396 = vld [vmem:[#allocation14 + $0x150] sm:$0xff]
    %v3397 = vld [vmem:[#allocation14 + $0x158] sm:$0xff]
    %v3398 = vld [vmem:[#allocation14 + $0x160] sm:$0xff]
    %v3399 = vld [vmem:[#allocation14 + $0x168] sm:$0xff]
    %v3400 = vld [vmem:[#allocation14 + $0x170] sm:$0xff]
    %v3401 = vld [vmem:[#allocation14 + $0x178] sm:$0xff]
    %v3402 = vld [vmem:[#allocation14 + $0x180] sm:$0xff]
    %v3403 = vld [vmem:[#allocation14 + $0x188] sm:$0xff]
    %v3404 = vld [vmem:[#allocation14 + $0x190] sm:$0xff]
    %v3405 = vld [vmem:[#allocation14 + $0x198] sm:$0xff]
    %v3406 = vld [vmem:[#allocation14 + $0x1a0] sm:$0xff]
    %v3407 = vld [vmem:[#allocation14 + $0x1a8] sm:$0xff]
    %v3408 = vld [vmem:[#allocation14 + $0x1b0] sm:$0xff]
    %v3409 = vld [vmem:[#allocation14 + $0x1b8] sm:$0xff]
    %v3410 = vld [vmem:[#allocation14 + $0x1c0] sm:$0xff]
    %v3411 = vld [vmem:[#allocation14 + $0x1c8] sm:$0xff]
    %v3412 = vld [vmem:[#allocation14 + $0x1d0] sm:$0xff]
    %v3413 = vld [vmem:[#allocation14 + $0x1d8] sm:$0xff]
    %v3414 = vld [vmem:[#allocation14 + $0x1e0] sm:$0xff]
    %v3415 = vld [vmem:[#allocation14 + $0x1e8] sm:$0xff]
    %v3416 = vld [vmem:[#allocation14 + $0x1f0] sm:$0xff]
    %v3417 = vld [vmem:[#allocation14 + $0x1f8] sm:$0xff]
    %v3418 = vld [vmem:[%s8] sm:$0xf]
    %v3420 = vlaneseq
    %v3421 = vshrl.u32 %v3420, 7
    %v3422 = vsub.s32 0, %v3421
    %v3423 = vrot.slane %v3418, %v3422
    %v3424 = vlaneseq
    %v3425 = vshrl.u32 %v3424, 7
    %v3426 = vsub.s32 1, %v3425
    %v3427 = vrot.slane %v3418, %v3426
    %v3428 = vlaneseq
    %v3429 = vshrl.u32 %v3428, 7
    %v3430 = vsub.s32 2, %v3429
    %v3431 = vrot.slane %v3418, %v3430
    %v3432 = vlaneseq
    %v3433 = vshrl.u32 %v3432, 7
    %v3434 = vsub.s32 3, %v3433
    %v3435 = vrot.slane %v3418, %v3434
    %3440 = vmatprep.subr.mxu0 %v3355
    %3441 = vmatpush1.msra.mxu0 %v3354
    %3442 = vmatprep.subr.mxu0 %v3359
    %3443 = vmatpush1.msra.mxu0 %v3358
    %3444 = vmatprep.subr.mxu0 %v3363
    %3445 = vmatpush1.msra.mxu0 %v3362
    %3446 = vmatprep.subr.mxu0 %v3367
    %3447 = vmatpush1.msra.mxu0 %v3366
    %3448 = vmatprep.subr.mxu0 %v3371
    %3449 = vmatpush1.msra.mxu0 %v3370
    %3450 = vmatprep.subr.mxu0 %v3375
    %3451 = vmatpush1.msra.mxu0 %v3374
    %3452 = vmatprep.subr.mxu0 %v3379
    %3453 = vmatpush1.msra.mxu0 %v3378
    %3454 = vmatprep.subr.mxu0 %v3383
    %3455 = vmatpush1.msra.mxu0 %v3382
    %3456 = vmatprep.subr.mxu0 %v3387
    %3457 = vmatpush1.msra.mxu0 %v3386
    %3458 = vmatprep.subr.mxu0 %v3391
    %3459 = vmatpush1.msra.mxu0 %v3390
    %3460 = vmatprep.subr.mxu0 %v3395
    %3461 = vmatpush1.msra.mxu0 %v3394
    %3462 = vmatprep.subr.mxu0 %v3399
    %3463 = vmatpush1.msra.mxu0 %v3398
    %3464 = vmatprep.subr.mxu0 %v3403
    %3465 = vmatpush1.msra.mxu0 %v3402
    %3466 = vmatprep.subr.mxu0 %v3407
    %3467 = vmatpush1.msra.mxu0 %v3406
    %3468 = vmatprep.subr.mxu0 %v3411
    %3469 = vmatpush1.msra.mxu0 %v3410
    %3470 = vmatprep.subr.mxu0 %v3415
    %3471 = vmatpush1.msra.mxu0 %v3414
    %3472 = vmatprep.subr.mxu0 0.0
    %3473 = vmatpush1.msra.mxu0 0.0
    %3474 = vmatprep.subr.mxu0 0.0
    %3475 = vmatpush1.msra.mxu0 0.0
    %3476 = vmatprep.subr.mxu0 0.0
    %3477 = vmatpush1.msra.mxu0 0.0
    %3478 = vmatprep.subr.mxu0 0.0
    %3479 = vmatpush1.msra.mxu0 0.0
    %3480 = vmatprep.subr.mxu0 0.0
    %3481 = vmatpush1.msra.mxu0 0.0
    %3482 = vmatprep.subr.mxu0 0.0
    %3483 = vmatpush1.msra.mxu0 0.0
    %3484 = vmatprep.subr.mxu0 0.0
    %3485 = vmatpush1.msra.mxu0 0.0
    %3486 = vmatprep.subr.mxu0 0.0
    %3487 = vmatpush1.msra.mxu0 0.0
    %3488 = vmatprep.subr.mxu0 0.0
    %3489 = vmatpush1.msra.mxu0 0.0
    %3490 = vmatprep.subr.mxu0 0.0
    %3491 = vmatpush1.msra.mxu0 0.0
    %3492 = vmatprep.subr.mxu0 0.0
    %3493 = vmatpush1.msra.mxu0 0.0
    %3494 = vmatprep.subr.mxu0 0.0
    %3495 = vmatpush1.msra.mxu0 0.0
    %3496 = vmatprep.subr.mxu0 0.0
    %3497 = vmatpush1.msra.mxu0 0.0
    %3498 = vmatprep.subr.mxu0 0.0
    %3499 = vmatpush1.msra.mxu0 0.0
    %3500 = vmatprep.subr.mxu0 0.0
    %3501 = vmatpush1.msra.mxu0 0.0
    %3502 = vmatprep.subr.mxu0 0.0
    %3503 = vmatpush1.msra.mxu0 0.0
    %3504 = vmatprep.mubr.f32.mxu0 0.0
    %3505 = vmatmul.mubr.f32.gmra.mrb[0].mxu0 %v3353
    %v3506 = vpop.f32.mrb[0].mxu0
    %v3507 = vadd.f32 %v3423, %v3506
    %v3508 = vpop.f32.mrb[0].mxu0
    %v3509 = vadd.f32 %v3427, %v3508
    %3510 = vdwg.mxu0
    %3511 = vmatprep.subr.mxu0 %v3357
    %3512 = vmatpush1.msra.mxu0 %v3356
    %3513 = vmatprep.subr.mxu0 %v3361
    %3514 = vmatpush1.msra.mxu0 %v3360
    %3515 = vmatprep.subr.mxu0 %v3365
    %3516 = vmatpush1.msra.mxu0 %v3364
    %3517 = vmatprep.subr.mxu0 %v3369
    %3518 = vmatpush1.msra.mxu0 %v3368
    %3519 = vmatprep.subr.mxu0 %v3373
    %3520 = vmatpush1.msra.mxu0 %v3372
    %3521 = vmatprep.subr.mxu0 %v3377
    %3522 = vmatpush1.msra.mxu0 %v3376
    %3523 = vmatprep.subr.mxu0 %v3381
    %3524 = vmatpush1.msra.mxu0 %v3380
    %3525 = vmatprep.subr.mxu0 %v3385
    %3526 = vmatpush1.msra.mxu0 %v3384
    %3527 = vmatprep.subr.mxu0 %v3389
    %3528 = vmatpush1.msra.mxu0 %v3388
    %3529 = vmatprep.subr.mxu0 %v3393
    %3530 = vmatpush1.msra.mxu0 %v3392
    %3531 = vmatprep.subr.mxu0 %v3397
    %3532 = vmatpush1.msra.mxu0 %v3396
    %3533 = vmatprep.subr.mxu0 %v3401
    %3534 = vmatpush1.msra.mxu0 %v3400
    %3535 = vmatprep.subr.mxu0 %v3405
    %3536 = vmatpush1.msra.mxu0 %v3404
    %3537 = vmatprep.subr.mxu0 %v3409
    %3538 = vmatpush1.msra.mxu0 %v3408
    %3539 = vmatprep.subr.mxu0 %v3413
    %3540 = vmatpush1.msra.mxu0 %v3412
    %3541 = vmatprep.subr.mxu0 %v3417
    %3542 = vmatpush1.msra.mxu0 %v3416
    %3543 = vmatprep.subr.mxu0 0.0
    %3544 = vmatpush1.msra.mxu0 0.0
    %3545 = vmatprep.subr.mxu0 0.0
    %3546 = vmatpush1.msra.mxu0 0.0
    %3547 = vmatprep.subr.mxu0 0.0
    %3548 = vmatpush1.msra.mxu0 0.0
    %3549 = vmatprep.subr.mxu0 0.0
    %3550 = vmatpush1.msra.mxu0 0.0
    %3551 = vmatprep.subr.mxu0 0.0
    %3552 = vmatpush1.msra.mxu0 0.0
    %3553 = vmatprep.subr.mxu0 0.0
    %3554 = vmatpush1.msra.mxu0 0.0
    %3555 = vmatprep.subr.mxu0 0.0
    %3556 = vmatpush1.msra.mxu0 0.0
    %3557 = vmatprep.subr.mxu0 0.0
    %3558 = vmatpush1.msra.mxu0 0.0
    %3559 = vmatprep.subr.mxu0 0.0
    %3560 = vmatpush1.msra.mxu0 0.0
    %3561 = vmatprep.subr.mxu0 0.0
    %3562 = vmatpush1.msra.mxu0 0.0
    %3563 = vmatprep.subr.mxu0 0.0
    %3564 = vmatpush1.msra.mxu0 0.0
    %3565 = vmatprep.subr.mxu0 0.0
    %3566 = vmatpush1.msra.mxu0 0.0
    %3567 = vmatprep.subr.mxu0 0.0
    %3568 = vmatpush1.msra.mxu0 0.0
    %3569 = vmatprep.subr.mxu0 0.0
    %3570 = vmatpush1.msra.mxu0 0.0
    %3571 = vmatprep.subr.mxu0 0.0
    %3572 = vmatpush1.msra.mxu0 0.0
    %3573 = vmatprep.subr.mxu0 0.0
    %3574 = vmatpush1.msra.mxu0 0.0
    %3575 = vmatprep.mubr.f32.mxu0 0.0
    %3576 = vmatmul.mubr.f32.gmra.mrb[0].mxu0 %v3353
    %v3577 = vpop.f32.mrb[0].mxu0
    %v3578 = vadd.f32 %v3431, %v3577
    %v3579 = vpop.f32.mrb[0].mxu0
    %v3580 = vadd.f32 %v3435, %v3579
    %3581 = vdwg.mxu0
    %3582 = vst [vmem:[#allocation4] sm:$0xff] %v3507
    %3583 = vst [vmem:[#allocation4 + $0x8] sm:$0xff] %v3509
    %3584 = vst [vmem:[#allocation4 + $0x10] sm:$0xff] %v3578
    %3585 = vst [vmem:[#allocation4 + $0x18] sm:$0xff] %v3580
    %v3586 = vld [vmem:[#allocation16] sm:$0xff]
    %v3587 = vld [vmem:[#allocation16 + $0x8] sm:$0xff]
    %v3588 = vld [vmem:[#allocation16 + $0x10] sm:$0xff]
    %v3589 = vld [vmem:[#allocation16 + $0x18] sm:$0xff]
    %v3590 = vld [vmem:[#allocation16 + $0x20] sm:$0xff]
    %v3591 = vld [vmem:[#allocation16 + $0x28] sm:$0xff]
    %v3592 = vld [vmem:[#allocation16 + $0x30] sm:$0xff]
    %v3593 = vld [vmem:[#allocation16 + $0x38] sm:$0xff]
    %v3594 = vld [vmem:[#allocation16 + $0x40] sm:$0xff]
    %v3595 = vld [vmem:[#allocation16 + $0x48] sm:$0xff]
    %v3596 = vld [vmem:[#allocation16 + $0x50] sm:$0xff]
    %v3597 = vld [vmem:[#allocation16 + $0x58] sm:$0xff]
    %v3598 = vld [vmem:[#allocation16 + $0x60] sm:$0xff]
    %v3599 = vld [vmem:[#allocation16 + $0x68] sm:$0xff]
    %v3600 = vld [vmem:[#allocation16 + $0x70] sm:$0xff]
    %v3601 = vld [vmem:[#allocation16 + $0x78] sm:$0xff]
    %v3602 = vld [vmem:[#allocation16 + $0x80] sm:$0xff]
    %v3603 = vld [vmem:[#allocation16 + $0x88] sm:$0xff]
    %v3604 = vld [vmem:[#allocation16 + $0x90] sm:$0xff]
    %v3605 = vld [vmem:[#allocation16 + $0x98] sm:$0xff]
    %v3606 = vld [vmem:[#allocation16 + $0xa0] sm:$0xff]
    %v3607 = vld [vmem:[#allocation16 + $0xa8] sm:$0xff]
    %v3608 = vld [vmem:[#allocation16 + $0xb0] sm:$0xff]
    %v3609 = vld [vmem:[#allocation16 + $0xb8] sm:$0xff]
    %v3610 = vld [vmem:[#allocation16 + $0xc0] sm:$0xff]
    %v3611 = vld [vmem:[#allocation16 + $0xc8] sm:$0xff]
    %v3612 = vld [vmem:[#allocation16 + $0xd0] sm:$0xff]
    %v3613 = vld [vmem:[#allocation16 + $0xd8] sm:$0xff]
    %v3614 = vld [vmem:[#allocation16 + $0xe0] sm:$0xff]
    %v3615 = vld [vmem:[#allocation16 + $0xe8] sm:$0xff]
    %v3616 = vld [vmem:[#allocation16 + $0xf0] sm:$0xff]
    %v3617 = vld [vmem:[#allocation16 + $0xf8] sm:$0xff]
    %v3618 = vld [vmem:[#allocation16 + $0x100] sm:$0xff]
    %v3619 = vld [vmem:[#allocation16 + $0x108] sm:$0xff]
    %v3620 = vld [vmem:[#allocation16 + $0x110] sm:$0xff]
    %v3621 = vld [vmem:[#allocation16 + $0x118] sm:$0xff]
    %v3622 = vld [vmem:[#allocation16 + $0x120] sm:$0xff]
    %v3623 = vld [vmem:[#allocation16 + $0x128] sm:$0xff]
    %v3624 = vld [vmem:[#allocation16 + $0x130] sm:$0xff]
    %v3625 = vld [vmem:[#allocation16 + $0x138] sm:$0xff]
    %v3626 = vld [vmem:[#allocation16 + $0x140] sm:$0xff]
    %v3627 = vld [vmem:[#allocation16 + $0x148] sm:$0xff]
    %v3628 = vld [vmem:[#allocation16 + $0x150] sm:$0xff]
    %v3629 = vld [vmem:[#allocation16 + $0x158] sm:$0xff]
    %v3630 = vld [vmem:[#allocation16 + $0x160] sm:$0xff]
    %v3631 = vld [vmem:[#allocation16 + $0x168] sm:$0xff]
    %v3632 = vld [vmem:[#allocation16 + $0x170] sm:$0xff]
    %v3633 = vld [vmem:[#allocation16 + $0x178] sm:$0xff]
    %v3634 = vld [vmem:[#allocation16 + $0x180] sm:$0xff]
    %v3635 = vld [vmem:[#allocation16 + $0x188] sm:$0xff]
    %v3636 = vld [vmem:[#allocation16 + $0x190] sm:$0xff]
    %v3637 = vld [vmem:[#allocation16 + $0x198] sm:$0xff]
    %v3638 = vld [vmem:[#allocation16 + $0x1a0] sm:$0xff]
    %v3639 = vld [vmem:[#allocation16 + $0x1a8] sm:$0xff]
    %v3640 = vld [vmem:[#allocation16 + $0x1b0] sm:$0xff]
    %v3641 = vld [vmem:[#allocation16 + $0x1b8] sm:$0xff]
    %v3642 = vld [vmem:[#allocation16 + $0x1c0] sm:$0xff]
    %v3643 = vld [vmem:[#allocation16 + $0x1c8] sm:$0xff]
    %v3644 = vld [vmem:[#allocation16 + $0x1d0] sm:$0xff]
    %v3645 = vld [vmem:[#allocation16 + $0x1d8] sm:$0xff]
    %v3646 = vld [vmem:[#allocation16 + $0x1e0] sm:$0xff]
    %v3647 = vld [vmem:[#allocation16 + $0x1e8] sm:$0xff]
    %v3648 = vld [vmem:[#allocation16 + $0x1f0] sm:$0xff]
    %v3649 = vld [vmem:[#allocation16 + $0x1f8] sm:$0xff]
    %3650 = vmatprep.subr.mxu0 %v3587
    %3651 = vmatpush1.msra.mxu0 %v3586
    %3652 = vmatprep.subr.mxu0 %v3591
    %3653 = vmatpush1.msra.mxu0 %v3590
    %3654 = vmatprep.subr.mxu0 %v3595
    %3655 = vmatpush1.msra.mxu0 %v3594
    %3656 = vmatprep.subr.mxu0 %v3599
    %3657 = vmatpush1.msra.mxu0 %v3598
    %3658 = vmatprep.subr.mxu0 %v3603
    %3659 = vmatpush1.msra.mxu0 %v3602
    %3660 = vmatprep.subr.mxu0 %v3607
    %3661 = vmatpush1.msra.mxu0 %v3606
    %3662 = vmatprep.subr.mxu0 %v3611
    %3663 = vmatpush1.msra.mxu0 %v3610
    %3664 = vmatprep.subr.mxu0 %v3615
    %3665 = vmatpush1.msra.mxu0 %v3614
    %3666 = vmatprep.subr.mxu0 %v3619
    %3667 = vmatpush1.msra.mxu0 %v3618
    %3668 = vmatprep.subr.mxu0 %v3623
    %3669 = vmatpush1.msra.mxu0 %v3622
    %3670 = vmatprep.subr.mxu0 %v3627
    %3671 = vmatpush1.msra.mxu0 %v3626
    %3672 = vmatprep.subr.mxu0 %v3631
    %3673 = vmatpush1.msra.mxu0 %v3630
    %3674 = vmatprep.subr.mxu0 %v3635
    %3675 = vmatpush1.msra.mxu0 %v3634
    %3676 = vmatprep.subr.mxu0 %v3639
    %3677 = vmatpush1.msra.mxu0 %v3638
    %3678 = vmatprep.subr.mxu0 %v3643
    %3679 = vmatpush1.msra.mxu0 %v3642
    %3680 = vmatprep.subr.mxu0 %v3647
    %3681 = vmatpush1.msra.mxu0 %v3646
    %3682 = vmatprep.subr.mxu0 0.0
    %3683 = vmatpush1.msra.mxu0 0.0
    %3684 = vmatprep.subr.mxu0 0.0
    %3685 = vmatpush1.msra.mxu0 0.0
    %3686 = vmatprep.subr.mxu0 0.0
    %3687 = vmatpush1.msra.mxu0 0.0
    %3688 = vmatprep.subr.mxu0 0.0
    %3689 = vmatpush1.msra.mxu0 0.0
    %3690 = vmatprep.subr.mxu0 0.0
    %3691 = vmatpush1.msra.mxu0 0.0
    %3692 = vmatprep.subr.mxu0 0.0
    %3693 = vmatpush1.msra.mxu0 0.0
    %3694 = vmatprep.subr.mxu0 0.0
    %3695 = vmatpush1.msra.mxu0 0.0
    %3696 = vmatprep.subr.mxu0 0.0
    %3697 = vmatpush1.msra.mxu0 0.0
    %3698 = vmatprep.subr.mxu0 0.0
    %3699 = vmatpush1.msra.mxu0 0.0
    %3700 = vmatprep.subr.mxu0 0.0
    %3701 = vmatpush1.msra.mxu0 0.0
    %3702 = vmatprep.subr.mxu0 0.0
    %3703 = vmatpush1.msra.mxu0 0.0
    %3704 = vmatprep.subr.mxu0 0.0
    %3705 = vmatpush1.msra.mxu0 0.0
    %3706 = vmatprep.subr.mxu0 0.0
    %3707 = vmatpush1.msra.mxu0 0.0
    %3708 = vmatprep.subr.mxu0 0.0
    %3709 = vmatpush1.msra.mxu0 0.0
    %3710 = vmatprep.subr.mxu0 0.0
    %3711 = vmatpush1.msra.mxu0 0.0
    %3712 = vmatprep.subr.mxu0 0.0
    %3713 = vmatpush1.msra.mxu0 0.0
    %3714 = vmatprep.mubr.f32.mxu0 0.0
    %3715 = vmatmul.mubr.f32.gmra.mrb[0].mxu0 %v3353
    %v3716 = vpop.f32.mrb[0].mxu0
    %v3717 = vadd.f32 0.0, %v3716
    %v3718 = vpop.f32.mrb[0].mxu0
    %v3719 = vadd.f32 0.0, %v3718
    %3720 = vdwg.mxu0
    %3721 = vmatprep.subr.mxu0 %v3589
    %3722 = vmatpush1.msra.mxu0 %v3588
    %3723 = vmatprep.subr.mxu0 %v3593
    %3724 = vmatpush1.msra.mxu0 %v3592
    %3725 = vmatprep.subr.mxu0 %v3597
    %3726 = vmatpush1.msra.mxu0 %v3596
    %3727 = vmatprep.subr.mxu0 %v3601
    %3728 = vmatpush1.msra.mxu0 %v3600
    %3729 = vmatprep.subr.mxu0 %v3605
    %3730 = vmatpush1.msra.mxu0 %v3604
    %3731 = vmatprep.subr.mxu0 %v3609
    %3732 = vmatpush1.msra.mxu0 %v3608
    %3733 = vmatprep.subr.mxu0 %v3613
    %3734 = vmatpush1.msra.mxu0 %v3612
    %3735 = vmatprep.subr.mxu0 %v3617
    %3736 = vmatpush1.msra.mxu0 %v3616
    %3737 = vmatprep.subr.mxu0 %v3621
    %3738 = vmatpush1.msra.mxu0 %v3620
    %3739 = vmatprep.subr.mxu0 %v3625
    %3740 = vmatpush1.msra.mxu0 %v3624
    %3741 = vmatprep.subr.mxu0 %v3629
    %3742 = vmatpush1.msra.mxu0 %v3628
    %3743 = vmatprep.subr.mxu0 %v3633
    %3744 = vmatpush1.msra.mxu0 %v3632
    %3745 = vmatprep.subr.mxu0 %v3637
    %3746 = vmatpush1.msra.mxu0 %v3636
    %3747 = vmatprep.subr.mxu0 %v3641
    %3748 = vmatpush1.msra.mxu0 %v3640
    %3749 = vmatprep.subr.mxu0 %v3645
    %3750 = vmatpush1.msra.mxu0 %v3644
    %3751 = vmatprep.subr.mxu0 %v3649
    %3752 = vmatpush1.msra.mxu0 %v3648
    %3753 = vmatprep.subr.mxu0 0.0
    %3754 = vmatpush1.msra.mxu0 0.0
    %3755 = vmatprep.subr.mxu0 0.0
    %3756 = vmatpush1.msra.mxu0 0.0
    %3757 = vmatprep.subr.mxu0 0.0
    %3758 = vmatpush1.msra.mxu0 0.0
    %3759 = vmatprep.subr.mxu0 0.0
    %3760 = vmatpush1.msra.mxu0 0.0
    %3761 = vmatprep.subr.mxu0 0.0
    %3762 = vmatpush1.msra.mxu0 0.0
    %3763 = vmatprep.subr.mxu0 0.0
    %3764 = vmatpush1.msra.mxu0 0.0
    %3765 = vmatprep.subr.mxu0 0.0
    %3766 = vmatpush1.msra.mxu0 0.0
    %3767 = vmatprep.subr.mxu0 0.0
    %3768 = vmatpush1.msra.mxu0 0.0
    %3769 = vmatprep.subr.mxu0 0.0
    %3770 = vmatpush1.msra.mxu0 0.0
    %3771 = vmatprep.subr.mxu0 0.0
    %3772 = vmatpush1.msra.mxu0 0.0
    %3773 = vmatprep.subr.mxu0 0.0
    %3774 = vmatpush1.msra.mxu0 0.0
    %3775 = vmatprep.subr.mxu0 0.0
    %3776 = vmatpush1.msra.mxu0 0.0
    %3777 = vmatprep.subr.mxu0 0.0
    %3778 = vmatpush1.msra.mxu0 0.0
    %3779 = vmatprep.subr.mxu0 0.0
    %3780 = vmatpush1.msra.mxu0 0.0
    %3781 = vmatprep.subr.mxu0 0.0
    %3782 = vmatpush1.msra.mxu0 0.0
    %3783 = vmatprep.subr.mxu0 0.0
    %3784 = vmatpush1.msra.mxu0 0.0
    %3785 = vmatprep.mubr.f32.mxu0 0.0
    %3786 = vmatmul.mubr.f32.gmra.mrb[0].mxu0 %v3353
    %v3787 = vpop.f32.mrb[0].mxu0
    %v3788 = vadd.f32 0.0, %v3787
    %v3789 = vpop.f32.mrb[0].mxu0
    %v3790 = vadd.f32 0.0, %v3789
    %3791 = vdwg.mxu0
    %3792 = vst [vmem:[#allocation5] sm:$0xff] %v3717
    %3793 = vst [vmem:[#allocation5 + $0x8] sm:$0xff] %v3719
    %3794 = vst [vmem:[#allocation5 + $0x10] sm:$0xff] %v3788
    %3795 = vst [vmem:[#allocation5 + $0x18] sm:$0xff] %v3790
    %v3796 = vld [vmem:[#allocation4] ss:$8 sm:$0xf]
    %s3797 = scalar_lea.vmem [#allocation5], 7
    %v3798 = vld [vmem:[%s3797] ss:$8 sm:$0xf]
    %v3799 = vadd.f32 %v3796, %v3798
    %v3800 = vld [vmem:[#allocation17] sm:$0xff]
    %v3801 = vld [vmem:[#allocation17 + $0x8] sm:$0xff]
    %v3802 = vld [vmem:[#allocation17 + $0x10] sm:$0xff]
    %v3803 = vld [vmem:[#allocation17 + $0x18] sm:$0xff]
    %v3804 = vld [vmem:[#allocation17 + $0x20] sm:$0xff]
    %v3805 = vld [vmem:[#allocation17 + $0x28] sm:$0xff]
    %v3806 = vld [vmem:[#allocation17 + $0x30] sm:$0xff]
    %v3807 = vld [vmem:[#allocation17 + $0x38] sm:$0xff]
    %v3808 = vld [vmem:[#allocation17 + $0x40] sm:$0xff]
    %v3809 = vld [vmem:[#allocation17 + $0x48] sm:$0xff]
    %v3810 = vld [vmem:[#allocation17 + $0x50] sm:$0xff]
    %v3811 = vld [vmem:[#allocation17 + $0x58] sm:$0xff]
    %v3812 = vld [vmem:[#allocation17 + $0x60] sm:$0xff]
    %v3813 = vld [vmem:[#allocation17 + $0x68] sm:$0xff]
    %v3814 = vld [vmem:[#allocation17 + $0x70] sm:$0xff]
    %v3815 = vld [vmem:[#allocation17 + $0x78] sm:$0xff]
    %v3816 = vld [vmem:[#allocation17 + $0x80] sm:$0xff]
    %v3817 = vld [vmem:[#allocation17 + $0x88] sm:$0xff]
    %v3818 = vld [vmem:[#allocation17 + $0x90] sm:$0xff]
    %v3819 = vld [vmem:[#allocation17 + $0x98] sm:$0xff]
    %v3820 = vld [vmem:[#allocation17 + $0xa0] sm:$0xff]
    %v3821 = vld [vmem:[#allocation17 + $0xa8] sm:$0xff]
    %v3822 = vld [vmem:[#allocation17 + $0xb0] sm:$0xff]
    %v3823 = vld [vmem:[#allocation17 + $0xb8] sm:$0xff]
    %v3824 = vld [vmem:[#allocation17 + $0xc0] sm:$0xff]
    %v3825 = vld [vmem:[#allocation17 + $0xc8] sm:$0xff]
    %v3826 = vld [vmem:[#allocation17 + $0xd0] sm:$0xff]
    %v3827 = vld [vmem:[#allocation17 + $0xd8] sm:$0xff]
    %v3828 = vld [vmem:[#allocation17 + $0xe0] sm:$0xff]
    %v3829 = vld [vmem:[#allocation17 + $0xe8] sm:$0xff]
    %v3830 = vld [vmem:[#allocation17 + $0xf0] sm:$0xff]
    %v3831 = vld [vmem:[#allocation17 + $0xf8] sm:$0xff]
    %v3832 = vld [vmem:[#allocation17 + $0x100] sm:$0xff]
    %v3833 = vld [vmem:[#allocation17 + $0x108] sm:$0xff]
    %v3834 = vld [vmem:[#allocation17 + $0x110] sm:$0xff]
    %v3835 = vld [vmem:[#allocation17 + $0x118] sm:$0xff]
    %v3836 = vld [vmem:[#allocation17 + $0x120] sm:$0xff]
    %v3837 = vld [vmem:[#allocation17 + $0x128] sm:$0xff]
    %v3838 = vld [vmem:[#allocation17 + $0x130] sm:$0xff]
    %v3839 = vld [vmem:[#allocation17 + $0x138] sm:$0xff]
    %v3840 = vld [vmem:[#allocation17 + $0x140] sm:$0xff]
    %v3841 = vld [vmem:[#allocation17 + $0x148] sm:$0xff]
    %v3842 = vld [vmem:[#allocation17 + $0x150] sm:$0xff]
    %v3843 = vld [vmem:[#allocation17 + $0x158] sm:$0xff]
    %v3844 = vld [vmem:[#allocation17 + $0x160] sm:$0xff]
    %v3845 = vld [vmem:[#allocation17 + $0x168] sm:$0xff]
    %v3846 = vld [vmem:[#allocation17 + $0x170] sm:$0xff]
    %v3847 = vld [vmem:[#allocation17 + $0x178] sm:$0xff]
    %v3848 = vld [vmem:[#allocation17 + $0x180] sm:$0xff]
    %v3849 = vld [vmem:[#allocation17 + $0x188] sm:$0xff]
    %v3850 = vld [vmem:[#allocation17 + $0x190] sm:$0xff]
    %v3851 = vld [vmem:[#allocation17 + $0x198] sm:$0xff]
    %v3852 = vld [vmem:[#allocation17 + $0x1a0] sm:$0xff]
    %v3853 = vld [vmem:[#allocation17 + $0x1a8] sm:$0xff]
    %v3854 = vld [vmem:[#allocation17 + $0x1b0] sm:$0xff]
    %v3855 = vld [vmem:[#allocation17 + $0x1b8] sm:$0xff]
    %v3856 = vld [vmem:[#allocation17 + $0x1c0] sm:$0xff]
    %v3857 = vld [vmem:[#allocation17 + $0x1c8] sm:$0xff]
    %v3858 = vld [vmem:[#allocation17 + $0x1d0] sm:$0xff]
    %v3859 = vld [vmem:[#allocation17 + $0x1d8] sm:$0xff]
    %v3860 = vld [vmem:[#allocation17 + $0x1e0] sm:$0xff]
    %v3861 = vld [vmem:[#allocation17 + $0x1e8] sm:$0xff]
    %v3862 = vld [vmem:[#allocation17 + $0x1f0] sm:$0xff]
    %v3863 = vld [vmem:[#allocation17 + $0x1f8] sm:$0xff]
    %3864 = vmatprep.subr.mxu0 %v3801
    %3865 = vmatpush1.msra.mxu0 %v3800
    %3866 = vmatprep.subr.mxu0 %v3805
    %3867 = vmatpush1.msra.mxu0 %v3804
    %3868 = vmatprep.subr.mxu0 %v3809
    %3869 = vmatpush1.msra.mxu0 %v3808
    %3870 = vmatprep.subr.mxu0 %v3813
    %3871 = vmatpush1.msra.mxu0 %v3812
    %3872 = vmatprep.subr.mxu0 %v3817
    %3873 = vmatpush1.msra.mxu0 %v3816
    %3874 = vmatprep.subr.mxu0 %v3821
    %3875 = vmatpush1.msra.mxu0 %v3820
    %3876 = vmatprep.subr.mxu0 %v3825
    %3877 = vmatpush1.msra.mxu0 %v3824
    %3878 = vmatprep.subr.mxu0 %v3829
    %3879 = vmatpush1.msra.mxu0 %v3828
    %3880 = vmatprep.subr.mxu0 %v3833
    %3881 = vmatpush1.msra.mxu0 %v3832
    %3882 = vmatprep.subr.mxu0 %v3837
    %3883 = vmatpush1.msra.mxu0 %v3836
    %3884 = vmatprep.subr.mxu0 %v3841
    %3885 = vmatpush1.msra.mxu0 %v3840
    %3886 = vmatprep.subr.mxu0 %v3845
    %3887 = vmatpush1.msra.mxu0 %v3844
    %3888 = vmatprep.subr.mxu0 %v3849
    %3889 = vmatpush1.msra.mxu0 %v3848
    %3890 = vmatprep.subr.mxu0 %v3853
    %3891 = vmatpush1.msra.mxu0 %v3852
    %3892 = vmatprep.subr.mxu0 %v3857
    %3893 = vmatpush1.msra.mxu0 %v3856
    %3894 = vmatprep.subr.mxu0 %v3861
    %3895 = vmatpush1.msra.mxu0 %v3860
    %3896 = vmatprep.subr.mxu0 0.0
    %3897 = vmatpush1.msra.mxu0 0.0
    %3898 = vmatprep.subr.mxu0 0.0
    %3899 = vmatpush1.msra.mxu0 0.0
    %3900 = vmatprep.subr.mxu0 0.0
    %3901 = vmatpush1.msra.mxu0 0.0
    %3902 = vmatprep.subr.mxu0 0.0
    %3903 = vmatpush1.msra.mxu0 0.0
    %3904 = vmatprep.subr.mxu0 0.0
    %3905 = vmatpush1.msra.mxu0 0.0
    %3906 = vmatprep.subr.mxu0 0.0
    %3907 = vmatpush1.msra.mxu0 0.0
    %3908 = vmatprep.subr.mxu0 0.0
    %3909 = vmatpush1.msra.mxu0 0.0
    %3910 = vmatprep.subr.mxu0 0.0
    %3911 = vmatpush1.msra.mxu0 0.0
    %3912 = vmatprep.subr.mxu0 0.0
    %3913 = vmatpush1.msra.mxu0 0.0
    %3914 = vmatprep.subr.mxu0 0.0
    %3915 = vmatpush1.msra.mxu0 0.0
    %3916 = vmatprep.subr.mxu0 0.0
    %3917 = vmatpush1.msra.mxu0 0.0
    %3918 = vmatprep.subr.mxu0 0.0
    %3919 = vmatpush1.msra.mxu0 0.0
    %3920 = vmatprep.subr.mxu0 0.0
    %3921 = vmatpush1.msra.mxu0 0.0
    %3922 = vmatprep.subr.mxu0 0.0
    %3923 = vmatpush1.msra.mxu0 0.0
    %3924 = vmatprep.subr.mxu0 0.0
    %3925 = vmatpush1.msra.mxu0 0.0
    %3926 = vmatprep.subr.mxu0 0.0
    %3927 = vmatpush1.msra.mxu0 0.0
    %3928 = vmatprep.mubr.f32.mxu0 0.0
    %3929 = vmatmul.mubr.f32.gmra.mrb[0].mxu0 0.0
    %v3930 = vpop.f32.mrb[0].mxu0
    %v3931 = vadd.f32 0.0, %v3930
    %v3932 = vpop.f32.mrb[0].mxu0
    %v3933 = vadd.f32 0.0, %v3932
    %3934 = vdwg.mxu0
    %3935 = vmatprep.subr.mxu0 %v3803
    %3936 = vmatpush1.msra.mxu0 %v3802
    %3937 = vmatprep.subr.mxu0 %v3807
    %3938 = vmatpush1.msra.mxu0 %v3806
    %3939 = vmatprep.subr.mxu0 %v3811
    %3940 = vmatpush1.msra.mxu0 %v3810
    %3941 = vmatprep.subr.mxu0 %v3815
    %3942 = vmatpush1.msra.mxu0 %v3814
    %3943 = vmatprep.subr.mxu0 %v3819
    %3944 = vmatpush1.msra.mxu0 %v3818
    %3945 = vmatprep.subr.mxu0 %v3823
    %3946 = vmatpush1.msra.mxu0 %v3822
    %3947 = vmatprep.subr.mxu0 %v3827
    %3948 = vmatpush1.msra.mxu0 %v3826
    %3949 = vmatprep.subr.mxu0 %v3831
    %3950 = vmatpush1.msra.mxu0 %v3830
    %3951 = vmatprep.subr.mxu0 %v3835
    %3952 = vmatpush1.msra.mxu0 %v3834
    %3953 = vmatprep.subr.mxu0 %v3839
    %3954 = vmatpush1.msra.mxu0 %v3838
    %3955 = vmatprep.subr.mxu0 %v3843
    %3956 = vmatpush1.msra.mxu0 %v3842
    %3957 = vmatprep.subr.mxu0 %v3847
    %3958 = vmatpush1.msra.mxu0 %v3846
    %3959 = vmatprep.subr.mxu0 %v3851
    %3960 = vmatpush1.msra.mxu0 %v3850
    %3961 = vmatprep.subr.mxu0 %v3855
    %3962 = vmatpush1.msra.mxu0 %v3854
    %3963 = vmatprep.subr.mxu0 %v3859
    %3964 = vmatpush1.msra.mxu0 %v3858
    %3965 = vmatprep.subr.mxu0 %v3863
    %3966 = vmatpush1.msra.mxu0 %v3862
    %3967 = vmatprep.subr.mxu0 0.0
    %3968 = vmatpush1.msra.mxu0 0.0
    %3969 = vmatprep.subr.mxu0 0.0
    %3970 = vmatpush1.msra.mxu0 0.0
    %3971 = vmatprep.subr.mxu0 0.0
    %3972 = vmatpush1.msra.mxu0 0.0
    %3973 = vmatprep.subr.mxu0 0.0
    %3974 = vmatpush1.msra.mxu0 0.0
    %3975 = vmatprep.subr.mxu0 0.0
    %3976 = vmatpush1.msra.mxu0 0.0
    %3977 = vmatprep.subr.mxu0 0.0
    %3978 = vmatpush1.msra.mxu0 0.0
    %3979 = vmatprep.subr.mxu0 0.0
    %3980 = vmatpush1.msra.mxu0 0.0
    %3981 = vmatprep.subr.mxu0 0.0
    %3982 = vmatpush1.msra.mxu0 0.0
    %3983 = vmatprep.subr.mxu0 0.0
    %3984 = vmatpush1.msra.mxu0 0.0
    %3985 = vmatprep.subr.mxu0 0.0
    %3986 = vmatpush1.msra.mxu0 0.0
    %3987 = vmatprep.subr.mxu0 0.0
    %3988 = vmatpush1.msra.mxu0 0.0
    %3989 = vmatprep.subr.mxu0 0.0
    %3990 = vmatpush1.msra.mxu0 0.0
    %3991 = vmatprep.subr.mxu0 0.0
    %3992 = vmatpush1.msra.mxu0 0.0
    %3993 = vmatprep.subr.mxu0 0.0
    %3994 = vmatpush1.msra.mxu0 0.0
    %3995 = vmatprep.subr.mxu0 0.0
    %3996 = vmatpush1.msra.mxu0 0.0
    %3997 = vmatprep.subr.mxu0 0.0
    %3998 = vmatpush1.msra.mxu0 0.0
    %3999 = vmatprep.mubr.f32.mxu0 0.0
    %4000 = vmatmul.mubr.f32.gmra.mrb[0].mxu0 0.0
    %v4001 = vpop.f32.mrb[0].mxu0
    %v4002 = vadd.f32 0.0, %v4001
    %v4003 = vpop.f32.mrb[0].mxu0
    %v4004 = vadd.f32 0.0, %v4003
    %4005 = vdwg.mxu0
    %v4010 = vcombine.low %v3931, %v3933
    %v4011 = vcombine.low %v4002, %v4004
    %v4013 = vunpack.c.l.s4 1966171168
    %v4014 = vunpack.c.0.s8 %v4013
    %v4015 = vlaneseq
    %v4016 = vshrl.u32 %v4015, 7
    %v4017 = vsub.s32 %v4014, %v4016
    %v4018 = vrot.slane %v4010, %v4017
    %v4020 = vunpack.c.l.s4 1966171168
    %v4021 = vunpack.c.0.s8 %v4020
    %v4022 = vlaneseq
    %v4023 = vshrl.u32 %v4022, 7
    %v4024 = vsub.s32 %v4021, %v4023
    %v4025 = vrot.slane %v4011, %v4024
    %v4026 = vcombine.low %v4018, %v4025
    %v4028 = vunpack.c.l.s4 1966171168
    %v4029 = vunpack.c.0.s8 %v4028
    %v4030 = vlaneseq
    %v4031 = vshrl.u32 %v4030, 7
    %v4032 = vsub.s32 %v4029, %v4031
    %v4033 = vrot.slane %v4026, %v4032
    %v4035 = vadd.f32 %v3799, %v4033
    %v4036 = vxor.u32 %v4035, 2147483648
    %v4037 = vmul.f32 %v4036, 1.442695
    %v4038 = vpow.pop %v4037
    %v4039 = vadd.f32 %v4038, 1.0
    %v4040 = vrcp.pop %v4039
    %v4041 = vmul.f32 1.0, %v4040
    %v4043 = vrot.slane %v4035, 1
    %v4045 = vxor.u32 %v4043, 2147483648
    %v4046 = vmul.f32 %v4045, 1.442695
    %v4047 = vpow.pop %v4046
    %v4048 = vadd.f32 %v4047, 1.0
    %v4049 = vrcp.pop %v4048
    %v4050 = vmul.f32 1.0, %v4049
    %v4051 = vrot.slane %v4035, 2
    %v4053 = vtanh.pop %v4051
    %v4054 = vrot.slane %v4035, 3
    %v4056 = vxor.u32 %v4054, 2147483648
    %v4057 = vmul.f32 %v4056, 1.442695
    %v4058 = vpow.pop %v4057
    %v4059 = vadd.f32 %v4058, 1.0
    %v4060 = vrcp.pop %v4059
    %v4061 = vmul.f32 1.0, %v4060
    %v4062 = vmul.f32 %v4050, 0.0
    %v4063 = vmul.f32 %v4041, %v4053
    %v4064 = vadd.f32 %v4062, %v4063
    %v4065 = vtanh.pop %v4064
    %v4066 = vmul.f32 %v4061, %v4065
    %v4067 = vmax.f32 %v4066, -1e+30
    %s4068 = scalar_lea.vmem [#allocation4], 1
    %v4069 = vld [vmem:[%s4068] ss:$8 sm:$0xf]
    %s4070 = scalar_lea.vmem [#allocation5], 6
    %v4071 = vld [vmem:[%s4070] ss:$8 sm:$0xf]
    %v4072 = vadd.f32 %v4069, %v4071
    %4073 = vmatprep.subr.mxu0 %v3801
    %4074 = vmatpush1.msra.mxu0 %v3800
    %4075 = vmatprep.subr.mxu0 %v3805
    %4076 = vmatpush1.msra.mxu0 %v3804
    %4077 = vmatprep.subr.mxu0 %v3809
    %4078 = vmatpush1.msra.mxu0 %v3808
    %4079 = vmatprep.subr.mxu0 %v3813
    %4080 = vmatpush1.msra.mxu0 %v3812
    %4081 = vmatprep.subr.mxu0 %v3817
    %4082 = vmatpush1.msra.mxu0 %v3816
    %4083 = vmatprep.subr.mxu0 %v3821
    %4084 = vmatpush1.msra.mxu0 %v3820
    %4085 = vmatprep.subr.mxu0 %v3825
    %4086 = vmatpush1.msra.mxu0 %v3824
    %4087 = vmatprep.subr.mxu0 %v3829
    %4088 = vmatpush1.msra.mxu0 %v3828
    %4089 = vmatprep.subr.mxu0 %v3833
    %4090 = vmatpush1.msra.mxu0 %v3832
    %4091 = vmatprep.subr.mxu0 %v3837
    %4092 = vmatpush1.msra.mxu0 %v3836
    %4093 = vmatprep.subr.mxu0 %v3841
    %4094 = vmatpush1.msra.mxu0 %v3840
    %4095 = vmatprep.subr.mxu0 %v3845
    %4096 = vmatpush1.msra.mxu0 %v3844
    %4097 = vmatprep.subr.mxu0 %v3849
    %4098 = vmatpush1.msra.mxu0 %v3848
    %4099 = vmatprep.subr.mxu0 %v3853
    %4100 = vmatpush1.msra.mxu0 %v3852
    %4101 = vmatprep.subr.mxu0 %v3857
    %4102 = vmatpush1.msra.mxu0 %v3856
    %4103 = vmatprep.subr.mxu0 %v3861
    %4104 = vmatpush1.msra.mxu0 %v3860
    %4105 = vmatprep.subr.mxu0 0.0
    %4106 = vmatpush1.msra.mxu0 0.0
    %4107 = vmatprep.subr.mxu0 0.0
    %4108 = vmatpush1.msra.mxu0 0.0
    %4109 = vmatprep.subr.mxu0 0.0
    %4110 = vmatpush1.msra.mxu0 0.0
    %4111 = vmatprep.subr.mxu0 0.0
    %4112 = vmatpush1.msra.mxu0 0.0
    %4113 = vmatprep.subr.mxu0 0.0
    %4114 = vmatpush1.msra.mxu0 0.0
    %4115 = vmatprep.subr.mxu0 0.0
    %4116 = vmatpush1.msra.mxu0 0.0
    %4117 = vmatprep.subr.mxu0 0.0
    %4118 = vmatpush1.msra.mxu0 0.0
    %4119 = vmatprep.subr.mxu0 0.0
    %4120 = vmatpush1.msra.mxu0 0.0
    %4121 = vmatprep.subr.mxu0 0.0
    %4122 = vmatpush1.msra.mxu0 0.0
    %4123 = vmatprep.subr.mxu0 0.0
    %4124 = vmatpush1.msra.mxu0 0.0
    %4125 = vmatprep.subr.mxu0 0.0
    %4126 = vmatpush1.msra.mxu0 0.0
    %4127 = vmatprep.subr.mxu0 0.0
    %4128 = vmatpush1.msra.mxu0 0.0
    %4129 = vmatprep.subr.mxu0 0.0
    %4130 = vmatpush1.msra.mxu0 0.0
    %4131 = vmatprep.subr.mxu0 0.0
    %4132 = vmatpush1.msra.mxu0 0.0
    %4133 = vmatprep.subr.mxu0 0.0
    %4134 = vmatpush1.msra.mxu0 0.0
    %4135 = vmatprep.subr.mxu0 0.0
    %4136 = vmatpush1.msra.mxu0 0.0
    %4137 = vmatprep.mubr.f32.mxu0 0.0
    %4138 = vmatmul.mubr.f32.gmra.mrb[0].mxu0 %v4066
    %v4139 = vpop.f32.mrb[0].mxu0
    %v4140 = vadd.f32 0.0, %v4139
    %v4141 = vpop.f32.mrb[0].mxu0
    %v4142 = vadd.f32 0.0, %v4141
    %4143 = vdwg.mxu0
    %4144 = vmatprep.subr.mxu0 %v3803
    %4145 = vmatpush1.msra.mxu0 %v3802
    %4146 = vmatprep.subr.mxu0 %v3807
    %4147 = vmatpush1.msra.mxu0 %v3806
    %4148 = vmatprep.subr.mxu0 %v3811
    %4149 = vmatpush1.msra.mxu0 %v3810
    %4150 = vmatprep.subr.mxu0 %v3815
    %4151 = vmatpush1.msra.mxu0 %v3814
    %4152 = vmatprep.subr.mxu0 %v3819
    %4153 = vmatpush1.msra.mxu0 %v3818
    %4154 = vmatprep.subr.mxu0 %v3823
    %4155 = vmatpush1.msra.mxu0 %v3822
    %4156 = vmatprep.subr.mxu0 %v3827
    %4157 = vmatpush1.msra.mxu0 %v3826
    %4158 = vmatprep.subr.mxu0 %v3831
    %4159 = vmatpush1.msra.mxu0 %v3830
    %4160 = vmatprep.subr.mxu0 %v3835
    %4161 = vmatpush1.msra.mxu0 %v3834
    %4162 = vmatprep.subr.mxu0 %v3839
    %4163 = vmatpush1.msra.mxu0 %v3838
    %4164 = vmatprep.subr.mxu0 %v3843
    %4165 = vmatpush1.msra.mxu0 %v3842
    %4166 = vmatprep.subr.mxu0 %v3847
    %4167 = vmatpush1.msra.mxu0 %v3846
    %4168 = vmatprep.subr.mxu0 %v3851
    %4169 = vmatpush1.msra.mxu0 %v3850
    %4170 = vmatprep.subr.mxu0 %v3855
    %4171 = vmatpush1.msra.mxu0 %v3854
    %4172 = vmatprep.subr.mxu0 %v3859
    %4173 = vmatpush1.msra.mxu0 %v3858
    %4174 = vmatprep.subr.mxu0 %v3863
    %4175 = vmatpush1.msra.mxu0 %v3862
    %4176 = vmatprep.subr.mxu0 0.0
    %4177 = vmatpush1.msra.mxu0 0.0
    %4178 = vmatprep.subr.mxu0 0.0
    %4179 = vmatpush1.msra.mxu0 0.0
    %4180 = vmatprep.subr.mxu0 0.0
    %4181 = vmatpush1.msra.mxu0 0.0
    %4182 = vmatprep.subr.mxu0 0.0
    %4183 = vmatpush1.msra.mxu0 0.0
    %4184 = vmatprep.subr.mxu0 0.0
    %4185 = vmatpush1.msra.mxu0 0.0
    %4186 = vmatprep.subr.mxu0 0.0
    %4187 = vmatpush1.msra.mxu0 0.0
    %4188 = vmatprep.subr.mxu0 0.0
    %4189 = vmatpush1.msra.mxu0 0.0
    %4190 = vmatprep.subr.mxu0 0.0
    %4191 = vmatpush1.msra.mxu0 0.0
    %4192 = vmatprep.subr.mxu0 0.0
    %4193 = vmatpush1.msra.mxu0 0.0
    %4194 = vmatprep.subr.mxu0 0.0
    %4195 = vmatpush1.msra.mxu0 0.0
    %4196 = vmatprep.subr.mxu0 0.0
    %4197 = vmatpush1.msra.mxu0 0.0
    %4198 = vmatprep.subr.mxu0 0.0
    %4199 = vmatpush1.msra.mxu0 0.0
    %4200 = vmatprep.subr.mxu0 0.0
    %4201 = vmatpush1.msra.mxu0 0.0
    %4202 = vmatprep.subr.mxu0 0.0
    %4203 = vmatpush1.msra.mxu0 0.0
    %4204 = vmatprep.subr.mxu0 0.0
    %4205 = vmatpush1.msra.mxu0 0.0
    %4206 = vmatprep.subr.mxu0 0.0
    %4207 = vmatpush1.msra.mxu0 0.0
    %4208 = vmatprep.mubr.f32.mxu0 0.0
    %4209 = vmatmul.mubr.f32.gmra.mrb[0].mxu0 %v4066
    %v4210 = vpop.f32.mrb[0].mxu0
    %v4211 = vadd.f32 0.0, %v4210
    %v4212 = vpop.f32.mrb[0].mxu0
    %v4213 = vadd.f32 0.0, %v4212
    %4214 = vdwg.mxu0
    %v4219 = vcombine.low %v4140, %v4142
    %v4220 = vcombine.low %v4211, %v4213
    %v4222 = vunpack.c.l.s4 1966171168
    %v4223 = vunpack.c.0.s8 %v4222
    %v4224 = vlaneseq
    %v4225 = vshrl.u32 %v4224, 7
    %v4226 = vsub.s32 %v4223, %v4225
    %v4227 = vrot.slane %v4219, %v4226
    %v4229 = vunpack.c.l.s4 1966171168
    %v4230 = vunpack.c.0.s8 %v4229
    %v4231 = vlaneseq
    %v4232 = vshrl.u32 %v4231, 7
    %v4233 = vsub.s32 %v4230, %v4232
    %v4234 = vrot.slane %v4220, %v4233
    %v4235 = vcombine.low %v4227, %v4234
    %v4237 = vunpack.c.l.s4 1966171168
    %v4238 = vunpack.c.0.s8 %v4237
    %v4239 = vlaneseq
    %v4240 = vshrl.u32 %v4239, 7
    %v4241 = vsub.s32 %v4238, %v4240
    %v4242 = vrot.slane %v4235, %v4241
    %v4244 = vadd.f32 %v4072, %v4242
    %v4245 = vxor.u32 %v4244, 2147483648
    %v4246 = vmul.f32 %v4245, 1.442695
    %v4247 = vpow.pop %v4246
    %v4248 = vadd.f32 %v4247, 1.0
    %v4249 = vrcp.pop %v4248
    %v4250 = vmul.f32 1.0, %v4249
    %v4252 = vrot.slane %v4244, 1
    %v4254 = vxor.u32 %v4252, 2147483648
    %v4255 = vmul.f32 %v4254, 1.442695
    %v4256 = vpow.pop %v4255
    %v4257 = vadd.f32 %v4256, 1.0
    %v4258 = vrcp.pop %v4257
    %v4259 = vmul.f32 1.0, %v4258
    %v4260 = vrot.slane %v4244, 2
    %v4262 = vtanh.pop %v4260
    %v4263 = vrot.slane %v4244, 3
    %v4265 = vxor.u32 %v4263, 2147483648
    %v4266 = vmul.f32 %v4265, 1.442695
    %v4267 = vpow.pop %v4266
    %v4268 = vadd.f32 %v4267, 1.0
    %v4269 = vrcp.pop %v4268
    %v4270 = vmul.f32 1.0, %v4269
    %v4271 = vmul.f32 %v4259, %v4064
    %v4272 = vmul.f32 %v4250, %v4262
    %v4273 = vadd.f32 %v4271, %v4272
    %v4274 = vtanh.pop %v4273
    %v4275 = vmul.f32 %v4270, %v4274
    %v4276 = vmax.f32 %v4067, %v4275
    %s4277 = scalar_lea.vmem [#allocation4], 2
    %v4278 = vld [vmem:[%s4277] ss:$8 sm:$0xf]
    %s4279 = scalar_lea.vmem [#allocation5], 5
    %v4280 = vld [vmem:[%s4279] ss:$8 sm:$0xf]
    %v4281 = vadd.f32 %v4278, %v4280
    %4282 = vmatprep.subr.mxu0 %v3801
    %4283 = vmatpush1.msra.mxu0 %v3800
    %4284 = vmatprep.subr.mxu0 %v3805
    %4285 = vmatpush1.msra.mxu0 %v3804
    %4286 = vmatprep.subr.mxu0 %v3809
    %4287 = vmatpush1.msra.mxu0 %v3808
    %4288 = vmatprep.subr.mxu0 %v3813
    %4289 = vmatpush1.msra.mxu0 %v3812
    %4290 = vmatprep.subr.mxu0 %v3817
    %4291 = vmatpush1.msra.mxu0 %v3816
    %4292 = vmatprep.subr.mxu0 %v3821
    %4293 = vmatpush1.msra.mxu0 %v3820
    %4294 = vmatprep.subr.mxu0 %v3825
    %4295 = vmatpush1.msra.mxu0 %v3824
    %4296 = vmatprep.subr.mxu0 %v3829
    %4297 = vmatpush1.msra.mxu0 %v3828
    %4298 = vmatprep.subr.mxu0 %v3833
    %4299 = vmatpush1.msra.mxu0 %v3832
    %4300 = vmatprep.subr.mxu0 %v3837
    %4301 = vmatpush1.msra.mxu0 %v3836
    %4302 = vmatprep.subr.mxu0 %v3841
    %4303 = vmatpush1.msra.mxu0 %v3840
    %4304 = vmatprep.subr.mxu0 %v3845
    %4305 = vmatpush1.msra.mxu0 %v3844
    %4306 = vmatprep.subr.mxu0 %v3849
    %4307 = vmatpush1.msra.mxu0 %v3848
    %4308 = vmatprep.subr.mxu0 %v3853
    %4309 = vmatpush1.msra.mxu0 %v3852
    %4310 = vmatprep.subr.mxu0 %v3857
    %4311 = vmatpush1.msra.mxu0 %v3856
    %4312 = vmatprep.subr.mxu0 %v3861
    %4313 = vmatpush1.msra.mxu0 %v3860
    %4314 = vmatprep.subr.mxu0 0.0
    %4315 = vmatpush1.msra.mxu0 0.0
    %4316 = vmatprep.subr.mxu0 0.0
    %4317 = vmatpush1.msra.mxu0 0.0
    %4318 = vmatprep.subr.mxu0 0.0
    %4319 = vmatpush1.msra.mxu0 0.0
    %4320 = vmatprep.subr.mxu0 0.0
    %4321 = vmatpush1.msra.mxu0 0.0
    %4322 = vmatprep.subr.mxu0 0.0
    %4323 = vmatpush1.msra.mxu0 0.0
    %4324 = vmatprep.subr.mxu0 0.0
    %4325 = vmatpush1.msra.mxu0 0.0
    %4326 = vmatprep.subr.mxu0 0.0
    %4327 = vmatpush1.msra.mxu0 0.0
    %4328 = vmatprep.subr.mxu0 0.0
    %4329 = vmatpush1.msra.mxu0 0.0
    %4330 = vmatprep.subr.mxu0 0.0
    %4331 = vmatpush1.msra.mxu0 0.0
    %4332 = vmatprep.subr.mxu0 0.0
    %4333 = vmatpush1.msra.mxu0 0.0
    %4334 = vmatprep.subr.mxu0 0.0
    %4335 = vmatpush1.msra.mxu0 0.0
    %4336 = vmatprep.subr.mxu0 0.0
    %4337 = vmatpush1.msra.mxu0 0.0
    %4338 = vmatprep.subr.mxu0 0.0
    %4339 = vmatpush1.msra.mxu0 0.0
    %4340 = vmatprep.subr.mxu0 0.0
    %4341 = vmatpush1.msra.mxu0 0.0
    %4342 = vmatprep.subr.mxu0 0.0
    %4343 = vmatpush1.msra.mxu0 0.0
    %4344 = vmatprep.subr.mxu0 0.0
    %4345 = vmatpush1.msra.mxu0 0.0
    %4346 = vmatprep.mubr.f32.mxu0 0.0
    %4347 = vmatmul.mubr.f32.gmra.mrb[0].mxu0 %v4275
    %v4348 = vpop.f32.mrb[0].mxu0
    %v4349 = vadd.f32 0.0, %v4348
    %v4350 = vpop.f32.mrb[0].mxu0
    %v4351 = vadd.f32 0.0, %v4350
    %4352 = vdwg.mxu0
    %4353 = vmatprep.subr.mxu0 %v3803
    %4354 = vmatpush1.msra.mxu0 %v3802
    %4355 = vmatprep.subr.mxu0 %v3807
    %4356 = vmatpush1.msra.mxu0 %v3806
    %4357 = vmatprep.subr.mxu0 %v3811
    %4358 = vmatpush1.msra.mxu0 %v3810
    %4359 = vmatprep.subr.mxu0 %v3815
    %4360 = vmatpush1.msra.mxu0 %v3814
    %4361 = vmatprep.subr.mxu0 %v3819
    %4362 = vmatpush1.msra.mxu0 %v3818
    %4363 = vmatprep.subr.mxu0 %v3823
    %4364 = vmatpush1.msra.mxu0 %v3822
    %4365 = vmatprep.subr.mxu0 %v3827
    %4366 = vmatpush1.msra.mxu0 %v3826
    %4367 = vmatprep.subr.mxu0 %v3831
    %4368 = vmatpush1.msra.mxu0 %v3830
    %4369 = vmatprep.subr.mxu0 %v3835
    %4370 = vmatpush1.msra.mxu0 %v3834
    %4371 = vmatprep.subr.mxu0 %v3839
    %4372 = vmatpush1.msra.mxu0 %v3838
    %4373 = vmatprep.subr.mxu0 %v3843
    %4374 = vmatpush1.msra.mxu0 %v3842
    %4375 = vmatprep.subr.mxu0 %v3847
    %4376 = vmatpush1.msra.mxu0 %v3846
    %4377 = vmatprep.subr.mxu0 %v3851
    %4378 = vmatpush1.msra.mxu0 %v3850
    %4379 = vmatprep.subr.mxu0 %v3855
    %4380 = vmatpush1.msra.mxu0 %v3854
    %4381 = vmatprep.subr.mxu0 %v3859
    %4382 = vmatpush1.msra.mxu0 %v3858
    %4383 = vmatprep.subr.mxu0 %v3863
    %4384 = vmatpush1.msra.mxu0 %v3862
    %4385 = vmatprep.subr.mxu0 0.0
    %4386 = vmatpush1.msra.mxu0 0.0
    %4387 = vmatprep.subr.mxu0 0.0
    %4388 = vmatpush1.msra.mxu0 0.0
    %4389 = vmatprep.subr.mxu0 0.0
    %4390 = vmatpush1.msra.mxu0 0.0
    %4391 = vmatprep.subr.mxu0 0.0
    %4392 = vmatpush1.msra.mxu0 0.0
    %4393 = vmatprep.subr.mxu0 0.0
    %4394 = vmatpush1.msra.mxu0 0.0
    %4395 = vmatprep.subr.mxu0 0.0
    %4396 = vmatpush1.msra.mxu0 0.0
    %4397 = vmatprep.subr.mxu0 0.0
    %4398 = vmatpush1.msra.mxu0 0.0
    %4399 = vmatprep.subr.mxu0 0.0
    %4400 = vmatpush1.msra.mxu0 0.0
    %4401 = vmatprep.subr.mxu0 0.0
    %4402 = vmatpush1.msra.mxu0 0.0
    %4403 = vmatprep.subr.mxu0 0.0
    %4404 = vmatpush1.msra.mxu0 0.0
    %4405 = vmatprep.subr.mxu0 0.0
    %4406 = vmatpush1.msra.mxu0 0.0
    %4407 = vmatprep.subr.mxu0 0.0
    %4408 = vmatpush1.msra.mxu0 0.0
    %4409 = vmatprep.subr.mxu0 0.0
    %4410 = vmatpush1.msra.mxu0 0.0
    %4411 = vmatprep.subr.mxu0 0.0
    %4412 = vmatpush1.msra.mxu0 0.0
    %4413 = vmatprep.subr.mxu0 0.0
    %4414 = vmatpush1.msra.mxu0 0.0
    %4415 = vmatprep.subr.mxu0 0.0
    %4416 = vmatpush1.msra.mxu0 0.0
    %4417 = vmatprep.mubr.f32.mxu0 0.0
    %4418 = vmatmul.mubr.f32.gmra.mrb[0].mxu0 %v4275
    %v4419 = vpop.f32.mrb[0].mxu0
    %v4420 = vadd.f32 0.0, %v4419
    %v4421 = vpop.f32.mrb[0].mxu0
    %v4422 = vadd.f32 0.0, %v4421
    %4423 = vdwg.mxu0
    %v4428 = vcombine.low %v4349, %v4351
    %v4429 = vcombine.low %v4420, %v4422
    %v4431 = vunpack.c.l.s4 1966171168
    %v4432 = vunpack.c.0.s8 %v4431
    %v4433 = vlaneseq
    %v4434 = vshrl.u32 %v4433, 7
    %v4435 = vsub.s32 %v4432, %v4434
    %v4436 = vrot.slane %v4428, %v4435
    %v4438 = vunpack.c.l.s4 1966171168
    %v4439 = vunpack.c.0.s8 %v4438
    %v4440 = vlaneseq
    %v4441 = vshrl.u32 %v4440, 7
    %v4442 = vsub.s32 %v4439, %v4441
    %v4443 = vrot.slane %v4429, %v4442
    %v4444 = vcombine.low %v4436, %v4443
    %v4446 = vunpack.c.l.s4 1966171168
    %v4447 = vunpack.c.0.s8 %v4446
    %v4448 = vlaneseq
    %v4449 = vshrl.u32 %v4448, 7
    %v4450 = vsub.s32 %v4447, %v4449
    %v4451 = vrot.slane %v4444, %v4450
    %v4453 = vadd.f32 %v4281, %v4451
    %v4454 = vxor.u32 %v4453, 2147483648
    %v4455 = vmul.f32 %v4454, 1.442695
    %v4456 = vpow.pop %v4455
    %v4457 = vadd.f32 %v4456, 1.0
    %v4458 = vrcp.pop %v4457
    %v4459 = vmul.f32 1.0, %v4458
    %v4461 = vrot.slane %v4453, 1
    %v4463 = vxor.u32 %v4461, 2147483648
    %v4464 = vmul.f32 %v4463, 1.442695
    %v4465 = vpow.pop %v4464
    %v4466 = vadd.f32 %v4465, 1.0
    %v4467 = vrcp.pop %v4466
    %v4468 = vmul.f32 1.0, %v4467
    %v4469 = vrot.slane %v4453, 2
    %v4471 = vtanh.pop %v4469
    %v4472 = vrot.slane %v4453, 3
    %v4474 = vxor.u32 %v4472, 2147483648
    %v4475 = vmul.f32 %v4474, 1.442695
    %v4476 = vpow.pop %v4475
    %v4477 = vadd.f32 %v4476, 1.0
    %v4478 = vrcp.pop %v4477
    %v4479 = vmul.f32 1.0, %v4478
    %v4480 = vmul.f32 %v4468, %v4273
    %v4481 = vmul.f32 %v4459, %v4471
    %v4482 = vadd.f32 %v4480, %v4481
    %v4483 = vtanh.pop %v4482
    %v4484 = vmul.f32 %v4479, %v4483
    %v4485 = vmax.f32 %v4276, %v4484
    %s4486 = scalar_lea.vmem [#allocation4], 3
    %v4487 = vld [vmem:[%s4486] ss:$8 sm:$0xf]
    %s4488 = scalar_lea.vmem [#allocation5], 4
    %v4489 = vld [vmem:[%s4488] ss:$8 sm:$0xf]
    %v4490 = vadd.f32 %v4487, %v4489
    %4491 = vmatprep.subr.mxu0 %v3801
    %4492 = vmatpush1.msra.mxu0 %v3800
    %4493 = vmatprep.subr.mxu0 %v3805
    %4494 = vmatpush1.msra.mxu0 %v3804
    %4495 = vmatprep.subr.mxu0 %v3809
    %4496 = vmatpush1.msra.mxu0 %v3808
    %4497 = vmatprep.subr.mxu0 %v3813
    %4498 = vmatpush1.msra.mxu0 %v3812
    %4499 = vmatprep.subr.mxu0 %v3817
    %4500 = vmatpush1.msra.mxu0 %v3816
    %4501 = vmatprep.subr.mxu0 %v3821
    %4502 = vmatpush1.msra.mxu0 %v3820
    %4503 = vmatprep.subr.mxu0 %v3825
    %4504 = vmatpush1.msra.mxu0 %v3824
    %4505 = vmatprep.subr.mxu0 %v3829
    %4506 = vmatpush1.msra.mxu0 %v3828
    %4507 = vmatprep.subr.mxu0 %v3833
    %4508 = vmatpush1.msra.mxu0 %v3832
    %4509 = vmatprep.subr.mxu0 %v3837
    %4510 = vmatpush1.msra.mxu0 %v3836
    %4511 = vmatprep.subr.mxu0 %v3841
    %4512 = vmatpush1.msra.mxu0 %v3840
    %4513 = vmatprep.subr.mxu0 %v3845
    %4514 = vmatpush1.msra.mxu0 %v3844
    %4515 = vmatprep.subr.mxu0 %v3849
    %4516 = vmatpush1.msra.mxu0 %v3848
    %4517 = vmatprep.subr.mxu0 %v3853
    %4518 = vmatpush1.msra.mxu0 %v3852
    %4519 = vmatprep.subr.mxu0 %v3857
    %4520 = vmatpush1.msra.mxu0 %v3856
    %4521 = vmatprep.subr.mxu0 %v3861
    %4522 = vmatpush1.msra.mxu0 %v3860
    %4523 = vmatprep.subr.mxu0 0.0
    %4524 = vmatpush1.msra.mxu0 0.0
    %4525 = vmatprep.subr.mxu0 0.0
    %4526 = vmatpush1.msra.mxu0 0.0
    %4527 = vmatprep.subr.mxu0 0.0
    %4528 = vmatpush1.msra.mxu0 0.0
    %4529 = vmatprep.subr.mxu0 0.0
    %4530 = vmatpush1.msra.mxu0 0.0
    %4531 = vmatprep.subr.mxu0 0.0
    %4532 = vmatpush1.msra.mxu0 0.0
    %4533 = vmatprep.subr.mxu0 0.0
    %4534 = vmatpush1.msra.mxu0 0.0
    %4535 = vmatprep.subr.mxu0 0.0
    %4536 = vmatpush1.msra.mxu0 0.0
    %4537 = vmatprep.subr.mxu0 0.0
    %4538 = vmatpush1.msra.mxu0 0.0
    %4539 = vmatprep.subr.mxu0 0.0
    %4540 = vmatpush1.msra.mxu0 0.0
    %4541 = vmatprep.subr.mxu0 0.0
    %4542 = vmatpush1.msra.mxu0 0.0
    %4543 = vmatprep.subr.mxu0 0.0
    %4544 = vmatpush1.msra.mxu0 0.0
    %4545 = vmatprep.subr.mxu0 0.0
    %4546 = vmatpush1.msra.mxu0 0.0
    %4547 = vmatprep.subr.mxu0 0.0
    %4548 = vmatpush1.msra.mxu0 0.0
    %4549 = vmatprep.subr.mxu0 0.0
    %4550 = vmatpush1.msra.mxu0 0.0
    %4551 = vmatprep.subr.mxu0 0.0
    %4552 = vmatpush1.msra.mxu0 0.0
    %4553 = vmatprep.subr.mxu0 0.0
    %4554 = vmatpush1.msra.mxu0 0.0
    %4555 = vmatprep.mubr.f32.mxu0 0.0
    %4556 = vmatmul.mubr.f32.gmra.mrb[0].mxu0 %v4484
    %v4557 = vpop.f32.mrb[0].mxu0
    %v4558 = vadd.f32 0.0, %v4557
    %v4559 = vpop.f32.mrb[0].mxu0
    %v4560 = vadd.f32 0.0, %v4559
    %4561 = vdwg.mxu0
    %4562 = vmatprep.subr.mxu0 %v3803
    %4563 = vmatpush1.msra.mxu0 %v3802
    %4564 = vmatprep.subr.mxu0 %v3807
    %4565 = vmatpush1.msra.mxu0 %v3806
    %4566 = vmatprep.subr.mxu0 %v3811
    %4567 = vmatpush1.msra.mxu0 %v3810
    %4568 = vmatprep.subr.mxu0 %v3815
    %4569 = vmatpush1.msra.mxu0 %v3814
    %4570 = vmatprep.subr.mxu0 %v3819
    %4571 = vmatpush1.msra.mxu0 %v3818
    %4572 = vmatprep.subr.mxu0 %v3823
    %4573 = vmatpush1.msra.mxu0 %v3822
    %4574 = vmatprep.subr.mxu0 %v3827
    %4575 = vmatpush1.msra.mxu0 %v3826
    %4576 = vmatprep.subr.mxu0 %v3831
    %4577 = vmatpush1.msra.mxu0 %v3830
    %4578 = vmatprep.subr.mxu0 %v3835
    %4579 = vmatpush1.msra.mxu0 %v3834
    %4580 = vmatprep.subr.mxu0 %v3839
    %4581 = vmatpush1.msra.mxu0 %v3838
    %4582 = vmatprep.subr.mxu0 %v3843
    %4583 = vmatpush1.msra.mxu0 %v3842
    %4584 = vmatprep.subr.mxu0 %v3847
    %4585 = vmatpush1.msra.mxu0 %v3846
    %4586 = vmatprep.subr.mxu0 %v3851
    %4587 = vmatpush1.msra.mxu0 %v3850
    %4588 = vmatprep.subr.mxu0 %v3855
    %4589 = vmatpush1.msra.mxu0 %v3854
    %4590 = vmatprep.subr.mxu0 %v3859
    %4591 = vmatpush1.msra.mxu0 %v3858
    %4592 = vmatprep.subr.mxu0 %v3863
    %4593 = vmatpush1.msra.mxu0 %v3862
    %4594 = vmatprep.subr.mxu0 0.0
    %4595 = vmatpush1.msra.mxu0 0.0
    %4596 = vmatprep.subr.mxu0 0.0
    %4597 = vmatpush1.msra.mxu0 0.0
    %4598 = vmatprep.subr.mxu0 0.0
    %4599 = vmatpush1.msra.mxu0 0.0
    %4600 = vmatprep.subr.mxu0 0.0
    %4601 = vmatpush1.msra.mxu0 0.0
    %4602 = vmatprep.subr.mxu0 0.0
    %4603 = vmatpush1.msra.mxu0 0.0
    %4604 = vmatprep.subr.mxu0 0.0
    %4605 = vmatpush1.msra.mxu0 0.0
    %4606 = vmatprep.subr.mxu0 0.0
    %4607 = vmatpush1.msra.mxu0 0.0
    %4608 = vmatprep.subr.mxu0 0.0
    %4609 = vmatpush1.msra.mxu0 0.0
    %4610 = vmatprep.subr.mxu0 0.0
    %4611 = vmatpush1.msra.mxu0 0.0
    %4612 = vmatprep.subr.mxu0 0.0
    %4613 = vmatpush1.msra.mxu0 0.0
    %4614 = vmatprep.subr.mxu0 0.0
    %4615 = vmatpush1.msra.mxu0 0.0
    %4616 = vmatprep.subr.mxu0 0.0
    %4617 = vmatpush1.msra.mxu0 0.0
    %4618 = vmatprep.subr.mxu0 0.0
    %4619 = vmatpush1.msra.mxu0 0.0
    %4620 = vmatprep.subr.mxu0 0.0
    %4621 = vmatpush1.msra.mxu0 0.0
    %4622 = vmatprep.subr.mxu0 0.0
    %4623 = vmatpush1.msra.mxu0 0.0
    %4624 = vmatprep.subr.mxu0 0.0
    %4625 = vmatpush1.msra.mxu0 0.0
    %4626 = vmatprep.mubr.f32.mxu0 0.0
    %4627 = vmatmul.mubr.f32.gmra.mrb[0].mxu0 %v4484
    %v4628 = vpop.f32.mrb[0].mxu0
    %v4629 = vadd.f32 0.0, %v4628
    %v4630 = vpop.f32.mrb[0].mxu0
    %v4631 = vadd.f32 0.0, %v4630
    %4632 = vdwg.mxu0
    %v4637 = vcombine.low %v4558, %v4560
    %v4638 = vcombine.low %v4629, %v4631
    %v4640 = vunpack.c.l.s4 1966171168
    %v4641 = vunpack.c.0.s8 %v4640
    %v4642 = vlaneseq
    %v4643 = vshrl.u32 %v4642, 7
    %v4644 = vsub.s32 %v4641, %v4643
    %v4645 = vrot.slane %v4637, %v4644
    %v4647 = vunpack.c.l.s4 1966171168
    %v4648 = vunpack.c.0.s8 %v4647
    %v4649 = vlaneseq
    %v4650 = vshrl.u32 %v4649, 7
    %v4651 = vsub.s32 %v4648, %v4650
    %v4652 = vrot.slane %v4638, %v4651
    %v4653 = vcombine.low %v4645, %v4652
    %v4655 = vunpack.c.l.s4 1966171168
    %v4656 = vunpack.c.0.s8 %v4655
    %v4657 = vlaneseq
    %v4658 = vshrl.u32 %v4657, 7
    %v4659 = vsub.s32 %v4656, %v4658
    %v4660 = vrot.slane %v4653, %v4659
    %v4662 = vadd.f32 %v4490, %v4660
    %v4663 = vxor.u32 %v4662, 2147483648
    %v4664 = vmul.f32 %v4663, 1.442695
    %v4665 = vpow.pop %v4664
    %v4666 = vadd.f32 %v4665, 1.0
    %v4667 = vrcp.pop %v4666
    %v4668 = vmul.f32 1.0, %v4667
    %v4670 = vrot.slane %v4662, 1
    %v4672 = vxor.u32 %v4670, 2147483648
    %v4673 = vmul.f32 %v4672, 1.442695
    %v4674 = vpow.pop %v4673
    %v4675 = vadd.f32 %v4674, 1.0
    %v4676 = vrcp.pop %v4675
    %v4677 = vmul.f32 1.0, %v4676
    %v4678 = vrot.slane %v4662, 2
    %v4680 = vtanh.pop %v4678
    %v4681 = vrot.slane %v4662, 3
    %v4683 = vxor.u32 %v4681, 2147483648
    %v4684 = vmul.f32 %v4683, 1.442695
    %v4685 = vpow.pop %v4684
    %v4686 = vadd.f32 %v4685, 1.0
    %v4687 = vrcp.pop %v4686
    %v4688 = vmul.f32 1.0, %v4687
    %v4689 = vmul.f32 %v4677, %v4482
    %v4690 = vmul.f32 %v4668, %v4680
    %v4691 = vadd.f32 %v4689, %v4690
    %v4692 = vtanh.pop %v4691
    %v4693 = vmul.f32 %v4688, %v4692
    %v4694 = vmax.f32 %v4485, %v4693
    %s4695 = scalar_lea.vmem [#allocation4], 4
    %v4696 = vld [vmem:[%s4695] ss:$8 sm:$0xf]
    %s4697 = scalar_lea.vmem [#allocation5], 3
    %v4698 = vld [vmem:[%s4697] ss:$8 sm:$0xf]
    %v4699 = vadd.f32 %v4696, %v4698
    %4700 = vmatprep.subr.mxu0 %v3801
    %4701 = vmatpush1.msra.mxu0 %v3800
    %4702 = vmatprep.subr.mxu0 %v3805
    %4703 = vmatpush1.msra.mxu0 %v3804
    %4704 = vmatprep.subr.mxu0 %v3809
    %4705 = vmatpush1.msra.mxu0 %v3808
    %4706 = vmatprep.subr.mxu0 %v3813
    %4707 = vmatpush1.msra.mxu0 %v3812
    %4708 = vmatprep.subr.mxu0 %v3817
    %4709 = vmatpush1.msra.mxu0 %v3816
    %4710 = vmatprep.subr.mxu0 %v3821
    %4711 = vmatpush1.msra.mxu0 %v3820
    %4712 = vmatprep.subr.mxu0 %v3825
    %4713 = vmatpush1.msra.mxu0 %v3824
    %4714 = vmatprep.subr.mxu0 %v3829
    %4715 = vmatpush1.msra.mxu0 %v3828
    %4716 = vmatprep.subr.mxu0 %v3833
    %4717 = vmatpush1.msra.mxu0 %v3832
    %4718 = vmatprep.subr.mxu0 %v3837
    %4719 = vmatpush1.msra.mxu0 %v3836
    %4720 = vmatprep.subr.mxu0 %v3841
    %4721 = vmatpush1.msra.mxu0 %v3840
    %4722 = vmatprep.subr.mxu0 %v3845
    %4723 = vmatpush1.msra.mxu0 %v3844
    %4724 = vmatprep.subr.mxu0 %v3849
    %4725 = vmatpush1.msra.mxu0 %v3848
    %4726 = vmatprep.subr.mxu0 %v3853
    %4727 = vmatpush1.msra.mxu0 %v3852
    %4728 = vmatprep.subr.mxu0 %v3857
    %4729 = vmatpush1.msra.mxu0 %v3856
    %4730 = vmatprep.subr.mxu0 %v3861
    %4731 = vmatpush1.msra.mxu0 %v3860
    %4732 = vmatprep.subr.mxu0 0.0
    %4733 = vmatpush1.msra.mxu0 0.0
    %4734 = vmatprep.subr.mxu0 0.0
    %4735 = vmatpush1.msra.mxu0 0.0
    %4736 = vmatprep.subr.mxu0 0.0
    %4737 = vmatpush1.msra.mxu0 0.0
    %4738 = vmatprep.subr.mxu0 0.0
    %4739 = vmatpush1.msra.mxu0 0.0
    %4740 = vmatprep.subr.mxu0 0.0
    %4741 = vmatpush1.msra.mxu0 0.0
    %4742 = vmatprep.subr.mxu0 0.0
    %4743 = vmatpush1.msra.mxu0 0.0
    %4744 = vmatprep.subr.mxu0 0.0
    %4745 = vmatpush1.msra.mxu0 0.0
    %4746 = vmatprep.subr.mxu0 0.0
    %4747 = vmatpush1.msra.mxu0 0.0
    %4748 = vmatprep.subr.mxu0 0.0
    %4749 = vmatpush1.msra.mxu0 0.0
    %4750 = vmatprep.subr.mxu0 0.0
    %4751 = vmatpush1.msra.mxu0 0.0
    %4752 = vmatprep.subr.mxu0 0.0
    %4753 = vmatpush1.msra.mxu0 0.0
    %4754 = vmatprep.subr.mxu0 0.0
    %4755 = vmatpush1.msra.mxu0 0.0
    %4756 = vmatprep.subr.mxu0 0.0
    %4757 = vmatpush1.msra.mxu0 0.0
    %4758 = vmatprep.subr.mxu0 0.0
    %4759 = vmatpush1.msra.mxu0 0.0
    %4760 = vmatprep.subr.mxu0 0.0
    %4761 = vmatpush1.msra.mxu0 0.0
    %4762 = vmatprep.subr.mxu0 0.0
    %4763 = vmatpush1.msra.mxu0 0.0
    %4764 = vmatprep.mubr.f32.mxu0 0.0
    %4765 = vmatmul.mubr.f32.gmra.mrb[0].mxu0 %v4693
    %v4766 = vpop.f32.mrb[0].mxu0
    %v4767 = vadd.f32 0.0, %v4766
    %v4768 = vpop.f32.mrb[0].mxu0
    %v4769 = vadd.f32 0.0, %v4768
    %4770 = vdwg.mxu0
    %4771 = vmatprep.subr.mxu0 %v3803
    %4772 = vmatpush1.msra.mxu0 %v3802
    %4773 = vmatprep.subr.mxu0 %v3807
    %4774 = vmatpush1.msra.mxu0 %v3806
    %4775 = vmatprep.subr.mxu0 %v3811
    %4776 = vmatpush1.msra.mxu0 %v3810
    %4777 = vmatprep.subr.mxu0 %v3815
    %4778 = vmatpush1.msra.mxu0 %v3814
    %4779 = vmatprep.subr.mxu0 %v3819
    %4780 = vmatpush1.msra.mxu0 %v3818
    %4781 = vmatprep.subr.mxu0 %v3823
    %4782 = vmatpush1.msra.mxu0 %v3822
    %4783 = vmatprep.subr.mxu0 %v3827
    %4784 = vmatpush1.msra.mxu0 %v3826
    %4785 = vmatprep.subr.mxu0 %v3831
    %4786 = vmatpush1.msra.mxu0 %v3830
    %4787 = vmatprep.subr.mxu0 %v3835
    %4788 = vmatpush1.msra.mxu0 %v3834
    %4789 = vmatprep.subr.mxu0 %v3839
    %4790 = vmatpush1.msra.mxu0 %v3838
    %4791 = vmatprep.subr.mxu0 %v3843
    %4792 = vmatpush1.msra.mxu0 %v3842
    %4793 = vmatprep.subr.mxu0 %v3847
    %4794 = vmatpush1.msra.mxu0 %v3846
    %4795 = vmatprep.subr.mxu0 %v3851
    %4796 = vmatpush1.msra.mxu0 %v3850
    %4797 = vmatprep.subr.mxu0 %v3855
    %4798 = vmatpush1.msra.mxu0 %v3854
    %4799 = vmatprep.subr.mxu0 %v3859
    %4800 = vmatpush1.msra.mxu0 %v3858
    %4801 = vmatprep.subr.mxu0 %v3863
    %4802 = vmatpush1.msra.mxu0 %v3862
    %4803 = vmatprep.subr.mxu0 0.0
    %4804 = vmatpush1.msra.mxu0 0.0
    %4805 = vmatprep.subr.mxu0 0.0
    %4806 = vmatpush1.msra.mxu0 0.0
    %4807 = vmatprep.subr.mxu0 0.0
    %4808 = vmatpush1.msra.mxu0 0.0
    %4809 = vmatprep.subr.mxu0 0.0
    %4810 = vmatpush1.msra.mxu0 0.0
    %4811 = vmatprep.subr.mxu0 0.0
    %4812 = vmatpush1.msra.mxu0 0.0
    %4813 = vmatprep.subr.mxu0 0.0
    %4814 = vmatpush1.msra.mxu0 0.0
    %4815 = vmatprep.subr.mxu0 0.0
    %4816 = vmatpush1.msra.mxu0 0.0
    %4817 = vmatprep.subr.mxu0 0.0
    %4818 = vmatpush1.msra.mxu0 0.0
    %4819 = vmatprep.subr.mxu0 0.0
    %4820 = vmatpush1.msra.mxu0 0.0
    %4821 = vmatprep.subr.mxu0 0.0
    %4822 = vmatpush1.msra.mxu0 0.0
    %4823 = vmatprep.subr.mxu0 0.0
    %4824 = vmatpush1.msra.mxu0 0.0
    %4825 = vmatprep.subr.mxu0 0.0
    %4826 = vmatpush1.msra.mxu0 0.0
    %4827 = vmatprep.subr.mxu0 0.0
    %4828 = vmatpush1.msra.mxu0 0.0
    %4829 = vmatprep.subr.mxu0 0.0
    %4830 = vmatpush1.msra.mxu0 0.0
    %4831 = vmatprep.subr.mxu0 0.0
    %4832 = vmatpush1.msra.mxu0 0.0
    %4833 = vmatprep.subr.mxu0 0.0
    %4834 = vmatpush1.msra.mxu0 0.0
    %4835 = vmatprep.mubr.f32.mxu0 0.0
    %4836 = vmatmul.mubr.f32.gmra.mrb[0].mxu0 %v4693
    %v4837 = vpop.f32.mrb[0].mxu0
    %v4838 = vadd.f32 0.0, %v4837
    %v4839 = vpop.f32.mrb[0].mxu0
    %v4840 = vadd.f32 0.0, %v4839
    %4841 = vdwg.mxu0
    %v4846 = vcombine.low %v4767, %v4769
    %v4847 = vcombine.low %v4838, %v4840
    %v4849 = vunpack.c.l.s4 1966171168
    %v4850 = vunpack.c.0.s8 %v4849
    %v4851 = vlaneseq
    %v4852 = vshrl.u32 %v4851, 7
    %v4853 = vsub.s32 %v4850, %v4852
    %v4854 = vrot.slane %v4846, %v4853
    %v4856 = vunpack.c.l.s4 1966171168
    %v4857 = vunpack.c.0.s8 %v4856
    %v4858 = vlaneseq
    %v4859 = vshrl.u32 %v4858, 7
    %v4860 = vsub.s32 %v4857, %v4859
    %v4861 = vrot.slane %v4847, %v4860
    %v4862 = vcombine.low %v4854, %v4861
    %v4864 = vunpack.c.l.s4 1966171168
    %v4865 = vunpack.c.0.s8 %v4864
    %v4866 = vlaneseq
    %v4867 = vshrl.u32 %v4866, 7
    %v4868 = vsub.s32 %v4865, %v4867
    %v4869 = vrot.slane %v4862, %v4868
    %v4871 = vadd.f32 %v4699, %v4869
    %v4872 = vxor.u32 %v4871, 2147483648
    %v4873 = vmul.f32 %v4872, 1.442695
    %v4874 = vpow.pop %v4873
    %v4875 = vadd.f32 %v4874, 1.0
    %v4876 = vrcp.pop %v4875
    %v4877 = vmul.f32 1.0, %v4876
    %v4879 = vrot.slane %v4871, 1
    %v4881 = vxor.u32 %v4879, 2147483648
    %v4882 = vmul.f32 %v4881, 1.442695
    %v4883 = vpow.pop %v4882
    %v4884 = vadd.f32 %v4883, 1.0
    %v4885 = vrcp.pop %v4884
    %v4886 = vmul.f32 1.0, %v4885
    %v4887 = vrot.slane %v4871, 2
    %v4889 = vtanh.pop %v4887
    %v4890 = vrot.slane %v4871, 3
    %v4892 = vxor.u32 %v4890, 2147483648
    %v4893 = vmul.f32 %v4892, 1.442695
    %v4894 = vpow.pop %v4893
    %v4895 = vadd.f32 %v4894, 1.0
    %v4896 = vrcp.pop %v4895
    %v4897 = vmul.f32 1.0, %v4896
    %v4898 = vmul.f32 %v4886, %v4691
    %v4899 = vmul.f32 %v4877, %v4889
    %v4900 = vadd.f32 %v4898, %v4899
    %v4901 = vtanh.pop %v4900
    %v4902 = vmul.f32 %v4897, %v4901
    %v4903 = vmax.f32 %v4694, %v4902
    %s4904 = scalar_lea.vmem [#allocation4], 5
    %v4905 = vld [vmem:[%s4904] ss:$8 sm:$0xf]
    %s4906 = scalar_lea.vmem [#allocation5], 2
    %v4907 = vld [vmem:[%s4906] ss:$8 sm:$0xf]
    %v4908 = vadd.f32 %v4905, %v4907
    %4909 = vmatprep.subr.mxu0 %v3801
    %4910 = vmatpush1.msra.mxu0 %v3800
    %4911 = vmatprep.subr.mxu0 %v3805
    %4912 = vmatpush1.msra.mxu0 %v3804
    %4913 = vmatprep.subr.mxu0 %v3809
    %4914 = vmatpush1.msra.mxu0 %v3808
    %4915 = vmatprep.subr.mxu0 %v3813
    %4916 = vmatpush1.msra.mxu0 %v3812
    %4917 = vmatprep.subr.mxu0 %v3817
    %4918 = vmatpush1.msra.mxu0 %v3816
    %4919 = vmatprep.subr.mxu0 %v3821
    %4920 = vmatpush1.msra.mxu0 %v3820
    %4921 = vmatprep.subr.mxu0 %v3825
    %4922 = vmatpush1.msra.mxu0 %v3824
    %4923 = vmatprep.subr.mxu0 %v3829
    %4924 = vmatpush1.msra.mxu0 %v3828
    %4925 = vmatprep.subr.mxu0 %v3833
    %4926 = vmatpush1.msra.mxu0 %v3832
    %4927 = vmatprep.subr.mxu0 %v3837
    %4928 = vmatpush1.msra.mxu0 %v3836
    %4929 = vmatprep.subr.mxu0 %v3841
    %4930 = vmatpush1.msra.mxu0 %v3840
    %4931 = vmatprep.subr.mxu0 %v3845
    %4932 = vmatpush1.msra.mxu0 %v3844
    %4933 = vmatprep.subr.mxu0 %v3849
    %4934 = vmatpush1.msra.mxu0 %v3848
    %4935 = vmatprep.subr.mxu0 %v3853
    %4936 = vmatpush1.msra.mxu0 %v3852
    %4937 = vmatprep.subr.mxu0 %v3857
    %4938 = vmatpush1.msra.mxu0 %v3856
    %4939 = vmatprep.subr.mxu0 %v3861
    %4940 = vmatpush1.msra.mxu0 %v3860
    %4941 = vmatprep.subr.mxu0 0.0
    %4942 = vmatpush1.msra.mxu0 0.0
    %4943 = vmatprep.subr.mxu0 0.0
    %4944 = vmatpush1.msra.mxu0 0.0
    %4945 = vmatprep.subr.mxu0 0.0
    %4946 = vmatpush1.msra.mxu0 0.0
    %4947 = vmatprep.subr.mxu0 0.0
    %4948 = vmatpush1.msra.mxu0 0.0
    %4949 = vmatprep.subr.mxu0 0.0
    %4950 = vmatpush1.msra.mxu0 0.0
    %4951 = vmatprep.subr.mxu0 0.0
    %4952 = vmatpush1.msra.mxu0 0.0
    %4953 = vmatprep.subr.mxu0 0.0
    %4954 = vmatpush1.msra.mxu0 0.0
    %4955 = vmatprep.subr.mxu0 0.0
    %4956 = vmatpush1.msra.mxu0 0.0
    %4957 = vmatprep.subr.mxu0 0.0
    %4958 = vmatpush1.msra.mxu0 0.0
    %4959 = vmatprep.subr.mxu0 0.0
    %4960 = vmatpush1.msra.mxu0 0.0
    %4961 = vmatprep.subr.mxu0 0.0
    %4962 = vmatpush1.msra.mxu0 0.0
    %4963 = vmatprep.subr.mxu0 0.0
    %4964 = vmatpush1.msra.mxu0 0.0
    %4965 = vmatprep.subr.mxu0 0.0
    %4966 = vmatpush1.msra.mxu0 0.0
    %4967 = vmatprep.subr.mxu0 0.0
    %4968 = vmatpush1.msra.mxu0 0.0
    %4969 = vmatprep.subr.mxu0 0.0
    %4970 = vmatpush1.msra.mxu0 0.0
    %4971 = vmatprep.subr.mxu0 0.0
    %4972 = vmatpush1.msra.mxu0 0.0
    %4973 = vmatprep.mubr.f32.mxu0 0.0
    %4974 = vmatmul.mubr.f32.gmra.mrb[0].mxu0 %v4902
    %v4975 = vpop.f32.mrb[0].mxu0
    %v4976 = vadd.f32 0.0, %v4975
    %v4977 = vpop.f32.mrb[0].mxu0
    %v4978 = vadd.f32 0.0, %v4977
    %4979 = vdwg.mxu0
    %4980 = vmatprep.subr.mxu0 %v3803
    %4981 = vmatpush1.msra.mxu0 %v3802
    %4982 = vmatprep.subr.mxu0 %v3807
    %4983 = vmatpush1.msra.mxu0 %v3806
    %4984 = vmatprep.subr.mxu0 %v3811
    %4985 = vmatpush1.msra.mxu0 %v3810
    %4986 = vmatprep.subr.mxu0 %v3815
    %4987 = vmatpush1.msra.mxu0 %v3814
    %4988 = vmatprep.subr.mxu0 %v3819
    %4989 = vmatpush1.msra.mxu0 %v3818
    %4990 = vmatprep.subr.mxu0 %v3823
    %4991 = vmatpush1.msra.mxu0 %v3822
    %4992 = vmatprep.subr.mxu0 %v3827
    %4993 = vmatpush1.msra.mxu0 %v3826
    %4994 = vmatprep.subr.mxu0 %v3831
    %4995 = vmatpush1.msra.mxu0 %v3830
    %4996 = vmatprep.subr.mxu0 %v3835
    %4997 = vmatpush1.msra.mxu0 %v3834
    %4998 = vmatprep.subr.mxu0 %v3839
    %4999 = vmatpush1.msra.mxu0 %v3838
    %5000 = vmatprep.subr.mxu0 %v3843
    %5001 = vmatpush1.msra.mxu0 %v3842
    %5002 = vmatprep.subr.mxu0 %v3847
    %5003 = vmatpush1.msra.mxu0 %v3846
    %5004 = vmatprep.subr.mxu0 %v3851
    %5005 = vmatpush1.msra.mxu0 %v3850
    %5006 = vmatprep.subr.mxu0 %v3855
    %5007 = vmatpush1.msra.mxu0 %v3854
    %5008 = vmatprep.subr.mxu0 %v3859
    %5009 = vmatpush1.msra.mxu0 %v3858
    %5010 = vmatprep.subr.mxu0 %v3863
    %5011 = vmatpush1.msra.mxu0 %v3862
    %5012 = vmatprep.subr.mxu0 0.0
    %5013 = vmatpush1.msra.mxu0 0.0
    %5014 = vmatprep.subr.mxu0 0.0
    %5015 = vmatpush1.msra.mxu0 0.0
    %5016 = vmatprep.subr.mxu0 0.0
    %5017 = vmatpush1.msra.mxu0 0.0
    %5018 = vmatprep.subr.mxu0 0.0
    %5019 = vmatpush1.msra.mxu0 0.0
    %5020 = vmatprep.subr.mxu0 0.0
    %5021 = vmatpush1.msra.mxu0 0.0
    %5022 = vmatprep.subr.mxu0 0.0
    %5023 = vmatpush1.msra.mxu0 0.0
    %5024 = vmatprep.subr.mxu0 0.0
    %5025 = vmatpush1.msra.mxu0 0.0
    %5026 = vmatprep.subr.mxu0 0.0
    %5027 = vmatpush1.msra.mxu0 0.0
    %5028 = vmatprep.subr.mxu0 0.0
    %5029 = vmatpush1.msra.mxu0 0.0
    %5030 = vmatprep.subr.mxu0 0.0
    %5031 = vmatpush1.msra.mxu0 0.0
    %5032 = vmatprep.subr.mxu0 0.0
    %5033 = vmatpush1.msra.mxu0 0.0
    %5034 = vmatprep.subr.mxu0 0.0
    %5035 = vmatpush1.msra.mxu0 0.0
    %5036 = vmatprep.subr.mxu0 0.0
    %5037 = vmatpush1.msra.mxu0 0.0
    %5038 = vmatprep.subr.mxu0 0.0
    %5039 = vmatpush1.msra.mxu0 0.0
    %5040 = vmatprep.subr.mxu0 0.0
    %5041 = vmatpush1.msra.mxu0 0.0
    %5042 = vmatprep.subr.mxu0 0.0
    %5043 = vmatpush1.msra.mxu0 0.0
    %5044 = vmatprep.mubr.f32.mxu0 0.0
    %5045 = vmatmul.mubr.f32.gmra.mrb[0].mxu0 %v4902
    %v5046 = vpop.f32.mrb[0].mxu0
    %v5047 = vadd.f32 0.0, %v5046
    %v5048 = vpop.f32.mrb[0].mxu0
    %v5049 = vadd.f32 0.0, %v5048
    %5050 = vdwg.mxu0
    %v5055 = vcombine.low %v4976, %v4978
    %v5056 = vcombine.low %v5047, %v5049
    %v5058 = vunpack.c.l.s4 1966171168
    %v5059 = vunpack.c.0.s8 %v5058
    %v5060 = vlaneseq
    %v5061 = vshrl.u32 %v5060, 7
    %v5062 = vsub.s32 %v5059, %v5061
    %v5063 = vrot.slane %v5055, %v5062
    %v5065 = vunpack.c.l.s4 1966171168
    %v5066 = vunpack.c.0.s8 %v5065
    %v5067 = vlaneseq
    %v5068 = vshrl.u32 %v5067, 7
    %v5069 = vsub.s32 %v5066, %v5068
    %v5070 = vrot.slane %v5056, %v5069
    %v5071 = vcombine.low %v5063, %v5070
    %v5073 = vunpack.c.l.s4 1966171168
    %v5074 = vunpack.c.0.s8 %v5073
    %v5075 = vlaneseq
    %v5076 = vshrl.u32 %v5075, 7
    %v5077 = vsub.s32 %v5074, %v5076
    %v5078 = vrot.slane %v5071, %v5077
    %v5080 = vadd.f32 %v4908, %v5078
    %v5081 = vxor.u32 %v5080, 2147483648
    %v5082 = vmul.f32 %v5081, 1.442695
    %v5083 = vpow.pop %v5082
    %v5084 = vadd.f32 %v5083, 1.0
    %v5085 = vrcp.pop %v5084
    %v5086 = vmul.f32 1.0, %v5085
    %v5088 = vrot.slane %v5080, 1
    %v5090 = vxor.u32 %v5088, 2147483648
    %v5091 = vmul.f32 %v5090, 1.442695
    %v5092 = vpow.pop %v5091
    %v5093 = vadd.f32 %v5092, 1.0
    %v5094 = vrcp.pop %v5093
    %v5095 = vmul.f32 1.0, %v5094
    %v5096 = vrot.slane %v5080, 2
    %v5098 = vtanh.pop %v5096
    %v5099 = vrot.slane %v5080, 3
    %v5101 = vxor.u32 %v5099, 2147483648
    %v5102 = vmul.f32 %v5101, 1.442695
    %v5103 = vpow.pop %v5102
    %v5104 = vadd.f32 %v5103, 1.0
    %v5105 = vrcp.pop %v5104
    %v5106 = vmul.f32 1.0, %v5105
    %v5107 = vmul.f32 %v5095, %v4900
    %v5108 = vmul.f32 %v5086, %v5098
    %v5109 = vadd.f32 %v5107, %v5108
    %v5110 = vtanh.pop %v5109
    %v5111 = vmul.f32 %v5106, %v5110
    %v5112 = vmax.f32 %v4903, %v5111
    %s5113 = scalar_lea.vmem [#allocation4], 6
    %v5114 = vld [vmem:[%s5113] ss:$8 sm:$0xf]
    %s5115 = scalar_lea.vmem [#allocation5], 1
    %v5116 = vld [vmem:[%s5115] ss:$8 sm:$0xf]
    %v5117 = vadd.f32 %v5114, %v5116
    %5118 = vmatprep.subr.mxu0 %v3801
    %5119 = vmatpush1.msra.mxu0 %v3800
    %5120 = vmatprep.subr.mxu0 %v3805
    %5121 = vmatpush1.msra.mxu0 %v3804
    %5122 = vmatprep.subr.mxu0 %v3809
    %5123 = vmatpush1.msra.mxu0 %v3808
    %5124 = vmatprep.subr.mxu0 %v3813
    %5125 = vmatpush1.msra.mxu0 %v3812
    %5126 = vmatprep.subr.mxu0 %v3817
    %5127 = vmatpush1.msra.mxu0 %v3816
    %5128 = vmatprep.subr.mxu0 %v3821
    %5129 = vmatpush1.msra.mxu0 %v3820
    %5130 = vmatprep.subr.mxu0 %v3825
    %5131 = vmatpush1.msra.mxu0 %v3824
    %5132 = vmatprep.subr.mxu0 %v3829
    %5133 = vmatpush1.msra.mxu0 %v3828
    %5134 = vmatprep.subr.mxu0 %v3833
    %5135 = vmatpush1.msra.mxu0 %v3832
    %5136 = vmatprep.subr.mxu0 %v3837
    %5137 = vmatpush1.msra.mxu0 %v3836
    %5138 = vmatprep.subr.mxu0 %v3841
    %5139 = vmatpush1.msra.mxu0 %v3840
    %5140 = vmatprep.subr.mxu0 %v3845
    %5141 = vmatpush1.msra.mxu0 %v3844
    %5142 = vmatprep.subr.mxu0 %v3849
    %5143 = vmatpush1.msra.mxu0 %v3848
    %5144 = vmatprep.subr.mxu0 %v3853
    %5145 = vmatpush1.msra.mxu0 %v3852
    %5146 = vmatprep.subr.mxu0 %v3857
    %5147 = vmatpush1.msra.mxu0 %v3856
    %5148 = vmatprep.subr.mxu0 %v3861
    %5149 = vmatpush1.msra.mxu0 %v3860
    %5150 = vmatprep.subr.mxu0 0.0
    %5151 = vmatpush1.msra.mxu0 0.0
    %5152 = vmatprep.subr.mxu0 0.0
    %5153 = vmatpush1.msra.mxu0 0.0
    %5154 = vmatprep.subr.mxu0 0.0
    %5155 = vmatpush1.msra.mxu0 0.0
    %5156 = vmatprep.subr.mxu0 0.0
    %5157 = vmatpush1.msra.mxu0 0.0
    %5158 = vmatprep.subr.mxu0 0.0
    %5159 = vmatpush1.msra.mxu0 0.0
    %5160 = vmatprep.subr.mxu0 0.0
    %5161 = vmatpush1.msra.mxu0 0.0
    %5162 = vmatprep.subr.mxu0 0.0
    %5163 = vmatpush1.msra.mxu0 0.0
    %5164 = vmatprep.subr.mxu0 0.0
    %5165 = vmatpush1.msra.mxu0 0.0
    %5166 = vmatprep.subr.mxu0 0.0
    %5167 = vmatpush1.msra.mxu0 0.0
    %5168 = vmatprep.subr.mxu0 0.0
    %5169 = vmatpush1.msra.mxu0 0.0
    %5170 = vmatprep.subr.mxu0 0.0
    %5171 = vmatpush1.msra.mxu0 0.0
    %5172 = vmatprep.subr.mxu0 0.0
    %5173 = vmatpush1.msra.mxu0 0.0
    %5174 = vmatprep.subr.mxu0 0.0
    %5175 = vmatpush1.msra.mxu0 0.0
    %5176 = vmatprep.subr.mxu0 0.0
    %5177 = vmatpush1.msra.mxu0 0.0
    %5178 = vmatprep.subr.mxu0 0.0
    %5179 = vmatpush1.msra.mxu0 0.0
    %5180 = vmatprep.subr.mxu0 0.0
    %5181 = vmatpush1.msra.mxu0 0.0
    %5182 = vmatprep.mubr.f32.mxu0 0.0
    %5183 = vmatmul.mubr.f32.gmra.mrb[0].mxu0 %v5111
    %v5184 = vpop.f32.mrb[0].mxu0
    %v5185 = vadd.f32 0.0, %v5184
    %v5186 = vpop.f32.mrb[0].mxu0
    %v5187 = vadd.f32 0.0, %v5186
    %5188 = vdwg.mxu0
    %5189 = vmatprep.subr.mxu0 %v3803
    %5190 = vmatpush1.msra.mxu0 %v3802
    %5191 = vmatprep.subr.mxu0 %v3807
    %5192 = vmatpush1.msra.mxu0 %v3806
    %5193 = vmatprep.subr.mxu0 %v3811
    %5194 = vmatpush1.msra.mxu0 %v3810
    %5195 = vmatprep.subr.mxu0 %v3815
    %5196 = vmatpush1.msra.mxu0 %v3814
    %5197 = vmatprep.subr.mxu0 %v3819
    %5198 = vmatpush1.msra.mxu0 %v3818
    %5199 = vmatprep.subr.mxu0 %v3823
    %5200 = vmatpush1.msra.mxu0 %v3822
    %5201 = vmatprep.subr.mxu0 %v3827
    %5202 = vmatpush1.msra.mxu0 %v3826
    %5203 = vmatprep.subr.mxu0 %v3831
    %5204 = vmatpush1.msra.mxu0 %v3830
    %5205 = vmatprep.subr.mxu0 %v3835
    %5206 = vmatpush1.msra.mxu0 %v3834
    %5207 = vmatprep.subr.mxu0 %v3839
    %5208 = vmatpush1.msra.mxu0 %v3838
    %5209 = vmatprep.subr.mxu0 %v3843
    %5210 = vmatpush1.msra.mxu0 %v3842
    %5211 = vmatprep.subr.mxu0 %v3847
    %5212 = vmatpush1.msra.mxu0 %v3846
    %5213 = vmatprep.subr.mxu0 %v3851
    %5214 = vmatpush1.msra.mxu0 %v3850
    %5215 = vmatprep.subr.mxu0 %v3855
    %5216 = vmatpush1.msra.mxu0 %v3854
    %5217 = vmatprep.subr.mxu0 %v3859
    %5218 = vmatpush1.msra.mxu0 %v3858
    %5219 = vmatprep.subr.mxu0 %v3863
    %5220 = vmatpush1.msra.mxu0 %v3862
    %5221 = vmatprep.subr.mxu0 0.0
    %5222 = vmatpush1.msra.mxu0 0.0
    %5223 = vmatprep.subr.mxu0 0.0
    %5224 = vmatpush1.msra.mxu0 0.0
    %5225 = vmatprep.subr.mxu0 0.0
    %5226 = vmatpush1.msra.mxu0 0.0
    %5227 = vmatprep.subr.mxu0 0.0
    %5228 = vmatpush1.msra.mxu0 0.0
    %5229 = vmatprep.subr.mxu0 0.0
    %5230 = vmatpush1.msra.mxu0 0.0
    %5231 = vmatprep.subr.mxu0 0.0
    %5232 = vmatpush1.msra.mxu0 0.0
    %5233 = vmatprep.subr.mxu0 0.0
    %5234 = vmatpush1.msra.mxu0 0.0
    %5235 = vmatprep.subr.mxu0 0.0
    %5236 = vmatpush1.msra.mxu0 0.0
    %5237 = vmatprep.subr.mxu0 0.0
    %5238 = vmatpush1.msra.mxu0 0.0
    %5239 = vmatprep.subr.mxu0 0.0
    %5240 = vmatpush1.msra.mxu0 0.0
    %5241 = vmatprep.subr.mxu0 0.0
    %5242 = vmatpush1.msra.mxu0 0.0
    %5243 = vmatprep.subr.mxu0 0.0
    %5244 = vmatpush1.msra.mxu0 0.0
    %5245 = vmatprep.subr.mxu0 0.0
    %5246 = vmatpush1.msra.mxu0 0.0
    %5247 = vmatprep.subr.mxu0 0.0
    %5248 = vmatpush1.msra.mxu0 0.0
    %5249 = vmatprep.subr.mxu0 0.0
    %5250 = vmatpush1.msra.mxu0 0.0
    %5251 = vmatprep.subr.mxu0 0.0
    %5252 = vmatpush1.msra.mxu0 0.0
    %5253 = vmatprep.mubr.f32.mxu0 0.0
    %5254 = vmatmul.mubr.f32.gmra.mrb[0].mxu0 %v5111
    %v5255 = vpop.f32.mrb[0].mxu0
    %v5256 = vadd.f32 0.0, %v5255
    %v5257 = vpop.f32.mrb[0].mxu0
    %v5258 = vadd.f32 0.0, %v5257
    %5259 = vdwg.mxu0
    %v5264 = vcombine.low %v5185, %v5187
    %v5265 = vcombine.low %v5256, %v5258
    %v5267 = vunpack.c.l.s4 1966171168
    %v5268 = vunpack.c.0.s8 %v5267
    %v5269 = vlaneseq
    %v5270 = vshrl.u32 %v5269, 7
    %v5271 = vsub.s32 %v5268, %v5270
    %v5272 = vrot.slane %v5264, %v5271
    %v5274 = vunpack.c.l.s4 1966171168
    %v5275 = vunpack.c.0.s8 %v5274
    %v5276 = vlaneseq
    %v5277 = vshrl.u32 %v5276, 7
    %v5278 = vsub.s32 %v5275, %v5277
    %v5279 = vrot.slane %v5265, %v5278
    %v5280 = vcombine.low %v5272, %v5279
    %v5282 = vunpack.c.l.s4 1966171168
    %v5283 = vunpack.c.0.s8 %v5282
    %v5284 = vlaneseq
    %v5285 = vshrl.u32 %v5284, 7
    %v5286 = vsub.s32 %v5283, %v5285
    %v5287 = vrot.slane %v5280, %v5286
    %v5289 = vadd.f32 %v5117, %v5287
    %v5290 = vxor.u32 %v5289, 2147483648
    %v5291 = vmul.f32 %v5290, 1.442695
    %v5292 = vpow.pop %v5291
    %v5293 = vadd.f32 %v5292, 1.0
    %v5294 = vrcp.pop %v5293
    %v5295 = vmul.f32 1.0, %v5294
    %v5297 = vrot.slane %v5289, 1
    %v5299 = vxor.u32 %v5297, 2147483648
    %v5300 = vmul.f32 %v5299, 1.442695
    %v5301 = vpow.pop %v5300
    %v5302 = vadd.f32 %v5301, 1.0
    %v5303 = vrcp.pop %v5302
    %v5304 = vmul.f32 1.0, %v5303
    %v5305 = vrot.slane %v5289, 2
    %v5307 = vtanh.pop %v5305
    %v5308 = vrot.slane %v5289, 3
    %v5310 = vxor.u32 %v5308, 2147483648
    %v5311 = vmul.f32 %v5310, 1.442695
    %v5312 = vpow.pop %v5311
    %v5313 = vadd.f32 %v5312, 1.0
    %v5314 = vrcp.pop %v5313
    %v5315 = vmul.f32 1.0, %v5314
    %v5316 = vmul.f32 %v5304, %v5109
    %v5317 = vmul.f32 %v5295, %v5307
    %v5318 = vadd.f32 %v5316, %v5317
    %v5319 = vtanh.pop %v5318
    %v5320 = vmul.f32 %v5315, %v5319
    %v5321 = vmax.f32 %v5112, %v5320
    %s5322 = scalar_lea.vmem [#allocation4], 7
    %v5323 = vld [vmem:[%s5322] ss:$8 sm:$0xf]
    %v5324 = vld [vmem:[#allocation5] ss:$8 sm:$0xf]
    %v5325 = vadd.f32 %v5323, %v5324
    %5326 = vmatprep.subr.mxu0 %v3801
    %5327 = vmatpush1.msra.mxu0 %v3800
    %5328 = vmatprep.subr.mxu0 %v3805
    %5329 = vmatpush1.msra.mxu0 %v3804
    %5330 = vmatprep.subr.mxu0 %v3809
    %5331 = vmatpush1.msra.mxu0 %v3808
    %5332 = vmatprep.subr.mxu0 %v3813
    %5333 = vmatpush1.msra.mxu0 %v3812
    %5334 = vmatprep.subr.mxu0 %v3817
    %5335 = vmatpush1.msra.mxu0 %v3816
    %5336 = vmatprep.subr.mxu0 %v3821
    %5337 = vmatpush1.msra.mxu0 %v3820
    %5338 = vmatprep.subr.mxu0 %v3825
    %5339 = vmatpush1.msra.mxu0 %v3824
    %5340 = vmatprep.subr.mxu0 %v3829
    %5341 = vmatpush1.msra.mxu0 %v3828
    %5342 = vmatprep.subr.mxu0 %v3833
    %5343 = vmatpush1.msra.mxu0 %v3832
    %5344 = vmatprep.subr.mxu0 %v3837
    %5345 = vmatpush1.msra.mxu0 %v3836
    %5346 = vmatprep.subr.mxu0 %v3841
    %5347 = vmatpush1.msra.mxu0 %v3840
    %5348 = vmatprep.subr.mxu0 %v3845
    %5349 = vmatpush1.msra.mxu0 %v3844
    %5350 = vmatprep.subr.mxu0 %v3849
    %5351 = vmatpush1.msra.mxu0 %v3848
    %5352 = vmatprep.subr.mxu0 %v3853
    %5353 = vmatpush1.msra.mxu0 %v3852
    %5354 = vmatprep.subr.mxu0 %v3857
    %5355 = vmatpush1.msra.mxu0 %v3856
    %5356 = vmatprep.subr.mxu0 %v3861
    %5357 = vmatpush1.msra.mxu0 %v3860
    %5358 = vmatprep.subr.mxu0 0.0
    %5359 = vmatpush1.msra.mxu0 0.0
    %5360 = vmatprep.subr.mxu0 0.0
    %5361 = vmatpush1.msra.mxu0 0.0
    %5362 = vmatprep.subr.mxu0 0.0
    %5363 = vmatpush1.msra.mxu0 0.0
    %5364 = vmatprep.subr.mxu0 0.0
    %5365 = vmatpush1.msra.mxu0 0.0
    %5366 = vmatprep.subr.mxu0 0.0
    %5367 = vmatpush1.msra.mxu0 0.0
    %5368 = vmatprep.subr.mxu0 0.0
    %5369 = vmatpush1.msra.mxu0 0.0
    %5370 = vmatprep.subr.mxu0 0.0
    %5371 = vmatpush1.msra.mxu0 0.0
    %5372 = vmatprep.subr.mxu0 0.0
    %5373 = vmatpush1.msra.mxu0 0.0
    %5374 = vmatprep.subr.mxu0 0.0
    %5375 = vmatpush1.msra.mxu0 0.0
    %5376 = vmatprep.subr.mxu0 0.0
    %5377 = vmatpush1.msra.mxu0 0.0
    %5378 = vmatprep.subr.mxu0 0.0
    %5379 = vmatpush1.msra.mxu0 0.0
    %5380 = vmatprep.subr.mxu0 0.0
    %5381 = vmatpush1.msra.mxu0 0.0
    %5382 = vmatprep.subr.mxu0 0.0
    %5383 = vmatpush1.msra.mxu0 0.0
    %5384 = vmatprep.subr.mxu0 0.0
    %5385 = vmatpush1.msra.mxu0 0.0
    %5386 = vmatprep.subr.mxu0 0.0
    %5387 = vmatpush1.msra.mxu0 0.0
    %5388 = vmatprep.subr.mxu0 0.0
    %5389 = vmatpush1.msra.mxu0 0.0
    %5390 = vmatprep.mubr.f32.mxu0 0.0
    %5391 = vmatmul.mubr.f32.gmra.mrb[0].mxu0 %v5320
    %v5392 = vpop.f32.mrb[0].mxu0
    %v5393 = vadd.f32 0.0, %v5392
    %v5394 = vpop.f32.mrb[0].mxu0
    %v5395 = vadd.f32 0.0, %v5394
    %5396 = vdwg.mxu0
    %5397 = vmatprep.subr.mxu0 %v3803
    %5398 = vmatpush1.msra.mxu0 %v3802
    %5399 = vmatprep.subr.mxu0 %v3807
    %5400 = vmatpush1.msra.mxu0 %v3806
    %5401 = vmatprep.subr.mxu0 %v3811
    %5402 = vmatpush1.msra.mxu0 %v3810
    %5403 = vmatprep.subr.mxu0 %v3815
    %5404 = vmatpush1.msra.mxu0 %v3814
    %5405 = vmatprep.subr.mxu0 %v3819
    %5406 = vmatpush1.msra.mxu0 %v3818
    %5407 = vmatprep.subr.mxu0 %v3823
    %5408 = vmatpush1.msra.mxu0 %v3822
    %5409 = vmatprep.subr.mxu0 %v3827
    %5410 = vmatpush1.msra.mxu0 %v3826
    %5411 = vmatprep.subr.mxu0 %v3831
    %5412 = vmatpush1.msra.mxu0 %v3830
    %5413 = vmatprep.subr.mxu0 %v3835
    %5414 = vmatpush1.msra.mxu0 %v3834
    %5415 = vmatprep.subr.mxu0 %v3839
    %5416 = vmatpush1.msra.mxu0 %v3838
    %5417 = vmatprep.subr.mxu0 %v3843
    %5418 = vmatpush1.msra.mxu0 %v3842
    %5419 = vmatprep.subr.mxu0 %v3847
    %5420 = vmatpush1.msra.mxu0 %v3846
    %5421 = vmatprep.subr.mxu0 %v3851
    %5422 = vmatpush1.msra.mxu0 %v3850
    %5423 = vmatprep.subr.mxu0 %v3855
    %5424 = vmatpush1.msra.mxu0 %v3854
    %5425 = vmatprep.subr.mxu0 %v3859
    %5426 = vmatpush1.msra.mxu0 %v3858
    %5427 = vmatprep.subr.mxu0 %v3863
    %5428 = vmatpush1.msra.mxu0 %v3862
    %5429 = vmatprep.subr.mxu0 0.0
    %5430 = vmatpush1.msra.mxu0 0.0
    %5431 = vmatprep.subr.mxu0 0.0
    %5432 = vmatpush1.msra.mxu0 0.0
    %5433 = vmatprep.subr.mxu0 0.0
    %5434 = vmatpush1.msra.mxu0 0.0
    %5435 = vmatprep.subr.mxu0 0.0
    %5436 = vmatpush1.msra.mxu0 0.0
    %5437 = vmatprep.subr.mxu0 0.0
    %5438 = vmatpush1.msra.mxu0 0.0
    %5439 = vmatprep.subr.mxu0 0.0
    %5440 = vmatpush1.msra.mxu0 0.0
    %5441 = vmatprep.subr.mxu0 0.0
    %5442 = vmatpush1.msra.mxu0 0.0
    %5443 = vmatprep.subr.mxu0 0.0
    %5444 = vmatpush1.msra.mxu0 0.0
    %5445 = vmatprep.subr.mxu0 0.0
    %5446 = vmatpush1.msra.mxu0 0.0
    %5447 = vmatprep.subr.mxu0 0.0
    %5448 = vmatpush1.msra.mxu0 0.0
    %5449 = vmatprep.subr.mxu0 0.0
    %5450 = vmatpush1.msra.mxu0 0.0
    %5451 = vmatprep.subr.mxu0 0.0
    %5452 = vmatpush1.msra.mxu0 0.0
    %5453 = vmatprep.subr.mxu0 0.0
    %5454 = vmatpush1.msra.mxu0 0.0
    %5455 = vmatprep.subr.mxu0 0.0
    %5456 = vmatpush1.msra.mxu0 0.0
    %5457 = vmatprep.subr.mxu0 0.0
    %5458 = vmatpush1.msra.mxu0 0.0
    %5459 = vmatprep.subr.mxu0 0.0
    %5460 = vmatpush1.msra.mxu0 0.0
    %5461 = vmatprep.mubr.f32.mxu0 0.0
    %5462 = vmatmul.mubr.f32.gmra.mrb[0].mxu0 %v5320
    %v5463 = vpop.f32.mrb[0].mxu0
    %v5464 = vadd.f32 0.0, %v5463
    %v5465 = vpop.f32.mrb[0].mxu0
    %v5466 = vadd.f32 0.0, %v5465
    %5467 = vdwg.mxu0
    %v5472 = vcombine.low %v5393, %v5395
    %v5473 = vcombine.low %v5464, %v5466
    %v5475 = vunpack.c.l.s4 1966171168
    %v5476 = vunpack.c.0.s8 %v5475
    %v5477 = vlaneseq
    %v5478 = vshrl.u32 %v5477, 7
    %v5479 = vsub.s32 %v5476, %v5478
    %v5480 = vrot.slane %v5472, %v5479
    %v5482 = vunpack.c.l.s4 1966171168
    %v5483 = vunpack.c.0.s8 %v5482
    %v5484 = vlaneseq
    %v5485 = vshrl.u32 %v5484, 7
    %v5486 = vsub.s32 %v5483, %v5485
    %v5487 = vrot.slane %v5473, %v5486
    %v5488 = vcombine.low %v5480, %v5487
    %v5490 = vunpack.c.l.s4 1966171168
    %v5491 = vunpack.c.0.s8 %v5490
    %v5492 = vlaneseq
    %v5493 = vshrl.u32 %v5492, 7
    %v5494 = vsub.s32 %v5491, %v5493
    %v5495 = vrot.slane %v5488, %v5494
    %v5497 = vadd.f32 %v5325, %v5495
    %v5498 = vxor.u32 %v5497, 2147483648
    %v5499 = vmul.f32 %v5498, 1.442695
    %v5500 = vpow.pop %v5499
    %v5501 = vadd.f32 %v5500, 1.0
    %v5502 = vrcp.pop %v5501
    %v5503 = vmul.f32 1.0, %v5502
    %v5505 = vrot.slane %v5497, 1
    %v5507 = vxor.u32 %v5505, 2147483648
    %v5508 = vmul.f32 %v5507, 1.442695
    %v5509 = vpow.pop %v5508
    %v5510 = vadd.f32 %v5509, 1.0
    %v5511 = vrcp.pop %v5510
    %v5512 = vmul.f32 1.0, %v5511
    %v5513 = vrot.slane %v5497, 2
    %v5515 = vtanh.pop %v5513
    %v5516 = vrot.slane %v5497, 3
    %v5518 = vxor.u32 %v5516, 2147483648
    %v5519 = vmul.f32 %v5518, 1.442695
    %v5520 = vpow.pop %v5519
    %v5521 = vadd.f32 %v5520, 1.0
    %v5522 = vrcp.pop %v5521
    %v5523 = vmul.f32 1.0, %v5522
    %v5524 = vmul.f32 %v5512, %v5318
    %v5525 = vmul.f32 %v5503, %v5515
    %v5526 = vadd.f32 %v5524, %v5525
    %v5527 = vtanh.pop %v5526
    %v5528 = vmul.f32 %v5523, %v5527
    %v5529 = vmax.f32 %v5321, %v5528
    %v5530 = vld [vmem:[%s9] sm:$0x1]
    %v5531 = vmul.f32 %v5529, %v5530
    %vm5532 = vcmask 1040384
    %v5533 = vsel %vm5532, %v5531, 0.0
    %5534 = vadd.xlane.f32.xlu0 %v5533
    %v5535 = vpop.xlane.xlu0 %5534
    %v5536 = vld [vmem:[#allocation7] sm:$0x1]
    %v5537 = vadd.f32 %v5535, %v5536
    %v5538 = vxor.u32 %v5537, 2147483648
    %v5539 = vmul.f32 %v5538, 1.442695
    %v5540 = vpow.pop %v5539
    %v5541 = vadd.f32 %v5540, 1.0
    %v5542 = vrcp.pop %v5541
    %v5543 = vmul.f32 1.0, %v5542
    %vm5544 = vcmask 0
    %5545 = vst.msk [vmem:[#allocation19] sm:$0x1] %vm5544, %v5543
    // Predicated region
    $region70: #{mynn_forward.1} parent=1 // pred_check
      _
    $region71: #{mynn_forward.1} parent=1 // pred_check_branch
      %5547 = sbr.rel (0) target = $region73
    $region72: #{mynn_forward.1} parent=1 // pred_region
      %s5549 = ssub.s32 16, 16
      %5550 = vsyncadd [#allocation10], %s5549
      %s5552 = sshll.u32 [#allocation19], 4
      %s5553 = int_to_ptr.vmem [resolvable:$true] %s5552
      %5555 = dma.vmem_to_hbm [thread:$0]  %s5553, 16, %s11, [#allocation10]
    $region73: #{mynn_forward.1} parent=1 // pred_fallthru
      _
    // Predicated region
    $region74: #{mynn_forward.1} parent=1 // pred_check
      _
    $region75: #{mynn_forward.1} parent=1 // pred_check_branch
      %5557 = sbr.rel (0) target = $region77
    $region76: #{mynn_forward.1} parent=1 // pred_region
      %5558 = dma.done [#allocation10], 16
    $region77: #{mynn_forward.1} parent=1 // pred_fallthru
      _
    %5559 = vsyncpa [#allocation9], 1
    %5560 = vsyncpa [#allocation12], 1
    %5561 = vsyncpa [#allocation15], 1
    %5562 = vsyncpa [#allocation18], 1
    %5563 = vsyncpa [#allocation10], 1

</llo_original>
